<compile_context>
chip_gen: v5e
topology: v5e:2x2
jax: 0.10.0
libtpu: 0.0.40
codegen_flags: <defaults>
</compile_context>

<pallas_src>
import functools

import numpy as np
import jax
import jax.numpy as jnp
from jax.experimental import pallas as pl
from jax.experimental.pallas import tpu as pltpu


# ---------------------------------------------------------------------------
# In-kernel helpers
# ---------------------------------------------------------------------------
def _conv3x3_relu(xf, w_ref, b_row, *, H, W):
    """3x3 'same' (zero-padded) conv on a channel-last flattened image.

    xf:    (H*W, CP) f32 value — image flattened row-major over (H, W),
           channels (zero-padded to CP=128) on the lane axis.
    w_ref: (9, CP, CP) bf16 ref — taps ordered k = (dy+1)*3 + (dx+1).
    b_row: (1, CP) f32.
    Each tap: sublane roll (XLU) + iota edge mask + dense (H*W,CP)x(CP,CP) MXU
    matmul with f32 accumulation. Returns relu(conv + bias) as (H*W, CP) f32.
    """
    HW = H * W
    CP = xf.shape[-1]
    idx = jax.lax.broadcasted_iota(jnp.int32, (HW, 1), 0)
    w_idx = (idx & (W - 1)) if (W & (W - 1)) == 0 else (idx % W)

    acc = jnp.zeros((HW, CP), jnp.float32)
    for dy in (-1, 0, 1):
        for dx in (-1, 0, 1):
            off = dy * W + dx
            shifted = xf if off == 0 else pltpu.roll(xf, shift=(-off) % HW, axis=0)
            conds = []
            if dy < 0:
                conds.append(idx >= (-dy) * W)        # h + dy >= 0
            if dy > 0:
                conds.append(idx < (H - dy) * W)      # h + dy <  H
            if dx < 0:
                conds.append(w_idx >= -dx)            # w + dx >= 0
            if dx > 0:
                conds.append(w_idx < W - dx)          # w + dx <  W
            if conds:
                valid = conds[0]
                for c in conds[1:]:
                    valid = jnp.logical_and(valid, c)
                shifted = jnp.where(valid, shifted, 0.0)
            k = (dy + 1) * 3 + (dx + 1)
            acc = acc + jnp.dot(shifted.astype(jnp.bfloat16), w_ref[k],
                                preferred_element_type=jnp.float32)
    return jnp.maximum(acc + b_row, 0.0)


def _upsample2x_rows(out2, *, H, W, C):
    """Bilinear 2x (PyTorch align_corners=False; exact only for integer 2x) on
    the flattened (H*W, CP) conv output. Shifted neighbours come from
    pltpu.roll + clamp masks (no concatenate temporaries). Returns the even and
    odd output rows as two lane-packed (H, 2*W*C) f32 slabs (channels of
    consecutive output pixels laid side by side on the lane axis)."""
    HW = H * W
    idx = jax.lax.broadcasted_iota(jnp.int32, (HW, 1), 0)
    w_idx = (idx & (W - 1)) if (W & (W - 1)) == 0 else (idx % W)

    v = out2
    # vertical neighbours, clamped at the border (sublane rolls by +/- W)
    up = jnp.where(idx < W, v, pltpu.roll(v, shift=W, axis=0))                   # row h-1
    dn = jnp.where(idx >= (H - 1) * W, v, pltpu.roll(v, shift=HW - W, axis=0))   # row h+1
    even_h = 0.75 * v + 0.25 * up          # -> output row 2h
    odd_h = 0.75 * v + 0.25 * dn           # -> output row 2h+1

    def horiz(r):
        lf = jnp.where(w_idx == 0, r, pltpu.roll(r, shift=1, axis=0))            # col w-1
        rt = jnp.where(w_idx == W - 1, r, pltpu.roll(r, shift=HW - 1, axis=0))   # col w+1
        return 0.75 * r + 0.25 * lf, 0.75 * r + 0.25 * rt                        # cols 2w, 2w+1

    ee, eo = horiz(even_h)     # (even row, even col) / (even row, odd col)
    oe, oo = horiz(odd_h)

    def pack_row(a, b):
        # (H*W, CP) phase pair -> lane-dense (H, 2*W*C) slab:
        # [a(w=0), b(w=0), a(w=1), b(w=1), ...], keeping only the C real channels.
        a3 = a.reshape(H, W, a.shape[-1])
        b3 = b.reshape(H, W, b.shape[-1])
        pieces = []
        for w in range(W):
            pieces.append(a3[:, w, :C])
            pieces.append(b3[:, w, :C])
        return jnp.concatenate(pieces, axis=1)

    return pack_row(ee, eo), pack_row(oe, oo)


# ---------------------------------------------------------------------------
# Fused kernel: conv1+relu -> (concat-free) conv2+relu -> bilinear 2x upsample
# ---------------------------------------------------------------------------
def _block_dec_kernel(x_ref, res_ref, w1_ref, w2_ref, b1_ref, b2_ref, o_ref,
                      *, H, W, Cout):
    # conv1 + relu on res. Its real output channels are pre-embedded (via the
    # wrapper's weight/bias padding) at lanes [Cx, Cx+Cout), so the
    # torch.cat([x, out1], 1) operand for conv2 is a plain add in registers.
    out1 = _conv3x3_relu(res_ref[0], w1_ref, b1_ref[...], H=H, W=W)
    combined = x_ref[0] + out1
    out2 = _conv3x3_relu(combined, w2_ref, b2_ref[...], H=H, W=W)

    # bilinear 2x upsample + lane-dense bf16 store.
    even_rows, odd_rows = _upsample2x_rows(out2, H=H, W=W, C=Cout)
    o_ref[0, :, 0, :] = even_rows.astype(o_ref.dtype)
    o_ref[0, :, 1, :] = odd_rows.astype(o_ref.dtype)


def block_dec_forward(x_nhwc, res_nhwc, params, *, cpad=128):
    """x: (N,H,W,Cx), res: (N,H,W,Cin)  ->  (N,2H,2W,Cout) bf16, all NHWC."""
    w1, b1, w2, b2 = params
    N, H, W, Cx = x_nhwc.shape
    Cin = res_nhwc.shape[-1]
    Cout = w1.shape[-1]
    assert w2.shape[2] == Cx + Cout, "conv2 expects torch.cat([x, out1]) input"
    assert max(Cin, Cx + Cout) <= cpad, "channel widths must fit one 128-lane group"
    assert W % 8 == 0 and (2 * W * Cout) % 128 == 0, "lane-dense packing constraint"
    HW = H * W

    def to_flat(a, c):
        a = jnp.pad(a, ((0, 0), (0, 0), (0, 0), (0, cpad - c)))
        return a.reshape(N, HW, cpad).astype(jnp.float32)

    xf = to_flat(x_nhwc, Cx)        # x channels live in lanes [0, Cx)
    rf = to_flat(res_nhwc, Cin)

    # conv1's output channels are embedded at lane offset Cx so that
    # x_lanes[0:Cx] + out1_lanes[Cx:Cx+Cout] reproduces torch.cat([x, out1], 1).
    w1p = (jnp.zeros((9, cpad, cpad), jnp.float32)
           .at[:, :Cin, Cx:Cx + Cout].set(w1.reshape(9, Cin, Cout))
           .astype(jnp.bfloat16))
    b1p = jnp.zeros((1, cpad), jnp.float32).at[0, Cx:Cx + Cout].set(b1)
    w2p = (jnp.zeros((9, cpad, cpad), jnp.float32)
           .at[:, :Cx + Cout, :Cout].set(w2.reshape(9, Cx + Cout, Cout))
           .astype(jnp.bfloat16))
    b2p = jnp.zeros((1, cpad), jnp.float32).at[0, :Cout].set(b2)

    kernel = functools.partial(_block_dec_kernel, H=H, W=W, Cout=Cout)
    out_packed = pl.pallas_call(
        kernel,
        out_shape=jax.ShapeDtypeStruct((N, H, 2, 2 * W * Cout), jnp.bfloat16),
        grid=(N,),
        in_specs=[
            pl.BlockSpec((1, HW, cpad), lambda n: (n, 0, 0)),
            pl.BlockSpec((1, HW, cpad), lambda n: (n, 0, 0)),
            pl.BlockSpec((9, cpad, cpad), lambda n: (0, 0, 0)),
            pl.BlockSpec((9, cpad, cpad), lambda n: (0, 0, 0)),
            pl.BlockSpec((1, cpad), lambda n: (0, 0)),
            pl.BlockSpec((1, cpad), lambda n: (0, 0)),
        ],
        out_specs=pl.BlockSpec((1, H, 2, 2 * W * Cout), lambda n: (n, 0, 0, 0)),
        compiler_params=pltpu.CompilerParams(
            dimension_semantics=("parallel",),
            vmem_limit_bytes=48 * 1024 * 1024),   # fits v7x's 64 MiB, roomy on v5e/v6e
    )(xf, rf, w1p, w2p, b1p, b2p)

    # (N, H, 2, 2W*Cout) is bit-contiguous with NHWC -> free reshape, no copy.
    return out_packed.reshape(N, 2 * H, 2 * W, Cout)


# ---------------------------------------------------------------------------
# Pure-JAX reference (mirrors the kernel's bf16-operand / f32-accumulate conv
# numerics; the upsample uses explicit PyTorch align_corners=False matrices as
# an independent check of the in-kernel 0.75/0.25 shifted-add formula).
# ---------------------------------------------------------------------------
def _bilinear_matrix_1d(n_in):
    n_out = 2 * n_in
    i = np.arange(n_out, dtype=np.float64)
    src = np.maximum((i + 0.5) * 0.5 - 0.5, 0.0)
    i0 = np.minimum(np.floor(src).astype(np.int64), n_in - 1)
    i1 = np.minimum(i0 + 1, n_in - 1)
    w1 = src - i0
    w0 = 1.0 - w1
    A = np.zeros((n_out, n_in), dtype=np.float32)
    A[np.arange(n_out), i0] += w0
    A[np.arange(n_out), i1] += w1
    return A


def block_dec_reference(x_nhwc, res_nhwc, params):
    w1, b1, w2, b2 = params
    q = lambda t: t.astype(jnp.bfloat16).astype(jnp.float32)

    def conv(inp, w, b):
        y = jax.lax.conv_general_dilated(
            q(inp), q(w), window_strides=(1, 1), padding=((1, 1), (1, 1)),
            dimension_numbers=("NHWC", "HWIO", "NHWC"),
            precision=jax.lax.Precision.HIGHEST)
        return y + b

    out = jax.nn.relu(conv(res_nhwc, w1, b1))
    out = jnp.concatenate([x_nhwc, out], axis=-1)
    out = jax.nn.relu(conv(out, w2, b2))
    _, Hc, Wc, _ = out.shape
    Ah = jnp.asarray(_bilinear_matrix_1d(Hc))
    Aw = jnp.asarray(_bilinear_matrix_1d(Wc))
    out = jnp.einsum("oh,nhwc->nowc", Ah, out, precision=jax.lax.Precision.HIGHEST)
    out = jnp.einsum("pw,nowc->nopc", Aw, out, precision=jax.lax.Precision.HIGHEST)
    return out


def init_params(key, in_channels, out_channels):
    # xavier_normal_ for conv weights (fan_in = Cin*9, fan_out = Cout*9), zero bias.
    k1, k2 = jax.random.split(key)

    def xavier(k, cin, cout):
        std = np.sqrt(2.0 / (cin * 9 + cout * 9))
        return jax.random.normal(k, (3, 3, cin, cout), jnp.float32) * std

    w1 = xavier(k1, in_channels, out_channels)
    b1 = jnp.zeros((out_channels,), jnp.float32)
    w2 = xavier(k2, out_channels * 2, out_channels)
    b2 = jnp.zeros((out_channels,), jnp.float32)
    return (w1, b1, w2, b2)


if __name__ == "__main__":
    N, in_channels, out_channels, H, W = 2, 4, 8, 16, 16

    key = jax.random.PRNGKey(0)
    kx, kr, kp = jax.random.split(key, 3)

    # PyTorch NCHW shapes: x (N, out_channels, H, W), res (N, in_channels, H, W)
    x_nchw = jax.random.normal(kx, (N, out_channels, H, W), jnp.float32)
    res_nchw = jax.random.normal(kr, (N, in_channels, H, W), jnp.float32)

    # layout plumbing: NCHW -> NHWC (channels on the lane axis) for the TPU kernel
    x_nhwc = jnp.transpose(x_nchw, (0, 2, 3, 1))
    res_nhwc = jnp.transpose(res_nchw, (0, 2, 3, 1))

    params = init_params(kp, in_channels, out_channels)

    out = jax.block_until_ready(block_dec_forward(x_nhwc, res_nhwc, params))
    assert out.shape == (N, 2 * H, 2 * W, out_channels)

    ref = block_dec_reference(x_nhwc, res_nhwc, params)
    np.testing.assert_allclose(np.asarray(out.astype(jnp.float32)),
                               np.asarray(ref), rtol=1e-2, atol=1e-2)

    print("KERNEL_OK")
</pallas_src>

<mosaic_0001>
module attributes {stable_mosaic.version = 11 : i64} {
  func.func @_block_dec_kernel(%arg0: i32, %arg1: memref<1x256x128xf32, #tpu.memory_space<vmem>>, %arg2: memref<1x256x128xf32, #tpu.memory_space<vmem>>, %arg3: memref<9x128x128xbf16, #tpu.memory_space<vmem>>, %arg4: memref<9x128x128xbf16, #tpu.memory_space<vmem>>, %arg5: memref<1x128xf32, #tpu.memory_space<vmem>>, %arg6: memref<1x128xf32, #tpu.memory_space<vmem>>, %arg7: memref<1x16x2x256xbf16, #tpu.memory_space<vmem>>) attributes {dimension_semantics = [#tpu.dimension_semantics<parallel>], iteration_bounds = array<i64: 2>, scalar_prefetch = 0 : i64, scratch_operands = 0 : i64, tpu.core_type = #tpu.core_type<tc>, window_params = [{transform_indices = @transform_0, window_bounds = array<i64: 1, 256, 128>}, {transform_indices = @transform_1, window_bounds = array<i64: 1, 256, 128>}, {pipeline_mode = #tpu.pipeline_mode<synchronous>, transform_indices = @transform_2, window_bounds = array<i64: 9, 128, 128>}, {pipeline_mode = #tpu.pipeline_mode<synchronous>, transform_indices = @transform_3, window_bounds = array<i64: 9, 128, 128>}, {pipeline_mode = #tpu.pipeline_mode<synchronous>, transform_indices = @transform_4, window_bounds = array<i64: 1, 128>}, {pipeline_mode = #tpu.pipeline_mode<synchronous>, transform_indices = @transform_5, window_bounds = array<i64: 1, 128>}, {transform_indices = @transform_6, window_bounds = array<i64: 1, 16, 2, 256>}]} {
    %c0 = arith.constant 0 : index
    %c0_0 = arith.constant 0 : index
    %c0_1 = arith.constant 0 : index
    %0 = vector.load %arg2[%c0, %c0_0, %c0_1] : memref<1x256x128xf32, #tpu.memory_space<vmem>>, vector<1x256x128xf32>
    %1 = vector.shape_cast %0 : vector<1x256x128xf32> to vector<256x128xf32>
    %c0_2 = arith.constant 0 : index
    %c0_3 = arith.constant 0 : index
    %2 = vector.load %arg5[%c0_2, %c0_3] : memref<1x128xf32, #tpu.memory_space<vmem>>, vector<1x128xf32>
    %3 = tpu.iota {dimensions = array<i32: 0>} : vector<256x1xi32>
    %c15_i32 = arith.constant 15 : i32
    %4 = vector.broadcast %c15_i32 : i32 to vector<256x1xi32>
    %5 = arith.andi %3, %4 : vector<256x1xi32>
    %cst = arith.constant 0.000000e+00 : f32
    %6 = vector.broadcast %cst : f32 to vector<256x128xf32>
    %c17_i32 = arith.constant 17 : i32
    %7 = tpu.dynamic_rotate %1 by %c17_i32 dim 0 : vector<256x128xf32>, i32 -> vector<256x128xf32>
    %c16_i32 = arith.constant 16 : i32
    %8 = vector.broadcast %c16_i32 : i32 to vector<256x1xi32>
    %9 = arith.cmpi sge, %3, %8 : vector<256x1xi32>
    %c1_i32 = arith.constant 1 : i32
    %10 = vector.broadcast %c1_i32 : i32 to vector<256x1xi32>
    %11 = arith.cmpi sge, %5, %10 : vector<256x1xi32>
    %12 = arith.andi %9, %11 : vector<256x1xi1>
    %cst_4 = arith.constant 0.000000e+00 : f32
    %13 = vector.shape_cast %12 : vector<256x1xi1> to vector<256x1xi1>
    %14 = vector.broadcast %13 : vector<256x1xi1> to vector<256x128xi1>
    %15 = vector.broadcast %cst_4 : f32 to vector<256x128xf32>
    %16 = arith.select %14, %7, %15 : vector<256x128xi1>, vector<256x128xf32>
    %17 = arith.truncf %16 : vector<256x128xf32> to vector<256x128xbf16>
    %c0_5 = arith.constant 0 : index
    %c0_6 = arith.constant 0 : index
    %c0_7 = arith.constant 0 : index
    %18 = vector.load %arg3[%c0_5, %c0_6, %c0_7] : memref<9x128x128xbf16, #tpu.memory_space<vmem>>, vector<1x128x128xbf16>
    %19 = vector.shape_cast %18 : vector<1x128x128xbf16> to vector<128x128xbf16>
    %cst_8 = arith.constant dense<0.000000e+00> : vector<256x128xf32>
    %20 = tpu.matmul %17, %19, %cst_8 {dimension_numbers = #tpu.dot_dimension_numbers<[1], [0], [0], [1], [0, 0, 1, 1], [], []>} : vector<256x128xbf16>, vector<128x128xbf16>, vector<256x128xf32> -> vector<256x128xf32>
    %21 = arith.addf %6, %20 : vector<256x128xf32>
    %c16_i32_9 = arith.constant 16 : i32
    %22 = tpu.dynamic_rotate %1 by %c16_i32_9 dim 0 : vector<256x128xf32>, i32 -> vector<256x128xf32>
    %c16_i32_10 = arith.constant 16 : i32
    %23 = vector.broadcast %c16_i32_10 : i32 to vector<256x1xi32>
    %24 = arith.cmpi sge, %3, %23 : vector<256x1xi32>
    %cst_11 = arith.constant 0.000000e+00 : f32
    %25 = vector.shape_cast %24 : vector<256x1xi1> to vector<256x1xi1>
    %26 = vector.broadcast %25 : vector<256x1xi1> to vector<256x128xi1>
    %27 = vector.broadcast %cst_11 : f32 to vector<256x128xf32>
    %28 = arith.select %26, %22, %27 : vector<256x128xi1>, vector<256x128xf32>
    %29 = arith.truncf %28 : vector<256x128xf32> to vector<256x128xbf16>
    %c1 = arith.constant 1 : index
    %c0_12 = arith.constant 0 : index
    %c0_13 = arith.constant 0 : index
    %30 = vector.load %arg3[%c1, %c0_12, %c0_13] : memref<9x128x128xbf16, #tpu.memory_space<vmem>>, vector<1x128x128xbf16>
    %31 = vector.shape_cast %30 : vector<1x128x128xbf16> to vector<128x128xbf16>
    %cst_14 = arith.constant dense<0.000000e+00> : vector<256x128xf32>
    %32 = tpu.matmul %29, %31, %cst_14 {dimension_numbers = #tpu.dot_dimension_numbers<[1], [0], [0], [1], [0, 0, 1, 1], [], []>} : vector<256x128xbf16>, vector<128x128xbf16>, vector<256x128xf32> -> vector<256x128xf32>
    %33 = arith.addf %21, %32 : vector<256x128xf32>
    %c15_i32_15 = arith.constant 15 : i32
    %34 = tpu.dynamic_rotate %1 by %c15_i32_15 dim 0 : vector<256x128xf32>, i32 -> vector<256x128xf32>
    %c16_i32_16 = arith.constant 16 : i32
    %35 = vector.broadcast %c16_i32_16 : i32 to vector<256x1xi32>
    %36 = arith.cmpi sge, %3, %35 : vector<256x1xi32>
    %c15_i32_17 = arith.constant 15 : i32
    %37 = vector.broadcast %c15_i32_17 : i32 to vector<256x1xi32>
    %38 = arith.cmpi slt, %5, %37 : vector<256x1xi32>
    %39 = arith.andi %36, %38 : vector<256x1xi1>
    %cst_18 = arith.constant 0.000000e+00 : f32
    %40 = vector.shape_cast %39 : vector<256x1xi1> to vector<256x1xi1>
    %41 = vector.broadcast %40 : vector<256x1xi1> to vector<256x128xi1>
    %42 = vector.broadcast %cst_18 : f32 to vector<256x128xf32>
    %43 = arith.select %41, %34, %42 : vector<256x128xi1>, vector<256x128xf32>
    %44 = arith.truncf %43 : vector<256x128xf32> to vector<256x128xbf16>
    %c2 = arith.constant 2 : index
    %c0_19 = arith.constant 0 : index
    %c0_20 = arith.constant 0 : index
    %45 = vector.load %arg3[%c2, %c0_19, %c0_20] : memref<9x128x128xbf16, #tpu.memory_space<vmem>>, vector<1x128x128xbf16>
    %46 = vector.shape_cast %45 : vector<1x128x128xbf16> to vector<128x128xbf16>
    %cst_21 = arith.constant dense<0.000000e+00> : vector<256x128xf32>
    %47 = tpu.matmul %44, %46, %cst_21 {dimension_numbers = #tpu.dot_dimension_numbers<[1], [0], [0], [1], [0, 0, 1, 1], [], []>} : vector<256x128xbf16>, vector<128x128xbf16>, vector<256x128xf32> -> vector<256x128xf32>
    %48 = arith.addf %33, %47 : vector<256x128xf32>
    %c1_i32_22 = arith.constant 1 : i32
    %49 = tpu.dynamic_rotate %1 by %c1_i32_22 dim 0 : vector<256x128xf32>, i32 -> vector<256x128xf32>
    %c1_i32_23 = arith.constant 1 : i32
    %50 = vector.broadcast %c1_i32_23 : i32 to vector<256x1xi32>
    %51 = arith.cmpi sge, %5, %50 : vector<256x1xi32>
    %cst_24 = arith.constant 0.000000e+00 : f32
    %52 = vector.shape_cast %51 : vector<256x1xi1> to vector<256x1xi1>
    %53 = vector.broadcast %52 : vector<256x1xi1> to vector<256x128xi1>
    %54 = vector.broadcast %cst_24 : f32 to vector<256x128xf32>
    %55 = arith.select %53, %49, %54 : vector<256x128xi1>, vector<256x128xf32>
    %56 = arith.truncf %55 : vector<256x128xf32> to vector<256x128xbf16>
    %c3 = arith.constant 3 : index
    %c0_25 = arith.constant 0 : index
    %c0_26 = arith.constant 0 : index
    %57 = vector.load %arg3[%c3, %c0_25, %c0_26] : memref<9x128x128xbf16, #tpu.memory_space<vmem>>, vector<1x128x128xbf16>
    %58 = vector.shape_cast %57 : vector<1x128x128xbf16> to vector<128x128xbf16>
    %cst_27 = arith.constant dense<0.000000e+00> : vector<256x128xf32>
    %59 = tpu.matmul %56, %58, %cst_27 {dimension_numbers = #tpu.dot_dimension_numbers<[1], [0], [0], [1], [0, 0, 1, 1], [], []>} : vector<256x128xbf16>, vector<128x128xbf16>, vector<256x128xf32> -> vector<256x128xf32>
    %60 = arith.addf %48, %59 : vector<256x128xf32>
    %61 = arith.truncf %1 : vector<256x128xf32> to vector<256x128xbf16>
    %c4 = arith.constant 4 : index
    %c0_28 = arith.constant 0 : index
    %c0_29 = arith.constant 0 : index
    %62 = vector.load %arg3[%c4, %c0_28, %c0_29] : memref<9x128x128xbf16, #tpu.memory_space<vmem>>, vector<1x128x128xbf16>
    %63 = vector.shape_cast %62 : vector<1x128x128xbf16> to vector<128x128xbf16>
    %cst_30 = arith.constant dense<0.000000e+00> : vector<256x128xf32>
    %64 = tpu.matmul %61, %63, %cst_30 {dimension_numbers = #tpu.dot_dimension_numbers<[1], [0], [0], [1], [0, 0, 1, 1], [], []>} : vector<256x128xbf16>, vector<128x128xbf16>, vector<256x128xf32> -> vector<256x128xf32>
    %65 = arith.addf %60, %64 : vector<256x128xf32>
    %c255_i32 = arith.constant 255 : i32
    %66 = tpu.dynamic_rotate %1 by %c255_i32 dim 0 : vector<256x128xf32>, i32 -> vector<256x128xf32>
    %c15_i32_31 = arith.constant 15 : i32
    %67 = vector.broadcast %c15_i32_31 : i32 to vector<256x1xi32>
    %68 = arith.cmpi slt, %5, %67 : vector<256x1xi32>
    %cst_32 = arith.constant 0.000000e+00 : f32
    %69 = vector.shape_cast %68 : vector<256x1xi1> to vector<256x1xi1>
    %70 = vector.broadcast %69 : vector<256x1xi1> to vector<256x128xi1>
    %71 = vector.broadcast %cst_32 : f32 to vector<256x128xf32>
    %72 = arith.select %70, %66, %71 : vector<256x128xi1>, vector<256x128xf32>
    %73 = arith.truncf %72 : vector<256x128xf32> to vector<256x128xbf16>
    %c5 = arith.constant 5 : index
    %c0_33 = arith.constant 0 : index
    %c0_34 = arith.constant 0 : index
    %74 = vector.load %arg3[%c5, %c0_33, %c0_34] : memref<9x128x128xbf16, #tpu.memory_space<vmem>>, vector<1x128x128xbf16>
    %75 = vector.shape_cast %74 : vector<1x128x128xbf16> to vector<128x128xbf16>
    %cst_35 = arith.constant dense<0.000000e+00> : vector<256x128xf32>
    %76 = tpu.matmul %73, %75, %cst_35 {dimension_numbers = #tpu.dot_dimension_numbers<[1], [0], [0], [1], [0, 0, 1, 1], [], []>} : vector<256x128xbf16>, vector<128x128xbf16>, vector<256x128xf32> -> vector<256x128xf32>
    %77 = arith.addf %65, %76 : vector<256x128xf32>
    %c241_i32 = arith.constant 241 : i32
    %78 = tpu.dynamic_rotate %1 by %c241_i32 dim 0 : vector<256x128xf32>, i32 -> vector<256x128xf32>
    %c240_i32 = arith.constant 240 : i32
    %79 = vector.broadcast %c240_i32 : i32 to vector<256x1xi32>
    %80 = arith.cmpi slt, %3, %79 : vector<256x1xi32>
    %c1_i32_36 = arith.constant 1 : i32
    %81 = vector.broadcast %c1_i32_36 : i32 to vector<256x1xi32>
    %82 = arith.cmpi sge, %5, %81 : vector<256x1xi32>
    %83 = arith.andi %80, %82 : vector<256x1xi1>
    %cst_37 = arith.constant 0.000000e+00 : f32
    %84 = vector.shape_cast %83 : vector<256x1xi1> to vector<256x1xi1>
    %85 = vector.broadcast %84 : vector<256x1xi1> to vector<256x128xi1>
    %86 = vector.broadcast %cst_37 : f32 to vector<256x128xf32>
    %87 = arith.select %85, %78, %86 : vector<256x128xi1>, vector<256x128xf32>
    %88 = arith.truncf %87 : vector<256x128xf32> to vector<256x128xbf16>
    %c6 = arith.constant 6 : index
    %c0_38 = arith.constant 0 : index
    %c0_39 = arith.constant 0 : index
    %89 = vector.load %arg3[%c6, %c0_38, %c0_39] : memref<9x128x128xbf16, #tpu.memory_space<vmem>>, vector<1x128x128xbf16>
    %90 = vector.shape_cast %89 : vector<1x128x128xbf16> to vector<128x128xbf16>
    %cst_40 = arith.constant dense<0.000000e+00> : vector<256x128xf32>
    %91 = tpu.matmul %88, %90, %cst_40 {dimension_numbers = #tpu.dot_dimension_numbers<[1], [0], [0], [1], [0, 0, 1, 1], [], []>} : vector<256x128xbf16>, vector<128x128xbf16>, vector<256x128xf32> -> vector<256x128xf32>
    %92 = arith.addf %77, %91 : vector<256x128xf32>
    %c240_i32_41 = arith.constant 240 : i32
    %93 = tpu.dynamic_rotate %1 by %c240_i32_41 dim 0 : vector<256x128xf32>, i32 -> vector<256x128xf32>
    %c240_i32_42 = arith.constant 240 : i32
    %94 = vector.broadcast %c240_i32_42 : i32 to vector<256x1xi32>
    %95 = arith.cmpi slt, %3, %94 : vector<256x1xi32>
    %cst_43 = arith.constant 0.000000e+00 : f32
    %96 = vector.shape_cast %95 : vector<256x1xi1> to vector<256x1xi1>
    %97 = vector.broadcast %96 : vector<256x1xi1> to vector<256x128xi1>
    %98 = vector.broadcast %cst_43 : f32 to vector<256x128xf32>
    %99 = arith.select %97, %93, %98 : vector<256x128xi1>, vector<256x128xf32>
    %100 = arith.truncf %99 : vector<256x128xf32> to vector<256x128xbf16>
    %c7 = arith.constant 7 : index
    %c0_44 = arith.constant 0 : index
    %c0_45 = arith.constant 0 : index
    %101 = vector.load %arg3[%c7, %c0_44, %c0_45] : memref<9x128x128xbf16, #tpu.memory_space<vmem>>, vector<1x128x128xbf16>
    %102 = vector.shape_cast %101 : vector<1x128x128xbf16> to vector<128x128xbf16>
    %cst_46 = arith.constant dense<0.000000e+00> : vector<256x128xf32>
    %103 = tpu.matmul %100, %102, %cst_46 {dimension_numbers = #tpu.dot_dimension_numbers<[1], [0], [0], [1], [0, 0, 1, 1], [], []>} : vector<256x128xbf16>, vector<128x128xbf16>, vector<256x128xf32> -> vector<256x128xf32>
    %104 = arith.addf %92, %103 : vector<256x128xf32>
    %c239_i32 = arith.constant 239 : i32
    %105 = tpu.dynamic_rotate %1 by %c239_i32 dim 0 : vector<256x128xf32>, i32 -> vector<256x128xf32>
    %c240_i32_47 = arith.constant 240 : i32
    %106 = vector.broadcast %c240_i32_47 : i32 to vector<256x1xi32>
    %107 = arith.cmpi slt, %3, %106 : vector<256x1xi32>
    %c15_i32_48 = arith.constant 15 : i32
    %108 = vector.broadcast %c15_i32_48 : i32 to vector<256x1xi32>
    %109 = arith.cmpi slt, %5, %108 : vector<256x1xi32>
    %110 = arith.andi %107, %109 : vector<256x1xi1>
    %cst_49 = arith.constant 0.000000e+00 : f32
    %111 = vector.shape_cast %110 : vector<256x1xi1> to vector<256x1xi1>
    %112 = vector.broadcast %111 : vector<256x1xi1> to vector<256x128xi1>
    %113 = vector.broadcast %cst_49 : f32 to vector<256x128xf32>
    %114 = arith.select %112, %105, %113 : vector<256x128xi1>, vector<256x128xf32>
    %115 = arith.truncf %114 : vector<256x128xf32> to vector<256x128xbf16>
    %c8 = arith.constant 8 : index
    %c0_50 = arith.constant 0 : index
    %c0_51 = arith.constant 0 : index
    %116 = vector.load %arg3[%c8, %c0_50, %c0_51] : memref<9x128x128xbf16, #tpu.memory_space<vmem>>, vector<1x128x128xbf16>
    %117 = vector.shape_cast %116 : vector<1x128x128xbf16> to vector<128x128xbf16>
    %cst_52 = arith.constant dense<0.000000e+00> : vector<256x128xf32>
    %118 = tpu.matmul %115, %117, %cst_52 {dimension_numbers = #tpu.dot_dimension_numbers<[1], [0], [0], [1], [0, 0, 1, 1], [], []>} : vector<256x128xbf16>, vector<128x128xbf16>, vector<256x128xf32> -> vector<256x128xf32>
    %119 = arith.addf %104, %118 : vector<256x128xf32>
    %120 = vector.broadcast %2 : vector<1x128xf32> to vector<256x128xf32>
    %121 = arith.addf %119, %120 : vector<256x128xf32>
    %cst_53 = arith.constant 0.000000e+00 : f32
    %122 = vector.broadcast %cst_53 : f32 to vector<256x128xf32>
    %123 = arith.maximumf %121, %122 : vector<256x128xf32>
    %c0_54 = arith.constant 0 : index
    %c0_55 = arith.constant 0 : index
    %c0_56 = arith.constant 0 : index
    %124 = vector.load %arg1[%c0_54, %c0_55, %c0_56] : memref<1x256x128xf32, #tpu.memory_space<vmem>>, vector<1x256x128xf32>
    %125 = vector.shape_cast %124 : vector<1x256x128xf32> to vector<256x128xf32>
    %126 = arith.addf %125, %123 : vector<256x128xf32>
    %c0_57 = arith.constant 0 : index
    %c0_58 = arith.constant 0 : index
    %127 = vector.load %arg6[%c0_57, %c0_58] : memref<1x128xf32, #tpu.memory_space<vmem>>, vector<1x128xf32>
    %128 = tpu.iota {dimensions = array<i32: 0>} : vector<256x1xi32>
    %c15_i32_59 = arith.constant 15 : i32
    %129 = vector.broadcast %c15_i32_59 : i32 to vector<256x1xi32>
    %130 = arith.andi %128, %129 : vector<256x1xi32>
    %cst_60 = arith.constant 0.000000e+00 : f32
    %131 = vector.broadcast %cst_60 : f32 to vector<256x128xf32>
    %c17_i32_61 = arith.constant 17 : i32
    %132 = tpu.dynamic_rotate %126 by %c17_i32_61 dim 0 : vector<256x128xf32>, i32 -> vector<256x128xf32>
    %c16_i32_62 = arith.constant 16 : i32
    %133 = vector.broadcast %c16_i32_62 : i32 to vector<256x1xi32>
    %134 = arith.cmpi sge, %128, %133 : vector<256x1xi32>
    %c1_i32_63 = arith.constant 1 : i32
    %135 = vector.broadcast %c1_i32_63 : i32 to vector<256x1xi32>
    %136 = arith.cmpi sge, %130, %135 : vector<256x1xi32>
    %137 = arith.andi %134, %136 : vector<256x1xi1>
    %cst_64 = arith.constant 0.000000e+00 : f32
    %138 = vector.shape_cast %137 : vector<256x1xi1> to vector<256x1xi1>
    %139 = vector.broadcast %138 : vector<256x1xi1> to vector<256x128xi1>
    %140 = vector.broadcast %cst_64 : f32 to vector<256x128xf32>
    %141 = arith.select %139, %132, %140 : vector<256x128xi1>, vector<256x128xf32>
    %142 = arith.truncf %141 : vector<256x128xf32> to vector<256x128xbf16>
    %c0_65 = arith.constant 0 : index
    %c0_66 = arith.constant 0 : index
    %c0_67 = arith.constant 0 : index
    %143 = vector.load %arg4[%c0_65, %c0_66, %c0_67] : memref<9x128x128xbf16, #tpu.memory_space<vmem>>, vector<1x128x128xbf16>
    %144 = vector.shape_cast %143 : vector<1x128x128xbf16> to vector<128x128xbf16>
    %cst_68 = arith.constant dense<0.000000e+00> : vector<256x128xf32>
    %145 = tpu.matmul %142, %144, %cst_68 {dimension_numbers = #tpu.dot_dimension_numbers<[1], [0], [0], [1], [0, 0, 1, 1], [], []>} : vector<256x128xbf16>, vector<128x128xbf16>, vector<256x128xf32> -> vector<256x128xf32>
    %146 = arith.addf %131, %145 : vector<256x128xf32>
    %c16_i32_69 = arith.constant 16 : i32
    %147 = tpu.dynamic_rotate %126 by %c16_i32_69 dim 0 : vector<256x128xf32>, i32 -> vector<256x128xf32>
    %c16_i32_70 = arith.constant 16 : i32
    %148 = vector.broadcast %c16_i32_70 : i32 to vector<256x1xi32>
    %149 = arith.cmpi sge, %128, %148 : vector<256x1xi32>
    %cst_71 = arith.constant 0.000000e+00 : f32
    %150 = vector.shape_cast %149 : vector<256x1xi1> to vector<256x1xi1>
    %151 = vector.broadcast %150 : vector<256x1xi1> to vector<256x128xi1>
    %152 = vector.broadcast %cst_71 : f32 to vector<256x128xf32>
    %153 = arith.select %151, %147, %152 : vector<256x128xi1>, vector<256x128xf32>
    %154 = arith.truncf %153 : vector<256x128xf32> to vector<256x128xbf16>
    %c1_72 = arith.constant 1 : index
    %c0_73 = arith.constant 0 : index
    %c0_74 = arith.constant 0 : index
    %155 = vector.load %arg4[%c1_72, %c0_73, %c0_74] : memref<9x128x128xbf16, #tpu.memory_space<vmem>>, vector<1x128x128xbf16>
    %156 = vector.shape_cast %155 : vector<1x128x128xbf16> to vector<128x128xbf16>
    %cst_75 = arith.constant dense<0.000000e+00> : vector<256x128xf32>
    %157 = tpu.matmul %154, %156, %cst_75 {dimension_numbers = #tpu.dot_dimension_numbers<[1], [0], [0], [1], [0, 0, 1, 1], [], []>} : vector<256x128xbf16>, vector<128x128xbf16>, vector<256x128xf32> -> vector<256x128xf32>
    %158 = arith.addf %146, %157 : vector<256x128xf32>
    %c15_i32_76 = arith.constant 15 : i32
    %159 = tpu.dynamic_rotate %126 by %c15_i32_76 dim 0 : vector<256x128xf32>, i32 -> vector<256x128xf32>
    %c16_i32_77 = arith.constant 16 : i32
    %160 = vector.broadcast %c16_i32_77 : i32 to vector<256x1xi32>
    %161 = arith.cmpi sge, %128, %160 : vector<256x1xi32>
    %c15_i32_78 = arith.constant 15 : i32
    %162 = vector.broadcast %c15_i32_78 : i32 to vector<256x1xi32>
    %163 = arith.cmpi slt, %130, %162 : vector<256x1xi32>
    %164 = arith.andi %161, %163 : vector<256x1xi1>
    %cst_79 = arith.constant 0.000000e+00 : f32
    %165 = vector.shape_cast %164 : vector<256x1xi1> to vector<256x1xi1>
    %166 = vector.broadcast %165 : vector<256x1xi1> to vector<256x128xi1>
    %167 = vector.broadcast %cst_79 : f32 to vector<256x128xf32>
    %168 = arith.select %166, %159, %167 : vector<256x128xi1>, vector<256x128xf32>
    %169 = arith.truncf %168 : vector<256x128xf32> to vector<256x128xbf16>
    %c2_80 = arith.constant 2 : index
    %c0_81 = arith.constant 0 : index
    %c0_82 = arith.constant 0 : index
    %170 = vector.load %arg4[%c2_80, %c0_81, %c0_82] : memref<9x128x128xbf16, #tpu.memory_space<vmem>>, vector<1x128x128xbf16>
    %171 = vector.shape_cast %170 : vector<1x128x128xbf16> to vector<128x128xbf16>
    %cst_83 = arith.constant dense<0.000000e+00> : vector<256x128xf32>
    %172 = tpu.matmul %169, %171, %cst_83 {dimension_numbers = #tpu.dot_dimension_numbers<[1], [0], [0], [1], [0, 0, 1, 1], [], []>} : vector<256x128xbf16>, vector<128x128xbf16>, vector<256x128xf32> -> vector<256x128xf32>
    %173 = arith.addf %158, %172 : vector<256x128xf32>
    %c1_i32_84 = arith.constant 1 : i32
    %174 = tpu.dynamic_rotate %126 by %c1_i32_84 dim 0 : vector<256x128xf32>, i32 -> vector<256x128xf32>
    %c1_i32_85 = arith.constant 1 : i32
    %175 = vector.broadcast %c1_i32_85 : i32 to vector<256x1xi32>
    %176 = arith.cmpi sge, %130, %175 : vector<256x1xi32>
    %cst_86 = arith.constant 0.000000e+00 : f32
    %177 = vector.shape_cast %176 : vector<256x1xi1> to vector<256x1xi1>
    %178 = vector.broadcast %177 : vector<256x1xi1> to vector<256x128xi1>
    %179 = vector.broadcast %cst_86 : f32 to vector<256x128xf32>
    %180 = arith.select %178, %174, %179 : vector<256x128xi1>, vector<256x128xf32>
    %181 = arith.truncf %180 : vector<256x128xf32> to vector<256x128xbf16>
    %c3_87 = arith.constant 3 : index
    %c0_88 = arith.constant 0 : index
    %c0_89 = arith.constant 0 : index
    %182 = vector.load %arg4[%c3_87, %c0_88, %c0_89] : memref<9x128x128xbf16, #tpu.memory_space<vmem>>, vector<1x128x128xbf16>
    %183 = vector.shape_cast %182 : vector<1x128x128xbf16> to vector<128x128xbf16>
    %cst_90 = arith.constant dense<0.000000e+00> : vector<256x128xf32>
    %184 = tpu.matmul %181, %183, %cst_90 {dimension_numbers = #tpu.dot_dimension_numbers<[1], [0], [0], [1], [0, 0, 1, 1], [], []>} : vector<256x128xbf16>, vector<128x128xbf16>, vector<256x128xf32> -> vector<256x128xf32>
    %185 = arith.addf %173, %184 : vector<256x128xf32>
    %186 = arith.truncf %126 : vector<256x128xf32> to vector<256x128xbf16>
    %c4_91 = arith.constant 4 : index
    %c0_92 = arith.constant 0 : index
    %c0_93 = arith.constant 0 : index
    %187 = vector.load %arg4[%c4_91, %c0_92, %c0_93] : memref<9x128x128xbf16, #tpu.memory_space<vmem>>, vector<1x128x128xbf16>
    %188 = vector.shape_cast %187 : vector<1x128x128xbf16> to vector<128x128xbf16>
    %cst_94 = arith.constant dense<0.000000e+00> : vector<256x128xf32>
    %189 = tpu.matmul %186, %188, %cst_94 {dimension_numbers = #tpu.dot_dimension_numbers<[1], [0], [0], [1], [0, 0, 1, 1], [], []>} : vector<256x128xbf16>, vector<128x128xbf16>, vector<256x128xf32> -> vector<256x128xf32>
    %190 = arith.addf %185, %189 : vector<256x128xf32>
    %c255_i32_95 = arith.constant 255 : i32
    %191 = tpu.dynamic_rotate %126 by %c255_i32_95 dim 0 : vector<256x128xf32>, i32 -> vector<256x128xf32>
    %c15_i32_96 = arith.constant 15 : i32
    %192 = vector.broadcast %c15_i32_96 : i32 to vector<256x1xi32>
    %193 = arith.cmpi slt, %130, %192 : vector<256x1xi32>
    %cst_97 = arith.constant 0.000000e+00 : f32
    %194 = vector.shape_cast %193 : vector<256x1xi1> to vector<256x1xi1>
    %195 = vector.broadcast %194 : vector<256x1xi1> to vector<256x128xi1>
    %196 = vector.broadcast %cst_97 : f32 to vector<256x128xf32>
    %197 = arith.select %195, %191, %196 : vector<256x128xi1>, vector<256x128xf32>
    %198 = arith.truncf %197 : vector<256x128xf32> to vector<256x128xbf16>
    %c5_98 = arith.constant 5 : index
    %c0_99 = arith.constant 0 : index
    %c0_100 = arith.constant 0 : index
    %199 = vector.load %arg4[%c5_98, %c0_99, %c0_100] : memref<9x128x128xbf16, #tpu.memory_space<vmem>>, vector<1x128x128xbf16>
    %200 = vector.shape_cast %199 : vector<1x128x128xbf16> to vector<128x128xbf16>
    %cst_101 = arith.constant dense<0.000000e+00> : vector<256x128xf32>
    %201 = tpu.matmul %198, %200, %cst_101 {dimension_numbers = #tpu.dot_dimension_numbers<[1], [0], [0], [1], [0, 0, 1, 1], [], []>} : vector<256x128xbf16>, vector<128x128xbf16>, vector<256x128xf32> -> vector<256x128xf32>
    %202 = arith.addf %190, %201 : vector<256x128xf32>
    %c241_i32_102 = arith.constant 241 : i32
    %203 = tpu.dynamic_rotate %126 by %c241_i32_102 dim 0 : vector<256x128xf32>, i32 -> vector<256x128xf32>
    %c240_i32_103 = arith.constant 240 : i32
    %204 = vector.broadcast %c240_i32_103 : i32 to vector<256x1xi32>
    %205 = arith.cmpi slt, %128, %204 : vector<256x1xi32>
    %c1_i32_104 = arith.constant 1 : i32
    %206 = vector.broadcast %c1_i32_104 : i32 to vector<256x1xi32>
    %207 = arith.cmpi sge, %130, %206 : vector<256x1xi32>
    %208 = arith.andi %205, %207 : vector<256x1xi1>
    %cst_105 = arith.constant 0.000000e+00 : f32
    %209 = vector.shape_cast %208 : vector<256x1xi1> to vector<256x1xi1>
    %210 = vector.broadcast %209 : vector<256x1xi1> to vector<256x128xi1>
    %211 = vector.broadcast %cst_105 : f32 to vector<256x128xf32>
    %212 = arith.select %210, %203, %211 : vector<256x128xi1>, vector<256x128xf32>
    %213 = arith.truncf %212 : vector<256x128xf32> to vector<256x128xbf16>
    %c6_106 = arith.constant 6 : index
    %c0_107 = arith.constant 0 : index
    %c0_108 = arith.constant 0 : index
    %214 = vector.load %arg4[%c6_106, %c0_107, %c0_108] : memref<9x128x128xbf16, #tpu.memory_space<vmem>>, vector<1x128x128xbf16>
    %215 = vector.shape_cast %214 : vector<1x128x128xbf16> to vector<128x128xbf16>
    %cst_109 = arith.constant dense<0.000000e+00> : vector<256x128xf32>
    %216 = tpu.matmul %213, %215, %cst_109 {dimension_numbers = #tpu.dot_dimension_numbers<[1], [0], [0], [1], [0, 0, 1, 1], [], []>} : vector<256x128xbf16>, vector<128x128xbf16>, vector<256x128xf32> -> vector<256x128xf32>
    %217 = arith.addf %202, %216 : vector<256x128xf32>
    %c240_i32_110 = arith.constant 240 : i32
    %218 = tpu.dynamic_rotate %126 by %c240_i32_110 dim 0 : vector<256x128xf32>, i32 -> vector<256x128xf32>
    %c240_i32_111 = arith.constant 240 : i32
    %219 = vector.broadcast %c240_i32_111 : i32 to vector<256x1xi32>
    %220 = arith.cmpi slt, %128, %219 : vector<256x1xi32>
    %cst_112 = arith.constant 0.000000e+00 : f32
    %221 = vector.shape_cast %220 : vector<256x1xi1> to vector<256x1xi1>
    %222 = vector.broadcast %221 : vector<256x1xi1> to vector<256x128xi1>
    %223 = vector.broadcast %cst_112 : f32 to vector<256x128xf32>
    %224 = arith.select %222, %218, %223 : vector<256x128xi1>, vector<256x128xf32>
    %225 = arith.truncf %224 : vector<256x128xf32> to vector<256x128xbf16>
    %c7_113 = arith.constant 7 : index
    %c0_114 = arith.constant 0 : index
    %c0_115 = arith.constant 0 : index
    %226 = vector.load %arg4[%c7_113, %c0_114, %c0_115] : memref<9x128x128xbf16, #tpu.memory_space<vmem>>, vector<1x128x128xbf16>
    %227 = vector.shape_cast %226 : vector<1x128x128xbf16> to vector<128x128xbf16>
    %cst_116 = arith.constant dense<0.000000e+00> : vector<256x128xf32>
    %228 = tpu.matmul %225, %227, %cst_116 {dimension_numbers = #tpu.dot_dimension_numbers<[1], [0], [0], [1], [0, 0, 1, 1], [], []>} : vector<256x128xbf16>, vector<128x128xbf16>, vector<256x128xf32> -> vector<256x128xf32>
    %229 = arith.addf %217, %228 : vector<256x128xf32>
    %c239_i32_117 = arith.constant 239 : i32
    %230 = tpu.dynamic_rotate %126 by %c239_i32_117 dim 0 : vector<256x128xf32>, i32 -> vector<256x128xf32>
    %c240_i32_118 = arith.constant 240 : i32
    %231 = vector.broadcast %c240_i32_118 : i32 to vector<256x1xi32>
    %232 = arith.cmpi slt, %128, %231 : vector<256x1xi32>
    %c15_i32_119 = arith.constant 15 : i32
    %233 = vector.broadcast %c15_i32_119 : i32 to vector<256x1xi32>
    %234 = arith.cmpi slt, %130, %233 : vector<256x1xi32>
    %235 = arith.andi %232, %234 : vector<256x1xi1>
    %cst_120 = arith.constant 0.000000e+00 : f32
    %236 = vector.shape_cast %235 : vector<256x1xi1> to vector<256x1xi1>
    %237 = vector.broadcast %236 : vector<256x1xi1> to vector<256x128xi1>
    %238 = vector.broadcast %cst_120 : f32 to vector<256x128xf32>
    %239 = arith.select %237, %230, %238 : vector<256x128xi1>, vector<256x128xf32>
    %240 = arith.truncf %239 : vector<256x128xf32> to vector<256x128xbf16>
    %c8_121 = arith.constant 8 : index
    %c0_122 = arith.constant 0 : index
    %c0_123 = arith.constant 0 : index
    %241 = vector.load %arg4[%c8_121, %c0_122, %c0_123] : memref<9x128x128xbf16, #tpu.memory_space<vmem>>, vector<1x128x128xbf16>
    %242 = vector.shape_cast %241 : vector<1x128x128xbf16> to vector<128x128xbf16>
    %cst_124 = arith.constant dense<0.000000e+00> : vector<256x128xf32>
    %243 = tpu.matmul %240, %242, %cst_124 {dimension_numbers = #tpu.dot_dimension_numbers<[1], [0], [0], [1], [0, 0, 1, 1], [], []>} : vector<256x128xbf16>, vector<128x128xbf16>, vector<256x128xf32> -> vector<256x128xf32>
    %244 = arith.addf %229, %243 : vector<256x128xf32>
    %245 = vector.broadcast %127 : vector<1x128xf32> to vector<256x128xf32>
    %246 = arith.addf %244, %245 : vector<256x128xf32>
    %cst_125 = arith.constant 0.000000e+00 : f32
    %247 = vector.broadcast %cst_125 : f32 to vector<256x128xf32>
    %248 = arith.maximumf %246, %247 : vector<256x128xf32>
    %249 = tpu.iota {dimensions = array<i32: 0>} : vector<256x1xi32>
    %c15_i32_126 = arith.constant 15 : i32
    %250 = vector.broadcast %c15_i32_126 : i32 to vector<256x1xi32>
    %251 = arith.andi %249, %250 : vector<256x1xi32>
    %c16_i32_127 = arith.constant 16 : i32
    %252 = vector.broadcast %c16_i32_127 : i32 to vector<256x1xi32>
    %253 = arith.cmpi slt, %249, %252 : vector<256x1xi32>
    %c16_i32_128 = arith.constant 16 : i32
    %254 = tpu.dynamic_rotate %248 by %c16_i32_128 dim 0 : vector<256x128xf32>, i32 -> vector<256x128xf32>
    %255 = vector.shape_cast %253 : vector<256x1xi1> to vector<256x1xi1>
    %256 = vector.broadcast %255 : vector<256x1xi1> to vector<256x128xi1>
    %257 = arith.select %256, %248, %254 : vector<256x128xi1>, vector<256x128xf32>
    %c240_i32_129 = arith.constant 240 : i32
    %258 = vector.broadcast %c240_i32_129 : i32 to vector<256x1xi32>
    %259 = arith.cmpi sge, %249, %258 : vector<256x1xi32>
    %c240_i32_130 = arith.constant 240 : i32
    %260 = tpu.dynamic_rotate %248 by %c240_i32_130 dim 0 : vector<256x128xf32>, i32 -> vector<256x128xf32>
    %261 = vector.shape_cast %259 : vector<256x1xi1> to vector<256x1xi1>
    %262 = vector.broadcast %261 : vector<256x1xi1> to vector<256x128xi1>
    %263 = arith.select %262, %248, %260 : vector<256x128xi1>, vector<256x128xf32>
    %cst_131 = arith.constant 7.500000e-01 : f32
    %264 = vector.broadcast %cst_131 : f32 to vector<256x128xf32>
    %265 = arith.mulf %264, %248 : vector<256x128xf32>
    %cst_132 = arith.constant 2.500000e-01 : f32
    %266 = vector.broadcast %cst_132 : f32 to vector<256x128xf32>
    %267 = arith.mulf %266, %257 : vector<256x128xf32>
    %268 = arith.addf %265, %267 : vector<256x128xf32>
    %cst_133 = arith.constant 7.500000e-01 : f32
    %269 = vector.broadcast %cst_133 : f32 to vector<256x128xf32>
    %270 = arith.mulf %269, %248 : vector<256x128xf32>
    %cst_134 = arith.constant 2.500000e-01 : f32
    %271 = vector.broadcast %cst_134 : f32 to vector<256x128xf32>
    %272 = arith.mulf %271, %263 : vector<256x128xf32>
    %273 = arith.addf %270, %272 : vector<256x128xf32>
    %c0_i32 = arith.constant 0 : i32
    %274 = vector.broadcast %c0_i32 : i32 to vector<256x1xi32>
    %275 = arith.cmpi eq, %251, %274 : vector<256x1xi32>
    %c1_i32_135 = arith.constant 1 : i32
    %276 = tpu.dynamic_rotate %268 by %c1_i32_135 dim 0 : vector<256x128xf32>, i32 -> vector<256x128xf32>
    %277 = vector.shape_cast %275 : vector<256x1xi1> to vector<256x1xi1>
    %278 = vector.broadcast %277 : vector<256x1xi1> to vector<256x128xi1>
    %279 = arith.select %278, %268, %276 : vector<256x128xi1>, vector<256x128xf32>
    %c15_i32_136 = arith.constant 15 : i32
    %280 = vector.broadcast %c15_i32_136 : i32 to vector<256x1xi32>
    %281 = arith.cmpi eq, %251, %280 : vector<256x1xi32>
    %c255_i32_137 = arith.constant 255 : i32
    %282 = tpu.dynamic_rotate %268 by %c255_i32_137 dim 0 : vector<256x128xf32>, i32 -> vector<256x128xf32>
    %283 = vector.shape_cast %281 : vector<256x1xi1> to vector<256x1xi1>
    %284 = vector.broadcast %283 : vector<256x1xi1> to vector<256x128xi1>
    %285 = arith.select %284, %268, %282 : vector<256x128xi1>, vector<256x128xf32>
    %cst_138 = arith.constant 7.500000e-01 : f32
    %286 = vector.broadcast %cst_138 : f32 to vector<256x128xf32>
    %287 = arith.mulf %286, %268 : vector<256x128xf32>
    %cst_139 = arith.constant 2.500000e-01 : f32
    %288 = vector.broadcast %cst_139 : f32 to vector<256x128xf32>
    %289 = arith.mulf %288, %279 : vector<256x128xf32>
    %290 = arith.addf %287, %289 : vector<256x128xf32>
    %cst_140 = arith.constant 7.500000e-01 : f32
    %291 = vector.broadcast %cst_140 : f32 to vector<256x128xf32>
    %292 = arith.mulf %291, %268 : vector<256x128xf32>
    %cst_141 = arith.constant 2.500000e-01 : f32
    %293 = vector.broadcast %cst_141 : f32 to vector<256x128xf32>
    %294 = arith.mulf %293, %285 : vector<256x128xf32>
    %295 = arith.addf %292, %294 : vector<256x128xf32>
    %c0_i32_142 = arith.constant 0 : i32
    %296 = vector.broadcast %c0_i32_142 : i32 to vector<256x1xi32>
    %297 = arith.cmpi eq, %251, %296 : vector<256x1xi32>
    %c1_i32_143 = arith.constant 1 : i32
    %298 = tpu.dynamic_rotate %273 by %c1_i32_143 dim 0 : vector<256x128xf32>, i32 -> vector<256x128xf32>
    %299 = vector.shape_cast %297 : vector<256x1xi1> to vector<256x1xi1>
    %300 = vector.broadcast %299 : vector<256x1xi1> to vector<256x128xi1>
    %301 = arith.select %300, %273, %298 : vector<256x128xi1>, vector<256x128xf32>
    %c15_i32_144 = arith.constant 15 : i32
    %302 = vector.broadcast %c15_i32_144 : i32 to vector<256x1xi32>
    %303 = arith.cmpi eq, %251, %302 : vector<256x1xi32>
    %c255_i32_145 = arith.constant 255 : i32
    %304 = tpu.dynamic_rotate %273 by %c255_i32_145 dim 0 : vector<256x128xf32>, i32 -> vector<256x128xf32>
    %305 = vector.shape_cast %303 : vector<256x1xi1> to vector<256x1xi1>
    %306 = vector.broadcast %305 : vector<256x1xi1> to vector<256x128xi1>
    %307 = arith.select %306, %273, %304 : vector<256x128xi1>, vector<256x128xf32>
    %cst_146 = arith.constant 7.500000e-01 : f32
    %308 = vector.broadcast %cst_146 : f32 to vector<256x128xf32>
    %309 = arith.mulf %308, %273 : vector<256x128xf32>
    %cst_147 = arith.constant 2.500000e-01 : f32
    %310 = vector.broadcast %cst_147 : f32 to vector<256x128xf32>
    %311 = arith.mulf %310, %301 : vector<256x128xf32>
    %312 = arith.addf %309, %311 : vector<256x128xf32>
    %cst_148 = arith.constant 7.500000e-01 : f32
    %313 = vector.broadcast %cst_148 : f32 to vector<256x128xf32>
    %314 = arith.mulf %313, %273 : vector<256x128xf32>
    %cst_149 = arith.constant 2.500000e-01 : f32
    %315 = vector.broadcast %cst_149 : f32 to vector<256x128xf32>
    %316 = arith.mulf %315, %307 : vector<256x128xf32>
    %317 = arith.addf %314, %316 : vector<256x128xf32>
    %318 = vector.shape_cast %290 : vector<256x128xf32> to vector<16x16x128xf32>
    %319 = vector.shape_cast %295 : vector<256x128xf32> to vector<16x16x128xf32>
    %320 = vector.extract_strided_slice %318 {offsets = [0, 0, 0], sizes = [16, 1, 8], strides = [1, 1, 1]} : vector<16x16x128xf32> to vector<16x1x8xf32>
    %321 = vector.shape_cast %320 : vector<16x1x8xf32> to vector<16x8xf32>
    %322 = vector.extract_strided_slice %319 {offsets = [0, 0, 0], sizes = [16, 1, 8], strides = [1, 1, 1]} : vector<16x16x128xf32> to vector<16x1x8xf32>
    %323 = vector.shape_cast %322 : vector<16x1x8xf32> to vector<16x8xf32>
    %324 = vector.extract_strided_slice %318 {offsets = [0, 1, 0], sizes = [16, 1, 8], strides = [1, 1, 1]} : vector<16x16x128xf32> to vector<16x1x8xf32>
    %325 = vector.shape_cast %324 : vector<16x1x8xf32> to vector<16x8xf32>
    %326 = vector.extract_strided_slice %319 {offsets = [0, 1, 0], sizes = [16, 1, 8], strides = [1, 1, 1]} : vector<16x16x128xf32> to vector<16x1x8xf32>
    %327 = vector.shape_cast %326 : vector<16x1x8xf32> to vector<16x8xf32>
    %328 = vector.extract_strided_slice %318 {offsets = [0, 2, 0], sizes = [16, 1, 8], strides = [1, 1, 1]} : vector<16x16x128xf32> to vector<16x1x8xf32>
    %329 = vector.shape_cast %328 : vector<16x1x8xf32> to vector<16x8xf32>
    %330 = vector.extract_strided_slice %319 {offsets = [0, 2, 0], sizes = [16, 1, 8], strides = [1, 1, 1]} : vector<16x16x128xf32> to vector<16x1x8xf32>
    %331 = vector.shape_cast %330 : vector<16x1x8xf32> to vector<16x8xf32>
    %332 = vector.extract_strided_slice %318 {offsets = [0, 3, 0], sizes = [16, 1, 8], strides = [1, 1, 1]} : vector<16x16x128xf32> to vector<16x1x8xf32>
    %333 = vector.shape_cast %332 : vector<16x1x8xf32> to vector<16x8xf32>
    %334 = vector.extract_strided_slice %319 {offsets = [0, 3, 0], sizes = [16, 1, 8], strides = [1, 1, 1]} : vector<16x16x128xf32> to vector<16x1x8xf32>
    %335 = vector.shape_cast %334 : vector<16x1x8xf32> to vector<16x8xf32>
    %336 = vector.extract_strided_slice %318 {offsets = [0, 4, 0], sizes = [16, 1, 8], strides = [1, 1, 1]} : vector<16x16x128xf32> to vector<16x1x8xf32>
    %337 = vector.shape_cast %336 : vector<16x1x8xf32> to vector<16x8xf32>
    %338 = vector.extract_strided_slice %319 {offsets = [0, 4, 0], sizes = [16, 1, 8], strides = [1, 1, 1]} : vector<16x16x128xf32> to vector<16x1x8xf32>
    %339 = vector.shape_cast %338 : vector<16x1x8xf32> to vector<16x8xf32>
    %340 = vector.extract_strided_slice %318 {offsets = [0, 5, 0], sizes = [16, 1, 8], strides = [1, 1, 1]} : vector<16x16x128xf32> to vector<16x1x8xf32>
    %341 = vector.shape_cast %340 : vector<16x1x8xf32> to vector<16x8xf32>
    %342 = vector.extract_strided_slice %319 {offsets = [0, 5, 0], sizes = [16, 1, 8], strides = [1, 1, 1]} : vector<16x16x128xf32> to vector<16x1x8xf32>
    %343 = vector.shape_cast %342 : vector<16x1x8xf32> to vector<16x8xf32>
    %344 = vector.extract_strided_slice %318 {offsets = [0, 6, 0], sizes = [16, 1, 8], strides = [1, 1, 1]} : vector<16x16x128xf32> to vector<16x1x8xf32>
    %345 = vector.shape_cast %344 : vector<16x1x8xf32> to vector<16x8xf32>
    %346 = vector.extract_strided_slice %319 {offsets = [0, 6, 0], sizes = [16, 1, 8], strides = [1, 1, 1]} : vector<16x16x128xf32> to vector<16x1x8xf32>
    %347 = vector.shape_cast %346 : vector<16x1x8xf32> to vector<16x8xf32>
    %348 = vector.extract_strided_slice %318 {offsets = [0, 7, 0], sizes = [16, 1, 8], strides = [1, 1, 1]} : vector<16x16x128xf32> to vector<16x1x8xf32>
    %349 = vector.shape_cast %348 : vector<16x1x8xf32> to vector<16x8xf32>
    %350 = vector.extract_strided_slice %319 {offsets = [0, 7, 0], sizes = [16, 1, 8], strides = [1, 1, 1]} : vector<16x16x128xf32> to vector<16x1x8xf32>
    %351 = vector.shape_cast %350 : vector<16x1x8xf32> to vector<16x8xf32>
    %352 = vector.extract_strided_slice %318 {offsets = [0, 8, 0], sizes = [16, 1, 8], strides = [1, 1, 1]} : vector<16x16x128xf32> to vector<16x1x8xf32>
    %353 = vector.shape_cast %352 : vector<16x1x8xf32> to vector<16x8xf32>
    %354 = vector.extract_strided_slice %319 {offsets = [0, 8, 0], sizes = [16, 1, 8], strides = [1, 1, 1]} : vector<16x16x128xf32> to vector<16x1x8xf32>
    %355 = vector.shape_cast %354 : vector<16x1x8xf32> to vector<16x8xf32>
    %356 = vector.extract_strided_slice %318 {offsets = [0, 9, 0], sizes = [16, 1, 8], strides = [1, 1, 1]} : vector<16x16x128xf32> to vector<16x1x8xf32>
    %357 = vector.shape_cast %356 : vector<16x1x8xf32> to vector<16x8xf32>
    %358 = vector.extract_strided_slice %319 {offsets = [0, 9, 0], sizes = [16, 1, 8], strides = [1, 1, 1]} : vector<16x16x128xf32> to vector<16x1x8xf32>
    %359 = vector.shape_cast %358 : vector<16x1x8xf32> to vector<16x8xf32>
    %360 = vector.extract_strided_slice %318 {offsets = [0, 10, 0], sizes = [16, 1, 8], strides = [1, 1, 1]} : vector<16x16x128xf32> to vector<16x1x8xf32>
    %361 = vector.shape_cast %360 : vector<16x1x8xf32> to vector<16x8xf32>
    %362 = vector.extract_strided_slice %319 {offsets = [0, 10, 0], sizes = [16, 1, 8], strides = [1, 1, 1]} : vector<16x16x128xf32> to vector<16x1x8xf32>
    %363 = vector.shape_cast %362 : vector<16x1x8xf32> to vector<16x8xf32>
    %364 = vector.extract_strided_slice %318 {offsets = [0, 11, 0], sizes = [16, 1, 8], strides = [1, 1, 1]} : vector<16x16x128xf32> to vector<16x1x8xf32>
    %365 = vector.shape_cast %364 : vector<16x1x8xf32> to vector<16x8xf32>
    %366 = vector.extract_strided_slice %319 {offsets = [0, 11, 0], sizes = [16, 1, 8], strides = [1, 1, 1]} : vector<16x16x128xf32> to vector<16x1x8xf32>
    %367 = vector.shape_cast %366 : vector<16x1x8xf32> to vector<16x8xf32>
    %368 = vector.extract_strided_slice %318 {offsets = [0, 12, 0], sizes = [16, 1, 8], strides = [1, 1, 1]} : vector<16x16x128xf32> to vector<16x1x8xf32>
    %369 = vector.shape_cast %368 : vector<16x1x8xf32> to vector<16x8xf32>
    %370 = vector.extract_strided_slice %319 {offsets = [0, 12, 0], sizes = [16, 1, 8], strides = [1, 1, 1]} : vector<16x16x128xf32> to vector<16x1x8xf32>
    %371 = vector.shape_cast %370 : vector<16x1x8xf32> to vector<16x8xf32>
    %372 = vector.extract_strided_slice %318 {offsets = [0, 13, 0], sizes = [16, 1, 8], strides = [1, 1, 1]} : vector<16x16x128xf32> to vector<16x1x8xf32>
    %373 = vector.shape_cast %372 : vector<16x1x8xf32> to vector<16x8xf32>
    %374 = vector.extract_strided_slice %319 {offsets = [0, 13, 0], sizes = [16, 1, 8], strides = [1, 1, 1]} : vector<16x16x128xf32> to vector<16x1x8xf32>
    %375 = vector.shape_cast %374 : vector<16x1x8xf32> to vector<16x8xf32>
    %376 = vector.extract_strided_slice %318 {offsets = [0, 14, 0], sizes = [16, 1, 8], strides = [1, 1, 1]} : vector<16x16x128xf32> to vector<16x1x8xf32>
    %377 = vector.shape_cast %376 : vector<16x1x8xf32> to vector<16x8xf32>
    %378 = vector.extract_strided_slice %319 {offsets = [0, 14, 0], sizes = [16, 1, 8], strides = [1, 1, 1]} : vector<16x16x128xf32> to vector<16x1x8xf32>
    %379 = vector.shape_cast %378 : vector<16x1x8xf32> to vector<16x8xf32>
    %380 = vector.extract_strided_slice %318 {offsets = [0, 15, 0], sizes = [16, 1, 8], strides = [1, 1, 1]} : vector<16x16x128xf32> to vector<16x1x8xf32>
    %381 = vector.shape_cast %380 : vector<16x1x8xf32> to vector<16x8xf32>
    %382 = vector.extract_strided_slice %319 {offsets = [0, 15, 0], sizes = [16, 1, 8], strides = [1, 1, 1]} : vector<16x16x128xf32> to vector<16x1x8xf32>
    %383 = vector.shape_cast %382 : vector<16x1x8xf32> to vector<16x8xf32>
    %384 = tpu.concatenate %321, %323, %325, %327, %329, %331, %333, %335, %337, %339, %341, %343, %345, %347, %349, %351 in 1 : vector<16x8xf32>, vector<16x8xf32>, vector<16x8xf32>, vector<16x8xf32>, vector<16x8xf32>, vector<16x8xf32>, vector<16x8xf32>, vector<16x8xf32>, vector<16x8xf32>, vector<16x8xf32>, vector<16x8xf32>, vector<16x8xf32>, vector<16x8xf32>, vector<16x8xf32>, vector<16x8xf32>, vector<16x8xf32> -> vector<16x128xf32>
    %385 = tpu.concatenate %353, %355, %357, %359, %361, %363, %365, %367, %369, %371, %373, %375, %377, %379, %381, %383 in 1 : vector<16x8xf32>, vector<16x8xf32>, vector<16x8xf32>, vector<16x8xf32>, vector<16x8xf32>, vector<16x8xf32>, vector<16x8xf32>, vector<16x8xf32>, vector<16x8xf32>, vector<16x8xf32>, vector<16x8xf32>, vector<16x8xf32>, vector<16x8xf32>, vector<16x8xf32>, vector<16x8xf32>, vector<16x8xf32> -> vector<16x128xf32>
    %386 = tpu.concatenate %384, %385 in 1 : vector<16x128xf32>, vector<16x128xf32> -> vector<16x256xf32>
    %387 = vector.shape_cast %312 : vector<256x128xf32> to vector<16x16x128xf32>
    %388 = vector.shape_cast %317 : vector<256x128xf32> to vector<16x16x128xf32>
    %389 = vector.extract_strided_slice %387 {offsets = [0, 0, 0], sizes = [16, 1, 8], strides = [1, 1, 1]} : vector<16x16x128xf32> to vector<16x1x8xf32>
    %390 = vector.shape_cast %389 : vector<16x1x8xf32> to vector<16x8xf32>
    %391 = vector.extract_strided_slice %388 {offsets = [0, 0, 0], sizes = [16, 1, 8], strides = [1, 1, 1]} : vector<16x16x128xf32> to vector<16x1x8xf32>
    %392 = vector.shape_cast %391 : vector<16x1x8xf32> to vector<16x8xf32>
    %393 = vector.extract_strided_slice %387 {offsets = [0, 1, 0], sizes = [16, 1, 8], strides = [1, 1, 1]} : vector<16x16x128xf32> to vector<16x1x8xf32>
    %394 = vector.shape_cast %393 : vector<16x1x8xf32> to vector<16x8xf32>
    %395 = vector.extract_strided_slice %388 {offsets = [0, 1, 0], sizes = [16, 1, 8], strides = [1, 1, 1]} : vector<16x16x128xf32> to vector<16x1x8xf32>
    %396 = vector.shape_cast %395 : vector<16x1x8xf32> to vector<16x8xf32>
    %397 = vector.extract_strided_slice %387 {offsets = [0, 2, 0], sizes = [16, 1, 8], strides = [1, 1, 1]} : vector<16x16x128xf32> to vector<16x1x8xf32>
    %398 = vector.shape_cast %397 : vector<16x1x8xf32> to vector<16x8xf32>
    %399 = vector.extract_strided_slice %388 {offsets = [0, 2, 0], sizes = [16, 1, 8], strides = [1, 1, 1]} : vector<16x16x128xf32> to vector<16x1x8xf32>
    %400 = vector.shape_cast %399 : vector<16x1x8xf32> to vector<16x8xf32>
    %401 = vector.extract_strided_slice %387 {offsets = [0, 3, 0], sizes = [16, 1, 8], strides = [1, 1, 1]} : vector<16x16x128xf32> to vector<16x1x8xf32>
    %402 = vector.shape_cast %401 : vector<16x1x8xf32> to vector<16x8xf32>
    %403 = vector.extract_strided_slice %388 {offsets = [0, 3, 0], sizes = [16, 1, 8], strides = [1, 1, 1]} : vector<16x16x128xf32> to vector<16x1x8xf32>
    %404 = vector.shape_cast %403 : vector<16x1x8xf32> to vector<16x8xf32>
    %405 = vector.extract_strided_slice %387 {offsets = [0, 4, 0], sizes = [16, 1, 8], strides = [1, 1, 1]} : vector<16x16x128xf32> to vector<16x1x8xf32>
    %406 = vector.shape_cast %405 : vector<16x1x8xf32> to vector<16x8xf32>
    %407 = vector.extract_strided_slice %388 {offsets = [0, 4, 0], sizes = [16, 1, 8], strides = [1, 1, 1]} : vector<16x16x128xf32> to vector<16x1x8xf32>
    %408 = vector.shape_cast %407 : vector<16x1x8xf32> to vector<16x8xf32>
    %409 = vector.extract_strided_slice %387 {offsets = [0, 5, 0], sizes = [16, 1, 8], strides = [1, 1, 1]} : vector<16x16x128xf32> to vector<16x1x8xf32>
    %410 = vector.shape_cast %409 : vector<16x1x8xf32> to vector<16x8xf32>
    %411 = vector.extract_strided_slice %388 {offsets = [0, 5, 0], sizes = [16, 1, 8], strides = [1, 1, 1]} : vector<16x16x128xf32> to vector<16x1x8xf32>
    %412 = vector.shape_cast %411 : vector<16x1x8xf32> to vector<16x8xf32>
    %413 = vector.extract_strided_slice %387 {offsets = [0, 6, 0], sizes = [16, 1, 8], strides = [1, 1, 1]} : vector<16x16x128xf32> to vector<16x1x8xf32>
    %414 = vector.shape_cast %413 : vector<16x1x8xf32> to vector<16x8xf32>
    %415 = vector.extract_strided_slice %388 {offsets = [0, 6, 0], sizes = [16, 1, 8], strides = [1, 1, 1]} : vector<16x16x128xf32> to vector<16x1x8xf32>
    %416 = vector.shape_cast %415 : vector<16x1x8xf32> to vector<16x8xf32>
    %417 = vector.extract_strided_slice %387 {offsets = [0, 7, 0], sizes = [16, 1, 8], strides = [1, 1, 1]} : vector<16x16x128xf32> to vector<16x1x8xf32>
    %418 = vector.shape_cast %417 : vector<16x1x8xf32> to vector<16x8xf32>
    %419 = vector.extract_strided_slice %388 {offsets = [0, 7, 0], sizes = [16, 1, 8], strides = [1, 1, 1]} : vector<16x16x128xf32> to vector<16x1x8xf32>
    %420 = vector.shape_cast %419 : vector<16x1x8xf32> to vector<16x8xf32>
    %421 = vector.extract_strided_slice %387 {offsets = [0, 8, 0], sizes = [16, 1, 8], strides = [1, 1, 1]} : vector<16x16x128xf32> to vector<16x1x8xf32>
    %422 = vector.shape_cast %421 : vector<16x1x8xf32> to vector<16x8xf32>
    %423 = vector.extract_strided_slice %388 {offsets = [0, 8, 0], sizes = [16, 1, 8], strides = [1, 1, 1]} : vector<16x16x128xf32> to vector<16x1x8xf32>
    %424 = vector.shape_cast %423 : vector<16x1x8xf32> to vector<16x8xf32>
    %425 = vector.extract_strided_slice %387 {offsets = [0, 9, 0], sizes = [16, 1, 8], strides = [1, 1, 1]} : vector<16x16x128xf32> to vector<16x1x8xf32>
    %426 = vector.shape_cast %425 : vector<16x1x8xf32> to vector<16x8xf32>
    %427 = vector.extract_strided_slice %388 {offsets = [0, 9, 0], sizes = [16, 1, 8], strides = [1, 1, 1]} : vector<16x16x128xf32> to vector<16x1x8xf32>
    %428 = vector.shape_cast %427 : vector<16x1x8xf32> to vector<16x8xf32>
    %429 = vector.extract_strided_slice %387 {offsets = [0, 10, 0], sizes = [16, 1, 8], strides = [1, 1, 1]} : vector<16x16x128xf32> to vector<16x1x8xf32>
    %430 = vector.shape_cast %429 : vector<16x1x8xf32> to vector<16x8xf32>
    %431 = vector.extract_strided_slice %388 {offsets = [0, 10, 0], sizes = [16, 1, 8], strides = [1, 1, 1]} : vector<16x16x128xf32> to vector<16x1x8xf32>
    %432 = vector.shape_cast %431 : vector<16x1x8xf32> to vector<16x8xf32>
    %433 = vector.extract_strided_slice %387 {offsets = [0, 11, 0], sizes = [16, 1, 8], strides = [1, 1, 1]} : vector<16x16x128xf32> to vector<16x1x8xf32>
    %434 = vector.shape_cast %433 : vector<16x1x8xf32> to vector<16x8xf32>
    %435 = vector.extract_strided_slice %388 {offsets = [0, 11, 0], sizes = [16, 1, 8], strides = [1, 1, 1]} : vector<16x16x128xf32> to vector<16x1x8xf32>
    %436 = vector.shape_cast %435 : vector<16x1x8xf32> to vector<16x8xf32>
    %437 = vector.extract_strided_slice %387 {offsets = [0, 12, 0], sizes = [16, 1, 8], strides = [1, 1, 1]} : vector<16x16x128xf32> to vector<16x1x8xf32>
    %438 = vector.shape_cast %437 : vector<16x1x8xf32> to vector<16x8xf32>
    %439 = vector.extract_strided_slice %388 {offsets = [0, 12, 0], sizes = [16, 1, 8], strides = [1, 1, 1]} : vector<16x16x128xf32> to vector<16x1x8xf32>
    %440 = vector.shape_cast %439 : vector<16x1x8xf32> to vector<16x8xf32>
    %441 = vector.extract_strided_slice %387 {offsets = [0, 13, 0], sizes = [16, 1, 8], strides = [1, 1, 1]} : vector<16x16x128xf32> to vector<16x1x8xf32>
    %442 = vector.shape_cast %441 : vector<16x1x8xf32> to vector<16x8xf32>
    %443 = vector.extract_strided_slice %388 {offsets = [0, 13, 0], sizes = [16, 1, 8], strides = [1, 1, 1]} : vector<16x16x128xf32> to vector<16x1x8xf32>
    %444 = vector.shape_cast %443 : vector<16x1x8xf32> to vector<16x8xf32>
    %445 = vector.extract_strided_slice %387 {offsets = [0, 14, 0], sizes = [16, 1, 8], strides = [1, 1, 1]} : vector<16x16x128xf32> to vector<16x1x8xf32>
    %446 = vector.shape_cast %445 : vector<16x1x8xf32> to vector<16x8xf32>
    %447 = vector.extract_strided_slice %388 {offsets = [0, 14, 0], sizes = [16, 1, 8], strides = [1, 1, 1]} : vector<16x16x128xf32> to vector<16x1x8xf32>
    %448 = vector.shape_cast %447 : vector<16x1x8xf32> to vector<16x8xf32>
    %449 = vector.extract_strided_slice %387 {offsets = [0, 15, 0], sizes = [16, 1, 8], strides = [1, 1, 1]} : vector<16x16x128xf32> to vector<16x1x8xf32>
    %450 = vector.shape_cast %449 : vector<16x1x8xf32> to vector<16x8xf32>
    %451 = vector.extract_strided_slice %388 {offsets = [0, 15, 0], sizes = [16, 1, 8], strides = [1, 1, 1]} : vector<16x16x128xf32> to vector<16x1x8xf32>
    %452 = vector.shape_cast %451 : vector<16x1x8xf32> to vector<16x8xf32>
    %453 = tpu.concatenate %390, %392, %394, %396, %398, %400, %402, %404, %406, %408, %410, %412, %414, %416, %418, %420 in 1 : vector<16x8xf32>, vector<16x8xf32>, vector<16x8xf32>, vector<16x8xf32>, vector<16x8xf32>, vector<16x8xf32>, vector<16x8xf32>, vector<16x8xf32>, vector<16x8xf32>, vector<16x8xf32>, vector<16x8xf32>, vector<16x8xf32>, vector<16x8xf32>, vector<16x8xf32>, vector<16x8xf32>, vector<16x8xf32> -> vector<16x128xf32>
    %454 = tpu.concatenate %422, %424, %426, %428, %430, %432, %434, %436, %438, %440, %442, %444, %446, %448, %450, %452 in 1 : vector<16x8xf32>, vector<16x8xf32>, vector<16x8xf32>, vector<16x8xf32>, vector<16x8xf32>, vector<16x8xf32>, vector<16x8xf32>, vector<16x8xf32>, vector<16x8xf32>, vector<16x8xf32>, vector<16x8xf32>, vector<16x8xf32>, vector<16x8xf32>, vector<16x8xf32>, vector<16x8xf32>, vector<16x8xf32> -> vector<16x128xf32>
    %455 = tpu.concatenate %453, %454 in 1 : vector<16x128xf32>, vector<16x128xf32> -> vector<16x256xf32>
    %456 = arith.truncf %386 : vector<16x256xf32> to vector<16x256xbf16>
    %c0_150 = arith.constant 0 : index
    %c0_151 = arith.constant 0 : index
    %c0_152 = arith.constant 0 : index
    %c0_153 = arith.constant 0 : index
    %457 = vector.load %arg7[%c0_150, %c0_151, %c0_152, %c0_153] : memref<1x16x2x256xbf16, #tpu.memory_space<vmem>>, vector<1x16x1x256xbf16>
    %458 = vector.shape_cast %457 : vector<1x16x1x256xbf16> to vector<16x256xbf16>
    %459 = vector.shape_cast %456 : vector<16x256xbf16> to vector<1x16x1x256xbf16>
    tpu.vector_store %arg7[%c0_150, %c0_151, %c0_152, %c0_153], %459 {strides = array<i32>} : memref<1x16x2x256xbf16, #tpu.memory_space<vmem>>, vector<1x16x1x256xbf16>,
    %460 = arith.truncf %455 : vector<16x256xf32> to vector<16x256xbf16>
    %c0_154 = arith.constant 0 : index
    %c0_155 = arith.constant 0 : index
    %c1_156 = arith.constant 1 : index
    %c0_157 = arith.constant 0 : index
    %461 = vector.load %arg7[%c0_154, %c0_155, %c1_156, %c0_157] : memref<1x16x2x256xbf16, #tpu.memory_space<vmem>>, vector<1x16x1x256xbf16>
    %462 = vector.shape_cast %461 : vector<1x16x1x256xbf16> to vector<16x256xbf16>
    %463 = vector.shape_cast %460 : vector<16x256xbf16> to vector<1x16x1x256xbf16>
    tpu.vector_store %arg7[%c0_154, %c0_155, %c1_156, %c0_157], %463 {strides = array<i32>} : memref<1x16x2x256xbf16, #tpu.memory_space<vmem>>, vector<1x16x1x256xbf16>,
    return
  }
  func.func @transform_0(%arg0: i32) -> (i32, i32, i32) {
    %c0_i32 = arith.constant 0 : i32
    %c0_i32_0 = arith.constant 0 : i32
    %c0_i32_1 = arith.constant 0 : i32
    return %arg0, %c0_i32, %c0_i32_0 : i32, i32, i32
  }
  func.func @transform_1(%arg0: i32) -> (i32, i32, i32) {
    %c0_i32 = arith.constant 0 : i32
    %c0_i32_0 = arith.constant 0 : i32
    %c0_i32_1 = arith.constant 0 : i32
    return %arg0, %c0_i32, %c0_i32_0 : i32, i32, i32
  }
  func.func @transform_2(%arg0: i32) -> (i32, i32, i32) {
    %c0_i32 = arith.constant 0 : i32
    %c0_i32_0 = arith.constant 0 : i32
    %c0_i32_1 = arith.constant 0 : i32
    %c0_i32_2 = arith.constant 0 : i32
    return %c0_i32, %c0_i32_0, %c0_i32_1 : i32, i32, i32
  }
  func.func @transform_3(%arg0: i32) -> (i32, i32, i32) {
    %c0_i32 = arith.constant 0 : i32
    %c0_i32_0 = arith.constant 0 : i32
    %c0_i32_1 = arith.constant 0 : i32
    %c0_i32_2 = arith.constant 0 : i32
    return %c0_i32, %c0_i32_0, %c0_i32_1 : i32, i32, i32
  }
  func.func @transform_4(%arg0: i32) -> (i32, i32) {
    %c0_i32 = arith.constant 0 : i32
    %c0_i32_0 = arith.constant 0 : i32
    %c0_i32_1 = arith.constant 0 : i32
    return %c0_i32, %c0_i32_0 : i32, i32
  }
  func.func @transform_5(%arg0: i32) -> (i32, i32) {
    %c0_i32 = arith.constant 0 : i32
    %c0_i32_0 = arith.constant 0 : i32
    %c0_i32_1 = arith.constant 0 : i32
    return %c0_i32, %c0_i32_0 : i32, i32
  }
  func.func @transform_6(%arg0: i32) -> (i32, i32, i32, i32) {
    %c0_i32 = arith.constant 0 : i32
    %c0_i32_0 = arith.constant 0 : i32
    %c0_i32_1 = arith.constant 0 : i32
    %c0_i32_2 = arith.constant 0 : i32
    return %arg0, %c0_i32, %c0_i32_0, %c0_i32_1 : i32, i32, i32, i32
  }
}

</mosaic_0001>

<llo_original>
// kernel: tpu_custom_call.1
$region0: #{tpu_custom_call.1}
  #allocation0 [shape = 'u32[]', space=smem, size = 0x4, offset = 0x4, fixed_abs, tag = 'smem constant byte address 0x4 - core index']
  #allocation1 [shape = 'u32[72,128]{1,0:T(1,128)}', space=vmem, size = 0x9000, scoped, tag = 'internal scratch']
  %s0 = inlined_call_operand.hbm [shape: f32[2,256,128], index: 0, kind: input, shape index: {}]
  %s1 = inlined_call_operand.hbm [shape: f32[2,256,128], index: 1, kind: input, shape index: {}]
  %s2 = inlined_call_operand.hbm [shape: bf16[9,128,128], index: 2, kind: input, shape index: {}]
  %s3 = inlined_call_operand.hbm [shape: bf16[9,128,128], index: 3, kind: input, shape index: {}]
  %s4 = inlined_call_operand.vmem [shape: f32[1,128], index: 4, kind: input, shape index: {}]
  %s5 = inlined_call_operand.vmem [shape: f32[1,128], index: 5, kind: input, shape index: {}]
  %s6 = inlined_call_operand.hbm [shape: bf16[2,16,2,256], index: 6, kind: output, shape index: {}]
  %s7 = sld [smem:[#allocation0]]
  $region73: #{tpu_custom_call.1} parent=0
    _
  %s9 = ssub.s32 1, %s7
  %s10 = scalar_select 0, %s9, %s7
  $region1: #{tpu_custom_call.1} parent=0
    #allocation2 [shape = 'u8[262144]{0}', space=vmem, size = 0x40000, scoped, tag = 'input window, operand 0']
    #allocation3 [shape = 's32[2]{0}', space=sflag, size = 0x8, scoped, tag = 'scoped memory for tpu_custom_call.1']
    #allocation4 [shape = 's32[2]{0}', space=sflag, size = 0x8, scoped, tag = 'scoped memory for tpu_custom_call.1']
    #allocation5 [shape = 'u8[262144]{0}', space=vmem, size = 0x40000, scoped, tag = 'input window, operand 1']
    #allocation6 [shape = 's32[2]{0}', space=sflag, size = 0x8, scoped, tag = 'scoped memory for tpu_custom_call.1']
    #allocation7 [shape = 'u8[294912]{0}', space=vmem, size = 0x48000, scoped, tag = 'input window, operand 2, single buffered']
    #allocation8 [shape = 'u8[294912]{0}', space=vmem, size = 0x48000, scoped, tag = 'input window, operand 3, single buffered']
    #allocation9 [shape = 's32[1]{0}', space=sflag, size = 0x4, scoped, tag = 'scoped memory for tpu_custom_call.1']
    #allocation10 [shape = 'u8[32768]{0}', space=vmem, size = 0x8000, scoped, tag = 'output window, operand 0']
    %11 = vsyncpa [#allocation3], 0
    %s12 = scalar_lea.sflag [#allocation3], 1
    %13 = vsyncpa %s12, 0
    %14 = vsyncpa [#allocation6], 0
    %s15 = scalar_lea.sflag [#allocation6], 1
    %16 = vsyncpa %s15, 0
    %17 = vsyncpa [#allocation9], 0
    %18 = vsyncpa [#allocation4], 0
    %s19 = scalar_lea.sflag [#allocation4], 1
    %20 = vsyncpa %s19, 0
    loop: start=0, step=1, limit=4
    $region2: #{tpu_custom_call.1} parent=1 // loop_pre_header
      _
    $region3: #{tpu_custom_call.1} parent=1 // loop_header
      %s22 = sphi 0, %s26
      %p23 = scmp.ge.s32.totalorder %s22, 4
      %s32 = sphi 0, %s34
      %s35 = sphi 0, %s32
      %s36 = sphi 0, %s35
      %s52 = sphi 0, %s36
      %s58 = sphi 0, %s60
      %s61 = sphi 0, %s58
      %s62 = sphi 0, %s61
      %s78 = sphi 0, %s62
      %s82 = sphi 0, %s82
      %s84 = sphi 0, %s82
      %s85 = sphi 0, %s84
      %s99 = sphi 0, %s85
      %s103 = sphi 0, %s103
      %s105 = sphi 0, %s103
      %s106 = sphi 0, %s105
      %s120 = sphi 0, %s106
      %s124 = sphi 0, %s124
      %s126 = sphi 0, %s124
      %s127 = sphi 0, %s126
      %s141 = sphi 0, %s127
      %s145 = sphi 0, %s145
      %s147 = sphi 0, %s145
      %s148 = sphi 0, %s147
      %s162 = sphi 0, %s148
      %s168 = sphi 0, %s170
      %s171 = sphi 0, %s168
      %s172 = sphi 0, %s171
      %s188 = sphi 0, %s172
    $region4: #{tpu_custom_call.1} parent=1 // loop_header_branch
      %25 = sbr.rel (%p23) target = $region8
    $region5: #{tpu_custom_call.1} parent=1 // loop_body
      %s27 = ssub.s32 %s22, 1
      %s28 = ssub.s32 %s22, 2
      %s29 = sadd.s32 %s22, 1
      %s30 = ssub.s32 %s22, %s29
      %p31 = scmp.eq.s32.totalorder %s30, 0
      %s33 = sadd.s32 %s32, 1
      %s34 = scalar_select %p31, %s32, %s33
      %p37 = pneg %p31
      %p38 = scmp.eq.s32.totalorder %s22, 1
      %p39 = por %p37, %p38
      %p40 = scmp.ne.s32.totalorder %s32, %s35
      %p41 = scmp.eq.s32.totalorder %s22, 0
      %p42 = por %p40, %p41
      %p43 = scmp.ne.s32.totalorder %s32, %s35
      %p44 = scmp.eq.s32.totalorder %s27, 1
      %p45 = por %p43, %p44
      %p46 = scmp.ne.s32.totalorder %s35, %s36
      %p47 = scmp.eq.s32.totalorder %s27, 0
      %p48 = por %p46, %p47
      %p49 = scmp.ne.s32.totalorder %s35, %s36
      %p50 = scmp.eq.s32.totalorder %s28, 1
      %p51 = por %p49, %p50
      %p53 = scmp.ne.s32.totalorder %s36, %s52
      %p54 = scmp.eq.s32.totalorder %s28, 0
      %p55 = por %p53, %p54
      %s56 = ssub.s32 %s22, %s29
      %p57 = scmp.eq.s32.totalorder %s56, 0
      %s59 = sadd.s32 %s58, 1
      %s60 = scalar_select %p57, %s58, %s59
      %p63 = pneg %p57
      %p64 = scmp.eq.s32.totalorder %s22, 1
      %p65 = por %p63, %p64
      %p66 = scmp.ne.s32.totalorder %s58, %s61
      %p67 = scmp.eq.s32.totalorder %s22, 0
      %p68 = por %p66, %p67
      %p69 = scmp.ne.s32.totalorder %s58, %s61
      %p70 = scmp.eq.s32.totalorder %s27, 1
      %p71 = por %p69, %p70
      %p72 = scmp.ne.s32.totalorder %s61, %s62
      %p73 = scmp.eq.s32.totalorder %s27, 0
      %p74 = por %p72, %p73
      %p75 = scmp.ne.s32.totalorder %s61, %s62
      %p76 = scmp.eq.s32.totalorder %s28, 1
      %p77 = por %p75, %p76
      %p79 = scmp.ne.s32.totalorder %s62, %s78
      %p80 = scmp.eq.s32.totalorder %s28, 0
      %p81 = por %p79, %p80
      %s83 = sadd.s32 %s82, 1
      %p86 = scmp.eq.s32.totalorder %s22, 1
      %p87 = scmp.ne.s32.totalorder %s82, %s84
      %p88 = scmp.eq.s32.totalorder %s22, 0
      %p89 = por %p87, %p88
      %p90 = scmp.ne.s32.totalorder %s82, %s84
      %p91 = scmp.eq.s32.totalorder %s27, 1
      %p92 = por %p90, %p91
      %p93 = scmp.ne.s32.totalorder %s84, %s85
      %p94 = scmp.eq.s32.totalorder %s27, 0
      %p95 = por %p93, %p94
      %p96 = scmp.ne.s32.totalorder %s84, %s85
      %p97 = scmp.eq.s32.totalorder %s28, 1
      %p98 = por %p96, %p97
      %p100 = scmp.ne.s32.totalorder %s85, %s99
      %p101 = scmp.eq.s32.totalorder %s28, 0
      %p102 = por %p100, %p101
      %s104 = sadd.s32 %s103, 1
      %p107 = scmp.eq.s32.totalorder %s22, 1
      %p108 = scmp.ne.s32.totalorder %s103, %s105
      %p109 = scmp.eq.s32.totalorder %s22, 0
      %p110 = por %p108, %p109
      %p111 = scmp.ne.s32.totalorder %s103, %s105
      %p112 = scmp.eq.s32.totalorder %s27, 1
      %p113 = por %p111, %p112
      %p114 = scmp.ne.s32.totalorder %s105, %s106
      %p115 = scmp.eq.s32.totalorder %s27, 0
      %p116 = por %p114, %p115
      %p117 = scmp.ne.s32.totalorder %s105, %s106
      %p118 = scmp.eq.s32.totalorder %s28, 1
      %p119 = por %p117, %p118
      %p121 = scmp.ne.s32.totalorder %s106, %s120
      %p122 = scmp.eq.s32.totalorder %s28, 0
      %p123 = por %p121, %p122
      %s125 = sadd.s32 %s124, 1
      %p128 = scmp.eq.s32.totalorder %s22, 1
      %p129 = scmp.ne.s32.totalorder %s124, %s126
      %p130 = scmp.eq.s32.totalorder %s22, 0
      %p131 = por %p129, %p130
      %p132 = scmp.ne.s32.totalorder %s124, %s126
      %p133 = scmp.eq.s32.totalorder %s27, 1
      %p134 = por %p132, %p133
      %p135 = scmp.ne.s32.totalorder %s126, %s127
      %p136 = scmp.eq.s32.totalorder %s27, 0
      %p137 = por %p135, %p136
      %p138 = scmp.ne.s32.totalorder %s126, %s127
      %p139 = scmp.eq.s32.totalorder %s28, 1
      %p140 = por %p138, %p139
      %p142 = scmp.ne.s32.totalorder %s127, %s141
      %p143 = scmp.eq.s32.totalorder %s28, 0
      %p144 = por %p142, %p143
      %s146 = sadd.s32 %s145, 1
      %p149 = scmp.eq.s32.totalorder %s22, 1
      %p150 = scmp.ne.s32.totalorder %s145, %s147
      %p151 = scmp.eq.s32.totalorder %s22, 0
      %p152 = por %p150, %p151
      %p153 = scmp.ne.s32.totalorder %s145, %s147
      %p154 = scmp.eq.s32.totalorder %s27, 1
      %p155 = por %p153, %p154
      %p156 = scmp.ne.s32.totalorder %s147, %s148
      %p157 = scmp.eq.s32.totalorder %s27, 0
      %p158 = por %p156, %p157
      %p159 = scmp.ne.s32.totalorder %s147, %s148
      %p160 = scmp.eq.s32.totalorder %s28, 1
      %p161 = por %p159, %p160
      %p163 = scmp.ne.s32.totalorder %s148, %s162
      %p164 = scmp.eq.s32.totalorder %s28, 0
      %p165 = por %p163, %p164
      %s166 = ssub.s32 %s22, %s29
      %p167 = scmp.eq.s32.totalorder %s166, 0
      %s169 = sadd.s32 %s168, 1
      %s170 = scalar_select %p167, %s168, %s169
      %p173 = pneg %p167
      %p174 = scmp.eq.s32.totalorder %s22, 1
      %p175 = por %p173, %p174
      %p176 = scmp.ne.s32.totalorder %s168, %s171
      %p177 = scmp.eq.s32.totalorder %s22, 0
      %p178 = por %p176, %p177
      %p179 = scmp.ne.s32.totalorder %s168, %s171
      %p180 = scmp.eq.s32.totalorder %s27, 1
      %p181 = por %p179, %p180
      %p182 = scmp.ne.s32.totalorder %s171, %s172
      %p183 = scmp.eq.s32.totalorder %s27, 0
      %p184 = por %p182, %p183
      %p185 = scmp.ne.s32.totalorder %s171, %s172
      %p186 = scmp.eq.s32.totalorder %s28, 1
      %p187 = por %p185, %p186
      %p189 = scmp.ne.s32.totalorder %s172, %s188
      %p190 = scmp.eq.s32.totalorder %s28, 0
      %p191 = por %p189, %p190
      %p192 = scmp.le.s32.totalorder 1, %s22
      %p193 = scmp.lt.s32.totalorder %s22, 3
      %p194 = pnand %p192, %p193
      %p195 = pneg %p194
      // Predicated region
      $region9: #{tpu_custom_call.1} parent=5 // pred_check
        _
      $region10: #{tpu_custom_call.1} parent=5 // pred_check_branch
        %197 = sbr.rel (%p194) target = $region12
      $region11: #{tpu_custom_call.1} parent=5 // pred_region
        %s198 = ssub.s32 %s22, 1
        // Predicated region
        $region13: #{tpu_custom_call.1} parent=11 // pred_check
          %p199 = pneg %p95
        $region14: #{tpu_custom_call.1} parent=11 // pred_check_branch
          %201 = sbr.rel (%p199) target = $region16
        $region15: #{tpu_custom_call.1} parent=11 // pred_region
          %203 = vsyncadd [#allocation6], 0
          %s204 = sshll.u32 %s2, 4
          %s205 = int_to_ptr.hbm [resolvable:$true] %s204
          %s206 = sshll.u32 [#allocation7], 4
          %s207 = int_to_ptr.vmem [resolvable:$true] %s206
          %212 = dma.hbm_to_vmem [thread:$0]  %s205, 9216, %s207, [#allocation6], 64, 64, 4
        $region16: #{tpu_custom_call.1} parent=11 // pred_fallthru
          _
        // Predicated region
        $region17: #{tpu_custom_call.1} parent=11 // pred_check
          %p213 = pneg %p116
        $region18: #{tpu_custom_call.1} parent=11 // pred_check_branch
          %215 = sbr.rel (%p213) target = $region20
        $region19: #{tpu_custom_call.1} parent=11 // pred_region
          %217 = vsyncadd [#allocation9], 0
          %s218 = sshll.u32 %s3, 4
          %s219 = int_to_ptr.hbm [resolvable:$true] %s218
          %s220 = sshll.u32 [#allocation8], 4
          %s221 = int_to_ptr.vmem [resolvable:$true] %s220
          %226 = dma.hbm_to_vmem [thread:$0]  %s219, 9216, %s221, [#allocation9], 64, 64, 4
        $region20: #{tpu_custom_call.1} parent=11 // pred_fallthru
          _
        // Predicated region
        $region21: #{tpu_custom_call.1} parent=11 // pred_check
          %p227 = pneg %p137
        $region22: #{tpu_custom_call.1} parent=11 // pred_check_branch
          %229 = sbr.rel (%p227) target = $region24
        $region23: #{tpu_custom_call.1} parent=11 // pred_region
          _
        $region24: #{tpu_custom_call.1} parent=11 // pred_fallthru
          _
        // Predicated region
        $region25: #{tpu_custom_call.1} parent=11 // pred_check
          %p230 = pneg %p158
        $region26: #{tpu_custom_call.1} parent=11 // pred_check_branch
          %232 = sbr.rel (%p230) target = $region28
        $region27: #{tpu_custom_call.1} parent=11 // pred_region
          _
        $region28: #{tpu_custom_call.1} parent=11 // pred_fallthru
          _
      $region12: #{tpu_custom_call.1} parent=5 // pred_fallthru
        _
      %p233 = scmp.lt.s32.totalorder %s22, 2
      // Predicated region
      $region29: #{tpu_custom_call.1} parent=5 // pred_check
        %p234 = pneg %p233
      $region30: #{tpu_custom_call.1} parent=5 // pred_check_branch
        %236 = sbr.rel (%p234) target = $region32
      $region31: #{tpu_custom_call.1} parent=5 // pred_region
        // Predicated region
        $region33: #{tpu_custom_call.1} parent=31 // pred_check
          %p237 = pneg %p42
        $region34: #{tpu_custom_call.1} parent=31 // pred_check_branch
          %239 = sbr.rel (%p237) target = $region36
        $region35: #{tpu_custom_call.1} parent=31 // pred_region
          %s240 = sand.u32 %s32, 1
          %s241 = scalar_lea.sflag [#allocation3], %s240
          %s242 = sand.u32 %s32, 1
          %s243 = smul.addr %s242, 256
          %s244 = scalar_lea.vmem [#allocation2], %s243
          %246 = vsyncadd %s241, 0
          %s247 = smul.addr %s22, 32
          %s248 = smul.addr %s247, 8
          %s249 = scalar_lea.hbm %s0, %s248
          %s250 = sshll.u32 %s249, 4
          %s251 = int_to_ptr.hbm [resolvable:$true] %s250
          %s252 = sshll.u32 %s244, 4
          %s253 = int_to_ptr.vmem [resolvable:$true] %s252
          %258 = dma.hbm_to_vmem [thread:$0]  %s251, 4096, %s253, %s241, 128, 128, 8
        $region36: #{tpu_custom_call.1} parent=31 // pred_fallthru
          _
        // Predicated region
        $region37: #{tpu_custom_call.1} parent=31 // pred_check
          %p259 = pneg %p68
        $region38: #{tpu_custom_call.1} parent=31 // pred_check_branch
          %261 = sbr.rel (%p259) target = $region40
        $region39: #{tpu_custom_call.1} parent=31 // pred_region
          %s262 = sand.u32 %s22, 1
          %s263 = scalar_lea.sflag [#allocation6], %s262
          %s264 = sand.u32 %s58, 1
          %s265 = smul.addr %s264, 256
          %s266 = scalar_lea.vmem [#allocation5], %s265
          %268 = vsyncadd %s263, 0
          %s269 = smul.addr %s22, 32
          %s270 = smul.addr %s269, 8
          %s271 = scalar_lea.hbm %s1, %s270
          %s272 = sshll.u32 %s271, 4
          %s273 = int_to_ptr.hbm [resolvable:$true] %s272
          %s274 = sshll.u32 %s266, 4
          %s275 = int_to_ptr.vmem [resolvable:$true] %s274
          %280 = dma.hbm_to_vmem [thread:$0]  %s273, 4096, %s275, %s263, 128, 128, 8
        $region40: #{tpu_custom_call.1} parent=31 // pred_fallthru
          _
      $region32: #{tpu_custom_call.1} parent=5 // pred_fallthru
        _
      %p281 = scmp.le.s32.totalorder 1, %s22
      %p282 = scmp.lt.s32.totalorder %s22, 3
      %p283 = pnand %p281, %p282
      %p284 = pneg %p283
      // Predicated region
      $region41: #{tpu_custom_call.1} parent=5 // pred_check
        _
      $region42: #{tpu_custom_call.1} parent=5 // pred_check_branch
        %286 = sbr.rel (%p283) target = $region44
      $region43: #{tpu_custom_call.1} parent=5 // pred_region
        %s287 = ssub.s32 %s22, 1
        %s288 = sand.u32 %s35, 1
        %s289 = scalar_lea.sflag [#allocation3], %s288
        %s290 = sand.u32 %s35, 1
        %s291 = smul.addr %s290, 256
        %s292 = scalar_lea.vmem [#allocation2], %s291
        // Predicated region
        $region45: #{tpu_custom_call.1} parent=43 // pred_check
          %p293 = pneg %p48
        $region46: #{tpu_custom_call.1} parent=43 // pred_check_branch
          %295 = sbr.rel (%p293) target = $region48
        $region47: #{tpu_custom_call.1} parent=43 // pred_region
          %297 = dma.done %s289, 4096
        $region48: #{tpu_custom_call.1} parent=43 // pred_fallthru
          _
        %s298 = sand.u32 %s27, 1
        %s299 = scalar_lea.sflag [#allocation6], %s298
        %s300 = sand.u32 %s61, 1
        %s301 = smul.addr %s300, 256
        %s302 = scalar_lea.vmem [#allocation5], %s301
        // Predicated region
        $region49: #{tpu_custom_call.1} parent=43 // pred_check
          %p303 = pneg %p74
        $region50: #{tpu_custom_call.1} parent=43 // pred_check_branch
          %305 = sbr.rel (%p303) target = $region52
        $region51: #{tpu_custom_call.1} parent=43 // pred_region
          %307 = dma.done %s299, 4096
        $region52: #{tpu_custom_call.1} parent=43 // pred_fallthru
          _
        // Predicated region
        $region53: #{tpu_custom_call.1} parent=43 // pred_check
          %p308 = pneg %p95
        $region54: #{tpu_custom_call.1} parent=43 // pred_check_branch
          %310 = sbr.rel (%p308) target = $region56
        $region55: #{tpu_custom_call.1} parent=43 // pred_region
          %312 = dma.done [#allocation6], 9216
        $region56: #{tpu_custom_call.1} parent=43 // pred_fallthru
          _
        // Predicated region
        $region57: #{tpu_custom_call.1} parent=43 // pred_check
          %p313 = pneg %p116
        $region58: #{tpu_custom_call.1} parent=43 // pred_check_branch
          %315 = sbr.rel (%p313) target = $region60
        $region59: #{tpu_custom_call.1} parent=43 // pred_region
          %317 = dma.done [#allocation9], 9216
        $region60: #{tpu_custom_call.1} parent=43 // pred_fallthru
          _
        %s318 = sand.u32 %s35, 1
        %s319 = scalar_lea.sflag [#allocation3], %s318
        %s320 = sand.u32 %s35, 1
        %s321 = smul.addr %s320, 256
        %s322 = scalar_lea.vmem [#allocation2], %s321
        %p323 = pneg %p48
        %p324 = pneg %p45
        %s325 = sand.u32 %s27, 1
        %s326 = scalar_lea.sflag [#allocation6], %s325
        %s327 = sand.u32 %s61, 1
        %s328 = smul.addr %s327, 256
        %s329 = scalar_lea.vmem [#allocation5], %s328
        %p330 = pneg %p74
        %p331 = pneg %p71
        %p332 = pneg %p95
        %p333 = pneg %p92
        %p334 = pneg %p116
        %p335 = pneg %p113
        %p336 = pneg %p137
        %p337 = pneg %p134
        %p338 = pneg %p158
        %p339 = pneg %p155
        %p340 = pneg %p184
        %p341 = pneg %p181
        %s342 = sand.u32 %s171, 1
        %s343 = scalar_lea.sflag [#allocation4], %s342
        %s344 = sand.u32 %s171, 1
        %s345 = smul.addr %s344, 32
        %s346 = scalar_lea.vmem [#allocation10], %s345
        %v347 = vld [vmem:[%s302] sm:$0xff]
        %v348 = vld [vmem:[%s302 + $0x8] sm:$0xff]
        %v349 = vld [vmem:[%s302 + $0x10] sm:$0xff]
        %v350 = vld [vmem:[%s302 + $0x18] sm:$0xff]
        %v351 = vld [vmem:[%s302 + $0x20] sm:$0xff]
        %v352 = vld [vmem:[%s302 + $0x28] sm:$0xff]
        %v353 = vld [vmem:[%s302 + $0x30] sm:$0xff]
        %v354 = vld [vmem:[%s302 + $0x38] sm:$0xff]
        %v355 = vld [vmem:[%s302 + $0x40] sm:$0xff]
        %v356 = vld [vmem:[%s302 + $0x48] sm:$0xff]
        %v357 = vld [vmem:[%s302 + $0x50] sm:$0xff]
        %v358 = vld [vmem:[%s302 + $0x58] sm:$0xff]
        %v359 = vld [vmem:[%s302 + $0x60] sm:$0xff]
        %v360 = vld [vmem:[%s302 + $0x68] sm:$0xff]
        %v361 = vld [vmem:[%s302 + $0x70] sm:$0xff]
        %v362 = vld [vmem:[%s302 + $0x78] sm:$0xff]
        %v363 = vld [vmem:[%s302 + $0x80] sm:$0xff]
        %v364 = vld [vmem:[%s302 + $0x88] sm:$0xff]
        %v365 = vld [vmem:[%s302 + $0x90] sm:$0xff]
        %v366 = vld [vmem:[%s302 + $0x98] sm:$0xff]
        %v367 = vld [vmem:[%s302 + $0xa0] sm:$0xff]
        %v368 = vld [vmem:[%s302 + $0xa8] sm:$0xff]
        %v369 = vld [vmem:[%s302 + $0xb0] sm:$0xff]
        %v370 = vld [vmem:[%s302 + $0xb8] sm:$0xff]
        %v371 = vld [vmem:[%s302 + $0xc0] sm:$0xff]
        %v372 = vld [vmem:[%s302 + $0xc8] sm:$0xff]
        %v373 = vld [vmem:[%s302 + $0xd0] sm:$0xff]
        %v374 = vld [vmem:[%s302 + $0xd8] sm:$0xff]
        %v375 = vld [vmem:[%s302 + $0xe0] sm:$0xff]
        %v376 = vld [vmem:[%s302 + $0xe8] sm:$0xff]
        %v377 = vld [vmem:[%s302 + $0xf0] sm:$0xff]
        %v378 = vld [vmem:[%s302 + $0xf8] sm:$0xff]
        %v379 = vld [vmem:[%s4] sm:$0x1]
        %v380 = vlaneseq
        %v381 = vshrl.u32 %v380, 7
        %v382 = vadd.s32 %v381, 8
        %v383 = vadd.s32 %v381, 16
        %v384 = vadd.s32 %v381, 24
        %v385 = vadd.s32 %v381, 32
        %v386 = vadd.s32 %v381, 40
        %v387 = vadd.s32 %v381, 48
        %v388 = vadd.s32 %v381, 56
        %v389 = vadd.s32 %v381, 64
        %v390 = vadd.s32 %v381, 72
        %v391 = vadd.s32 %v381, 80
        %v392 = vadd.s32 %v381, 88
        %v393 = vadd.s32 %v381, 96
        %v394 = vadd.s32 %v381, 104
        %v395 = vadd.s32 %v381, 112
        %v396 = vadd.s32 %v381, 120
        %v397 = vadd.s32 %v381, 128
        %v398 = vadd.s32 %v381, 136
        %v399 = vadd.s32 %v381, 144
        %v400 = vadd.s32 %v381, 152
        %v401 = vadd.s32 %v381, 160
        %v402 = vadd.s32 %v381, 168
        %v403 = vadd.s32 %v381, 176
        %v404 = vadd.s32 %v381, 184
        %v405 = vadd.s32 %v381, 192
        %v406 = vadd.s32 %v381, 200
        %v407 = vadd.s32 %v381, 208
        %v408 = vadd.s32 %v381, 216
        %v409 = vadd.s32 %v381, 224
        %v410 = vadd.s32 %v381, 232
        %v411 = vadd.s32 %v381, 240
        %v412 = vadd.s32 %v381, 248
        %v413 = vand.u32 %v381, 15
        %v414 = vand.u32 %v382, 15
        %v415 = vand.u32 %v383, 15
        %v416 = vand.u32 %v384, 15
        %v417 = vand.u32 %v385, 15
        %v418 = vand.u32 %v386, 15
        %v419 = vand.u32 %v387, 15
        %v420 = vand.u32 %v388, 15
        %v421 = vand.u32 %v389, 15
        %v422 = vand.u32 %v390, 15
        %v423 = vand.u32 %v391, 15
        %v424 = vand.u32 %v392, 15
        %v425 = vand.u32 %v393, 15
        %v426 = vand.u32 %v394, 15
        %v427 = vand.u32 %v395, 15
        %v428 = vand.u32 %v396, 15
        %v429 = vand.u32 %v397, 15
        %v430 = vand.u32 %v398, 15
        %v431 = vand.u32 %v399, 15
        %v432 = vand.u32 %v400, 15
        %v433 = vand.u32 %v401, 15
        %v434 = vand.u32 %v402, 15
        %v435 = vand.u32 %v403, 15
        %v436 = vand.u32 %v404, 15
        %v437 = vand.u32 %v405, 15
        %v438 = vand.u32 %v406, 15
        %v439 = vand.u32 %v407, 15
        %v440 = vand.u32 %v408, 15
        %v441 = vand.u32 %v409, 15
        %v442 = vand.u32 %v410, 15
        %v443 = vand.u32 %v411, 15
        %v444 = vand.u32 %v412, 15
        %v445 = vrot.slane %v347, 7
        %v446 = vrot.slane %v348, 7
        %v447 = vrot.slane %v349, 7
        %v448 = vrot.slane %v350, 7
        %v449 = vrot.slane %v351, 7
        %v450 = vrot.slane %v352, 7
        %v451 = vrot.slane %v353, 7
        %v452 = vrot.slane %v354, 7
        %v453 = vrot.slane %v355, 7
        %v454 = vrot.slane %v356, 7
        %v455 = vrot.slane %v357, 7
        %v456 = vrot.slane %v358, 7
        %v457 = vrot.slane %v359, 7
        %v458 = vrot.slane %v360, 7
        %v459 = vrot.slane %v361, 7
        %v460 = vrot.slane %v362, 7
        %v461 = vrot.slane %v363, 7
        %v462 = vrot.slane %v364, 7
        %v463 = vrot.slane %v365, 7
        %v464 = vrot.slane %v366, 7
        %v465 = vrot.slane %v367, 7
        %v466 = vrot.slane %v368, 7
        %v467 = vrot.slane %v369, 7
        %v468 = vrot.slane %v370, 7
        %v469 = vrot.slane %v371, 7
        %v470 = vrot.slane %v372, 7
        %v471 = vrot.slane %v373, 7
        %v472 = vrot.slane %v374, 7
        %v473 = vrot.slane %v375, 7
        %v474 = vrot.slane %v376, 7
        %v475 = vrot.slane %v377, 7
        %v476 = vrot.slane %v378, 7
        %vm477 = vcmp.lt.s32.totalorder %v381, 1
        %v478 = vsel %vm477, %v475, %v476
        %v479 = vsel %vm477, %v474, %v475
        %v480 = vsel %vm477, %v473, %v474
        %v481 = vsel %vm477, %v472, %v473
        %v482 = vsel %vm477, %v471, %v472
        %v483 = vsel %vm477, %v470, %v471
        %v484 = vsel %vm477, %v469, %v470
        %v485 = vsel %vm477, %v468, %v469
        %v486 = vsel %vm477, %v467, %v468
        %v487 = vsel %vm477, %v466, %v467
        %v488 = vsel %vm477, %v465, %v466
        %v489 = vsel %vm477, %v464, %v465
        %v490 = vsel %vm477, %v463, %v464
        %v491 = vsel %vm477, %v462, %v463
        %v492 = vsel %vm477, %v461, %v462
        %v493 = vsel %vm477, %v460, %v461
        %v494 = vsel %vm477, %v459, %v460
        %v495 = vsel %vm477, %v458, %v459
        %v496 = vsel %vm477, %v457, %v458
        %v497 = vsel %vm477, %v456, %v457
        %v498 = vsel %vm477, %v455, %v456
        %v499 = vsel %vm477, %v454, %v455
        %v500 = vsel %vm477, %v453, %v454
        %v501 = vsel %vm477, %v452, %v453
        %v502 = vsel %vm477, %v451, %v452
        %v503 = vsel %vm477, %v450, %v451
        %v504 = vsel %vm477, %v449, %v450
        %v505 = vsel %vm477, %v448, %v449
        %v506 = vsel %vm477, %v447, %v448
        %v507 = vsel %vm477, %v446, %v447
        %v508 = vsel %vm477, %v445, %v446
        %v509 = vsel %vm477, %v476, %v445
        %vm510 = vcmp.ge.s32.totalorder %v381, 16
        %vm511 = vcmp.ge.s32.totalorder %v382, 16
        %vm512 = vcmp.ge.s32.totalorder %v383, 16
        %vm513 = vcmp.ge.s32.totalorder %v384, 16
        %vm514 = vcmp.ge.s32.totalorder %v385, 16
        %vm515 = vcmp.ge.s32.totalorder %v386, 16
        %vm516 = vcmp.ge.s32.totalorder %v387, 16
        %vm517 = vcmp.ge.s32.totalorder %v388, 16
        %vm518 = vcmp.ge.s32.totalorder %v389, 16
        %vm519 = vcmp.ge.s32.totalorder %v390, 16
        %vm520 = vcmp.ge.s32.totalorder %v391, 16
        %vm521 = vcmp.ge.s32.totalorder %v392, 16
        %vm522 = vcmp.ge.s32.totalorder %v393, 16
        %vm523 = vcmp.ge.s32.totalorder %v394, 16
        %vm524 = vcmp.ge.s32.totalorder %v395, 16
        %vm525 = vcmp.ge.s32.totalorder %v396, 16
        %vm526 = vcmp.ge.s32.totalorder %v397, 16
        %vm527 = vcmp.ge.s32.totalorder %v398, 16
        %vm528 = vcmp.ge.s32.totalorder %v399, 16
        %vm529 = vcmp.ge.s32.totalorder %v400, 16
        %vm530 = vcmp.ge.s32.totalorder %v401, 16
        %vm531 = vcmp.ge.s32.totalorder %v402, 16
        %vm532 = vcmp.ge.s32.totalorder %v403, 16
        %vm533 = vcmp.ge.s32.totalorder %v404, 16
        %vm534 = vcmp.ge.s32.totalorder %v405, 16
        %vm535 = vcmp.ge.s32.totalorder %v406, 16
        %vm536 = vcmp.ge.s32.totalorder %v407, 16
        %vm537 = vcmp.ge.s32.totalorder %v408, 16
        %vm538 = vcmp.ge.s32.totalorder %v409, 16
        %vm539 = vcmp.ge.s32.totalorder %v410, 16
        %vm540 = vcmp.ge.s32.totalorder %v411, 16
        %vm541 = vcmp.ge.s32.totalorder %v412, 16
        %vm542 = vcmp.ge.s32.totalorder %v413, 1
        %vm543 = vcmp.ge.s32.totalorder %v414, 1
        %vm544 = vcmp.ge.s32.totalorder %v415, 1
        %vm545 = vcmp.ge.s32.totalorder %v416, 1
        %vm546 = vcmp.ge.s32.totalorder %v417, 1
        %vm547 = vcmp.ge.s32.totalorder %v418, 1
        %vm548 = vcmp.ge.s32.totalorder %v419, 1
        %vm549 = vcmp.ge.s32.totalorder %v420, 1
        %vm550 = vcmp.ge.s32.totalorder %v421, 1
        %vm551 = vcmp.ge.s32.totalorder %v422, 1
        %vm552 = vcmp.ge.s32.totalorder %v423, 1
        %vm553 = vcmp.ge.s32.totalorder %v424, 1
        %vm554 = vcmp.ge.s32.totalorder %v425, 1
        %vm555 = vcmp.ge.s32.totalorder %v426, 1
        %vm556 = vcmp.ge.s32.totalorder %v427, 1
        %vm557 = vcmp.ge.s32.totalorder %v428, 1
        %vm558 = vcmp.ge.s32.totalorder %v429, 1
        %vm559 = vcmp.ge.s32.totalorder %v430, 1
        %vm560 = vcmp.ge.s32.totalorder %v431, 1
        %vm561 = vcmp.ge.s32.totalorder %v432, 1
        %vm562 = vcmp.ge.s32.totalorder %v433, 1
        %vm563 = vcmp.ge.s32.totalorder %v434, 1
        %vm564 = vcmp.ge.s32.totalorder %v435, 1
        %vm565 = vcmp.ge.s32.totalorder %v436, 1
        %vm566 = vcmp.ge.s32.totalorder %v437, 1
        %vm567 = vcmp.ge.s32.totalorder %v438, 1
        %vm568 = vcmp.ge.s32.totalorder %v439, 1
        %vm569 = vcmp.ge.s32.totalorder %v440, 1
        %vm570 = vcmp.ge.s32.totalorder %v441, 1
        %vm571 = vcmp.ge.s32.totalorder %v442, 1
        %vm572 = vcmp.ge.s32.totalorder %v443, 1
        %vm573 = vcmp.ge.s32.totalorder %v444, 1
        %vm574 = vmand %vm510, %vm542
        %vm575 = vmand %vm511, %vm543
        %vm576 = vmand %vm512, %vm544
        %vm577 = vmand %vm513, %vm545
        %vm578 = vmand %vm514, %vm546
        %vm579 = vmand %vm515, %vm547
        %vm580 = vmand %vm516, %vm548
        %vm581 = vmand %vm517, %vm549
        %vm582 = vmand %vm518, %vm550
        %vm583 = vmand %vm519, %vm551
        %vm584 = vmand %vm520, %vm552
        %vm585 = vmand %vm521, %vm553
        %vm586 = vmand %vm522, %vm554
        %vm587 = vmand %vm523, %vm555
        %vm588 = vmand %vm524, %vm556
        %vm589 = vmand %vm525, %vm557
        %vm590 = vmand %vm526, %vm558
        %vm591 = vmand %vm527, %vm559
        %vm592 = vmand %vm528, %vm560
        %vm593 = vmand %vm529, %vm561
        %vm594 = vmand %vm530, %vm562
        %vm595 = vmand %vm531, %vm563
        %vm596 = vmand %vm532, %vm564
        %vm597 = vmand %vm533, %vm565
        %vm598 = vmand %vm534, %vm566
        %vm599 = vmand %vm535, %vm567
        %vm600 = vmand %vm536, %vm568
        %vm601 = vmand %vm537, %vm569
        %vm602 = vmand %vm538, %vm570
        %vm603 = vmand %vm539, %vm571
        %vm604 = vmand %vm540, %vm572
        %vm605 = vmand %vm541, %vm573
        %v606 = vsel %vm574, 1, 0
        %v607 = vsel %vm575, 1, 0
        %v608 = vsel %vm576, 1, 0
        %v609 = vsel %vm577, 1, 0
        %v610 = vsel %vm578, 1, 0
        %v611 = vsel %vm579, 1, 0
        %v612 = vsel %vm580, 1, 0
        %v613 = vsel %vm581, 1, 0
        %v614 = vsel %vm582, 1, 0
        %v615 = vsel %vm583, 1, 0
        %v616 = vsel %vm584, 1, 0
        %v617 = vsel %vm585, 1, 0
        %v618 = vsel %vm586, 1, 0
        %v619 = vsel %vm587, 1, 0
        %v620 = vsel %vm588, 1, 0
        %v621 = vsel %vm589, 1, 0
        %v622 = vsel %vm590, 1, 0
        %v623 = vsel %vm591, 1, 0
        %v624 = vsel %vm592, 1, 0
        %v625 = vsel %vm593, 1, 0
        %v626 = vsel %vm594, 1, 0
        %v627 = vsel %vm595, 1, 0
        %v628 = vsel %vm596, 1, 0
        %v629 = vsel %vm597, 1, 0
        %v630 = vsel %vm598, 1, 0
        %v631 = vsel %vm599, 1, 0
        %v632 = vsel %vm600, 1, 0
        %v633 = vsel %vm601, 1, 0
        %v634 = vsel %vm602, 1, 0
        %v635 = vsel %vm603, 1, 0
        %v636 = vsel %vm604, 1, 0
        %v637 = vsel %vm605, 1, 0
        %vm638 = vcmp.eq.s32.totalorder %v606, 1
        %vm639 = vcmp.eq.s32.totalorder %v607, 1
        %vm640 = vcmp.eq.s32.totalorder %v608, 1
        %vm641 = vcmp.eq.s32.totalorder %v609, 1
        %vm642 = vcmp.eq.s32.totalorder %v610, 1
        %vm643 = vcmp.eq.s32.totalorder %v611, 1
        %vm644 = vcmp.eq.s32.totalorder %v612, 1
        %vm645 = vcmp.eq.s32.totalorder %v613, 1
        %vm646 = vcmp.eq.s32.totalorder %v614, 1
        %vm647 = vcmp.eq.s32.totalorder %v615, 1
        %vm648 = vcmp.eq.s32.totalorder %v616, 1
        %vm649 = vcmp.eq.s32.totalorder %v617, 1
        %vm650 = vcmp.eq.s32.totalorder %v618, 1
        %vm651 = vcmp.eq.s32.totalorder %v619, 1
        %vm652 = vcmp.eq.s32.totalorder %v620, 1
        %vm653 = vcmp.eq.s32.totalorder %v621, 1
        %vm654 = vcmp.eq.s32.totalorder %v622, 1
        %vm655 = vcmp.eq.s32.totalorder %v623, 1
        %vm656 = vcmp.eq.s32.totalorder %v624, 1
        %vm657 = vcmp.eq.s32.totalorder %v625, 1
        %vm658 = vcmp.eq.s32.totalorder %v626, 1
        %vm659 = vcmp.eq.s32.totalorder %v627, 1
        %vm660 = vcmp.eq.s32.totalorder %v628, 1
        %vm661 = vcmp.eq.s32.totalorder %v629, 1
        %vm662 = vcmp.eq.s32.totalorder %v630, 1
        %vm663 = vcmp.eq.s32.totalorder %v631, 1
        %vm664 = vcmp.eq.s32.totalorder %v632, 1
        %vm665 = vcmp.eq.s32.totalorder %v633, 1
        %vm666 = vcmp.eq.s32.totalorder %v634, 1
        %vm667 = vcmp.eq.s32.totalorder %v635, 1
        %vm668 = vcmp.eq.s32.totalorder %v636, 1
        %vm669 = vcmp.eq.s32.totalorder %v637, 1
        %v670 = vsel %vm638, %v479, 0.0
        %v671 = vsel %vm639, %v478, 0.0
        %v672 = vsel %vm640, %v509, 0.0
        %v673 = vsel %vm641, %v508, 0.0
        %v674 = vsel %vm642, %v507, 0.0
        %v675 = vsel %vm643, %v506, 0.0
        %v676 = vsel %vm644, %v505, 0.0
        %v677 = vsel %vm645, %v504, 0.0
        %v678 = vsel %vm646, %v503, 0.0
        %v679 = vsel %vm647, %v502, 0.0
        %v680 = vsel %vm648, %v501, 0.0
        %v681 = vsel %vm649, %v500, 0.0
        %v682 = vsel %vm650, %v499, 0.0
        %v683 = vsel %vm651, %v498, 0.0
        %v684 = vsel %vm652, %v497, 0.0
        %v685 = vsel %vm653, %v496, 0.0
        %v686 = vsel %vm654, %v495, 0.0
        %v687 = vsel %vm655, %v494, 0.0
        %v688 = vsel %vm656, %v493, 0.0
        %v689 = vsel %vm657, %v492, 0.0
        %v690 = vsel %vm658, %v491, 0.0
        %v691 = vsel %vm659, %v490, 0.0
        %v692 = vsel %vm660, %v489, 0.0
        %v693 = vsel %vm661, %v488, 0.0
        %v694 = vsel %vm662, %v487, 0.0
        %v695 = vsel %vm663, %v486, 0.0
        %v696 = vsel %vm664, %v485, 0.0
        %v697 = vsel %vm665, %v484, 0.0
        %v698 = vsel %vm666, %v483, 0.0
        %v699 = vsel %vm667, %v482, 0.0
        %v700 = vsel %vm668, %v481, 0.0
        %v701 = vsel %vm669, %v480, 0.0
        %v702 = vpack.c.bf16 %v671, %v670
        %v703 = vpack.c.bf16 %v673, %v672
        %v704 = vpack.c.bf16 %v675, %v674
        %v705 = vpack.c.bf16 %v677, %v676
        %v706 = vpack.c.bf16 %v679, %v678
        %v707 = vpack.c.bf16 %v681, %v680
        %v708 = vpack.c.bf16 %v683, %v682
        %v709 = vpack.c.bf16 %v685, %v684
        %v710 = vpack.c.bf16 %v687, %v686
        %v711 = vpack.c.bf16 %v689, %v688
        %v712 = vpack.c.bf16 %v691, %v690
        %v713 = vpack.c.bf16 %v693, %v692
        %v714 = vpack.c.bf16 %v695, %v694
        %v715 = vpack.c.bf16 %v697, %v696
        %v716 = vpack.c.bf16 %v699, %v698
        %v717 = vpack.c.bf16 %v701, %v700
        %v718 = vld [vmem:[#allocation7] sm:$0xf]
        %v719 = vld [vmem:[#allocation7 + $0x4] sm:$0xf]
        %v720 = vld [vmem:[#allocation7 + $0x8] sm:$0xf]
        %v721 = vld [vmem:[#allocation7 + $0xc] sm:$0xf]
        %v722 = vld [vmem:[#allocation7 + $0x10] sm:$0xf]
        %v723 = vld [vmem:[#allocation7 + $0x14] sm:$0xf]
        %v724 = vld [vmem:[#allocation7 + $0x18] sm:$0xf]
        %v725 = vld [vmem:[#allocation7 + $0x1c] sm:$0xf]
        %v726 = vld [vmem:[#allocation7 + $0x20] sm:$0xf]
        %v727 = vld [vmem:[#allocation7 + $0x24] sm:$0xf]
        %v728 = vld [vmem:[#allocation7 + $0x28] sm:$0xf]
        %v729 = vld [vmem:[#allocation7 + $0x2c] sm:$0xf]
        %v730 = vld [vmem:[#allocation7 + $0x30] sm:$0xf]
        %v731 = vld [vmem:[#allocation7 + $0x34] sm:$0xf]
        %v732 = vld [vmem:[#allocation7 + $0x38] sm:$0xf]
        %v733 = vld [vmem:[#allocation7 + $0x3c] sm:$0xf]
        %v734 = vsel %vm510, 1, 0
        %v735 = vsel %vm511, 1, 0
        %v736 = vsel %vm512, 1, 0
        %v737 = vsel %vm513, 1, 0
        %v738 = vsel %vm514, 1, 0
        %v739 = vsel %vm515, 1, 0
        %v740 = vsel %vm516, 1, 0
        %v741 = vsel %vm517, 1, 0
        %v742 = vsel %vm518, 1, 0
        %v743 = vsel %vm519, 1, 0
        %v744 = vsel %vm520, 1, 0
        %v745 = vsel %vm521, 1, 0
        %v746 = vsel %vm522, 1, 0
        %v747 = vsel %vm523, 1, 0
        %v748 = vsel %vm524, 1, 0
        %v749 = vsel %vm525, 1, 0
        %v750 = vsel %vm526, 1, 0
        %v751 = vsel %vm527, 1, 0
        %v752 = vsel %vm528, 1, 0
        %v753 = vsel %vm529, 1, 0
        %v754 = vsel %vm530, 1, 0
        %v755 = vsel %vm531, 1, 0
        %v756 = vsel %vm532, 1, 0
        %v757 = vsel %vm533, 1, 0
        %v758 = vsel %vm534, 1, 0
        %v759 = vsel %vm535, 1, 0
        %v760 = vsel %vm536, 1, 0
        %v761 = vsel %vm537, 1, 0
        %v762 = vsel %vm538, 1, 0
        %v763 = vsel %vm539, 1, 0
        %v764 = vsel %vm540, 1, 0
        %v765 = vsel %vm541, 1, 0
        %vm766 = vcmp.eq.s32.totalorder %v734, 1
        %vm767 = vcmp.eq.s32.totalorder %v735, 1
        %vm768 = vcmp.eq.s32.totalorder %v736, 1
        %vm769 = vcmp.eq.s32.totalorder %v737, 1
        %vm770 = vcmp.eq.s32.totalorder %v738, 1
        %vm771 = vcmp.eq.s32.totalorder %v739, 1
        %vm772 = vcmp.eq.s32.totalorder %v740, 1
        %vm773 = vcmp.eq.s32.totalorder %v741, 1
        %vm774 = vcmp.eq.s32.totalorder %v742, 1
        %vm775 = vcmp.eq.s32.totalorder %v743, 1
        %vm776 = vcmp.eq.s32.totalorder %v744, 1
        %vm777 = vcmp.eq.s32.totalorder %v745, 1
        %vm778 = vcmp.eq.s32.totalorder %v746, 1
        %vm779 = vcmp.eq.s32.totalorder %v747, 1
        %vm780 = vcmp.eq.s32.totalorder %v748, 1
        %vm781 = vcmp.eq.s32.totalorder %v749, 1
        %vm782 = vcmp.eq.s32.totalorder %v750, 1
        %vm783 = vcmp.eq.s32.totalorder %v751, 1
        %vm784 = vcmp.eq.s32.totalorder %v752, 1
        %vm785 = vcmp.eq.s32.totalorder %v753, 1
        %vm786 = vcmp.eq.s32.totalorder %v754, 1
        %vm787 = vcmp.eq.s32.totalorder %v755, 1
        %vm788 = vcmp.eq.s32.totalorder %v756, 1
        %vm789 = vcmp.eq.s32.totalorder %v757, 1
        %vm790 = vcmp.eq.s32.totalorder %v758, 1
        %vm791 = vcmp.eq.s32.totalorder %v759, 1
        %vm792 = vcmp.eq.s32.totalorder %v760, 1
        %vm793 = vcmp.eq.s32.totalorder %v761, 1
        %vm794 = vcmp.eq.s32.totalorder %v762, 1
        %vm795 = vcmp.eq.s32.totalorder %v763, 1
        %vm796 = vcmp.eq.s32.totalorder %v764, 1
        %vm797 = vcmp.eq.s32.totalorder %v765, 1
        %v798 = vsel %vm766, %v377, 0.0
        %v799 = vsel %vm767, %v378, 0.0
        %v800 = vsel %vm768, %v347, 0.0
        %v801 = vsel %vm769, %v348, 0.0
        %v802 = vsel %vm770, %v349, 0.0
        %v803 = vsel %vm771, %v350, 0.0
        %v804 = vsel %vm772, %v351, 0.0
        %v805 = vsel %vm773, %v352, 0.0
        %v806 = vsel %vm774, %v353, 0.0
        %v807 = vsel %vm775, %v354, 0.0
        %v808 = vsel %vm776, %v355, 0.0
        %v809 = vsel %vm777, %v356, 0.0
        %v810 = vsel %vm778, %v357, 0.0
        %v811 = vsel %vm779, %v358, 0.0
        %v812 = vsel %vm780, %v359, 0.0
        %v813 = vsel %vm781, %v360, 0.0
        %v814 = vsel %vm782, %v361, 0.0
        %v815 = vsel %vm783, %v362, 0.0
        %v816 = vsel %vm784, %v363, 0.0
        %v817 = vsel %vm785, %v364, 0.0
        %v818 = vsel %vm786, %v365, 0.0
        %v819 = vsel %vm787, %v366, 0.0
        %v820 = vsel %vm788, %v367, 0.0
        %v821 = vsel %vm789, %v368, 0.0
        %v822 = vsel %vm790, %v369, 0.0
        %v823 = vsel %vm791, %v370, 0.0
        %v824 = vsel %vm792, %v371, 0.0
        %v825 = vsel %vm793, %v372, 0.0
        %v826 = vsel %vm794, %v373, 0.0
        %v827 = vsel %vm795, %v374, 0.0
        %v828 = vsel %vm796, %v375, 0.0
        %v829 = vsel %vm797, %v376, 0.0
        %v830 = vpack.c.bf16 %v799, %v798
        %v831 = vpack.c.bf16 %v801, %v800
        %v832 = vpack.c.bf16 %v803, %v802
        %v833 = vpack.c.bf16 %v805, %v804
        %v834 = vpack.c.bf16 %v807, %v806
        %v835 = vpack.c.bf16 %v809, %v808
        %v836 = vpack.c.bf16 %v811, %v810
        %v837 = vpack.c.bf16 %v813, %v812
        %v838 = vpack.c.bf16 %v815, %v814
        %v839 = vpack.c.bf16 %v817, %v816
        %v840 = vpack.c.bf16 %v819, %v818
        %v841 = vpack.c.bf16 %v821, %v820
        %v842 = vpack.c.bf16 %v823, %v822
        %v843 = vpack.c.bf16 %v825, %v824
        %v844 = vpack.c.bf16 %v827, %v826
        %v845 = vpack.c.bf16 %v829, %v828
        %s846 = scalar_lea.vmem [#allocation7], 64
        %v847 = vld [vmem:[%s846] sm:$0xf]
        %v848 = vld [vmem:[%s846 + $0x4] sm:$0xf]
        %v849 = vld [vmem:[%s846 + $0x8] sm:$0xf]
        %v850 = vld [vmem:[%s846 + $0xc] sm:$0xf]
        %v851 = vld [vmem:[%s846 + $0x10] sm:$0xf]
        %v852 = vld [vmem:[%s846 + $0x14] sm:$0xf]
        %v853 = vld [vmem:[%s846 + $0x18] sm:$0xf]
        %v854 = vld [vmem:[%s846 + $0x1c] sm:$0xf]
        %v855 = vld [vmem:[%s846 + $0x20] sm:$0xf]
        %v856 = vld [vmem:[%s846 + $0x24] sm:$0xf]
        %v857 = vld [vmem:[%s846 + $0x28] sm:$0xf]
        %v858 = vld [vmem:[%s846 + $0x2c] sm:$0xf]
        %v859 = vld [vmem:[%s846 + $0x30] sm:$0xf]
        %v860 = vld [vmem:[%s846 + $0x34] sm:$0xf]
        %v861 = vld [vmem:[%s846 + $0x38] sm:$0xf]
        %v862 = vld [vmem:[%s846 + $0x3c] sm:$0xf]
        %v879 = vunpack.c.l.b16 %v847
        %v880 = vunpack.c.l.b16 %v848
        %v881 = vunpack.c.l.b16 %v849
        %v882 = vunpack.c.l.b16 %v850
        %v883 = vunpack.c.l.b16 %v851
        %v884 = vunpack.c.l.b16 %v852
        %v885 = vunpack.c.l.b16 %v853
        %v886 = vunpack.c.l.b16 %v854
        %v887 = vunpack.c.l.b16 %v855
        %v888 = vunpack.c.l.b16 %v856
        %v889 = vunpack.c.l.b16 %v857
        %v890 = vunpack.c.l.b16 %v858
        %v891 = vunpack.c.l.b16 %v859
        %v892 = vunpack.c.l.b16 %v860
        %v893 = vunpack.c.l.b16 %v861
        %v894 = vunpack.c.l.b16 %v862
        %v895 = vpack.c.b16 %v880, %v879
        %v896 = vpack.c.b16 %v882, %v881
        %v897 = vpack.c.b16 %v884, %v883
        %v898 = vpack.c.b16 %v886, %v885
        %v899 = vpack.c.b16 %v888, %v887
        %v900 = vpack.c.b16 %v890, %v889
        %v901 = vpack.c.b16 %v892, %v891
        %v902 = vpack.c.b16 %v894, %v893
        %911 = vmatpush.bf16.msra.mxu0 %v902
        %912 = vmatpush.bf16.msra.mxu0 %v901
        %913 = vmatpush.bf16.msra.mxu0 %v900
        %914 = vmatpush.bf16.msra.mxu0 %v899
        %915 = vmatpush.bf16.msra.mxu0 %v898
        %916 = vmatpush.bf16.msra.mxu0 %v897
        %917 = vmatpush.bf16.msra.mxu0 %v896
        %918 = vmatpush.bf16.msra.mxu0 %v895
        %919 = vmatmul.bf16.gmra.mxu0 %v830
        %v920 = vpop.f32.mrf.mxu0
        %v921 = vadd.f32 0.0, %v920
        %v922 = vpop.f32.mrf.mxu0
        %v923 = vadd.f32 0.0, %v922
        %924 = vmatmul.bf16.gmra.mxu0 %v831
        %v925 = vpop.f32.mrf.mxu0
        %v926 = vadd.f32 0.0, %v925
        %v927 = vpop.f32.mrf.mxu0
        %v928 = vadd.f32 0.0, %v927
        %929 = vmatmul.bf16.gmra.mxu0 %v832
        %v930 = vpop.f32.mrf.mxu0
        %v931 = vadd.f32 0.0, %v930
        %v932 = vpop.f32.mrf.mxu0
        %v933 = vadd.f32 0.0, %v932
        %934 = vmatmul.bf16.gmra.mxu0 %v833
        %v935 = vpop.f32.mrf.mxu0
        %v936 = vadd.f32 0.0, %v935
        %v937 = vpop.f32.mrf.mxu0
        %v938 = vadd.f32 0.0, %v937
        %939 = vmatmul.bf16.gmra.mxu0 %v834
        %v940 = vpop.f32.mrf.mxu0
        %v941 = vadd.f32 0.0, %v940
        %v942 = vpop.f32.mrf.mxu0
        %v943 = vadd.f32 0.0, %v942
        %944 = vmatmul.bf16.gmra.mxu0 %v835
        %v945 = vpop.f32.mrf.mxu0
        %v946 = vadd.f32 0.0, %v945
        %v947 = vpop.f32.mrf.mxu0
        %v948 = vadd.f32 0.0, %v947
        %949 = vmatmul.bf16.gmra.mxu0 %v836
        %v950 = vpop.f32.mrf.mxu0
        %v951 = vadd.f32 0.0, %v950
        %v952 = vpop.f32.mrf.mxu0
        %v953 = vadd.f32 0.0, %v952
        %954 = vmatmul.bf16.gmra.mxu0 %v837
        %v955 = vpop.f32.mrf.mxu0
        %v956 = vadd.f32 0.0, %v955
        %v957 = vpop.f32.mrf.mxu0
        %v958 = vadd.f32 0.0, %v957
        %959 = vmatmul.bf16.gmra.mxu0 %v838
        %v960 = vpop.f32.mrf.mxu0
        %v961 = vadd.f32 0.0, %v960
        %v962 = vpop.f32.mrf.mxu0
        %v963 = vadd.f32 0.0, %v962
        %964 = vmatmul.bf16.gmra.mxu0 %v839
        %v965 = vpop.f32.mrf.mxu0
        %v966 = vadd.f32 0.0, %v965
        %v967 = vpop.f32.mrf.mxu0
        %v968 = vadd.f32 0.0, %v967
        %969 = vmatmul.bf16.gmra.mxu0 %v840
        %v970 = vpop.f32.mrf.mxu0
        %v971 = vadd.f32 0.0, %v970
        %v972 = vpop.f32.mrf.mxu0
        %v973 = vadd.f32 0.0, %v972
        %974 = vmatmul.bf16.gmra.mxu0 %v841
        %v975 = vpop.f32.mrf.mxu0
        %v976 = vadd.f32 0.0, %v975
        %v977 = vpop.f32.mrf.mxu0
        %v978 = vadd.f32 0.0, %v977
        %979 = vmatmul.bf16.gmra.mxu0 %v842
        %v980 = vpop.f32.mrf.mxu0
        %v981 = vadd.f32 0.0, %v980
        %v982 = vpop.f32.mrf.mxu0
        %v983 = vadd.f32 0.0, %v982
        %984 = vmatmul.bf16.gmra.mxu0 %v843
        %v985 = vpop.f32.mrf.mxu0
        %v986 = vadd.f32 0.0, %v985
        %v987 = vpop.f32.mrf.mxu0
        %v988 = vadd.f32 0.0, %v987
        %989 = vmatmul.bf16.gmra.mxu0 %v844
        %v990 = vpop.f32.mrf.mxu0
        %v991 = vadd.f32 0.0, %v990
        %v992 = vpop.f32.mrf.mxu0
        %v993 = vadd.f32 0.0, %v992
        %994 = vmatmul.bf16.gmra.mxu0 %v845
        %v995 = vpop.f32.mrf.mxu0
        %v996 = vadd.f32 0.0, %v995
        %v997 = vpop.f32.mrf.mxu0
        %v998 = vadd.f32 0.0, %v997
        %999 = vdwg.mxu0
        %v1016 = vunpack.c.l.b16 %v718
        %v1017 = vunpack.c.l.b16 %v719
        %v1018 = vunpack.c.l.b16 %v720
        %v1019 = vunpack.c.l.b16 %v721
        %v1020 = vunpack.c.l.b16 %v722
        %v1021 = vunpack.c.l.b16 %v723
        %v1022 = vunpack.c.l.b16 %v724
        %v1023 = vunpack.c.l.b16 %v725
        %v1024 = vunpack.c.l.b16 %v726
        %v1025 = vunpack.c.l.b16 %v727
        %v1026 = vunpack.c.l.b16 %v728
        %v1027 = vunpack.c.l.b16 %v729
        %v1028 = vunpack.c.l.b16 %v730
        %v1029 = vunpack.c.l.b16 %v731
        %v1030 = vunpack.c.l.b16 %v732
        %v1031 = vunpack.c.l.b16 %v733
        %v1032 = vpack.c.b16 %v1017, %v1016
        %v1033 = vpack.c.b16 %v1019, %v1018
        %v1034 = vpack.c.b16 %v1021, %v1020
        %v1035 = vpack.c.b16 %v1023, %v1022
        %v1036 = vpack.c.b16 %v1025, %v1024
        %v1037 = vpack.c.b16 %v1027, %v1026
        %v1038 = vpack.c.b16 %v1029, %v1028
        %v1039 = vpack.c.b16 %v1031, %v1030
        %1048 = vmatpush.bf16.msra.mxu0 %v1039
        %1049 = vmatpush.bf16.msra.mxu0 %v1038
        %1050 = vmatpush.bf16.msra.mxu0 %v1037
        %1051 = vmatpush.bf16.msra.mxu0 %v1036
        %1052 = vmatpush.bf16.msra.mxu0 %v1035
        %1053 = vmatpush.bf16.msra.mxu0 %v1034
        %1054 = vmatpush.bf16.msra.mxu0 %v1033
        %1055 = vmatpush.bf16.msra.mxu0 %v1032
        %1056 = vmatmul.bf16.gmra.mxu0 %v702
        %v1057 = vpop.f32.mrf.mxu0
        %v1058 = vadd.f32 %v921, %v1057
        %v1059 = vpop.f32.mrf.mxu0
        %v1060 = vadd.f32 %v923, %v1059
        %1061 = vmatmul.bf16.gmra.mxu0 %v703
        %v1062 = vpop.f32.mrf.mxu0
        %v1063 = vadd.f32 %v926, %v1062
        %v1064 = vpop.f32.mrf.mxu0
        %v1065 = vadd.f32 %v928, %v1064
        %1066 = vmatmul.bf16.gmra.mxu0 %v704
        %v1067 = vpop.f32.mrf.mxu0
        %v1068 = vadd.f32 %v931, %v1067
        %v1069 = vpop.f32.mrf.mxu0
        %v1070 = vadd.f32 %v933, %v1069
        %1071 = vmatmul.bf16.gmra.mxu0 %v705
        %v1072 = vpop.f32.mrf.mxu0
        %v1073 = vadd.f32 %v936, %v1072
        %v1074 = vpop.f32.mrf.mxu0
        %v1075 = vadd.f32 %v938, %v1074
        %1076 = vmatmul.bf16.gmra.mxu0 %v706
        %v1077 = vpop.f32.mrf.mxu0
        %v1078 = vadd.f32 %v941, %v1077
        %v1079 = vpop.f32.mrf.mxu0
        %v1080 = vadd.f32 %v943, %v1079
        %1081 = vmatmul.bf16.gmra.mxu0 %v707
        %v1082 = vpop.f32.mrf.mxu0
        %v1083 = vadd.f32 %v946, %v1082
        %v1084 = vpop.f32.mrf.mxu0
        %v1085 = vadd.f32 %v948, %v1084
        %1086 = vmatmul.bf16.gmra.mxu0 %v708
        %v1087 = vpop.f32.mrf.mxu0
        %v1088 = vadd.f32 %v951, %v1087
        %v1089 = vpop.f32.mrf.mxu0
        %v1090 = vadd.f32 %v953, %v1089
        %1091 = vmatmul.bf16.gmra.mxu0 %v709
        %v1092 = vpop.f32.mrf.mxu0
        %v1093 = vadd.f32 %v956, %v1092
        %v1094 = vpop.f32.mrf.mxu0
        %v1095 = vadd.f32 %v958, %v1094
        %1096 = vmatmul.bf16.gmra.mxu0 %v710
        %v1097 = vpop.f32.mrf.mxu0
        %v1098 = vadd.f32 %v961, %v1097
        %v1099 = vpop.f32.mrf.mxu0
        %v1100 = vadd.f32 %v963, %v1099
        %1101 = vmatmul.bf16.gmra.mxu0 %v711
        %v1102 = vpop.f32.mrf.mxu0
        %v1103 = vadd.f32 %v966, %v1102
        %v1104 = vpop.f32.mrf.mxu0
        %v1105 = vadd.f32 %v968, %v1104
        %1106 = vmatmul.bf16.gmra.mxu0 %v712
        %v1107 = vpop.f32.mrf.mxu0
        %v1108 = vadd.f32 %v971, %v1107
        %v1109 = vpop.f32.mrf.mxu0
        %v1110 = vadd.f32 %v973, %v1109
        %1111 = vmatmul.bf16.gmra.mxu0 %v713
        %v1112 = vpop.f32.mrf.mxu0
        %v1113 = vadd.f32 %v976, %v1112
        %v1114 = vpop.f32.mrf.mxu0
        %v1115 = vadd.f32 %v978, %v1114
        %1116 = vmatmul.bf16.gmra.mxu0 %v714
        %v1117 = vpop.f32.mrf.mxu0
        %v1118 = vadd.f32 %v981, %v1117
        %v1119 = vpop.f32.mrf.mxu0
        %v1120 = vadd.f32 %v983, %v1119
        %1121 = vmatmul.bf16.gmra.mxu0 %v715
        %v1122 = vpop.f32.mrf.mxu0
        %v1123 = vadd.f32 %v986, %v1122
        %v1124 = vpop.f32.mrf.mxu0
        %v1125 = vadd.f32 %v988, %v1124
        %1126 = vmatmul.bf16.gmra.mxu0 %v716
        %v1127 = vpop.f32.mrf.mxu0
        %v1128 = vadd.f32 %v991, %v1127
        %v1129 = vpop.f32.mrf.mxu0
        %v1130 = vadd.f32 %v993, %v1129
        %1131 = vmatmul.bf16.gmra.mxu0 %v717
        %v1132 = vpop.f32.mrf.mxu0
        %v1133 = vadd.f32 %v996, %v1132
        %v1134 = vpop.f32.mrf.mxu0
        %v1135 = vadd.f32 %v998, %v1134
        %1136 = vdwg.mxu0
        %v1137 = vrot.slane %v347, 1
        %v1138 = vrot.slane %v348, 1
        %v1139 = vrot.slane %v349, 1
        %v1140 = vrot.slane %v350, 1
        %v1141 = vrot.slane %v351, 1
        %v1142 = vrot.slane %v352, 1
        %v1143 = vrot.slane %v353, 1
        %v1144 = vrot.slane %v354, 1
        %v1145 = vrot.slane %v355, 1
        %v1146 = vrot.slane %v356, 1
        %v1147 = vrot.slane %v357, 1
        %v1148 = vrot.slane %v358, 1
        %v1149 = vrot.slane %v359, 1
        %v1150 = vrot.slane %v360, 1
        %v1151 = vrot.slane %v361, 1
        %v1152 = vrot.slane %v362, 1
        %v1153 = vrot.slane %v363, 1
        %v1154 = vrot.slane %v364, 1
        %v1155 = vrot.slane %v365, 1
        %v1156 = vrot.slane %v366, 1
        %v1157 = vrot.slane %v367, 1
        %v1158 = vrot.slane %v368, 1
        %v1159 = vrot.slane %v369, 1
        %v1160 = vrot.slane %v370, 1
        %v1161 = vrot.slane %v371, 1
        %v1162 = vrot.slane %v372, 1
        %v1163 = vrot.slane %v373, 1
        %v1164 = vrot.slane %v374, 1
        %v1165 = vrot.slane %v375, 1
        %v1166 = vrot.slane %v376, 1
        %v1167 = vrot.slane %v377, 1
        %v1168 = vrot.slane %v378, 1
        %vm1169 = vcmp.lt.s32.totalorder %v381, 7
        %v1170 = vsel %vm1169, %v1167, %v1168
        %v1171 = vsel %vm1169, %v1166, %v1167
        %v1172 = vsel %vm1169, %v1165, %v1166
        %v1173 = vsel %vm1169, %v1164, %v1165
        %v1174 = vsel %vm1169, %v1163, %v1164
        %v1175 = vsel %vm1169, %v1162, %v1163
        %v1176 = vsel %vm1169, %v1161, %v1162
        %v1177 = vsel %vm1169, %v1160, %v1161
        %v1178 = vsel %vm1169, %v1159, %v1160
        %v1179 = vsel %vm1169, %v1158, %v1159
        %v1180 = vsel %vm1169, %v1157, %v1158
        %v1181 = vsel %vm1169, %v1156, %v1157
        %v1182 = vsel %vm1169, %v1155, %v1156
        %v1183 = vsel %vm1169, %v1154, %v1155
        %v1184 = vsel %vm1169, %v1153, %v1154
        %v1185 = vsel %vm1169, %v1152, %v1153
        %v1186 = vsel %vm1169, %v1151, %v1152
        %v1187 = vsel %vm1169, %v1150, %v1151
        %v1188 = vsel %vm1169, %v1149, %v1150
        %v1189 = vsel %vm1169, %v1148, %v1149
        %v1190 = vsel %vm1169, %v1147, %v1148
        %v1191 = vsel %vm1169, %v1146, %v1147
        %v1192 = vsel %vm1169, %v1145, %v1146
        %v1193 = vsel %vm1169, %v1144, %v1145
        %v1194 = vsel %vm1169, %v1143, %v1144
        %v1195 = vsel %vm1169, %v1142, %v1143
        %v1196 = vsel %vm1169, %v1141, %v1142
        %v1197 = vsel %vm1169, %v1140, %v1141
        %v1198 = vsel %vm1169, %v1139, %v1140
        %v1199 = vsel %vm1169, %v1138, %v1139
        %v1200 = vsel %vm1169, %v1137, %v1138
        %v1201 = vsel %vm1169, %v1168, %v1137
        %vm1202 = vcmp.lt.s32.totalorder %v413, 15
        %vm1203 = vcmp.lt.s32.totalorder %v414, 15
        %vm1204 = vcmp.lt.s32.totalorder %v415, 15
        %vm1205 = vcmp.lt.s32.totalorder %v416, 15
        %vm1206 = vcmp.lt.s32.totalorder %v417, 15
        %vm1207 = vcmp.lt.s32.totalorder %v418, 15
        %vm1208 = vcmp.lt.s32.totalorder %v419, 15
        %vm1209 = vcmp.lt.s32.totalorder %v420, 15
        %vm1210 = vcmp.lt.s32.totalorder %v421, 15
        %vm1211 = vcmp.lt.s32.totalorder %v422, 15
        %vm1212 = vcmp.lt.s32.totalorder %v423, 15
        %vm1213 = vcmp.lt.s32.totalorder %v424, 15
        %vm1214 = vcmp.lt.s32.totalorder %v425, 15
        %vm1215 = vcmp.lt.s32.totalorder %v426, 15
        %vm1216 = vcmp.lt.s32.totalorder %v427, 15
        %vm1217 = vcmp.lt.s32.totalorder %v428, 15
        %vm1218 = vcmp.lt.s32.totalorder %v429, 15
        %vm1219 = vcmp.lt.s32.totalorder %v430, 15
        %vm1220 = vcmp.lt.s32.totalorder %v431, 15
        %vm1221 = vcmp.lt.s32.totalorder %v432, 15
        %vm1222 = vcmp.lt.s32.totalorder %v433, 15
        %vm1223 = vcmp.lt.s32.totalorder %v434, 15
        %vm1224 = vcmp.lt.s32.totalorder %v435, 15
        %vm1225 = vcmp.lt.s32.totalorder %v436, 15
        %vm1226 = vcmp.lt.s32.totalorder %v437, 15
        %vm1227 = vcmp.lt.s32.totalorder %v438, 15
        %vm1228 = vcmp.lt.s32.totalorder %v439, 15
        %vm1229 = vcmp.lt.s32.totalorder %v440, 15
        %vm1230 = vcmp.lt.s32.totalorder %v441, 15
        %vm1231 = vcmp.lt.s32.totalorder %v442, 15
        %vm1232 = vcmp.lt.s32.totalorder %v443, 15
        %vm1233 = vcmp.lt.s32.totalorder %v444, 15
        %vm1234 = vmand %vm510, %vm1202
        %vm1235 = vmand %vm511, %vm1203
        %vm1236 = vmand %vm512, %vm1204
        %vm1237 = vmand %vm513, %vm1205
        %vm1238 = vmand %vm514, %vm1206
        %vm1239 = vmand %vm515, %vm1207
        %vm1240 = vmand %vm516, %vm1208
        %vm1241 = vmand %vm517, %vm1209
        %vm1242 = vmand %vm518, %vm1210
        %vm1243 = vmand %vm519, %vm1211
        %vm1244 = vmand %vm520, %vm1212
        %vm1245 = vmand %vm521, %vm1213
        %vm1246 = vmand %vm522, %vm1214
        %vm1247 = vmand %vm523, %vm1215
        %vm1248 = vmand %vm524, %vm1216
        %vm1249 = vmand %vm525, %vm1217
        %vm1250 = vmand %vm526, %vm1218
        %vm1251 = vmand %vm527, %vm1219
        %vm1252 = vmand %vm528, %vm1220
        %vm1253 = vmand %vm529, %vm1221
        %vm1254 = vmand %vm530, %vm1222
        %vm1255 = vmand %vm531, %vm1223
        %vm1256 = vmand %vm532, %vm1224
        %vm1257 = vmand %vm533, %vm1225
        %vm1258 = vmand %vm534, %vm1226
        %vm1259 = vmand %vm535, %vm1227
        %vm1260 = vmand %vm536, %vm1228
        %vm1261 = vmand %vm537, %vm1229
        %vm1262 = vmand %vm538, %vm1230
        %vm1263 = vmand %vm539, %vm1231
        %vm1264 = vmand %vm540, %vm1232
        %vm1265 = vmand %vm541, %vm1233
        %v1266 = vsel %vm1234, 1, 0
        %v1267 = vsel %vm1235, 1, 0
        %v1268 = vsel %vm1236, 1, 0
        %v1269 = vsel %vm1237, 1, 0
        %v1270 = vsel %vm1238, 1, 0
        %v1271 = vsel %vm1239, 1, 0
        %v1272 = vsel %vm1240, 1, 0
        %v1273 = vsel %vm1241, 1, 0
        %v1274 = vsel %vm1242, 1, 0
        %v1275 = vsel %vm1243, 1, 0
        %v1276 = vsel %vm1244, 1, 0
        %v1277 = vsel %vm1245, 1, 0
        %v1278 = vsel %vm1246, 1, 0
        %v1279 = vsel %vm1247, 1, 0
        %v1280 = vsel %vm1248, 1, 0
        %v1281 = vsel %vm1249, 1, 0
        %v1282 = vsel %vm1250, 1, 0
        %v1283 = vsel %vm1251, 1, 0
        %v1284 = vsel %vm1252, 1, 0
        %v1285 = vsel %vm1253, 1, 0
        %v1286 = vsel %vm1254, 1, 0
        %v1287 = vsel %vm1255, 1, 0
        %v1288 = vsel %vm1256, 1, 0
        %v1289 = vsel %vm1257, 1, 0
        %v1290 = vsel %vm1258, 1, 0
        %v1291 = vsel %vm1259, 1, 0
        %v1292 = vsel %vm1260, 1, 0
        %v1293 = vsel %vm1261, 1, 0
        %v1294 = vsel %vm1262, 1, 0
        %v1295 = vsel %vm1263, 1, 0
        %v1296 = vsel %vm1264, 1, 0
        %v1297 = vsel %vm1265, 1, 0
        %vm1298 = vcmp.eq.s32.totalorder %v1266, 1
        %vm1299 = vcmp.eq.s32.totalorder %v1267, 1
        %vm1300 = vcmp.eq.s32.totalorder %v1268, 1
        %vm1301 = vcmp.eq.s32.totalorder %v1269, 1
        %vm1302 = vcmp.eq.s32.totalorder %v1270, 1
        %vm1303 = vcmp.eq.s32.totalorder %v1271, 1
        %vm1304 = vcmp.eq.s32.totalorder %v1272, 1
        %vm1305 = vcmp.eq.s32.totalorder %v1273, 1
        %vm1306 = vcmp.eq.s32.totalorder %v1274, 1
        %vm1307 = vcmp.eq.s32.totalorder %v1275, 1
        %vm1308 = vcmp.eq.s32.totalorder %v1276, 1
        %vm1309 = vcmp.eq.s32.totalorder %v1277, 1
        %vm1310 = vcmp.eq.s32.totalorder %v1278, 1
        %vm1311 = vcmp.eq.s32.totalorder %v1279, 1
        %vm1312 = vcmp.eq.s32.totalorder %v1280, 1
        %vm1313 = vcmp.eq.s32.totalorder %v1281, 1
        %vm1314 = vcmp.eq.s32.totalorder %v1282, 1
        %vm1315 = vcmp.eq.s32.totalorder %v1283, 1
        %vm1316 = vcmp.eq.s32.totalorder %v1284, 1
        %vm1317 = vcmp.eq.s32.totalorder %v1285, 1
        %vm1318 = vcmp.eq.s32.totalorder %v1286, 1
        %vm1319 = vcmp.eq.s32.totalorder %v1287, 1
        %vm1320 = vcmp.eq.s32.totalorder %v1288, 1
        %vm1321 = vcmp.eq.s32.totalorder %v1289, 1
        %vm1322 = vcmp.eq.s32.totalorder %v1290, 1
        %vm1323 = vcmp.eq.s32.totalorder %v1291, 1
        %vm1324 = vcmp.eq.s32.totalorder %v1292, 1
        %vm1325 = vcmp.eq.s32.totalorder %v1293, 1
        %vm1326 = vcmp.eq.s32.totalorder %v1294, 1
        %vm1327 = vcmp.eq.s32.totalorder %v1295, 1
        %vm1328 = vcmp.eq.s32.totalorder %v1296, 1
        %vm1329 = vcmp.eq.s32.totalorder %v1297, 1
        %v1330 = vsel %vm1298, %v1170, 0.0
        %v1331 = vsel %vm1299, %v1201, 0.0
        %v1332 = vsel %vm1300, %v1200, 0.0
        %v1333 = vsel %vm1301, %v1199, 0.0
        %v1334 = vsel %vm1302, %v1198, 0.0
        %v1335 = vsel %vm1303, %v1197, 0.0
        %v1336 = vsel %vm1304, %v1196, 0.0
        %v1337 = vsel %vm1305, %v1195, 0.0
        %v1338 = vsel %vm1306, %v1194, 0.0
        %v1339 = vsel %vm1307, %v1193, 0.0
        %v1340 = vsel %vm1308, %v1192, 0.0
        %v1341 = vsel %vm1309, %v1191, 0.0
        %v1342 = vsel %vm1310, %v1190, 0.0
        %v1343 = vsel %vm1311, %v1189, 0.0
        %v1344 = vsel %vm1312, %v1188, 0.0
        %v1345 = vsel %vm1313, %v1187, 0.0
        %v1346 = vsel %vm1314, %v1186, 0.0
        %v1347 = vsel %vm1315, %v1185, 0.0
        %v1348 = vsel %vm1316, %v1184, 0.0
        %v1349 = vsel %vm1317, %v1183, 0.0
        %v1350 = vsel %vm1318, %v1182, 0.0
        %v1351 = vsel %vm1319, %v1181, 0.0
        %v1352 = vsel %vm1320, %v1180, 0.0
        %v1353 = vsel %vm1321, %v1179, 0.0
        %v1354 = vsel %vm1322, %v1178, 0.0
        %v1355 = vsel %vm1323, %v1177, 0.0
        %v1356 = vsel %vm1324, %v1176, 0.0
        %v1357 = vsel %vm1325, %v1175, 0.0
        %v1358 = vsel %vm1326, %v1174, 0.0
        %v1359 = vsel %vm1327, %v1173, 0.0
        %v1360 = vsel %vm1328, %v1172, 0.0
        %v1361 = vsel %vm1329, %v1171, 0.0
        %v1362 = vpack.c.bf16 %v1331, %v1330
        %v1363 = vpack.c.bf16 %v1333, %v1332
        %v1364 = vpack.c.bf16 %v1335, %v1334
        %v1365 = vpack.c.bf16 %v1337, %v1336
        %v1366 = vpack.c.bf16 %v1339, %v1338
        %v1367 = vpack.c.bf16 %v1341, %v1340
        %v1368 = vpack.c.bf16 %v1343, %v1342
        %v1369 = vpack.c.bf16 %v1345, %v1344
        %v1370 = vpack.c.bf16 %v1347, %v1346
        %v1371 = vpack.c.bf16 %v1349, %v1348
        %v1372 = vpack.c.bf16 %v1351, %v1350
        %v1373 = vpack.c.bf16 %v1353, %v1352
        %v1374 = vpack.c.bf16 %v1355, %v1354
        %v1375 = vpack.c.bf16 %v1357, %v1356
        %v1376 = vpack.c.bf16 %v1359, %v1358
        %v1377 = vpack.c.bf16 %v1361, %v1360
        %s1378 = scalar_lea.vmem [#allocation7], 128
        %v1379 = vld [vmem:[%s1378] sm:$0xf]
        %v1380 = vld [vmem:[%s1378 + $0x4] sm:$0xf]
        %v1381 = vld [vmem:[%s1378 + $0x8] sm:$0xf]
        %v1382 = vld [vmem:[%s1378 + $0xc] sm:$0xf]
        %v1383 = vld [vmem:[%s1378 + $0x10] sm:$0xf]
        %v1384 = vld [vmem:[%s1378 + $0x14] sm:$0xf]
        %v1385 = vld [vmem:[%s1378 + $0x18] sm:$0xf]
        %v1386 = vld [vmem:[%s1378 + $0x1c] sm:$0xf]
        %v1387 = vld [vmem:[%s1378 + $0x20] sm:$0xf]
        %v1388 = vld [vmem:[%s1378 + $0x24] sm:$0xf]
        %v1389 = vld [vmem:[%s1378 + $0x28] sm:$0xf]
        %v1390 = vld [vmem:[%s1378 + $0x2c] sm:$0xf]
        %v1391 = vld [vmem:[%s1378 + $0x30] sm:$0xf]
        %v1392 = vld [vmem:[%s1378 + $0x34] sm:$0xf]
        %v1393 = vld [vmem:[%s1378 + $0x38] sm:$0xf]
        %v1394 = vld [vmem:[%s1378 + $0x3c] sm:$0xf]
        %v1411 = vunpack.c.l.b16 %v1379
        %v1412 = vunpack.c.l.b16 %v1380
        %v1413 = vunpack.c.l.b16 %v1381
        %v1414 = vunpack.c.l.b16 %v1382
        %v1415 = vunpack.c.l.b16 %v1383
        %v1416 = vunpack.c.l.b16 %v1384
        %v1417 = vunpack.c.l.b16 %v1385
        %v1418 = vunpack.c.l.b16 %v1386
        %v1419 = vunpack.c.l.b16 %v1387
        %v1420 = vunpack.c.l.b16 %v1388
        %v1421 = vunpack.c.l.b16 %v1389
        %v1422 = vunpack.c.l.b16 %v1390
        %v1423 = vunpack.c.l.b16 %v1391
        %v1424 = vunpack.c.l.b16 %v1392
        %v1425 = vunpack.c.l.b16 %v1393
        %v1426 = vunpack.c.l.b16 %v1394
        %v1427 = vpack.c.b16 %v1412, %v1411
        %v1428 = vpack.c.b16 %v1414, %v1413
        %v1429 = vpack.c.b16 %v1416, %v1415
        %v1430 = vpack.c.b16 %v1418, %v1417
        %v1431 = vpack.c.b16 %v1420, %v1419
        %v1432 = vpack.c.b16 %v1422, %v1421
        %v1433 = vpack.c.b16 %v1424, %v1423
        %v1434 = vpack.c.b16 %v1426, %v1425
        %1443 = vmatpush.bf16.msra.mxu0 %v1434
        %1444 = vmatpush.bf16.msra.mxu0 %v1433
        %1445 = vmatpush.bf16.msra.mxu0 %v1432
        %1446 = vmatpush.bf16.msra.mxu0 %v1431
        %1447 = vmatpush.bf16.msra.mxu0 %v1430
        %1448 = vmatpush.bf16.msra.mxu0 %v1429
        %1449 = vmatpush.bf16.msra.mxu0 %v1428
        %1450 = vmatpush.bf16.msra.mxu0 %v1427
        %1451 = vmatmul.bf16.gmra.mxu0 %v1362
        %v1452 = vpop.f32.mrf.mxu0
        %v1453 = vadd.f32 0.0, %v1452
        %v1454 = vpop.f32.mrf.mxu0
        %v1455 = vadd.f32 0.0, %v1454
        %1456 = vmatmul.bf16.gmra.mxu0 %v1363
        %v1457 = vpop.f32.mrf.mxu0
        %v1458 = vadd.f32 0.0, %v1457
        %v1459 = vpop.f32.mrf.mxu0
        %v1460 = vadd.f32 0.0, %v1459
        %1461 = vmatmul.bf16.gmra.mxu0 %v1364
        %v1462 = vpop.f32.mrf.mxu0
        %v1463 = vadd.f32 0.0, %v1462
        %v1464 = vpop.f32.mrf.mxu0
        %v1465 = vadd.f32 0.0, %v1464
        %1466 = vmatmul.bf16.gmra.mxu0 %v1365
        %v1467 = vpop.f32.mrf.mxu0
        %v1468 = vadd.f32 0.0, %v1467
        %v1469 = vpop.f32.mrf.mxu0
        %v1470 = vadd.f32 0.0, %v1469
        %1471 = vmatmul.bf16.gmra.mxu0 %v1366
        %v1472 = vpop.f32.mrf.mxu0
        %v1473 = vadd.f32 0.0, %v1472
        %v1474 = vpop.f32.mrf.mxu0
        %v1475 = vadd.f32 0.0, %v1474
        %1476 = vmatmul.bf16.gmra.mxu0 %v1367
        %v1477 = vpop.f32.mrf.mxu0
        %v1478 = vadd.f32 0.0, %v1477
        %v1479 = vpop.f32.mrf.mxu0
        %v1480 = vadd.f32 0.0, %v1479
        %1481 = vmatmul.bf16.gmra.mxu0 %v1368
        %v1482 = vpop.f32.mrf.mxu0
        %v1483 = vadd.f32 0.0, %v1482
        %v1484 = vpop.f32.mrf.mxu0
        %v1485 = vadd.f32 0.0, %v1484
        %1486 = vmatmul.bf16.gmra.mxu0 %v1369
        %v1487 = vpop.f32.mrf.mxu0
        %v1488 = vadd.f32 0.0, %v1487
        %v1489 = vpop.f32.mrf.mxu0
        %v1490 = vadd.f32 0.0, %v1489
        %1491 = vmatmul.bf16.gmra.mxu0 %v1370
        %v1492 = vpop.f32.mrf.mxu0
        %v1493 = vadd.f32 0.0, %v1492
        %v1494 = vpop.f32.mrf.mxu0
        %v1495 = vadd.f32 0.0, %v1494
        %1496 = vmatmul.bf16.gmra.mxu0 %v1371
        %v1497 = vpop.f32.mrf.mxu0
        %v1498 = vadd.f32 0.0, %v1497
        %v1499 = vpop.f32.mrf.mxu0
        %v1500 = vadd.f32 0.0, %v1499
        %1501 = vmatmul.bf16.gmra.mxu0 %v1372
        %v1502 = vpop.f32.mrf.mxu0
        %v1503 = vadd.f32 0.0, %v1502
        %v1504 = vpop.f32.mrf.mxu0
        %v1505 = vadd.f32 0.0, %v1504
        %1506 = vmatmul.bf16.gmra.mxu0 %v1373
        %v1507 = vpop.f32.mrf.mxu0
        %v1508 = vadd.f32 0.0, %v1507
        %v1509 = vpop.f32.mrf.mxu0
        %v1510 = vadd.f32 0.0, %v1509
        %1511 = vmatmul.bf16.gmra.mxu0 %v1374
        %v1512 = vpop.f32.mrf.mxu0
        %v1513 = vadd.f32 0.0, %v1512
        %v1514 = vpop.f32.mrf.mxu0
        %v1515 = vadd.f32 0.0, %v1514
        %1516 = vmatmul.bf16.gmra.mxu0 %v1375
        %v1517 = vpop.f32.mrf.mxu0
        %v1518 = vadd.f32 0.0, %v1517
        %v1519 = vpop.f32.mrf.mxu0
        %v1520 = vadd.f32 0.0, %v1519
        %1521 = vmatmul.bf16.gmra.mxu0 %v1376
        %v1522 = vpop.f32.mrf.mxu0
        %v1523 = vadd.f32 0.0, %v1522
        %v1524 = vpop.f32.mrf.mxu0
        %v1525 = vadd.f32 0.0, %v1524
        %1526 = vmatmul.bf16.gmra.mxu0 %v1377
        %v1527 = vpop.f32.mrf.mxu0
        %v1528 = vadd.f32 0.0, %v1527
        %v1529 = vpop.f32.mrf.mxu0
        %v1530 = vadd.f32 0.0, %v1529
        %1531 = vdwg.mxu0
        %v1532 = vadd.f32 %v1058, %v1453
        %v1533 = vadd.f32 %v1060, %v1455
        %v1534 = vadd.f32 %v1063, %v1458
        %v1535 = vadd.f32 %v1065, %v1460
        %v1536 = vadd.f32 %v1068, %v1463
        %v1537 = vadd.f32 %v1070, %v1465
        %v1538 = vadd.f32 %v1073, %v1468
        %v1539 = vadd.f32 %v1075, %v1470
        %v1540 = vadd.f32 %v1078, %v1473
        %v1541 = vadd.f32 %v1080, %v1475
        %v1542 = vadd.f32 %v1083, %v1478
        %v1543 = vadd.f32 %v1085, %v1480
        %v1544 = vadd.f32 %v1088, %v1483
        %v1545 = vadd.f32 %v1090, %v1485
        %v1546 = vadd.f32 %v1093, %v1488
        %v1547 = vadd.f32 %v1095, %v1490
        %v1548 = vadd.f32 %v1098, %v1493
        %v1549 = vadd.f32 %v1100, %v1495
        %v1550 = vadd.f32 %v1103, %v1498
        %v1551 = vadd.f32 %v1105, %v1500
        %v1552 = vadd.f32 %v1108, %v1503
        %v1553 = vadd.f32 %v1110, %v1505
        %v1554 = vadd.f32 %v1113, %v1508
        %v1555 = vadd.f32 %v1115, %v1510
        %v1556 = vadd.f32 %v1118, %v1513
        %v1557 = vadd.f32 %v1120, %v1515
        %v1558 = vadd.f32 %v1123, %v1518
        %v1559 = vadd.f32 %v1125, %v1520
        %v1560 = vadd.f32 %v1128, %v1523
        %v1561 = vadd.f32 %v1130, %v1525
        %v1562 = vadd.f32 %v1133, %v1528
        %v1563 = vadd.f32 %v1135, %v1530
        %v1564 = vsel %vm542, 1, 0
        %v1565 = vsel %vm543, 1, 0
        %v1566 = vsel %vm544, 1, 0
        %v1567 = vsel %vm545, 1, 0
        %v1568 = vsel %vm546, 1, 0
        %v1569 = vsel %vm547, 1, 0
        %v1570 = vsel %vm548, 1, 0
        %v1571 = vsel %vm549, 1, 0
        %v1572 = vsel %vm550, 1, 0
        %v1573 = vsel %vm551, 1, 0
        %v1574 = vsel %vm552, 1, 0
        %v1575 = vsel %vm553, 1, 0
        %v1576 = vsel %vm554, 1, 0
        %v1577 = vsel %vm555, 1, 0
        %v1578 = vsel %vm556, 1, 0
        %v1579 = vsel %vm557, 1, 0
        %v1580 = vsel %vm558, 1, 0
        %v1581 = vsel %vm559, 1, 0
        %v1582 = vsel %vm560, 1, 0
        %v1583 = vsel %vm561, 1, 0
        %v1584 = vsel %vm562, 1, 0
        %v1585 = vsel %vm563, 1, 0
        %v1586 = vsel %vm564, 1, 0
        %v1587 = vsel %vm565, 1, 0
        %v1588 = vsel %vm566, 1, 0
        %v1589 = vsel %vm567, 1, 0
        %v1590 = vsel %vm568, 1, 0
        %v1591 = vsel %vm569, 1, 0
        %v1592 = vsel %vm570, 1, 0
        %v1593 = vsel %vm571, 1, 0
        %v1594 = vsel %vm572, 1, 0
        %v1595 = vsel %vm573, 1, 0
        %vm1596 = vcmp.eq.s32.totalorder %v1564, 1
        %vm1597 = vcmp.eq.s32.totalorder %v1565, 1
        %vm1598 = vcmp.eq.s32.totalorder %v1566, 1
        %vm1599 = vcmp.eq.s32.totalorder %v1567, 1
        %vm1600 = vcmp.eq.s32.totalorder %v1568, 1
        %vm1601 = vcmp.eq.s32.totalorder %v1569, 1
        %vm1602 = vcmp.eq.s32.totalorder %v1570, 1
        %vm1603 = vcmp.eq.s32.totalorder %v1571, 1
        %vm1604 = vcmp.eq.s32.totalorder %v1572, 1
        %vm1605 = vcmp.eq.s32.totalorder %v1573, 1
        %vm1606 = vcmp.eq.s32.totalorder %v1574, 1
        %vm1607 = vcmp.eq.s32.totalorder %v1575, 1
        %vm1608 = vcmp.eq.s32.totalorder %v1576, 1
        %vm1609 = vcmp.eq.s32.totalorder %v1577, 1
        %vm1610 = vcmp.eq.s32.totalorder %v1578, 1
        %vm1611 = vcmp.eq.s32.totalorder %v1579, 1
        %vm1612 = vcmp.eq.s32.totalorder %v1580, 1
        %vm1613 = vcmp.eq.s32.totalorder %v1581, 1
        %vm1614 = vcmp.eq.s32.totalorder %v1582, 1
        %vm1615 = vcmp.eq.s32.totalorder %v1583, 1
        %vm1616 = vcmp.eq.s32.totalorder %v1584, 1
        %vm1617 = vcmp.eq.s32.totalorder %v1585, 1
        %vm1618 = vcmp.eq.s32.totalorder %v1586, 1
        %vm1619 = vcmp.eq.s32.totalorder %v1587, 1
        %vm1620 = vcmp.eq.s32.totalorder %v1588, 1
        %vm1621 = vcmp.eq.s32.totalorder %v1589, 1
        %vm1622 = vcmp.eq.s32.totalorder %v1590, 1
        %vm1623 = vcmp.eq.s32.totalorder %v1591, 1
        %vm1624 = vcmp.eq.s32.totalorder %v1592, 1
        %vm1625 = vcmp.eq.s32.totalorder %v1593, 1
        %vm1626 = vcmp.eq.s32.totalorder %v1594, 1
        %vm1627 = vcmp.eq.s32.totalorder %v1595, 1
        %v1628 = vsel %vm1596, %v509, 0.0
        %v1629 = vsel %vm1597, %v508, 0.0
        %v1630 = vsel %vm1598, %v507, 0.0
        %v1631 = vsel %vm1599, %v506, 0.0
        %v1632 = vsel %vm1600, %v505, 0.0
        %v1633 = vsel %vm1601, %v504, 0.0
        %v1634 = vsel %vm1602, %v503, 0.0
        %v1635 = vsel %vm1603, %v502, 0.0
        %v1636 = vsel %vm1604, %v501, 0.0
        %v1637 = vsel %vm1605, %v500, 0.0
        %v1638 = vsel %vm1606, %v499, 0.0
        %v1639 = vsel %vm1607, %v498, 0.0
        %v1640 = vsel %vm1608, %v497, 0.0
        %v1641 = vsel %vm1609, %v496, 0.0
        %v1642 = vsel %vm1610, %v495, 0.0
        %v1643 = vsel %vm1611, %v494, 0.0
        %v1644 = vsel %vm1612, %v493, 0.0
        %v1645 = vsel %vm1613, %v492, 0.0
        %v1646 = vsel %vm1614, %v491, 0.0
        %v1647 = vsel %vm1615, %v490, 0.0
        %v1648 = vsel %vm1616, %v489, 0.0
        %v1649 = vsel %vm1617, %v488, 0.0
        %v1650 = vsel %vm1618, %v487, 0.0
        %v1651 = vsel %vm1619, %v486, 0.0
        %v1652 = vsel %vm1620, %v485, 0.0
        %v1653 = vsel %vm1621, %v484, 0.0
        %v1654 = vsel %vm1622, %v483, 0.0
        %v1655 = vsel %vm1623, %v482, 0.0
        %v1656 = vsel %vm1624, %v481, 0.0
        %v1657 = vsel %vm1625, %v480, 0.0
        %v1658 = vsel %vm1626, %v479, 0.0
        %v1659 = vsel %vm1627, %v478, 0.0
        %v1660 = vpack.c.bf16 %v1629, %v1628
        %v1661 = vpack.c.bf16 %v1631, %v1630
        %v1662 = vpack.c.bf16 %v1633, %v1632
        %v1663 = vpack.c.bf16 %v1635, %v1634
        %v1664 = vpack.c.bf16 %v1637, %v1636
        %v1665 = vpack.c.bf16 %v1639, %v1638
        %v1666 = vpack.c.bf16 %v1641, %v1640
        %v1667 = vpack.c.bf16 %v1643, %v1642
        %v1668 = vpack.c.bf16 %v1645, %v1644
        %v1669 = vpack.c.bf16 %v1647, %v1646
        %v1670 = vpack.c.bf16 %v1649, %v1648
        %v1671 = vpack.c.bf16 %v1651, %v1650
        %v1672 = vpack.c.bf16 %v1653, %v1652
        %v1673 = vpack.c.bf16 %v1655, %v1654
        %v1674 = vpack.c.bf16 %v1657, %v1656
        %v1675 = vpack.c.bf16 %v1659, %v1658
        %s1676 = scalar_lea.vmem [#allocation7], 192
        %v1677 = vld [vmem:[%s1676] sm:$0xf]
        %v1678 = vld [vmem:[%s1676 + $0x4] sm:$0xf]
        %v1679 = vld [vmem:[%s1676 + $0x8] sm:$0xf]
        %v1680 = vld [vmem:[%s1676 + $0xc] sm:$0xf]
        %v1681 = vld [vmem:[%s1676 + $0x10] sm:$0xf]
        %v1682 = vld [vmem:[%s1676 + $0x14] sm:$0xf]
        %v1683 = vld [vmem:[%s1676 + $0x18] sm:$0xf]
        %v1684 = vld [vmem:[%s1676 + $0x1c] sm:$0xf]
        %v1685 = vld [vmem:[%s1676 + $0x20] sm:$0xf]
        %v1686 = vld [vmem:[%s1676 + $0x24] sm:$0xf]
        %v1687 = vld [vmem:[%s1676 + $0x28] sm:$0xf]
        %v1688 = vld [vmem:[%s1676 + $0x2c] sm:$0xf]
        %v1689 = vld [vmem:[%s1676 + $0x30] sm:$0xf]
        %v1690 = vld [vmem:[%s1676 + $0x34] sm:$0xf]
        %v1691 = vld [vmem:[%s1676 + $0x38] sm:$0xf]
        %v1692 = vld [vmem:[%s1676 + $0x3c] sm:$0xf]
        %v1709 = vunpack.c.l.b16 %v1677
        %v1710 = vunpack.c.l.b16 %v1678
        %v1711 = vunpack.c.l.b16 %v1679
        %v1712 = vunpack.c.l.b16 %v1680
        %v1713 = vunpack.c.l.b16 %v1681
        %v1714 = vunpack.c.l.b16 %v1682
        %v1715 = vunpack.c.l.b16 %v1683
        %v1716 = vunpack.c.l.b16 %v1684
        %v1717 = vunpack.c.l.b16 %v1685
        %v1718 = vunpack.c.l.b16 %v1686
        %v1719 = vunpack.c.l.b16 %v1687
        %v1720 = vunpack.c.l.b16 %v1688
        %v1721 = vunpack.c.l.b16 %v1689
        %v1722 = vunpack.c.l.b16 %v1690
        %v1723 = vunpack.c.l.b16 %v1691
        %v1724 = vunpack.c.l.b16 %v1692
        %v1725 = vpack.c.b16 %v1710, %v1709
        %v1726 = vpack.c.b16 %v1712, %v1711
        %v1727 = vpack.c.b16 %v1714, %v1713
        %v1728 = vpack.c.b16 %v1716, %v1715
        %v1729 = vpack.c.b16 %v1718, %v1717
        %v1730 = vpack.c.b16 %v1720, %v1719
        %v1731 = vpack.c.b16 %v1722, %v1721
        %v1732 = vpack.c.b16 %v1724, %v1723
        %1741 = vmatpush.bf16.msra.mxu0 %v1732
        %1742 = vmatpush.bf16.msra.mxu0 %v1731
        %1743 = vmatpush.bf16.msra.mxu0 %v1730
        %1744 = vmatpush.bf16.msra.mxu0 %v1729
        %1745 = vmatpush.bf16.msra.mxu0 %v1728
        %1746 = vmatpush.bf16.msra.mxu0 %v1727
        %1747 = vmatpush.bf16.msra.mxu0 %v1726
        %1748 = vmatpush.bf16.msra.mxu0 %v1725
        %1749 = vmatmul.bf16.gmra.mxu0 %v1660
        %v1750 = vpop.f32.mrf.mxu0
        %v1751 = vadd.f32 0.0, %v1750
        %v1752 = vpop.f32.mrf.mxu0
        %v1753 = vadd.f32 0.0, %v1752
        %1754 = vmatmul.bf16.gmra.mxu0 %v1661
        %v1755 = vpop.f32.mrf.mxu0
        %v1756 = vadd.f32 0.0, %v1755
        %v1757 = vpop.f32.mrf.mxu0
        %v1758 = vadd.f32 0.0, %v1757
        %1759 = vmatmul.bf16.gmra.mxu0 %v1662
        %v1760 = vpop.f32.mrf.mxu0
        %v1761 = vadd.f32 0.0, %v1760
        %v1762 = vpop.f32.mrf.mxu0
        %v1763 = vadd.f32 0.0, %v1762
        %1764 = vmatmul.bf16.gmra.mxu0 %v1663
        %v1765 = vpop.f32.mrf.mxu0
        %v1766 = vadd.f32 0.0, %v1765
        %v1767 = vpop.f32.mrf.mxu0
        %v1768 = vadd.f32 0.0, %v1767
        %1769 = vmatmul.bf16.gmra.mxu0 %v1664
        %v1770 = vpop.f32.mrf.mxu0
        %v1771 = vadd.f32 0.0, %v1770
        %v1772 = vpop.f32.mrf.mxu0
        %v1773 = vadd.f32 0.0, %v1772
        %1774 = vmatmul.bf16.gmra.mxu0 %v1665
        %v1775 = vpop.f32.mrf.mxu0
        %v1776 = vadd.f32 0.0, %v1775
        %v1777 = vpop.f32.mrf.mxu0
        %v1778 = vadd.f32 0.0, %v1777
        %1779 = vmatmul.bf16.gmra.mxu0 %v1666
        %v1780 = vpop.f32.mrf.mxu0
        %v1781 = vadd.f32 0.0, %v1780
        %v1782 = vpop.f32.mrf.mxu0
        %v1783 = vadd.f32 0.0, %v1782
        %1784 = vmatmul.bf16.gmra.mxu0 %v1667
        %v1785 = vpop.f32.mrf.mxu0
        %v1786 = vadd.f32 0.0, %v1785
        %v1787 = vpop.f32.mrf.mxu0
        %v1788 = vadd.f32 0.0, %v1787
        %1789 = vmatmul.bf16.gmra.mxu0 %v1668
        %v1790 = vpop.f32.mrf.mxu0
        %v1791 = vadd.f32 0.0, %v1790
        %v1792 = vpop.f32.mrf.mxu0
        %v1793 = vadd.f32 0.0, %v1792
        %1794 = vmatmul.bf16.gmra.mxu0 %v1669
        %v1795 = vpop.f32.mrf.mxu0
        %v1796 = vadd.f32 0.0, %v1795
        %v1797 = vpop.f32.mrf.mxu0
        %v1798 = vadd.f32 0.0, %v1797
        %1799 = vmatmul.bf16.gmra.mxu0 %v1670
        %v1800 = vpop.f32.mrf.mxu0
        %v1801 = vadd.f32 0.0, %v1800
        %v1802 = vpop.f32.mrf.mxu0
        %v1803 = vadd.f32 0.0, %v1802
        %1804 = vmatmul.bf16.gmra.mxu0 %v1671
        %v1805 = vpop.f32.mrf.mxu0
        %v1806 = vadd.f32 0.0, %v1805
        %v1807 = vpop.f32.mrf.mxu0
        %v1808 = vadd.f32 0.0, %v1807
        %1809 = vmatmul.bf16.gmra.mxu0 %v1672
        %v1810 = vpop.f32.mrf.mxu0
        %v1811 = vadd.f32 0.0, %v1810
        %v1812 = vpop.f32.mrf.mxu0
        %v1813 = vadd.f32 0.0, %v1812
        %1814 = vmatmul.bf16.gmra.mxu0 %v1673
        %v1815 = vpop.f32.mrf.mxu0
        %v1816 = vadd.f32 0.0, %v1815
        %v1817 = vpop.f32.mrf.mxu0
        %v1818 = vadd.f32 0.0, %v1817
        %1819 = vmatmul.bf16.gmra.mxu0 %v1674
        %v1820 = vpop.f32.mrf.mxu0
        %v1821 = vadd.f32 0.0, %v1820
        %v1822 = vpop.f32.mrf.mxu0
        %v1823 = vadd.f32 0.0, %v1822
        %1824 = vmatmul.bf16.gmra.mxu0 %v1675
        %v1825 = vpop.f32.mrf.mxu0
        %v1826 = vadd.f32 0.0, %v1825
        %v1827 = vpop.f32.mrf.mxu0
        %v1828 = vadd.f32 0.0, %v1827
        %1829 = vdwg.mxu0
        %v1830 = vadd.f32 %v1532, %v1751
        %v1831 = vadd.f32 %v1533, %v1753
        %v1832 = vadd.f32 %v1534, %v1756
        %v1833 = vadd.f32 %v1535, %v1758
        %v1834 = vadd.f32 %v1536, %v1761
        %v1835 = vadd.f32 %v1537, %v1763
        %v1836 = vadd.f32 %v1538, %v1766
        %v1837 = vadd.f32 %v1539, %v1768
        %v1838 = vadd.f32 %v1540, %v1771
        %v1839 = vadd.f32 %v1541, %v1773
        %v1840 = vadd.f32 %v1542, %v1776
        %v1841 = vadd.f32 %v1543, %v1778
        %v1842 = vadd.f32 %v1544, %v1781
        %v1843 = vadd.f32 %v1545, %v1783
        %v1844 = vadd.f32 %v1546, %v1786
        %v1845 = vadd.f32 %v1547, %v1788
        %v1846 = vadd.f32 %v1548, %v1791
        %v1847 = vadd.f32 %v1549, %v1793
        %v1848 = vadd.f32 %v1550, %v1796
        %v1849 = vadd.f32 %v1551, %v1798
        %v1850 = vadd.f32 %v1552, %v1801
        %v1851 = vadd.f32 %v1553, %v1803
        %v1852 = vadd.f32 %v1554, %v1806
        %v1853 = vadd.f32 %v1555, %v1808
        %v1854 = vadd.f32 %v1556, %v1811
        %v1855 = vadd.f32 %v1557, %v1813
        %v1856 = vadd.f32 %v1558, %v1816
        %v1857 = vadd.f32 %v1559, %v1818
        %v1858 = vadd.f32 %v1560, %v1821
        %v1859 = vadd.f32 %v1561, %v1823
        %v1860 = vadd.f32 %v1562, %v1826
        %v1861 = vadd.f32 %v1563, %v1828
        %v1862 = vpack.c.bf16 %v348, %v347
        %v1863 = vpack.c.bf16 %v350, %v349
        %v1864 = vpack.c.bf16 %v352, %v351
        %v1865 = vpack.c.bf16 %v354, %v353
        %v1866 = vpack.c.bf16 %v356, %v355
        %v1867 = vpack.c.bf16 %v358, %v357
        %v1868 = vpack.c.bf16 %v360, %v359
        %v1869 = vpack.c.bf16 %v362, %v361
        %v1870 = vpack.c.bf16 %v364, %v363
        %v1871 = vpack.c.bf16 %v366, %v365
        %v1872 = vpack.c.bf16 %v368, %v367
        %v1873 = vpack.c.bf16 %v370, %v369
        %v1874 = vpack.c.bf16 %v372, %v371
        %v1875 = vpack.c.bf16 %v374, %v373
        %v1876 = vpack.c.bf16 %v376, %v375
        %v1877 = vpack.c.bf16 %v378, %v377
        %s1878 = scalar_lea.vmem [#allocation7], 256
        %v1879 = vld [vmem:[%s1878] sm:$0xf]
        %v1880 = vld [vmem:[%s1878 + $0x4] sm:$0xf]
        %v1881 = vld [vmem:[%s1878 + $0x8] sm:$0xf]
        %v1882 = vld [vmem:[%s1878 + $0xc] sm:$0xf]
        %v1883 = vld [vmem:[%s1878 + $0x10] sm:$0xf]
        %v1884 = vld [vmem:[%s1878 + $0x14] sm:$0xf]
        %v1885 = vld [vmem:[%s1878 + $0x18] sm:$0xf]
        %v1886 = vld [vmem:[%s1878 + $0x1c] sm:$0xf]
        %v1887 = vld [vmem:[%s1878 + $0x20] sm:$0xf]
        %v1888 = vld [vmem:[%s1878 + $0x24] sm:$0xf]
        %v1889 = vld [vmem:[%s1878 + $0x28] sm:$0xf]
        %v1890 = vld [vmem:[%s1878 + $0x2c] sm:$0xf]
        %v1891 = vld [vmem:[%s1878 + $0x30] sm:$0xf]
        %v1892 = vld [vmem:[%s1878 + $0x34] sm:$0xf]
        %v1893 = vld [vmem:[%s1878 + $0x38] sm:$0xf]
        %v1894 = vld [vmem:[%s1878 + $0x3c] sm:$0xf]
        %v1911 = vunpack.c.l.b16 %v1879
        %v1912 = vunpack.c.l.b16 %v1880
        %v1913 = vunpack.c.l.b16 %v1881
        %v1914 = vunpack.c.l.b16 %v1882
        %v1915 = vunpack.c.l.b16 %v1883
        %v1916 = vunpack.c.l.b16 %v1884
        %v1917 = vunpack.c.l.b16 %v1885
        %v1918 = vunpack.c.l.b16 %v1886
        %v1919 = vunpack.c.l.b16 %v1887
        %v1920 = vunpack.c.l.b16 %v1888
        %v1921 = vunpack.c.l.b16 %v1889
        %v1922 = vunpack.c.l.b16 %v1890
        %v1923 = vunpack.c.l.b16 %v1891
        %v1924 = vunpack.c.l.b16 %v1892
        %v1925 = vunpack.c.l.b16 %v1893
        %v1926 = vunpack.c.l.b16 %v1894
        %v1927 = vpack.c.b16 %v1912, %v1911
        %v1928 = vpack.c.b16 %v1914, %v1913
        %v1929 = vpack.c.b16 %v1916, %v1915
        %v1930 = vpack.c.b16 %v1918, %v1917
        %v1931 = vpack.c.b16 %v1920, %v1919
        %v1932 = vpack.c.b16 %v1922, %v1921
        %v1933 = vpack.c.b16 %v1924, %v1923
        %v1934 = vpack.c.b16 %v1926, %v1925
        %1943 = vmatpush.bf16.msra.mxu0 %v1934
        %1944 = vmatpush.bf16.msra.mxu0 %v1933
        %1945 = vmatpush.bf16.msra.mxu0 %v1932
        %1946 = vmatpush.bf16.msra.mxu0 %v1931
        %1947 = vmatpush.bf16.msra.mxu0 %v1930
        %1948 = vmatpush.bf16.msra.mxu0 %v1929
        %1949 = vmatpush.bf16.msra.mxu0 %v1928
        %1950 = vmatpush.bf16.msra.mxu0 %v1927
        %1951 = vmatmul.bf16.gmra.mxu0 %v1862
        %v1952 = vpop.f32.mrf.mxu0
        %v1953 = vadd.f32 0.0, %v1952
        %v1954 = vpop.f32.mrf.mxu0
        %v1955 = vadd.f32 0.0, %v1954
        %1956 = vmatmul.bf16.gmra.mxu0 %v1863
        %v1957 = vpop.f32.mrf.mxu0
        %v1958 = vadd.f32 0.0, %v1957
        %v1959 = vpop.f32.mrf.mxu0
        %v1960 = vadd.f32 0.0, %v1959
        %1961 = vmatmul.bf16.gmra.mxu0 %v1864
        %v1962 = vpop.f32.mrf.mxu0
        %v1963 = vadd.f32 0.0, %v1962
        %v1964 = vpop.f32.mrf.mxu0
        %v1965 = vadd.f32 0.0, %v1964
        %1966 = vmatmul.bf16.gmra.mxu0 %v1865
        %v1967 = vpop.f32.mrf.mxu0
        %v1968 = vadd.f32 0.0, %v1967
        %v1969 = vpop.f32.mrf.mxu0
        %v1970 = vadd.f32 0.0, %v1969
        %1971 = vmatmul.bf16.gmra.mxu0 %v1866
        %v1972 = vpop.f32.mrf.mxu0
        %v1973 = vadd.f32 0.0, %v1972
        %v1974 = vpop.f32.mrf.mxu0
        %v1975 = vadd.f32 0.0, %v1974
        %1976 = vmatmul.bf16.gmra.mxu0 %v1867
        %v1977 = vpop.f32.mrf.mxu0
        %v1978 = vadd.f32 0.0, %v1977
        %v1979 = vpop.f32.mrf.mxu0
        %v1980 = vadd.f32 0.0, %v1979
        %1981 = vmatmul.bf16.gmra.mxu0 %v1868
        %v1982 = vpop.f32.mrf.mxu0
        %v1983 = vadd.f32 0.0, %v1982
        %v1984 = vpop.f32.mrf.mxu0
        %v1985 = vadd.f32 0.0, %v1984
        %1986 = vmatmul.bf16.gmra.mxu0 %v1869
        %v1987 = vpop.f32.mrf.mxu0
        %v1988 = vadd.f32 0.0, %v1987
        %v1989 = vpop.f32.mrf.mxu0
        %v1990 = vadd.f32 0.0, %v1989
        %1991 = vmatmul.bf16.gmra.mxu0 %v1870
        %v1992 = vpop.f32.mrf.mxu0
        %v1993 = vadd.f32 0.0, %v1992
        %v1994 = vpop.f32.mrf.mxu0
        %v1995 = vadd.f32 0.0, %v1994
        %1996 = vmatmul.bf16.gmra.mxu0 %v1871
        %v1997 = vpop.f32.mrf.mxu0
        %v1998 = vadd.f32 0.0, %v1997
        %v1999 = vpop.f32.mrf.mxu0
        %v2000 = vadd.f32 0.0, %v1999
        %2001 = vmatmul.bf16.gmra.mxu0 %v1872
        %v2002 = vpop.f32.mrf.mxu0
        %v2003 = vadd.f32 0.0, %v2002
        %v2004 = vpop.f32.mrf.mxu0
        %v2005 = vadd.f32 0.0, %v2004
        %2006 = vmatmul.bf16.gmra.mxu0 %v1873
        %v2007 = vpop.f32.mrf.mxu0
        %v2008 = vadd.f32 0.0, %v2007
        %v2009 = vpop.f32.mrf.mxu0
        %v2010 = vadd.f32 0.0, %v2009
        %2011 = vmatmul.bf16.gmra.mxu0 %v1874
        %v2012 = vpop.f32.mrf.mxu0
        %v2013 = vadd.f32 0.0, %v2012
        %v2014 = vpop.f32.mrf.mxu0
        %v2015 = vadd.f32 0.0, %v2014
        %2016 = vmatmul.bf16.gmra.mxu0 %v1875
        %v2017 = vpop.f32.mrf.mxu0
        %v2018 = vadd.f32 0.0, %v2017
        %v2019 = vpop.f32.mrf.mxu0
        %v2020 = vadd.f32 0.0, %v2019
        %2021 = vmatmul.bf16.gmra.mxu0 %v1876
        %v2022 = vpop.f32.mrf.mxu0
        %v2023 = vadd.f32 0.0, %v2022
        %v2024 = vpop.f32.mrf.mxu0
        %v2025 = vadd.f32 0.0, %v2024
        %2026 = vmatmul.bf16.gmra.mxu0 %v1877
        %v2027 = vpop.f32.mrf.mxu0
        %v2028 = vadd.f32 0.0, %v2027
        %v2029 = vpop.f32.mrf.mxu0
        %v2030 = vadd.f32 0.0, %v2029
        %2031 = vdwg.mxu0
        %v2032 = vadd.f32 %v1830, %v1953
        %v2033 = vadd.f32 %v1831, %v1955
        %v2034 = vadd.f32 %v1832, %v1958
        %v2035 = vadd.f32 %v1833, %v1960
        %v2036 = vadd.f32 %v1834, %v1963
        %v2037 = vadd.f32 %v1835, %v1965
        %v2038 = vadd.f32 %v1836, %v1968
        %v2039 = vadd.f32 %v1837, %v1970
        %v2040 = vadd.f32 %v1838, %v1973
        %v2041 = vadd.f32 %v1839, %v1975
        %v2042 = vadd.f32 %v1840, %v1978
        %v2043 = vadd.f32 %v1841, %v1980
        %v2044 = vadd.f32 %v1842, %v1983
        %v2045 = vadd.f32 %v1843, %v1985
        %v2046 = vadd.f32 %v1844, %v1988
        %v2047 = vadd.f32 %v1845, %v1990
        %v2048 = vadd.f32 %v1846, %v1993
        %v2049 = vadd.f32 %v1847, %v1995
        %v2050 = vadd.f32 %v1848, %v1998
        %v2051 = vadd.f32 %v1849, %v2000
        %v2052 = vadd.f32 %v1850, %v2003
        %v2053 = vadd.f32 %v1851, %v2005
        %v2054 = vadd.f32 %v1852, %v2008
        %v2055 = vadd.f32 %v1853, %v2010
        %v2056 = vadd.f32 %v1854, %v2013
        %v2057 = vadd.f32 %v1855, %v2015
        %v2058 = vadd.f32 %v1856, %v2018
        %v2059 = vadd.f32 %v1857, %v2020
        %v2060 = vadd.f32 %v1858, %v2023
        %v2061 = vadd.f32 %v1859, %v2025
        %v2062 = vadd.f32 %v1860, %v2028
        %v2063 = vadd.f32 %v1861, %v2030
        %v2064 = vsel %vm1202, 1, 0
        %v2065 = vsel %vm1203, 1, 0
        %v2066 = vsel %vm1204, 1, 0
        %v2067 = vsel %vm1205, 1, 0
        %v2068 = vsel %vm1206, 1, 0
        %v2069 = vsel %vm1207, 1, 0
        %v2070 = vsel %vm1208, 1, 0
        %v2071 = vsel %vm1209, 1, 0
        %v2072 = vsel %vm1210, 1, 0
        %v2073 = vsel %vm1211, 1, 0
        %v2074 = vsel %vm1212, 1, 0
        %v2075 = vsel %vm1213, 1, 0
        %v2076 = vsel %vm1214, 1, 0
        %v2077 = vsel %vm1215, 1, 0
        %v2078 = vsel %vm1216, 1, 0
        %v2079 = vsel %vm1217, 1, 0
        %v2080 = vsel %vm1218, 1, 0
        %v2081 = vsel %vm1219, 1, 0
        %v2082 = vsel %vm1220, 1, 0
        %v2083 = vsel %vm1221, 1, 0
        %v2084 = vsel %vm1222, 1, 0
        %v2085 = vsel %vm1223, 1, 0
        %v2086 = vsel %vm1224, 1, 0
        %v2087 = vsel %vm1225, 1, 0
        %v2088 = vsel %vm1226, 1, 0
        %v2089 = vsel %vm1227, 1, 0
        %v2090 = vsel %vm1228, 1, 0
        %v2091 = vsel %vm1229, 1, 0
        %v2092 = vsel %vm1230, 1, 0
        %v2093 = vsel %vm1231, 1, 0
        %v2094 = vsel %vm1232, 1, 0
        %v2095 = vsel %vm1233, 1, 0
        %vm2096 = vcmp.eq.s32.totalorder %v2064, 1
        %vm2097 = vcmp.eq.s32.totalorder %v2065, 1
        %vm2098 = vcmp.eq.s32.totalorder %v2066, 1
        %vm2099 = vcmp.eq.s32.totalorder %v2067, 1
        %vm2100 = vcmp.eq.s32.totalorder %v2068, 1
        %vm2101 = vcmp.eq.s32.totalorder %v2069, 1
        %vm2102 = vcmp.eq.s32.totalorder %v2070, 1
        %vm2103 = vcmp.eq.s32.totalorder %v2071, 1
        %vm2104 = vcmp.eq.s32.totalorder %v2072, 1
        %vm2105 = vcmp.eq.s32.totalorder %v2073, 1
        %vm2106 = vcmp.eq.s32.totalorder %v2074, 1
        %vm2107 = vcmp.eq.s32.totalorder %v2075, 1
        %vm2108 = vcmp.eq.s32.totalorder %v2076, 1
        %vm2109 = vcmp.eq.s32.totalorder %v2077, 1
        %vm2110 = vcmp.eq.s32.totalorder %v2078, 1
        %vm2111 = vcmp.eq.s32.totalorder %v2079, 1
        %vm2112 = vcmp.eq.s32.totalorder %v2080, 1
        %vm2113 = vcmp.eq.s32.totalorder %v2081, 1
        %vm2114 = vcmp.eq.s32.totalorder %v2082, 1
        %vm2115 = vcmp.eq.s32.totalorder %v2083, 1
        %vm2116 = vcmp.eq.s32.totalorder %v2084, 1
        %vm2117 = vcmp.eq.s32.totalorder %v2085, 1
        %vm2118 = vcmp.eq.s32.totalorder %v2086, 1
        %vm2119 = vcmp.eq.s32.totalorder %v2087, 1
        %vm2120 = vcmp.eq.s32.totalorder %v2088, 1
        %vm2121 = vcmp.eq.s32.totalorder %v2089, 1
        %vm2122 = vcmp.eq.s32.totalorder %v2090, 1
        %vm2123 = vcmp.eq.s32.totalorder %v2091, 1
        %vm2124 = vcmp.eq.s32.totalorder %v2092, 1
        %vm2125 = vcmp.eq.s32.totalorder %v2093, 1
        %vm2126 = vcmp.eq.s32.totalorder %v2094, 1
        %vm2127 = vcmp.eq.s32.totalorder %v2095, 1
        %v2128 = vsel %vm2096, %v1200, 0.0
        %v2129 = vsel %vm2097, %v1199, 0.0
        %v2130 = vsel %vm2098, %v1198, 0.0
        %v2131 = vsel %vm2099, %v1197, 0.0
        %v2132 = vsel %vm2100, %v1196, 0.0
        %v2133 = vsel %vm2101, %v1195, 0.0
        %v2134 = vsel %vm2102, %v1194, 0.0
        %v2135 = vsel %vm2103, %v1193, 0.0
        %v2136 = vsel %vm2104, %v1192, 0.0
        %v2137 = vsel %vm2105, %v1191, 0.0
        %v2138 = vsel %vm2106, %v1190, 0.0
        %v2139 = vsel %vm2107, %v1189, 0.0
        %v2140 = vsel %vm2108, %v1188, 0.0
        %v2141 = vsel %vm2109, %v1187, 0.0
        %v2142 = vsel %vm2110, %v1186, 0.0
        %v2143 = vsel %vm2111, %v1185, 0.0
        %v2144 = vsel %vm2112, %v1184, 0.0
        %v2145 = vsel %vm2113, %v1183, 0.0
        %v2146 = vsel %vm2114, %v1182, 0.0
        %v2147 = vsel %vm2115, %v1181, 0.0
        %v2148 = vsel %vm2116, %v1180, 0.0
        %v2149 = vsel %vm2117, %v1179, 0.0
        %v2150 = vsel %vm2118, %v1178, 0.0
        %v2151 = vsel %vm2119, %v1177, 0.0
        %v2152 = vsel %vm2120, %v1176, 0.0
        %v2153 = vsel %vm2121, %v1175, 0.0
        %v2154 = vsel %vm2122, %v1174, 0.0
        %v2155 = vsel %vm2123, %v1173, 0.0
        %v2156 = vsel %vm2124, %v1172, 0.0
        %v2157 = vsel %vm2125, %v1171, 0.0
        %v2158 = vsel %vm2126, %v1170, 0.0
        %v2159 = vsel %vm2127, %v1201, 0.0
        %v2160 = vpack.c.bf16 %v2129, %v2128
        %v2161 = vpack.c.bf16 %v2131, %v2130
        %v2162 = vpack.c.bf16 %v2133, %v2132
        %v2163 = vpack.c.bf16 %v2135, %v2134
        %v2164 = vpack.c.bf16 %v2137, %v2136
        %v2165 = vpack.c.bf16 %v2139, %v2138
        %v2166 = vpack.c.bf16 %v2141, %v2140
        %v2167 = vpack.c.bf16 %v2143, %v2142
        %v2168 = vpack.c.bf16 %v2145, %v2144
        %v2169 = vpack.c.bf16 %v2147, %v2146
        %v2170 = vpack.c.bf16 %v2149, %v2148
        %v2171 = vpack.c.bf16 %v2151, %v2150
        %v2172 = vpack.c.bf16 %v2153, %v2152
        %v2173 = vpack.c.bf16 %v2155, %v2154
        %v2174 = vpack.c.bf16 %v2157, %v2156
        %v2175 = vpack.c.bf16 %v2159, %v2158
        %s2176 = scalar_lea.vmem [#allocation7], 320
        %v2177 = vld [vmem:[%s2176] sm:$0xf]
        %v2178 = vld [vmem:[%s2176 + $0x4] sm:$0xf]
        %v2179 = vld [vmem:[%s2176 + $0x8] sm:$0xf]
        %v2180 = vld [vmem:[%s2176 + $0xc] sm:$0xf]
        %v2181 = vld [vmem:[%s2176 + $0x10] sm:$0xf]
        %v2182 = vld [vmem:[%s2176 + $0x14] sm:$0xf]
        %v2183 = vld [vmem:[%s2176 + $0x18] sm:$0xf]
        %v2184 = vld [vmem:[%s2176 + $0x1c] sm:$0xf]
        %v2185 = vld [vmem:[%s2176 + $0x20] sm:$0xf]
        %v2186 = vld [vmem:[%s2176 + $0x24] sm:$0xf]
        %v2187 = vld [vmem:[%s2176 + $0x28] sm:$0xf]
        %v2188 = vld [vmem:[%s2176 + $0x2c] sm:$0xf]
        %v2189 = vld [vmem:[%s2176 + $0x30] sm:$0xf]
        %v2190 = vld [vmem:[%s2176 + $0x34] sm:$0xf]
        %v2191 = vld [vmem:[%s2176 + $0x38] sm:$0xf]
        %v2192 = vld [vmem:[%s2176 + $0x3c] sm:$0xf]
        %v2209 = vunpack.c.l.b16 %v2177
        %v2210 = vunpack.c.l.b16 %v2178
        %v2211 = vunpack.c.l.b16 %v2179
        %v2212 = vunpack.c.l.b16 %v2180
        %v2213 = vunpack.c.l.b16 %v2181
        %v2214 = vunpack.c.l.b16 %v2182
        %v2215 = vunpack.c.l.b16 %v2183
        %v2216 = vunpack.c.l.b16 %v2184
        %v2217 = vunpack.c.l.b16 %v2185
        %v2218 = vunpack.c.l.b16 %v2186
        %v2219 = vunpack.c.l.b16 %v2187
        %v2220 = vunpack.c.l.b16 %v2188
        %v2221 = vunpack.c.l.b16 %v2189
        %v2222 = vunpack.c.l.b16 %v2190
        %v2223 = vunpack.c.l.b16 %v2191
        %v2224 = vunpack.c.l.b16 %v2192
        %v2225 = vpack.c.b16 %v2210, %v2209
        %v2226 = vpack.c.b16 %v2212, %v2211
        %v2227 = vpack.c.b16 %v2214, %v2213
        %v2228 = vpack.c.b16 %v2216, %v2215
        %v2229 = vpack.c.b16 %v2218, %v2217
        %v2230 = vpack.c.b16 %v2220, %v2219
        %v2231 = vpack.c.b16 %v2222, %v2221
        %v2232 = vpack.c.b16 %v2224, %v2223
        %2241 = vmatpush.bf16.msra.mxu0 %v2232
        %2242 = vmatpush.bf16.msra.mxu0 %v2231
        %2243 = vmatpush.bf16.msra.mxu0 %v2230
        %2244 = vmatpush.bf16.msra.mxu0 %v2229
        %2245 = vmatpush.bf16.msra.mxu0 %v2228
        %2246 = vmatpush.bf16.msra.mxu0 %v2227
        %2247 = vmatpush.bf16.msra.mxu0 %v2226
        %2248 = vmatpush.bf16.msra.mxu0 %v2225
        %2249 = vmatmul.bf16.gmra.mxu0 %v2160
        %v2250 = vpop.f32.mrf.mxu0
        %v2251 = vadd.f32 0.0, %v2250
        %v2252 = vpop.f32.mrf.mxu0
        %v2253 = vadd.f32 0.0, %v2252
        %2254 = vmatmul.bf16.gmra.mxu0 %v2161
        %v2255 = vpop.f32.mrf.mxu0
        %v2256 = vadd.f32 0.0, %v2255
        %v2257 = vpop.f32.mrf.mxu0
        %v2258 = vadd.f32 0.0, %v2257
        %2259 = vmatmul.bf16.gmra.mxu0 %v2162
        %v2260 = vpop.f32.mrf.mxu0
        %v2261 = vadd.f32 0.0, %v2260
        %v2262 = vpop.f32.mrf.mxu0
        %v2263 = vadd.f32 0.0, %v2262
        %2264 = vmatmul.bf16.gmra.mxu0 %v2163
        %v2265 = vpop.f32.mrf.mxu0
        %v2266 = vadd.f32 0.0, %v2265
        %v2267 = vpop.f32.mrf.mxu0
        %v2268 = vadd.f32 0.0, %v2267
        %2269 = vmatmul.bf16.gmra.mxu0 %v2164
        %v2270 = vpop.f32.mrf.mxu0
        %v2271 = vadd.f32 0.0, %v2270
        %v2272 = vpop.f32.mrf.mxu0
        %v2273 = vadd.f32 0.0, %v2272
        %2274 = vmatmul.bf16.gmra.mxu0 %v2165
        %v2275 = vpop.f32.mrf.mxu0
        %v2276 = vadd.f32 0.0, %v2275
        %v2277 = vpop.f32.mrf.mxu0
        %v2278 = vadd.f32 0.0, %v2277
        %2279 = vmatmul.bf16.gmra.mxu0 %v2166
        %v2280 = vpop.f32.mrf.mxu0
        %v2281 = vadd.f32 0.0, %v2280
        %v2282 = vpop.f32.mrf.mxu0
        %v2283 = vadd.f32 0.0, %v2282
        %2284 = vmatmul.bf16.gmra.mxu0 %v2167
        %v2285 = vpop.f32.mrf.mxu0
        %v2286 = vadd.f32 0.0, %v2285
        %v2287 = vpop.f32.mrf.mxu0
        %v2288 = vadd.f32 0.0, %v2287
        %2289 = vmatmul.bf16.gmra.mxu0 %v2168
        %v2290 = vpop.f32.mrf.mxu0
        %v2291 = vadd.f32 0.0, %v2290
        %v2292 = vpop.f32.mrf.mxu0
        %v2293 = vadd.f32 0.0, %v2292
        %2294 = vmatmul.bf16.gmra.mxu0 %v2169
        %v2295 = vpop.f32.mrf.mxu0
        %v2296 = vadd.f32 0.0, %v2295
        %v2297 = vpop.f32.mrf.mxu0
        %v2298 = vadd.f32 0.0, %v2297
        %2299 = vmatmul.bf16.gmra.mxu0 %v2170
        %v2300 = vpop.f32.mrf.mxu0
        %v2301 = vadd.f32 0.0, %v2300
        %v2302 = vpop.f32.mrf.mxu0
        %v2303 = vadd.f32 0.0, %v2302
        %2304 = vmatmul.bf16.gmra.mxu0 %v2171
        %v2305 = vpop.f32.mrf.mxu0
        %v2306 = vadd.f32 0.0, %v2305
        %v2307 = vpop.f32.mrf.mxu0
        %v2308 = vadd.f32 0.0, %v2307
        %2309 = vmatmul.bf16.gmra.mxu0 %v2172
        %v2310 = vpop.f32.mrf.mxu0
        %v2311 = vadd.f32 0.0, %v2310
        %v2312 = vpop.f32.mrf.mxu0
        %v2313 = vadd.f32 0.0, %v2312
        %2314 = vmatmul.bf16.gmra.mxu0 %v2173
        %v2315 = vpop.f32.mrf.mxu0
        %v2316 = vadd.f32 0.0, %v2315
        %v2317 = vpop.f32.mrf.mxu0
        %v2318 = vadd.f32 0.0, %v2317
        %2319 = vmatmul.bf16.gmra.mxu0 %v2174
        %v2320 = vpop.f32.mrf.mxu0
        %v2321 = vadd.f32 0.0, %v2320
        %v2322 = vpop.f32.mrf.mxu0
        %v2323 = vadd.f32 0.0, %v2322
        %2324 = vmatmul.bf16.gmra.mxu0 %v2175
        %v2325 = vpop.f32.mrf.mxu0
        %v2326 = vadd.f32 0.0, %v2325
        %v2327 = vpop.f32.mrf.mxu0
        %v2328 = vadd.f32 0.0, %v2327
        %2329 = vdwg.mxu0
        %v2330 = vadd.f32 %v2032, %v2251
        %v2331 = vadd.f32 %v2033, %v2253
        %v2332 = vadd.f32 %v2034, %v2256
        %v2333 = vadd.f32 %v2035, %v2258
        %v2334 = vadd.f32 %v2036, %v2261
        %v2335 = vadd.f32 %v2037, %v2263
        %v2336 = vadd.f32 %v2038, %v2266
        %v2337 = vadd.f32 %v2039, %v2268
        %v2338 = vadd.f32 %v2040, %v2271
        %v2339 = vadd.f32 %v2041, %v2273
        %v2340 = vadd.f32 %v2042, %v2276
        %v2341 = vadd.f32 %v2043, %v2278
        %v2342 = vadd.f32 %v2044, %v2281
        %v2343 = vadd.f32 %v2045, %v2283
        %v2344 = vadd.f32 %v2046, %v2286
        %v2345 = vadd.f32 %v2047, %v2288
        %v2346 = vadd.f32 %v2048, %v2291
        %v2347 = vadd.f32 %v2049, %v2293
        %v2348 = vadd.f32 %v2050, %v2296
        %v2349 = vadd.f32 %v2051, %v2298
        %v2350 = vadd.f32 %v2052, %v2301
        %v2351 = vadd.f32 %v2053, %v2303
        %v2352 = vadd.f32 %v2054, %v2306
        %v2353 = vadd.f32 %v2055, %v2308
        %v2354 = vadd.f32 %v2056, %v2311
        %v2355 = vadd.f32 %v2057, %v2313
        %v2356 = vadd.f32 %v2058, %v2316
        %v2357 = vadd.f32 %v2059, %v2318
        %v2358 = vadd.f32 %v2060, %v2321
        %v2359 = vadd.f32 %v2061, %v2323
        %v2360 = vadd.f32 %v2062, %v2326
        %v2361 = vadd.f32 %v2063, %v2328
        %vm2362 = vcmp.lt.s32.totalorder %v381, 240
        %vm2363 = vcmp.lt.s32.totalorder %v382, 240
        %vm2364 = vcmp.lt.s32.totalorder %v383, 240
        %vm2365 = vcmp.lt.s32.totalorder %v384, 240
        %vm2366 = vcmp.lt.s32.totalorder %v385, 240
        %vm2367 = vcmp.lt.s32.totalorder %v386, 240
        %vm2368 = vcmp.lt.s32.totalorder %v387, 240
        %vm2369 = vcmp.lt.s32.totalorder %v388, 240
        %vm2370 = vcmp.lt.s32.totalorder %v389, 240
        %vm2371 = vcmp.lt.s32.totalorder %v390, 240
        %vm2372 = vcmp.lt.s32.totalorder %v391, 240
        %vm2373 = vcmp.lt.s32.totalorder %v392, 240
        %vm2374 = vcmp.lt.s32.totalorder %v393, 240
        %vm2375 = vcmp.lt.s32.totalorder %v394, 240
        %vm2376 = vcmp.lt.s32.totalorder %v395, 240
        %vm2377 = vcmp.lt.s32.totalorder %v396, 240
        %vm2378 = vcmp.lt.s32.totalorder %v397, 240
        %vm2379 = vcmp.lt.s32.totalorder %v398, 240
        %vm2380 = vcmp.lt.s32.totalorder %v399, 240
        %vm2381 = vcmp.lt.s32.totalorder %v400, 240
        %vm2382 = vcmp.lt.s32.totalorder %v401, 240
        %vm2383 = vcmp.lt.s32.totalorder %v402, 240
        %vm2384 = vcmp.lt.s32.totalorder %v403, 240
        %vm2385 = vcmp.lt.s32.totalorder %v404, 240
        %vm2386 = vcmp.lt.s32.totalorder %v405, 240
        %vm2387 = vcmp.lt.s32.totalorder %v406, 240
        %vm2388 = vcmp.lt.s32.totalorder %v407, 240
        %vm2389 = vcmp.lt.s32.totalorder %v408, 240
        %vm2390 = vcmp.lt.s32.totalorder %v409, 240
        %vm2391 = vcmp.lt.s32.totalorder %v410, 240
        %vm2392 = vcmp.lt.s32.totalorder %v411, 240
        %vm2393 = vcmp.lt.s32.totalorder %v412, 240
        %vm2394 = vmand %vm2362, %vm542
        %vm2395 = vmand %vm2363, %vm543
        %vm2396 = vmand %vm2364, %vm544
        %vm2397 = vmand %vm2365, %vm545
        %vm2398 = vmand %vm2366, %vm546
        %vm2399 = vmand %vm2367, %vm547
        %vm2400 = vmand %vm2368, %vm548
        %vm2401 = vmand %vm2369, %vm549
        %vm2402 = vmand %vm2370, %vm550
        %vm2403 = vmand %vm2371, %vm551
        %vm2404 = vmand %vm2372, %vm552
        %vm2405 = vmand %vm2373, %vm553
        %vm2406 = vmand %vm2374, %vm554
        %vm2407 = vmand %vm2375, %vm555
        %vm2408 = vmand %vm2376, %vm556
        %vm2409 = vmand %vm2377, %vm557
        %vm2410 = vmand %vm2378, %vm558
        %vm2411 = vmand %vm2379, %vm559
        %vm2412 = vmand %vm2380, %vm560
        %vm2413 = vmand %vm2381, %vm561
        %vm2414 = vmand %vm2382, %vm562
        %vm2415 = vmand %vm2383, %vm563
        %vm2416 = vmand %vm2384, %vm564
        %vm2417 = vmand %vm2385, %vm565
        %vm2418 = vmand %vm2386, %vm566
        %vm2419 = vmand %vm2387, %vm567
        %vm2420 = vmand %vm2388, %vm568
        %vm2421 = vmand %vm2389, %vm569
        %vm2422 = vmand %vm2390, %vm570
        %vm2423 = vmand %vm2391, %vm571
        %vm2424 = vmand %vm2392, %vm572
        %vm2425 = vmand %vm2393, %vm573
        %v2426 = vsel %vm2394, 1, 0
        %v2427 = vsel %vm2395, 1, 0
        %v2428 = vsel %vm2396, 1, 0
        %v2429 = vsel %vm2397, 1, 0
        %v2430 = vsel %vm2398, 1, 0
        %v2431 = vsel %vm2399, 1, 0
        %v2432 = vsel %vm2400, 1, 0
        %v2433 = vsel %vm2401, 1, 0
        %v2434 = vsel %vm2402, 1, 0
        %v2435 = vsel %vm2403, 1, 0
        %v2436 = vsel %vm2404, 1, 0
        %v2437 = vsel %vm2405, 1, 0
        %v2438 = vsel %vm2406, 1, 0
        %v2439 = vsel %vm2407, 1, 0
        %v2440 = vsel %vm2408, 1, 0
        %v2441 = vsel %vm2409, 1, 0
        %v2442 = vsel %vm2410, 1, 0
        %v2443 = vsel %vm2411, 1, 0
        %v2444 = vsel %vm2412, 1, 0
        %v2445 = vsel %vm2413, 1, 0
        %v2446 = vsel %vm2414, 1, 0
        %v2447 = vsel %vm2415, 1, 0
        %v2448 = vsel %vm2416, 1, 0
        %v2449 = vsel %vm2417, 1, 0
        %v2450 = vsel %vm2418, 1, 0
        %v2451 = vsel %vm2419, 1, 0
        %v2452 = vsel %vm2420, 1, 0
        %v2453 = vsel %vm2421, 1, 0
        %v2454 = vsel %vm2422, 1, 0
        %v2455 = vsel %vm2423, 1, 0
        %v2456 = vsel %vm2424, 1, 0
        %v2457 = vsel %vm2425, 1, 0
        %vm2458 = vcmp.eq.s32.totalorder %v2426, 1
        %vm2459 = vcmp.eq.s32.totalorder %v2427, 1
        %vm2460 = vcmp.eq.s32.totalorder %v2428, 1
        %vm2461 = vcmp.eq.s32.totalorder %v2429, 1
        %vm2462 = vcmp.eq.s32.totalorder %v2430, 1
        %vm2463 = vcmp.eq.s32.totalorder %v2431, 1
        %vm2464 = vcmp.eq.s32.totalorder %v2432, 1
        %vm2465 = vcmp.eq.s32.totalorder %v2433, 1
        %vm2466 = vcmp.eq.s32.totalorder %v2434, 1
        %vm2467 = vcmp.eq.s32.totalorder %v2435, 1
        %vm2468 = vcmp.eq.s32.totalorder %v2436, 1
        %vm2469 = vcmp.eq.s32.totalorder %v2437, 1
        %vm2470 = vcmp.eq.s32.totalorder %v2438, 1
        %vm2471 = vcmp.eq.s32.totalorder %v2439, 1
        %vm2472 = vcmp.eq.s32.totalorder %v2440, 1
        %vm2473 = vcmp.eq.s32.totalorder %v2441, 1
        %vm2474 = vcmp.eq.s32.totalorder %v2442, 1
        %vm2475 = vcmp.eq.s32.totalorder %v2443, 1
        %vm2476 = vcmp.eq.s32.totalorder %v2444, 1
        %vm2477 = vcmp.eq.s32.totalorder %v2445, 1
        %vm2478 = vcmp.eq.s32.totalorder %v2446, 1
        %vm2479 = vcmp.eq.s32.totalorder %v2447, 1
        %vm2480 = vcmp.eq.s32.totalorder %v2448, 1
        %vm2481 = vcmp.eq.s32.totalorder %v2449, 1
        %vm2482 = vcmp.eq.s32.totalorder %v2450, 1
        %vm2483 = vcmp.eq.s32.totalorder %v2451, 1
        %vm2484 = vcmp.eq.s32.totalorder %v2452, 1
        %vm2485 = vcmp.eq.s32.totalorder %v2453, 1
        %vm2486 = vcmp.eq.s32.totalorder %v2454, 1
        %vm2487 = vcmp.eq.s32.totalorder %v2455, 1
        %vm2488 = vcmp.eq.s32.totalorder %v2456, 1
        %vm2489 = vcmp.eq.s32.totalorder %v2457, 1
        %v2490 = vsel %vm2458, %v507, 0.0
        %v2491 = vsel %vm2459, %v506, 0.0
        %v2492 = vsel %vm2460, %v505, 0.0
        %v2493 = vsel %vm2461, %v504, 0.0
        %v2494 = vsel %vm2462, %v503, 0.0
        %v2495 = vsel %vm2463, %v502, 0.0
        %v2496 = vsel %vm2464, %v501, 0.0
        %v2497 = vsel %vm2465, %v500, 0.0
        %v2498 = vsel %vm2466, %v499, 0.0
        %v2499 = vsel %vm2467, %v498, 0.0
        %v2500 = vsel %vm2468, %v497, 0.0
        %v2501 = vsel %vm2469, %v496, 0.0
        %v2502 = vsel %vm2470, %v495, 0.0
        %v2503 = vsel %vm2471, %v494, 0.0
        %v2504 = vsel %vm2472, %v493, 0.0
        %v2505 = vsel %vm2473, %v492, 0.0
        %v2506 = vsel %vm2474, %v491, 0.0
        %v2507 = vsel %vm2475, %v490, 0.0
        %v2508 = vsel %vm2476, %v489, 0.0
        %v2509 = vsel %vm2477, %v488, 0.0
        %v2510 = vsel %vm2478, %v487, 0.0
        %v2511 = vsel %vm2479, %v486, 0.0
        %v2512 = vsel %vm2480, %v485, 0.0
        %v2513 = vsel %vm2481, %v484, 0.0
        %v2514 = vsel %vm2482, %v483, 0.0
        %v2515 = vsel %vm2483, %v482, 0.0
        %v2516 = vsel %vm2484, %v481, 0.0
        %v2517 = vsel %vm2485, %v480, 0.0
        %v2518 = vsel %vm2486, %v479, 0.0
        %v2519 = vsel %vm2487, %v478, 0.0
        %v2520 = vsel %vm2488, %v509, 0.0
        %v2521 = vsel %vm2489, %v508, 0.0
        %v2522 = vpack.c.bf16 %v2491, %v2490
        %v2523 = vpack.c.bf16 %v2493, %v2492
        %v2524 = vpack.c.bf16 %v2495, %v2494
        %v2525 = vpack.c.bf16 %v2497, %v2496
        %v2526 = vpack.c.bf16 %v2499, %v2498
        %v2527 = vpack.c.bf16 %v2501, %v2500
        %v2528 = vpack.c.bf16 %v2503, %v2502
        %v2529 = vpack.c.bf16 %v2505, %v2504
        %v2530 = vpack.c.bf16 %v2507, %v2506
        %v2531 = vpack.c.bf16 %v2509, %v2508
        %v2532 = vpack.c.bf16 %v2511, %v2510
        %v2533 = vpack.c.bf16 %v2513, %v2512
        %v2534 = vpack.c.bf16 %v2515, %v2514
        %v2535 = vpack.c.bf16 %v2517, %v2516
        %v2536 = vpack.c.bf16 %v2519, %v2518
        %v2537 = vpack.c.bf16 %v2521, %v2520
        %s2538 = scalar_lea.vmem [#allocation7], 384
        %v2539 = vld [vmem:[%s2538] sm:$0xf]
        %v2540 = vld [vmem:[%s2538 + $0x4] sm:$0xf]
        %v2541 = vld [vmem:[%s2538 + $0x8] sm:$0xf]
        %v2542 = vld [vmem:[%s2538 + $0xc] sm:$0xf]
        %v2543 = vld [vmem:[%s2538 + $0x10] sm:$0xf]
        %v2544 = vld [vmem:[%s2538 + $0x14] sm:$0xf]
        %v2545 = vld [vmem:[%s2538 + $0x18] sm:$0xf]
        %v2546 = vld [vmem:[%s2538 + $0x1c] sm:$0xf]
        %v2547 = vld [vmem:[%s2538 + $0x20] sm:$0xf]
        %v2548 = vld [vmem:[%s2538 + $0x24] sm:$0xf]
        %v2549 = vld [vmem:[%s2538 + $0x28] sm:$0xf]
        %v2550 = vld [vmem:[%s2538 + $0x2c] sm:$0xf]
        %v2551 = vld [vmem:[%s2538 + $0x30] sm:$0xf]
        %v2552 = vld [vmem:[%s2538 + $0x34] sm:$0xf]
        %v2553 = vld [vmem:[%s2538 + $0x38] sm:$0xf]
        %v2554 = vld [vmem:[%s2538 + $0x3c] sm:$0xf]
        %v2571 = vunpack.c.l.b16 %v2539
        %v2572 = vunpack.c.l.b16 %v2540
        %v2573 = vunpack.c.l.b16 %v2541
        %v2574 = vunpack.c.l.b16 %v2542
        %v2575 = vunpack.c.l.b16 %v2543
        %v2576 = vunpack.c.l.b16 %v2544
        %v2577 = vunpack.c.l.b16 %v2545
        %v2578 = vunpack.c.l.b16 %v2546
        %v2579 = vunpack.c.l.b16 %v2547
        %v2580 = vunpack.c.l.b16 %v2548
        %v2581 = vunpack.c.l.b16 %v2549
        %v2582 = vunpack.c.l.b16 %v2550
        %v2583 = vunpack.c.l.b16 %v2551
        %v2584 = vunpack.c.l.b16 %v2552
        %v2585 = vunpack.c.l.b16 %v2553
        %v2586 = vunpack.c.l.b16 %v2554
        %v2587 = vpack.c.b16 %v2572, %v2571
        %v2588 = vpack.c.b16 %v2574, %v2573
        %v2589 = vpack.c.b16 %v2576, %v2575
        %v2590 = vpack.c.b16 %v2578, %v2577
        %v2591 = vpack.c.b16 %v2580, %v2579
        %v2592 = vpack.c.b16 %v2582, %v2581
        %v2593 = vpack.c.b16 %v2584, %v2583
        %v2594 = vpack.c.b16 %v2586, %v2585
        %2603 = vmatpush.bf16.msra.mxu0 %v2594
        %2604 = vmatpush.bf16.msra.mxu0 %v2593
        %2605 = vmatpush.bf16.msra.mxu0 %v2592
        %2606 = vmatpush.bf16.msra.mxu0 %v2591
        %2607 = vmatpush.bf16.msra.mxu0 %v2590
        %2608 = vmatpush.bf16.msra.mxu0 %v2589
        %2609 = vmatpush.bf16.msra.mxu0 %v2588
        %2610 = vmatpush.bf16.msra.mxu0 %v2587
        %2611 = vmatmul.bf16.gmra.mxu0 %v2522
        %v2612 = vpop.f32.mrf.mxu0
        %v2613 = vadd.f32 0.0, %v2612
        %v2614 = vpop.f32.mrf.mxu0
        %v2615 = vadd.f32 0.0, %v2614
        %2616 = vmatmul.bf16.gmra.mxu0 %v2523
        %v2617 = vpop.f32.mrf.mxu0
        %v2618 = vadd.f32 0.0, %v2617
        %v2619 = vpop.f32.mrf.mxu0
        %v2620 = vadd.f32 0.0, %v2619
        %2621 = vmatmul.bf16.gmra.mxu0 %v2524
        %v2622 = vpop.f32.mrf.mxu0
        %v2623 = vadd.f32 0.0, %v2622
        %v2624 = vpop.f32.mrf.mxu0
        %v2625 = vadd.f32 0.0, %v2624
        %2626 = vmatmul.bf16.gmra.mxu0 %v2525
        %v2627 = vpop.f32.mrf.mxu0
        %v2628 = vadd.f32 0.0, %v2627
        %v2629 = vpop.f32.mrf.mxu0
        %v2630 = vadd.f32 0.0, %v2629
        %2631 = vmatmul.bf16.gmra.mxu0 %v2526
        %v2632 = vpop.f32.mrf.mxu0
        %v2633 = vadd.f32 0.0, %v2632
        %v2634 = vpop.f32.mrf.mxu0
        %v2635 = vadd.f32 0.0, %v2634
        %2636 = vmatmul.bf16.gmra.mxu0 %v2527
        %v2637 = vpop.f32.mrf.mxu0
        %v2638 = vadd.f32 0.0, %v2637
        %v2639 = vpop.f32.mrf.mxu0
        %v2640 = vadd.f32 0.0, %v2639
        %2641 = vmatmul.bf16.gmra.mxu0 %v2528
        %v2642 = vpop.f32.mrf.mxu0
        %v2643 = vadd.f32 0.0, %v2642
        %v2644 = vpop.f32.mrf.mxu0
        %v2645 = vadd.f32 0.0, %v2644
        %2646 = vmatmul.bf16.gmra.mxu0 %v2529
        %v2647 = vpop.f32.mrf.mxu0
        %v2648 = vadd.f32 0.0, %v2647
        %v2649 = vpop.f32.mrf.mxu0
        %v2650 = vadd.f32 0.0, %v2649
        %2651 = vmatmul.bf16.gmra.mxu0 %v2530
        %v2652 = vpop.f32.mrf.mxu0
        %v2653 = vadd.f32 0.0, %v2652
        %v2654 = vpop.f32.mrf.mxu0
        %v2655 = vadd.f32 0.0, %v2654
        %2656 = vmatmul.bf16.gmra.mxu0 %v2531
        %v2657 = vpop.f32.mrf.mxu0
        %v2658 = vadd.f32 0.0, %v2657
        %v2659 = vpop.f32.mrf.mxu0
        %v2660 = vadd.f32 0.0, %v2659
        %2661 = vmatmul.bf16.gmra.mxu0 %v2532
        %v2662 = vpop.f32.mrf.mxu0
        %v2663 = vadd.f32 0.0, %v2662
        %v2664 = vpop.f32.mrf.mxu0
        %v2665 = vadd.f32 0.0, %v2664
        %2666 = vmatmul.bf16.gmra.mxu0 %v2533
        %v2667 = vpop.f32.mrf.mxu0
        %v2668 = vadd.f32 0.0, %v2667
        %v2669 = vpop.f32.mrf.mxu0
        %v2670 = vadd.f32 0.0, %v2669
        %2671 = vmatmul.bf16.gmra.mxu0 %v2534
        %v2672 = vpop.f32.mrf.mxu0
        %v2673 = vadd.f32 0.0, %v2672
        %v2674 = vpop.f32.mrf.mxu0
        %v2675 = vadd.f32 0.0, %v2674
        %2676 = vmatmul.bf16.gmra.mxu0 %v2535
        %v2677 = vpop.f32.mrf.mxu0
        %v2678 = vadd.f32 0.0, %v2677
        %v2679 = vpop.f32.mrf.mxu0
        %v2680 = vadd.f32 0.0, %v2679
        %2681 = vmatmul.bf16.gmra.mxu0 %v2536
        %v2682 = vpop.f32.mrf.mxu0
        %v2683 = vadd.f32 0.0, %v2682
        %v2684 = vpop.f32.mrf.mxu0
        %v2685 = vadd.f32 0.0, %v2684
        %2686 = vmatmul.bf16.gmra.mxu0 %v2537
        %v2687 = vpop.f32.mrf.mxu0
        %v2688 = vadd.f32 0.0, %v2687
        %v2689 = vpop.f32.mrf.mxu0
        %v2690 = vadd.f32 0.0, %v2689
        %2691 = vdwg.mxu0
        %v2692 = vadd.f32 %v2330, %v2613
        %v2693 = vadd.f32 %v2331, %v2615
        %v2694 = vadd.f32 %v2332, %v2618
        %v2695 = vadd.f32 %v2333, %v2620
        %v2696 = vadd.f32 %v2334, %v2623
        %v2697 = vadd.f32 %v2335, %v2625
        %v2698 = vadd.f32 %v2336, %v2628
        %v2699 = vadd.f32 %v2337, %v2630
        %v2700 = vadd.f32 %v2338, %v2633
        %v2701 = vadd.f32 %v2339, %v2635
        %v2702 = vadd.f32 %v2340, %v2638
        %v2703 = vadd.f32 %v2341, %v2640
        %v2704 = vadd.f32 %v2342, %v2643
        %v2705 = vadd.f32 %v2343, %v2645
        %v2706 = vadd.f32 %v2344, %v2648
        %v2707 = vadd.f32 %v2345, %v2650
        %v2708 = vadd.f32 %v2346, %v2653
        %v2709 = vadd.f32 %v2347, %v2655
        %v2710 = vadd.f32 %v2348, %v2658
        %v2711 = vadd.f32 %v2349, %v2660
        %v2712 = vadd.f32 %v2350, %v2663
        %v2713 = vadd.f32 %v2351, %v2665
        %v2714 = vadd.f32 %v2352, %v2668
        %v2715 = vadd.f32 %v2353, %v2670
        %v2716 = vadd.f32 %v2354, %v2673
        %v2717 = vadd.f32 %v2355, %v2675
        %v2718 = vadd.f32 %v2356, %v2678
        %v2719 = vadd.f32 %v2357, %v2680
        %v2720 = vadd.f32 %v2358, %v2683
        %v2721 = vadd.f32 %v2359, %v2685
        %v2722 = vadd.f32 %v2360, %v2688
        %v2723 = vadd.f32 %v2361, %v2690
        %v2724 = vsel %vm2362, 1, 0
        %v2725 = vsel %vm2363, 1, 0
        %v2726 = vsel %vm2364, 1, 0
        %v2727 = vsel %vm2365, 1, 0
        %v2728 = vsel %vm2366, 1, 0
        %v2729 = vsel %vm2367, 1, 0
        %v2730 = vsel %vm2368, 1, 0
        %v2731 = vsel %vm2369, 1, 0
        %v2732 = vsel %vm2370, 1, 0
        %v2733 = vsel %vm2371, 1, 0
        %v2734 = vsel %vm2372, 1, 0
        %v2735 = vsel %vm2373, 1, 0
        %v2736 = vsel %vm2374, 1, 0
        %v2737 = vsel %vm2375, 1, 0
        %v2738 = vsel %vm2376, 1, 0
        %v2739 = vsel %vm2377, 1, 0
        %v2740 = vsel %vm2378, 1, 0
        %v2741 = vsel %vm2379, 1, 0
        %v2742 = vsel %vm2380, 1, 0
        %v2743 = vsel %vm2381, 1, 0
        %v2744 = vsel %vm2382, 1, 0
        %v2745 = vsel %vm2383, 1, 0
        %v2746 = vsel %vm2384, 1, 0
        %v2747 = vsel %vm2385, 1, 0
        %v2748 = vsel %vm2386, 1, 0
        %v2749 = vsel %vm2387, 1, 0
        %v2750 = vsel %vm2388, 1, 0
        %v2751 = vsel %vm2389, 1, 0
        %v2752 = vsel %vm2390, 1, 0
        %v2753 = vsel %vm2391, 1, 0
        %v2754 = vsel %vm2392, 1, 0
        %v2755 = vsel %vm2393, 1, 0
        %vm2756 = vcmp.eq.s32.totalorder %v2724, 1
        %vm2757 = vcmp.eq.s32.totalorder %v2725, 1
        %vm2758 = vcmp.eq.s32.totalorder %v2726, 1
        %vm2759 = vcmp.eq.s32.totalorder %v2727, 1
        %vm2760 = vcmp.eq.s32.totalorder %v2728, 1
        %vm2761 = vcmp.eq.s32.totalorder %v2729, 1
        %vm2762 = vcmp.eq.s32.totalorder %v2730, 1
        %vm2763 = vcmp.eq.s32.totalorder %v2731, 1
        %vm2764 = vcmp.eq.s32.totalorder %v2732, 1
        %vm2765 = vcmp.eq.s32.totalorder %v2733, 1
        %vm2766 = vcmp.eq.s32.totalorder %v2734, 1
        %vm2767 = vcmp.eq.s32.totalorder %v2735, 1
        %vm2768 = vcmp.eq.s32.totalorder %v2736, 1
        %vm2769 = vcmp.eq.s32.totalorder %v2737, 1
        %vm2770 = vcmp.eq.s32.totalorder %v2738, 1
        %vm2771 = vcmp.eq.s32.totalorder %v2739, 1
        %vm2772 = vcmp.eq.s32.totalorder %v2740, 1
        %vm2773 = vcmp.eq.s32.totalorder %v2741, 1
        %vm2774 = vcmp.eq.s32.totalorder %v2742, 1
        %vm2775 = vcmp.eq.s32.totalorder %v2743, 1
        %vm2776 = vcmp.eq.s32.totalorder %v2744, 1
        %vm2777 = vcmp.eq.s32.totalorder %v2745, 1
        %vm2778 = vcmp.eq.s32.totalorder %v2746, 1
        %vm2779 = vcmp.eq.s32.totalorder %v2747, 1
        %vm2780 = vcmp.eq.s32.totalorder %v2748, 1
        %vm2781 = vcmp.eq.s32.totalorder %v2749, 1
        %vm2782 = vcmp.eq.s32.totalorder %v2750, 1
        %vm2783 = vcmp.eq.s32.totalorder %v2751, 1
        %vm2784 = vcmp.eq.s32.totalorder %v2752, 1
        %vm2785 = vcmp.eq.s32.totalorder %v2753, 1
        %vm2786 = vcmp.eq.s32.totalorder %v2754, 1
        %vm2787 = vcmp.eq.s32.totalorder %v2755, 1
        %v2788 = vsel %vm2756, %v349, 0.0
        %v2789 = vsel %vm2757, %v350, 0.0
        %v2790 = vsel %vm2758, %v351, 0.0
        %v2791 = vsel %vm2759, %v352, 0.0
        %v2792 = vsel %vm2760, %v353, 0.0
        %v2793 = vsel %vm2761, %v354, 0.0
        %v2794 = vsel %vm2762, %v355, 0.0
        %v2795 = vsel %vm2763, %v356, 0.0
        %v2796 = vsel %vm2764, %v357, 0.0
        %v2797 = vsel %vm2765, %v358, 0.0
        %v2798 = vsel %vm2766, %v359, 0.0
        %v2799 = vsel %vm2767, %v360, 0.0
        %v2800 = vsel %vm2768, %v361, 0.0
        %v2801 = vsel %vm2769, %v362, 0.0
        %v2802 = vsel %vm2770, %v363, 0.0
        %v2803 = vsel %vm2771, %v364, 0.0
        %v2804 = vsel %vm2772, %v365, 0.0
        %v2805 = vsel %vm2773, %v366, 0.0
        %v2806 = vsel %vm2774, %v367, 0.0
        %v2807 = vsel %vm2775, %v368, 0.0
        %v2808 = vsel %vm2776, %v369, 0.0
        %v2809 = vsel %vm2777, %v370, 0.0
        %v2810 = vsel %vm2778, %v371, 0.0
        %v2811 = vsel %vm2779, %v372, 0.0
        %v2812 = vsel %vm2780, %v373, 0.0
        %v2813 = vsel %vm2781, %v374, 0.0
        %v2814 = vsel %vm2782, %v375, 0.0
        %v2815 = vsel %vm2783, %v376, 0.0
        %v2816 = vsel %vm2784, %v377, 0.0
        %v2817 = vsel %vm2785, %v378, 0.0
        %v2818 = vsel %vm2786, %v347, 0.0
        %v2819 = vsel %vm2787, %v348, 0.0
        %v2820 = vpack.c.bf16 %v2789, %v2788
        %v2821 = vpack.c.bf16 %v2791, %v2790
        %v2822 = vpack.c.bf16 %v2793, %v2792
        %v2823 = vpack.c.bf16 %v2795, %v2794
        %v2824 = vpack.c.bf16 %v2797, %v2796
        %v2825 = vpack.c.bf16 %v2799, %v2798
        %v2826 = vpack.c.bf16 %v2801, %v2800
        %v2827 = vpack.c.bf16 %v2803, %v2802
        %v2828 = vpack.c.bf16 %v2805, %v2804
        %v2829 = vpack.c.bf16 %v2807, %v2806
        %v2830 = vpack.c.bf16 %v2809, %v2808
        %v2831 = vpack.c.bf16 %v2811, %v2810
        %v2832 = vpack.c.bf16 %v2813, %v2812
        %v2833 = vpack.c.bf16 %v2815, %v2814
        %v2834 = vpack.c.bf16 %v2817, %v2816
        %v2835 = vpack.c.bf16 %v2819, %v2818
        %s2836 = scalar_lea.vmem [#allocation7], 448
        %v2837 = vld [vmem:[%s2836] sm:$0xf]
        %v2838 = vld [vmem:[%s2836 + $0x4] sm:$0xf]
        %v2839 = vld [vmem:[%s2836 + $0x8] sm:$0xf]
        %v2840 = vld [vmem:[%s2836 + $0xc] sm:$0xf]
        %v2841 = vld [vmem:[%s2836 + $0x10] sm:$0xf]
        %v2842 = vld [vmem:[%s2836 + $0x14] sm:$0xf]
        %v2843 = vld [vmem:[%s2836 + $0x18] sm:$0xf]
        %v2844 = vld [vmem:[%s2836 + $0x1c] sm:$0xf]
        %v2845 = vld [vmem:[%s2836 + $0x20] sm:$0xf]
        %v2846 = vld [vmem:[%s2836 + $0x24] sm:$0xf]
        %v2847 = vld [vmem:[%s2836 + $0x28] sm:$0xf]
        %v2848 = vld [vmem:[%s2836 + $0x2c] sm:$0xf]
        %v2849 = vld [vmem:[%s2836 + $0x30] sm:$0xf]
        %v2850 = vld [vmem:[%s2836 + $0x34] sm:$0xf]
        %v2851 = vld [vmem:[%s2836 + $0x38] sm:$0xf]
        %v2852 = vld [vmem:[%s2836 + $0x3c] sm:$0xf]
        %v2869 = vunpack.c.l.b16 %v2837
        %v2870 = vunpack.c.l.b16 %v2838
        %v2871 = vunpack.c.l.b16 %v2839
        %v2872 = vunpack.c.l.b16 %v2840
        %v2873 = vunpack.c.l.b16 %v2841
        %v2874 = vunpack.c.l.b16 %v2842
        %v2875 = vunpack.c.l.b16 %v2843
        %v2876 = vunpack.c.l.b16 %v2844
        %v2877 = vunpack.c.l.b16 %v2845
        %v2878 = vunpack.c.l.b16 %v2846
        %v2879 = vunpack.c.l.b16 %v2847
        %v2880 = vunpack.c.l.b16 %v2848
        %v2881 = vunpack.c.l.b16 %v2849
        %v2882 = vunpack.c.l.b16 %v2850
        %v2883 = vunpack.c.l.b16 %v2851
        %v2884 = vunpack.c.l.b16 %v2852
        %v2885 = vpack.c.b16 %v2870, %v2869
        %v2886 = vpack.c.b16 %v2872, %v2871
        %v2887 = vpack.c.b16 %v2874, %v2873
        %v2888 = vpack.c.b16 %v2876, %v2875
        %v2889 = vpack.c.b16 %v2878, %v2877
        %v2890 = vpack.c.b16 %v2880, %v2879
        %v2891 = vpack.c.b16 %v2882, %v2881
        %v2892 = vpack.c.b16 %v2884, %v2883
        %2901 = vmatpush.bf16.msra.mxu0 %v2892
        %2902 = vmatpush.bf16.msra.mxu0 %v2891
        %2903 = vmatpush.bf16.msra.mxu0 %v2890
        %2904 = vmatpush.bf16.msra.mxu0 %v2889
        %2905 = vmatpush.bf16.msra.mxu0 %v2888
        %2906 = vmatpush.bf16.msra.mxu0 %v2887
        %2907 = vmatpush.bf16.msra.mxu0 %v2886
        %2908 = vmatpush.bf16.msra.mxu0 %v2885
        %2909 = vmatmul.bf16.gmra.mxu0 %v2820
        %v2910 = vpop.f32.mrf.mxu0
        %v2911 = vadd.f32 0.0, %v2910
        %v2912 = vpop.f32.mrf.mxu0
        %v2913 = vadd.f32 0.0, %v2912
        %2914 = vmatmul.bf16.gmra.mxu0 %v2821
        %v2915 = vpop.f32.mrf.mxu0
        %v2916 = vadd.f32 0.0, %v2915
        %v2917 = vpop.f32.mrf.mxu0
        %v2918 = vadd.f32 0.0, %v2917
        %2919 = vmatmul.bf16.gmra.mxu0 %v2822
        %v2920 = vpop.f32.mrf.mxu0
        %v2921 = vadd.f32 0.0, %v2920
        %v2922 = vpop.f32.mrf.mxu0
        %v2923 = vadd.f32 0.0, %v2922
        %2924 = vmatmul.bf16.gmra.mxu0 %v2823
        %v2925 = vpop.f32.mrf.mxu0
        %v2926 = vadd.f32 0.0, %v2925
        %v2927 = vpop.f32.mrf.mxu0
        %v2928 = vadd.f32 0.0, %v2927
        %2929 = vmatmul.bf16.gmra.mxu0 %v2824
        %v2930 = vpop.f32.mrf.mxu0
        %v2931 = vadd.f32 0.0, %v2930
        %v2932 = vpop.f32.mrf.mxu0
        %v2933 = vadd.f32 0.0, %v2932
        %2934 = vmatmul.bf16.gmra.mxu0 %v2825
        %v2935 = vpop.f32.mrf.mxu0
        %v2936 = vadd.f32 0.0, %v2935
        %v2937 = vpop.f32.mrf.mxu0
        %v2938 = vadd.f32 0.0, %v2937
        %2939 = vmatmul.bf16.gmra.mxu0 %v2826
        %v2940 = vpop.f32.mrf.mxu0
        %v2941 = vadd.f32 0.0, %v2940
        %v2942 = vpop.f32.mrf.mxu0
        %v2943 = vadd.f32 0.0, %v2942
        %2944 = vmatmul.bf16.gmra.mxu0 %v2827
        %v2945 = vpop.f32.mrf.mxu0
        %v2946 = vadd.f32 0.0, %v2945
        %v2947 = vpop.f32.mrf.mxu0
        %v2948 = vadd.f32 0.0, %v2947
        %2949 = vmatmul.bf16.gmra.mxu0 %v2828
        %v2950 = vpop.f32.mrf.mxu0
        %v2951 = vadd.f32 0.0, %v2950
        %v2952 = vpop.f32.mrf.mxu0
        %v2953 = vadd.f32 0.0, %v2952
        %2954 = vmatmul.bf16.gmra.mxu0 %v2829
        %v2955 = vpop.f32.mrf.mxu0
        %v2956 = vadd.f32 0.0, %v2955
        %v2957 = vpop.f32.mrf.mxu0
        %v2958 = vadd.f32 0.0, %v2957
        %2959 = vmatmul.bf16.gmra.mxu0 %v2830
        %v2960 = vpop.f32.mrf.mxu0
        %v2961 = vadd.f32 0.0, %v2960
        %v2962 = vpop.f32.mrf.mxu0
        %v2963 = vadd.f32 0.0, %v2962
        %2964 = vmatmul.bf16.gmra.mxu0 %v2831
        %v2965 = vpop.f32.mrf.mxu0
        %v2966 = vadd.f32 0.0, %v2965
        %v2967 = vpop.f32.mrf.mxu0
        %v2968 = vadd.f32 0.0, %v2967
        %2969 = vmatmul.bf16.gmra.mxu0 %v2832
        %v2970 = vpop.f32.mrf.mxu0
        %v2971 = vadd.f32 0.0, %v2970
        %v2972 = vpop.f32.mrf.mxu0
        %v2973 = vadd.f32 0.0, %v2972
        %2974 = vmatmul.bf16.gmra.mxu0 %v2833
        %v2975 = vpop.f32.mrf.mxu0
        %v2976 = vadd.f32 0.0, %v2975
        %v2977 = vpop.f32.mrf.mxu0
        %v2978 = vadd.f32 0.0, %v2977
        %2979 = vmatmul.bf16.gmra.mxu0 %v2834
        %v2980 = vpop.f32.mrf.mxu0
        %v2981 = vadd.f32 0.0, %v2980
        %v2982 = vpop.f32.mrf.mxu0
        %v2983 = vadd.f32 0.0, %v2982
        %2984 = vmatmul.bf16.gmra.mxu0 %v2835
        %v2985 = vpop.f32.mrf.mxu0
        %v2986 = vadd.f32 0.0, %v2985
        %v2987 = vpop.f32.mrf.mxu0
        %v2988 = vadd.f32 0.0, %v2987
        %2989 = vdwg.mxu0
        %v2990 = vadd.f32 %v2692, %v2911
        %v2991 = vadd.f32 %v2693, %v2913
        %v2992 = vadd.f32 %v2694, %v2916
        %v2993 = vadd.f32 %v2695, %v2918
        %v2994 = vadd.f32 %v2696, %v2921
        %v2995 = vadd.f32 %v2697, %v2923
        %v2996 = vadd.f32 %v2698, %v2926
        %v2997 = vadd.f32 %v2699, %v2928
        %v2998 = vadd.f32 %v2700, %v2931
        %v2999 = vadd.f32 %v2701, %v2933
        %v3000 = vadd.f32 %v2702, %v2936
        %v3001 = vadd.f32 %v2703, %v2938
        %v3002 = vadd.f32 %v2704, %v2941
        %v3003 = vadd.f32 %v2705, %v2943
        %v3004 = vadd.f32 %v2706, %v2946
        %v3005 = vadd.f32 %v2707, %v2948
        %v3006 = vadd.f32 %v2708, %v2951
        %v3007 = vadd.f32 %v2709, %v2953
        %v3008 = vadd.f32 %v2710, %v2956
        %v3009 = vadd.f32 %v2711, %v2958
        %v3010 = vadd.f32 %v2712, %v2961
        %v3011 = vadd.f32 %v2713, %v2963
        %v3012 = vadd.f32 %v2714, %v2966
        %v3013 = vadd.f32 %v2715, %v2968
        %v3014 = vadd.f32 %v2716, %v2971
        %v3015 = vadd.f32 %v2717, %v2973
        %v3016 = vadd.f32 %v2718, %v2976
        %v3017 = vadd.f32 %v2719, %v2978
        %v3018 = vadd.f32 %v2720, %v2981
        %v3019 = vadd.f32 %v2721, %v2983
        %v3020 = vadd.f32 %v2722, %v2986
        %v3021 = vadd.f32 %v2723, %v2988
        %vm3022 = vmand %vm2362, %vm1202
        %vm3023 = vmand %vm2363, %vm1203
        %vm3024 = vmand %vm2364, %vm1204
        %vm3025 = vmand %vm2365, %vm1205
        %vm3026 = vmand %vm2366, %vm1206
        %vm3027 = vmand %vm2367, %vm1207
        %vm3028 = vmand %vm2368, %vm1208
        %vm3029 = vmand %vm2369, %vm1209
        %vm3030 = vmand %vm2370, %vm1210
        %vm3031 = vmand %vm2371, %vm1211
        %vm3032 = vmand %vm2372, %vm1212
        %vm3033 = vmand %vm2373, %vm1213
        %vm3034 = vmand %vm2374, %vm1214
        %vm3035 = vmand %vm2375, %vm1215
        %vm3036 = vmand %vm2376, %vm1216
        %vm3037 = vmand %vm2377, %vm1217
        %vm3038 = vmand %vm2378, %vm1218
        %vm3039 = vmand %vm2379, %vm1219
        %vm3040 = vmand %vm2380, %vm1220
        %vm3041 = vmand %vm2381, %vm1221
        %vm3042 = vmand %vm2382, %vm1222
        %vm3043 = vmand %vm2383, %vm1223
        %vm3044 = vmand %vm2384, %vm1224
        %vm3045 = vmand %vm2385, %vm1225
        %vm3046 = vmand %vm2386, %vm1226
        %vm3047 = vmand %vm2387, %vm1227
        %vm3048 = vmand %vm2388, %vm1228
        %vm3049 = vmand %vm2389, %vm1229
        %vm3050 = vmand %vm2390, %vm1230
        %vm3051 = vmand %vm2391, %vm1231
        %vm3052 = vmand %vm2392, %vm1232
        %vm3053 = vmand %vm2393, %vm1233
        %v3054 = vsel %vm3022, 1, 0
        %v3055 = vsel %vm3023, 1, 0
        %v3056 = vsel %vm3024, 1, 0
        %v3057 = vsel %vm3025, 1, 0
        %v3058 = vsel %vm3026, 1, 0
        %v3059 = vsel %vm3027, 1, 0
        %v3060 = vsel %vm3028, 1, 0
        %v3061 = vsel %vm3029, 1, 0
        %v3062 = vsel %vm3030, 1, 0
        %v3063 = vsel %vm3031, 1, 0
        %v3064 = vsel %vm3032, 1, 0
        %v3065 = vsel %vm3033, 1, 0
        %v3066 = vsel %vm3034, 1, 0
        %v3067 = vsel %vm3035, 1, 0
        %v3068 = vsel %vm3036, 1, 0
        %v3069 = vsel %vm3037, 1, 0
        %v3070 = vsel %vm3038, 1, 0
        %v3071 = vsel %vm3039, 1, 0
        %v3072 = vsel %vm3040, 1, 0
        %v3073 = vsel %vm3041, 1, 0
        %v3074 = vsel %vm3042, 1, 0
        %v3075 = vsel %vm3043, 1, 0
        %v3076 = vsel %vm3044, 1, 0
        %v3077 = vsel %vm3045, 1, 0
        %v3078 = vsel %vm3046, 1, 0
        %v3079 = vsel %vm3047, 1, 0
        %v3080 = vsel %vm3048, 1, 0
        %v3081 = vsel %vm3049, 1, 0
        %v3082 = vsel %vm3050, 1, 0
        %v3083 = vsel %vm3051, 1, 0
        %v3084 = vsel %vm3052, 1, 0
        %v3085 = vsel %vm3053, 1, 0
        %vm3086 = vcmp.eq.s32.totalorder %v3054, 1
        %vm3087 = vcmp.eq.s32.totalorder %v3055, 1
        %vm3088 = vcmp.eq.s32.totalorder %v3056, 1
        %vm3089 = vcmp.eq.s32.totalorder %v3057, 1
        %vm3090 = vcmp.eq.s32.totalorder %v3058, 1
        %vm3091 = vcmp.eq.s32.totalorder %v3059, 1
        %vm3092 = vcmp.eq.s32.totalorder %v3060, 1
        %vm3093 = vcmp.eq.s32.totalorder %v3061, 1
        %vm3094 = vcmp.eq.s32.totalorder %v3062, 1
        %vm3095 = vcmp.eq.s32.totalorder %v3063, 1
        %vm3096 = vcmp.eq.s32.totalorder %v3064, 1
        %vm3097 = vcmp.eq.s32.totalorder %v3065, 1
        %vm3098 = vcmp.eq.s32.totalorder %v3066, 1
        %vm3099 = vcmp.eq.s32.totalorder %v3067, 1
        %vm3100 = vcmp.eq.s32.totalorder %v3068, 1
        %vm3101 = vcmp.eq.s32.totalorder %v3069, 1
        %vm3102 = vcmp.eq.s32.totalorder %v3070, 1
        %vm3103 = vcmp.eq.s32.totalorder %v3071, 1
        %vm3104 = vcmp.eq.s32.totalorder %v3072, 1
        %vm3105 = vcmp.eq.s32.totalorder %v3073, 1
        %vm3106 = vcmp.eq.s32.totalorder %v3074, 1
        %vm3107 = vcmp.eq.s32.totalorder %v3075, 1
        %vm3108 = vcmp.eq.s32.totalorder %v3076, 1
        %vm3109 = vcmp.eq.s32.totalorder %v3077, 1
        %vm3110 = vcmp.eq.s32.totalorder %v3078, 1
        %vm3111 = vcmp.eq.s32.totalorder %v3079, 1
        %vm3112 = vcmp.eq.s32.totalorder %v3080, 1
        %vm3113 = vcmp.eq.s32.totalorder %v3081, 1
        %vm3114 = vcmp.eq.s32.totalorder %v3082, 1
        %vm3115 = vcmp.eq.s32.totalorder %v3083, 1
        %vm3116 = vcmp.eq.s32.totalorder %v3084, 1
        %vm3117 = vcmp.eq.s32.totalorder %v3085, 1
        %v3118 = vsel %vm3086, %v1198, 0.0
        %v3119 = vsel %vm3087, %v1197, 0.0
        %v3120 = vsel %vm3088, %v1196, 0.0
        %v3121 = vsel %vm3089, %v1195, 0.0
        %v3122 = vsel %vm3090, %v1194, 0.0
        %v3123 = vsel %vm3091, %v1193, 0.0
        %v3124 = vsel %vm3092, %v1192, 0.0
        %v3125 = vsel %vm3093, %v1191, 0.0
        %v3126 = vsel %vm3094, %v1190, 0.0
        %v3127 = vsel %vm3095, %v1189, 0.0
        %v3128 = vsel %vm3096, %v1188, 0.0
        %v3129 = vsel %vm3097, %v1187, 0.0
        %v3130 = vsel %vm3098, %v1186, 0.0
        %v3131 = vsel %vm3099, %v1185, 0.0
        %v3132 = vsel %vm3100, %v1184, 0.0
        %v3133 = vsel %vm3101, %v1183, 0.0
        %v3134 = vsel %vm3102, %v1182, 0.0
        %v3135 = vsel %vm3103, %v1181, 0.0
        %v3136 = vsel %vm3104, %v1180, 0.0
        %v3137 = vsel %vm3105, %v1179, 0.0
        %v3138 = vsel %vm3106, %v1178, 0.0
        %v3139 = vsel %vm3107, %v1177, 0.0
        %v3140 = vsel %vm3108, %v1176, 0.0
        %v3141 = vsel %vm3109, %v1175, 0.0
        %v3142 = vsel %vm3110, %v1174, 0.0
        %v3143 = vsel %vm3111, %v1173, 0.0
        %v3144 = vsel %vm3112, %v1172, 0.0
        %v3145 = vsel %vm3113, %v1171, 0.0
        %v3146 = vsel %vm3114, %v1170, 0.0
        %v3147 = vsel %vm3115, %v1201, 0.0
        %v3148 = vsel %vm3116, %v1200, 0.0
        %v3149 = vsel %vm3117, %v1199, 0.0
        %v3150 = vpack.c.bf16 %v3119, %v3118
        %v3151 = vpack.c.bf16 %v3121, %v3120
        %v3152 = vpack.c.bf16 %v3123, %v3122
        %v3153 = vpack.c.bf16 %v3125, %v3124
        %v3154 = vpack.c.bf16 %v3127, %v3126
        %v3155 = vpack.c.bf16 %v3129, %v3128
        %v3156 = vpack.c.bf16 %v3131, %v3130
        %v3157 = vpack.c.bf16 %v3133, %v3132
        %v3158 = vpack.c.bf16 %v3135, %v3134
        %v3159 = vpack.c.bf16 %v3137, %v3136
        %v3160 = vpack.c.bf16 %v3139, %v3138
        %v3161 = vpack.c.bf16 %v3141, %v3140
        %v3162 = vpack.c.bf16 %v3143, %v3142
        %v3163 = vpack.c.bf16 %v3145, %v3144
        %v3164 = vpack.c.bf16 %v3147, %v3146
        %v3165 = vpack.c.bf16 %v3149, %v3148
        %s3166 = scalar_lea.vmem [#allocation7], 512
        %v3167 = vld [vmem:[%s3166] sm:$0xf]
        %v3168 = vld [vmem:[%s3166 + $0x4] sm:$0xf]
        %v3169 = vld [vmem:[%s3166 + $0x8] sm:$0xf]
        %v3170 = vld [vmem:[%s3166 + $0xc] sm:$0xf]
        %v3171 = vld [vmem:[%s3166 + $0x10] sm:$0xf]
        %v3172 = vld [vmem:[%s3166 + $0x14] sm:$0xf]
        %v3173 = vld [vmem:[%s3166 + $0x18] sm:$0xf]
        %v3174 = vld [vmem:[%s3166 + $0x1c] sm:$0xf]
        %v3175 = vld [vmem:[%s3166 + $0x20] sm:$0xf]
        %v3176 = vld [vmem:[%s3166 + $0x24] sm:$0xf]
        %v3177 = vld [vmem:[%s3166 + $0x28] sm:$0xf]
        %v3178 = vld [vmem:[%s3166 + $0x2c] sm:$0xf]
        %v3179 = vld [vmem:[%s3166 + $0x30] sm:$0xf]
        %v3180 = vld [vmem:[%s3166 + $0x34] sm:$0xf]
        %v3181 = vld [vmem:[%s3166 + $0x38] sm:$0xf]
        %v3182 = vld [vmem:[%s3166 + $0x3c] sm:$0xf]
        %v3199 = vunpack.c.l.b16 %v3167
        %v3200 = vunpack.c.l.b16 %v3168
        %v3201 = vunpack.c.l.b16 %v3169
        %v3202 = vunpack.c.l.b16 %v3170
        %v3203 = vunpack.c.l.b16 %v3171
        %v3204 = vunpack.c.l.b16 %v3172
        %v3205 = vunpack.c.l.b16 %v3173
        %v3206 = vunpack.c.l.b16 %v3174
        %v3207 = vunpack.c.l.b16 %v3175
        %v3208 = vunpack.c.l.b16 %v3176
        %v3209 = vunpack.c.l.b16 %v3177
        %v3210 = vunpack.c.l.b16 %v3178
        %v3211 = vunpack.c.l.b16 %v3179
        %v3212 = vunpack.c.l.b16 %v3180
        %v3213 = vunpack.c.l.b16 %v3181
        %v3214 = vunpack.c.l.b16 %v3182
        %v3215 = vpack.c.b16 %v3200, %v3199
        %v3216 = vpack.c.b16 %v3202, %v3201
        %v3217 = vpack.c.b16 %v3204, %v3203
        %v3218 = vpack.c.b16 %v3206, %v3205
        %v3219 = vpack.c.b16 %v3208, %v3207
        %v3220 = vpack.c.b16 %v3210, %v3209
        %v3221 = vpack.c.b16 %v3212, %v3211
        %v3222 = vpack.c.b16 %v3214, %v3213
        %3231 = vmatpush.bf16.msra.mxu0 %v3222
        %3232 = vmatpush.bf16.msra.mxu0 %v3221
        %3233 = vmatpush.bf16.msra.mxu0 %v3220
        %3234 = vmatpush.bf16.msra.mxu0 %v3219
        %3235 = vmatpush.bf16.msra.mxu0 %v3218
        %3236 = vmatpush.bf16.msra.mxu0 %v3217
        %3237 = vmatpush.bf16.msra.mxu0 %v3216
        %3238 = vmatpush.bf16.msra.mxu0 %v3215
        %3239 = vmatmul.bf16.gmra.mxu0 %v3150
        %v3240 = vpop.f32.mrf.mxu0
        %v3241 = vadd.f32 0.0, %v3240
        %v3242 = vpop.f32.mrf.mxu0
        %v3243 = vadd.f32 0.0, %v3242
        %3244 = vmatmul.bf16.gmra.mxu0 %v3151
        %v3245 = vpop.f32.mrf.mxu0
        %v3246 = vadd.f32 0.0, %v3245
        %v3247 = vpop.f32.mrf.mxu0
        %v3248 = vadd.f32 0.0, %v3247
        %3249 = vmatmul.bf16.gmra.mxu0 %v3152
        %v3250 = vpop.f32.mrf.mxu0
        %v3251 = vadd.f32 0.0, %v3250
        %v3252 = vpop.f32.mrf.mxu0
        %v3253 = vadd.f32 0.0, %v3252
        %3254 = vmatmul.bf16.gmra.mxu0 %v3153
        %v3255 = vpop.f32.mrf.mxu0
        %v3256 = vadd.f32 0.0, %v3255
        %v3257 = vpop.f32.mrf.mxu0
        %v3258 = vadd.f32 0.0, %v3257
        %3259 = vmatmul.bf16.gmra.mxu0 %v3154
        %v3260 = vpop.f32.mrf.mxu0
        %v3261 = vadd.f32 0.0, %v3260
        %v3262 = vpop.f32.mrf.mxu0
        %v3263 = vadd.f32 0.0, %v3262
        %3264 = vmatmul.bf16.gmra.mxu0 %v3155
        %v3265 = vpop.f32.mrf.mxu0
        %v3266 = vadd.f32 0.0, %v3265
        %v3267 = vpop.f32.mrf.mxu0
        %v3268 = vadd.f32 0.0, %v3267
        %3269 = vmatmul.bf16.gmra.mxu0 %v3156
        %v3270 = vpop.f32.mrf.mxu0
        %v3271 = vadd.f32 0.0, %v3270
        %v3272 = vpop.f32.mrf.mxu0
        %v3273 = vadd.f32 0.0, %v3272
        %3274 = vmatmul.bf16.gmra.mxu0 %v3157
        %v3275 = vpop.f32.mrf.mxu0
        %v3276 = vadd.f32 0.0, %v3275
        %v3277 = vpop.f32.mrf.mxu0
        %v3278 = vadd.f32 0.0, %v3277
        %3279 = vmatmul.bf16.gmra.mxu0 %v3158
        %v3280 = vpop.f32.mrf.mxu0
        %v3281 = vadd.f32 0.0, %v3280
        %v3282 = vpop.f32.mrf.mxu0
        %v3283 = vadd.f32 0.0, %v3282
        %3284 = vmatmul.bf16.gmra.mxu0 %v3159
        %v3285 = vpop.f32.mrf.mxu0
        %v3286 = vadd.f32 0.0, %v3285
        %v3287 = vpop.f32.mrf.mxu0
        %v3288 = vadd.f32 0.0, %v3287
        %3289 = vmatmul.bf16.gmra.mxu0 %v3160
        %v3290 = vpop.f32.mrf.mxu0
        %v3291 = vadd.f32 0.0, %v3290
        %v3292 = vpop.f32.mrf.mxu0
        %v3293 = vadd.f32 0.0, %v3292
        %3294 = vmatmul.bf16.gmra.mxu0 %v3161
        %v3295 = vpop.f32.mrf.mxu0
        %v3296 = vadd.f32 0.0, %v3295
        %v3297 = vpop.f32.mrf.mxu0
        %v3298 = vadd.f32 0.0, %v3297
        %3299 = vmatmul.bf16.gmra.mxu0 %v3162
        %v3300 = vpop.f32.mrf.mxu0
        %v3301 = vadd.f32 0.0, %v3300
        %v3302 = vpop.f32.mrf.mxu0
        %v3303 = vadd.f32 0.0, %v3302
        %3304 = vmatmul.bf16.gmra.mxu0 %v3163
        %v3305 = vpop.f32.mrf.mxu0
        %v3306 = vadd.f32 0.0, %v3305
        %v3307 = vpop.f32.mrf.mxu0
        %v3308 = vadd.f32 0.0, %v3307
        %3309 = vmatmul.bf16.gmra.mxu0 %v3164
        %v3310 = vpop.f32.mrf.mxu0
        %v3311 = vadd.f32 0.0, %v3310
        %v3312 = vpop.f32.mrf.mxu0
        %v3313 = vadd.f32 0.0, %v3312
        %3314 = vmatmul.bf16.gmra.mxu0 %v3165
        %v3315 = vpop.f32.mrf.mxu0
        %v3316 = vadd.f32 0.0, %v3315
        %v3317 = vpop.f32.mrf.mxu0
        %v3318 = vadd.f32 0.0, %v3317
        %3319 = vdwg.mxu0
        %v3320 = vadd.f32 %v2990, %v3241
        %v3321 = vadd.f32 %v2991, %v3243
        %v3322 = vadd.f32 %v2992, %v3246
        %v3323 = vadd.f32 %v2993, %v3248
        %v3324 = vadd.f32 %v2994, %v3251
        %v3325 = vadd.f32 %v2995, %v3253
        %v3326 = vadd.f32 %v2996, %v3256
        %v3327 = vadd.f32 %v2997, %v3258
        %v3328 = vadd.f32 %v2998, %v3261
        %v3329 = vadd.f32 %v2999, %v3263
        %v3330 = vadd.f32 %v3000, %v3266
        %v3331 = vadd.f32 %v3001, %v3268
        %v3332 = vadd.f32 %v3002, %v3271
        %v3333 = vadd.f32 %v3003, %v3273
        %v3334 = vadd.f32 %v3004, %v3276
        %v3335 = vadd.f32 %v3005, %v3278
        %v3336 = vadd.f32 %v3006, %v3281
        %v3337 = vadd.f32 %v3007, %v3283
        %v3338 = vadd.f32 %v3008, %v3286
        %v3339 = vadd.f32 %v3009, %v3288
        %v3340 = vadd.f32 %v3010, %v3291
        %v3341 = vadd.f32 %v3011, %v3293
        %v3342 = vadd.f32 %v3012, %v3296
        %v3343 = vadd.f32 %v3013, %v3298
        %v3344 = vadd.f32 %v3014, %v3301
        %v3345 = vadd.f32 %v3015, %v3303
        %v3346 = vadd.f32 %v3016, %v3306
        %v3347 = vadd.f32 %v3017, %v3308
        %v3348 = vadd.f32 %v3018, %v3311
        %v3349 = vadd.f32 %v3019, %v3313
        %v3350 = vadd.f32 %v3020, %v3316
        %v3351 = vadd.f32 %v3021, %v3318
        %v3353 = vperm.slane %v379, 0
        %v3355 = vadd.f32 %v3320, %v3353
        %v3356 = vadd.f32 %v3321, %v3353
        %v3357 = vadd.f32 %v3322, %v3353
        %v3358 = vadd.f32 %v3323, %v3353
        %v3359 = vadd.f32 %v3324, %v3353
        %v3360 = vadd.f32 %v3325, %v3353
        %v3361 = vadd.f32 %v3326, %v3353
        %v3362 = vadd.f32 %v3327, %v3353
        %v3363 = vadd.f32 %v3328, %v3353
        %v3364 = vadd.f32 %v3329, %v3353
        %v3365 = vadd.f32 %v3330, %v3353
        %v3366 = vadd.f32 %v3331, %v3353
        %v3367 = vadd.f32 %v3332, %v3353
        %v3368 = vadd.f32 %v3333, %v3353
        %v3369 = vadd.f32 %v3334, %v3353
        %v3370 = vadd.f32 %v3335, %v3353
        %v3371 = vadd.f32 %v3336, %v3353
        %v3372 = vadd.f32 %v3337, %v3353
        %v3373 = vadd.f32 %v3338, %v3353
        %v3374 = vadd.f32 %v3339, %v3353
        %v3375 = vadd.f32 %v3340, %v3353
        %v3376 = vadd.f32 %v3341, %v3353
        %v3377 = vadd.f32 %v3342, %v3353
        %v3378 = vadd.f32 %v3343, %v3353
        %v3379 = vadd.f32 %v3344, %v3353
        %v3380 = vadd.f32 %v3345, %v3353
        %v3381 = vadd.f32 %v3346, %v3353
        %v3382 = vadd.f32 %v3347, %v3353
        %v3383 = vadd.f32 %v3348, %v3353
        %v3384 = vadd.f32 %v3349, %v3353
        %v3385 = vadd.f32 %v3350, %v3353
        %v3386 = vadd.f32 %v3351, %v3353
        %v3387 = vmax.f32 %v3355, 0.0
        %v3388 = vmax.f32 %v3356, 0.0
        %v3389 = vmax.f32 %v3357, 0.0
        %v3390 = vmax.f32 %v3358, 0.0
        %v3391 = vmax.f32 %v3359, 0.0
        %v3392 = vmax.f32 %v3360, 0.0
        %v3393 = vmax.f32 %v3361, 0.0
        %v3394 = vmax.f32 %v3362, 0.0
        %v3395 = vmax.f32 %v3363, 0.0
        %v3396 = vmax.f32 %v3364, 0.0
        %v3397 = vmax.f32 %v3365, 0.0
        %v3398 = vmax.f32 %v3366, 0.0
        %v3399 = vmax.f32 %v3367, 0.0
        %v3400 = vmax.f32 %v3368, 0.0
        %v3401 = vmax.f32 %v3369, 0.0
        %v3402 = vmax.f32 %v3370, 0.0
        %v3403 = vmax.f32 %v3371, 0.0
        %v3404 = vmax.f32 %v3372, 0.0
        %v3405 = vmax.f32 %v3373, 0.0
        %v3406 = vmax.f32 %v3374, 0.0
        %v3407 = vmax.f32 %v3375, 0.0
        %v3408 = vmax.f32 %v3376, 0.0
        %v3409 = vmax.f32 %v3377, 0.0
        %v3410 = vmax.f32 %v3378, 0.0
        %v3411 = vmax.f32 %v3379, 0.0
        %v3412 = vmax.f32 %v3380, 0.0
        %v3413 = vmax.f32 %v3381, 0.0
        %v3414 = vmax.f32 %v3382, 0.0
        %v3415 = vmax.f32 %v3383, 0.0
        %v3416 = vmax.f32 %v3384, 0.0
        %v3417 = vmax.f32 %v3385, 0.0
        %v3418 = vmax.f32 %v3386, 0.0
        %v3419 = vld [vmem:[%s292] sm:$0xff]
        %v3420 = vld [vmem:[%s292 + $0x8] sm:$0xff]
        %v3421 = vld [vmem:[%s292 + $0x10] sm:$0xff]
        %v3422 = vld [vmem:[%s292 + $0x18] sm:$0xff]
        %v3423 = vld [vmem:[%s292 + $0x20] sm:$0xff]
        %v3424 = vld [vmem:[%s292 + $0x28] sm:$0xff]
        %v3425 = vld [vmem:[%s292 + $0x30] sm:$0xff]
        %v3426 = vld [vmem:[%s292 + $0x38] sm:$0xff]
        %v3427 = vld [vmem:[%s292 + $0x40] sm:$0xff]
        %v3428 = vld [vmem:[%s292 + $0x48] sm:$0xff]
        %v3429 = vld [vmem:[%s292 + $0x50] sm:$0xff]
        %v3430 = vld [vmem:[%s292 + $0x58] sm:$0xff]
        %v3431 = vld [vmem:[%s292 + $0x60] sm:$0xff]
        %v3432 = vld [vmem:[%s292 + $0x68] sm:$0xff]
        %v3433 = vld [vmem:[%s292 + $0x70] sm:$0xff]
        %v3434 = vld [vmem:[%s292 + $0x78] sm:$0xff]
        %v3435 = vld [vmem:[%s292 + $0x80] sm:$0xff]
        %v3436 = vld [vmem:[%s292 + $0x88] sm:$0xff]
        %v3437 = vld [vmem:[%s292 + $0x90] sm:$0xff]
        %v3438 = vld [vmem:[%s292 + $0x98] sm:$0xff]
        %v3439 = vld [vmem:[%s292 + $0xa0] sm:$0xff]
        %v3440 = vld [vmem:[%s292 + $0xa8] sm:$0xff]
        %v3441 = vld [vmem:[%s292 + $0xb0] sm:$0xff]
        %v3442 = vld [vmem:[%s292 + $0xb8] sm:$0xff]
        %v3443 = vld [vmem:[%s292 + $0xc0] sm:$0xff]
        %v3444 = vld [vmem:[%s292 + $0xc8] sm:$0xff]
        %v3445 = vld [vmem:[%s292 + $0xd0] sm:$0xff]
        %v3446 = vld [vmem:[%s292 + $0xd8] sm:$0xff]
        %v3447 = vld [vmem:[%s292 + $0xe0] sm:$0xff]
        %v3448 = vld [vmem:[%s292 + $0xe8] sm:$0xff]
        %v3449 = vld [vmem:[%s292 + $0xf0] sm:$0xff]
        %v3450 = vld [vmem:[%s292 + $0xf8] sm:$0xff]
        %v3451 = vadd.f32 %v3419, %v3387
        %v3452 = vadd.f32 %v3420, %v3388
        %v3453 = vadd.f32 %v3421, %v3389
        %v3454 = vadd.f32 %v3422, %v3390
        %v3455 = vadd.f32 %v3423, %v3391
        %v3456 = vadd.f32 %v3424, %v3392
        %v3457 = vadd.f32 %v3425, %v3393
        %v3458 = vadd.f32 %v3426, %v3394
        %v3459 = vadd.f32 %v3427, %v3395
        %v3460 = vadd.f32 %v3428, %v3396
        %v3461 = vadd.f32 %v3429, %v3397
        %v3462 = vadd.f32 %v3430, %v3398
        %v3463 = vadd.f32 %v3431, %v3399
        %v3464 = vadd.f32 %v3432, %v3400
        %v3465 = vadd.f32 %v3433, %v3401
        %v3466 = vadd.f32 %v3434, %v3402
        %v3467 = vadd.f32 %v3435, %v3403
        %v3468 = vadd.f32 %v3436, %v3404
        %v3469 = vadd.f32 %v3437, %v3405
        %v3470 = vadd.f32 %v3438, %v3406
        %v3471 = vadd.f32 %v3439, %v3407
        %v3472 = vadd.f32 %v3440, %v3408
        %v3473 = vadd.f32 %v3441, %v3409
        %v3474 = vadd.f32 %v3442, %v3410
        %v3475 = vadd.f32 %v3443, %v3411
        %v3476 = vadd.f32 %v3444, %v3412
        %v3477 = vadd.f32 %v3445, %v3413
        %v3478 = vadd.f32 %v3446, %v3414
        %v3479 = vadd.f32 %v3447, %v3415
        %v3480 = vadd.f32 %v3448, %v3416
        %v3481 = vadd.f32 %v3449, %v3417
        %v3482 = vadd.f32 %v3450, %v3418
        %v3483 = vld [vmem:[%s5] sm:$0x1]
        %v3484 = vrot.slane %v3451, 7
        %v3485 = vrot.slane %v3452, 7
        %v3486 = vrot.slane %v3453, 7
        %v3487 = vrot.slane %v3454, 7
        %v3488 = vrot.slane %v3455, 7
        %v3489 = vrot.slane %v3456, 7
        %v3490 = vrot.slane %v3457, 7
        %v3491 = vrot.slane %v3458, 7
        %v3492 = vrot.slane %v3459, 7
        %v3493 = vrot.slane %v3460, 7
        %v3494 = vrot.slane %v3461, 7
        %v3495 = vrot.slane %v3462, 7
        %v3496 = vrot.slane %v3463, 7
        %v3497 = vrot.slane %v3464, 7
        %v3498 = vrot.slane %v3465, 7
        %v3499 = vrot.slane %v3466, 7
        %v3500 = vrot.slane %v3467, 7
        %v3501 = vrot.slane %v3468, 7
        %v3502 = vrot.slane %v3469, 7
        %v3503 = vrot.slane %v3470, 7
        %v3504 = vrot.slane %v3471, 7
        %v3505 = vrot.slane %v3472, 7
        %v3506 = vrot.slane %v3473, 7
        %v3507 = vrot.slane %v3474, 7
        %v3508 = vrot.slane %v3475, 7
        %v3509 = vrot.slane %v3476, 7
        %v3510 = vrot.slane %v3477, 7
        %v3511 = vrot.slane %v3478, 7
        %v3512 = vrot.slane %v3479, 7
        %v3513 = vrot.slane %v3480, 7
        %v3514 = vrot.slane %v3481, 7
        %v3515 = vrot.slane %v3482, 7
        %v3516 = vsel %vm477, %v3514, %v3515
        %v3517 = vsel %vm477, %v3513, %v3514
        %v3518 = vsel %vm477, %v3512, %v3513
        %v3519 = vsel %vm477, %v3511, %v3512
        %v3520 = vsel %vm477, %v3510, %v3511
        %v3521 = vsel %vm477, %v3509, %v3510
        %v3522 = vsel %vm477, %v3508, %v3509
        %v3523 = vsel %vm477, %v3507, %v3508
        %v3524 = vsel %vm477, %v3506, %v3507
        %v3525 = vsel %vm477, %v3505, %v3506
        %v3526 = vsel %vm477, %v3504, %v3505
        %v3527 = vsel %vm477, %v3503, %v3504
        %v3528 = vsel %vm477, %v3502, %v3503
        %v3529 = vsel %vm477, %v3501, %v3502
        %v3530 = vsel %vm477, %v3500, %v3501
        %v3531 = vsel %vm477, %v3499, %v3500
        %v3532 = vsel %vm477, %v3498, %v3499
        %v3533 = vsel %vm477, %v3497, %v3498
        %v3534 = vsel %vm477, %v3496, %v3497
        %v3535 = vsel %vm477, %v3495, %v3496
        %v3536 = vsel %vm477, %v3494, %v3495
        %v3537 = vsel %vm477, %v3493, %v3494
        %v3538 = vsel %vm477, %v3492, %v3493
        %v3539 = vsel %vm477, %v3491, %v3492
        %v3540 = vsel %vm477, %v3490, %v3491
        %v3541 = vsel %vm477, %v3489, %v3490
        %v3542 = vsel %vm477, %v3488, %v3489
        %v3543 = vsel %vm477, %v3487, %v3488
        %v3544 = vsel %vm477, %v3486, %v3487
        %v3545 = vsel %vm477, %v3485, %v3486
        %v3546 = vsel %vm477, %v3484, %v3485
        %v3547 = vsel %vm477, %v3515, %v3484
        %v3548 = vsel %vm638, %v3517, 0.0
        %v3549 = vsel %vm639, %v3516, 0.0
        %v3550 = vsel %vm640, %v3547, 0.0
        %v3551 = vsel %vm641, %v3546, 0.0
        %v3552 = vsel %vm642, %v3545, 0.0
        %v3553 = vsel %vm643, %v3544, 0.0
        %v3554 = vsel %vm644, %v3543, 0.0
        %v3555 = vsel %vm645, %v3542, 0.0
        %v3556 = vsel %vm646, %v3541, 0.0
        %v3557 = vsel %vm647, %v3540, 0.0
        %v3558 = vsel %vm648, %v3539, 0.0
        %v3559 = vsel %vm649, %v3538, 0.0
        %v3560 = vsel %vm650, %v3537, 0.0
        %v3561 = vsel %vm651, %v3536, 0.0
        %v3562 = vsel %vm652, %v3535, 0.0
        %v3563 = vsel %vm653, %v3534, 0.0
        %v3564 = vsel %vm654, %v3533, 0.0
        %v3565 = vsel %vm655, %v3532, 0.0
        %v3566 = vsel %vm656, %v3531, 0.0
        %v3567 = vsel %vm657, %v3530, 0.0
        %v3568 = vsel %vm658, %v3529, 0.0
        %v3569 = vsel %vm659, %v3528, 0.0
        %v3570 = vsel %vm660, %v3527, 0.0
        %v3571 = vsel %vm661, %v3526, 0.0
        %v3572 = vsel %vm662, %v3525, 0.0
        %v3573 = vsel %vm663, %v3524, 0.0
        %v3574 = vsel %vm664, %v3523, 0.0
        %v3575 = vsel %vm665, %v3522, 0.0
        %v3576 = vsel %vm666, %v3521, 0.0
        %v3577 = vsel %vm667, %v3520, 0.0
        %v3578 = vsel %vm668, %v3519, 0.0
        %v3579 = vsel %vm669, %v3518, 0.0
        %v3580 = vpack.c.bf16 %v3549, %v3548
        %v3581 = vpack.c.bf16 %v3551, %v3550
        %v3582 = vpack.c.bf16 %v3553, %v3552
        %v3583 = vpack.c.bf16 %v3555, %v3554
        %v3584 = vpack.c.bf16 %v3557, %v3556
        %v3585 = vpack.c.bf16 %v3559, %v3558
        %v3586 = vpack.c.bf16 %v3561, %v3560
        %v3587 = vpack.c.bf16 %v3563, %v3562
        %v3588 = vpack.c.bf16 %v3565, %v3564
        %v3589 = vpack.c.bf16 %v3567, %v3566
        %v3590 = vpack.c.bf16 %v3569, %v3568
        %v3591 = vpack.c.bf16 %v3571, %v3570
        %v3592 = vpack.c.bf16 %v3573, %v3572
        %v3593 = vpack.c.bf16 %v3575, %v3574
        %v3594 = vpack.c.bf16 %v3577, %v3576
        %v3595 = vpack.c.bf16 %v3579, %v3578
        %v3596 = vld [vmem:[#allocation8] sm:$0xf]
        %v3597 = vld [vmem:[#allocation8 + $0x4] sm:$0xf]
        %v3598 = vld [vmem:[#allocation8 + $0x8] sm:$0xf]
        %v3599 = vld [vmem:[#allocation8 + $0xc] sm:$0xf]
        %v3600 = vld [vmem:[#allocation8 + $0x10] sm:$0xf]
        %v3601 = vld [vmem:[#allocation8 + $0x14] sm:$0xf]
        %v3602 = vld [vmem:[#allocation8 + $0x18] sm:$0xf]
        %v3603 = vld [vmem:[#allocation8 + $0x1c] sm:$0xf]
        %v3604 = vld [vmem:[#allocation8 + $0x20] sm:$0xf]
        %v3605 = vld [vmem:[#allocation8 + $0x24] sm:$0xf]
        %v3606 = vld [vmem:[#allocation8 + $0x28] sm:$0xf]
        %v3607 = vld [vmem:[#allocation8 + $0x2c] sm:$0xf]
        %v3608 = vld [vmem:[#allocation8 + $0x30] sm:$0xf]
        %v3609 = vld [vmem:[#allocation8 + $0x34] sm:$0xf]
        %v3610 = vld [vmem:[#allocation8 + $0x38] sm:$0xf]
        %v3611 = vld [vmem:[#allocation8 + $0x3c] sm:$0xf]
        %v3612 = vsel %vm766, %v3481, 0.0
        %v3613 = vsel %vm767, %v3482, 0.0
        %v3614 = vsel %vm768, %v3451, 0.0
        %v3615 = vsel %vm769, %v3452, 0.0
        %v3616 = vsel %vm770, %v3453, 0.0
        %v3617 = vsel %vm771, %v3454, 0.0
        %v3618 = vsel %vm772, %v3455, 0.0
        %v3619 = vsel %vm773, %v3456, 0.0
        %v3620 = vsel %vm774, %v3457, 0.0
        %v3621 = vsel %vm775, %v3458, 0.0
        %v3622 = vsel %vm776, %v3459, 0.0
        %v3623 = vsel %vm777, %v3460, 0.0
        %v3624 = vsel %vm778, %v3461, 0.0
        %v3625 = vsel %vm779, %v3462, 0.0
        %v3626 = vsel %vm780, %v3463, 0.0
        %v3627 = vsel %vm781, %v3464, 0.0
        %v3628 = vsel %vm782, %v3465, 0.0
        %v3629 = vsel %vm783, %v3466, 0.0
        %v3630 = vsel %vm784, %v3467, 0.0
        %v3631 = vsel %vm785, %v3468, 0.0
        %v3632 = vsel %vm786, %v3469, 0.0
        %v3633 = vsel %vm787, %v3470, 0.0
        %v3634 = vsel %vm788, %v3471, 0.0
        %v3635 = vsel %vm789, %v3472, 0.0
        %v3636 = vsel %vm790, %v3473, 0.0
        %v3637 = vsel %vm791, %v3474, 0.0
        %v3638 = vsel %vm792, %v3475, 0.0
        %v3639 = vsel %vm793, %v3476, 0.0
        %v3640 = vsel %vm794, %v3477, 0.0
        %v3641 = vsel %vm795, %v3478, 0.0
        %v3642 = vsel %vm796, %v3479, 0.0
        %v3643 = vsel %vm797, %v3480, 0.0
        %v3644 = vpack.c.bf16 %v3613, %v3612
        %v3645 = vpack.c.bf16 %v3615, %v3614
        %v3646 = vpack.c.bf16 %v3617, %v3616
        %v3647 = vpack.c.bf16 %v3619, %v3618
        %v3648 = vpack.c.bf16 %v3621, %v3620
        %v3649 = vpack.c.bf16 %v3623, %v3622
        %v3650 = vpack.c.bf16 %v3625, %v3624
        %v3651 = vpack.c.bf16 %v3627, %v3626
        %v3652 = vpack.c.bf16 %v3629, %v3628
        %v3653 = vpack.c.bf16 %v3631, %v3630
        %v3654 = vpack.c.bf16 %v3633, %v3632
        %v3655 = vpack.c.bf16 %v3635, %v3634
        %v3656 = vpack.c.bf16 %v3637, %v3636
        %v3657 = vpack.c.bf16 %v3639, %v3638
        %v3658 = vpack.c.bf16 %v3641, %v3640
        %v3659 = vpack.c.bf16 %v3643, %v3642
        %s3660 = scalar_lea.vmem [#allocation8], 64
        %v3661 = vld [vmem:[%s3660] sm:$0xf]
        %v3662 = vld [vmem:[%s3660 + $0x4] sm:$0xf]
        %v3663 = vld [vmem:[%s3660 + $0x8] sm:$0xf]
        %v3664 = vld [vmem:[%s3660 + $0xc] sm:$0xf]
        %v3665 = vld [vmem:[%s3660 + $0x10] sm:$0xf]
        %v3666 = vld [vmem:[%s3660 + $0x14] sm:$0xf]
        %v3667 = vld [vmem:[%s3660 + $0x18] sm:$0xf]
        %v3668 = vld [vmem:[%s3660 + $0x1c] sm:$0xf]
        %v3669 = vld [vmem:[%s3660 + $0x20] sm:$0xf]
        %v3670 = vld [vmem:[%s3660 + $0x24] sm:$0xf]
        %v3671 = vld [vmem:[%s3660 + $0x28] sm:$0xf]
        %v3672 = vld [vmem:[%s3660 + $0x2c] sm:$0xf]
        %v3673 = vld [vmem:[%s3660 + $0x30] sm:$0xf]
        %v3674 = vld [vmem:[%s3660 + $0x34] sm:$0xf]
        %v3675 = vld [vmem:[%s3660 + $0x38] sm:$0xf]
        %v3676 = vld [vmem:[%s3660 + $0x3c] sm:$0xf]
        %v3693 = vunpack.c.l.b16 %v3661
        %v3694 = vunpack.c.l.b16 %v3662
        %v3695 = vunpack.c.l.b16 %v3663
        %v3696 = vunpack.c.l.b16 %v3664
        %v3697 = vunpack.c.l.b16 %v3665
        %v3698 = vunpack.c.l.b16 %v3666
        %v3699 = vunpack.c.l.b16 %v3667
        %v3700 = vunpack.c.l.b16 %v3668
        %v3701 = vunpack.c.l.b16 %v3669
        %v3702 = vunpack.c.l.b16 %v3670
        %v3703 = vunpack.c.l.b16 %v3671
        %v3704 = vunpack.c.l.b16 %v3672
        %v3705 = vunpack.c.l.b16 %v3673
        %v3706 = vunpack.c.l.b16 %v3674
        %v3707 = vunpack.c.l.b16 %v3675
        %v3708 = vunpack.c.l.b16 %v3676
        %v3709 = vpack.c.b16 %v3694, %v3693
        %v3710 = vpack.c.b16 %v3696, %v3695
        %v3711 = vpack.c.b16 %v3698, %v3697
        %v3712 = vpack.c.b16 %v3700, %v3699
        %v3713 = vpack.c.b16 %v3702, %v3701
        %v3714 = vpack.c.b16 %v3704, %v3703
        %v3715 = vpack.c.b16 %v3706, %v3705
        %v3716 = vpack.c.b16 %v3708, %v3707
        %3725 = vmatpush.bf16.msra.mxu0 %v3716
        %3726 = vmatpush.bf16.msra.mxu0 %v3715
        %3727 = vmatpush.bf16.msra.mxu0 %v3714
        %3728 = vmatpush.bf16.msra.mxu0 %v3713
        %3729 = vmatpush.bf16.msra.mxu0 %v3712
        %3730 = vmatpush.bf16.msra.mxu0 %v3711
        %3731 = vmatpush.bf16.msra.mxu0 %v3710
        %3732 = vmatpush.bf16.msra.mxu0 %v3709
        %3733 = vmatmul.bf16.gmra.mxu0 %v3644
        %v3734 = vpop.f32.mrf.mxu0
        %v3735 = vadd.f32 0.0, %v3734
        %v3736 = vpop.f32.mrf.mxu0
        %v3737 = vadd.f32 0.0, %v3736
        %3738 = vmatmul.bf16.gmra.mxu0 %v3645
        %v3739 = vpop.f32.mrf.mxu0
        %v3740 = vadd.f32 0.0, %v3739
        %v3741 = vpop.f32.mrf.mxu0
        %v3742 = vadd.f32 0.0, %v3741
        %3743 = vmatmul.bf16.gmra.mxu0 %v3646
        %v3744 = vpop.f32.mrf.mxu0
        %v3745 = vadd.f32 0.0, %v3744
        %v3746 = vpop.f32.mrf.mxu0
        %v3747 = vadd.f32 0.0, %v3746
        %3748 = vmatmul.bf16.gmra.mxu0 %v3647
        %v3749 = vpop.f32.mrf.mxu0
        %v3750 = vadd.f32 0.0, %v3749
        %v3751 = vpop.f32.mrf.mxu0
        %v3752 = vadd.f32 0.0, %v3751
        %3753 = vmatmul.bf16.gmra.mxu0 %v3648
        %v3754 = vpop.f32.mrf.mxu0
        %v3755 = vadd.f32 0.0, %v3754
        %v3756 = vpop.f32.mrf.mxu0
        %v3757 = vadd.f32 0.0, %v3756
        %3758 = vmatmul.bf16.gmra.mxu0 %v3649
        %v3759 = vpop.f32.mrf.mxu0
        %v3760 = vadd.f32 0.0, %v3759
        %v3761 = vpop.f32.mrf.mxu0
        %v3762 = vadd.f32 0.0, %v3761
        %3763 = vmatmul.bf16.gmra.mxu0 %v3650
        %v3764 = vpop.f32.mrf.mxu0
        %v3765 = vadd.f32 0.0, %v3764
        %v3766 = vpop.f32.mrf.mxu0
        %v3767 = vadd.f32 0.0, %v3766
        %3768 = vmatmul.bf16.gmra.mxu0 %v3651
        %v3769 = vpop.f32.mrf.mxu0
        %v3770 = vadd.f32 0.0, %v3769
        %v3771 = vpop.f32.mrf.mxu0
        %v3772 = vadd.f32 0.0, %v3771
        %3773 = vmatmul.bf16.gmra.mxu0 %v3652
        %v3774 = vpop.f32.mrf.mxu0
        %v3775 = vadd.f32 0.0, %v3774
        %v3776 = vpop.f32.mrf.mxu0
        %v3777 = vadd.f32 0.0, %v3776
        %3778 = vmatmul.bf16.gmra.mxu0 %v3653
        %v3779 = vpop.f32.mrf.mxu0
        %v3780 = vadd.f32 0.0, %v3779
        %v3781 = vpop.f32.mrf.mxu0
        %v3782 = vadd.f32 0.0, %v3781
        %3783 = vmatmul.bf16.gmra.mxu0 %v3654
        %v3784 = vpop.f32.mrf.mxu0
        %v3785 = vadd.f32 0.0, %v3784
        %v3786 = vpop.f32.mrf.mxu0
        %v3787 = vadd.f32 0.0, %v3786
        %3788 = vmatmul.bf16.gmra.mxu0 %v3655
        %v3789 = vpop.f32.mrf.mxu0
        %v3790 = vadd.f32 0.0, %v3789
        %v3791 = vpop.f32.mrf.mxu0
        %v3792 = vadd.f32 0.0, %v3791
        %3793 = vmatmul.bf16.gmra.mxu0 %v3656
        %v3794 = vpop.f32.mrf.mxu0
        %v3795 = vadd.f32 0.0, %v3794
        %v3796 = vpop.f32.mrf.mxu0
        %v3797 = vadd.f32 0.0, %v3796
        %3798 = vmatmul.bf16.gmra.mxu0 %v3657
        %v3799 = vpop.f32.mrf.mxu0
        %v3800 = vadd.f32 0.0, %v3799
        %v3801 = vpop.f32.mrf.mxu0
        %v3802 = vadd.f32 0.0, %v3801
        %3803 = vmatmul.bf16.gmra.mxu0 %v3658
        %v3804 = vpop.f32.mrf.mxu0
        %v3805 = vadd.f32 0.0, %v3804
        %v3806 = vpop.f32.mrf.mxu0
        %v3807 = vadd.f32 0.0, %v3806
        %3808 = vmatmul.bf16.gmra.mxu0 %v3659
        %v3809 = vpop.f32.mrf.mxu0
        %v3810 = vadd.f32 0.0, %v3809
        %v3811 = vpop.f32.mrf.mxu0
        %v3812 = vadd.f32 0.0, %v3811
        %3813 = vdwg.mxu0
        %v3830 = vunpack.c.l.b16 %v3596
        %v3831 = vunpack.c.l.b16 %v3597
        %v3832 = vunpack.c.l.b16 %v3598
        %v3833 = vunpack.c.l.b16 %v3599
        %v3834 = vunpack.c.l.b16 %v3600
        %v3835 = vunpack.c.l.b16 %v3601
        %v3836 = vunpack.c.l.b16 %v3602
        %v3837 = vunpack.c.l.b16 %v3603
        %v3838 = vunpack.c.l.b16 %v3604
        %v3839 = vunpack.c.l.b16 %v3605
        %v3840 = vunpack.c.l.b16 %v3606
        %v3841 = vunpack.c.l.b16 %v3607
        %v3842 = vunpack.c.l.b16 %v3608
        %v3843 = vunpack.c.l.b16 %v3609
        %v3844 = vunpack.c.l.b16 %v3610
        %v3845 = vunpack.c.l.b16 %v3611
        %v3846 = vpack.c.b16 %v3831, %v3830
        %v3847 = vpack.c.b16 %v3833, %v3832
        %v3848 = vpack.c.b16 %v3835, %v3834
        %v3849 = vpack.c.b16 %v3837, %v3836
        %v3850 = vpack.c.b16 %v3839, %v3838
        %v3851 = vpack.c.b16 %v3841, %v3840
        %v3852 = vpack.c.b16 %v3843, %v3842
        %v3853 = vpack.c.b16 %v3845, %v3844
        %3862 = vmatpush.bf16.msra.mxu0 %v3853
        %3863 = vmatpush.bf16.msra.mxu0 %v3852
        %3864 = vmatpush.bf16.msra.mxu0 %v3851
        %3865 = vmatpush.bf16.msra.mxu0 %v3850
        %3866 = vmatpush.bf16.msra.mxu0 %v3849
        %3867 = vmatpush.bf16.msra.mxu0 %v3848
        %3868 = vmatpush.bf16.msra.mxu0 %v3847
        %3869 = vmatpush.bf16.msra.mxu0 %v3846
        %3870 = vmatmul.bf16.gmra.mxu0 %v3580
        %v3871 = vpop.f32.mrf.mxu0
        %v3872 = vadd.f32 %v3735, %v3871
        %v3873 = vpop.f32.mrf.mxu0
        %v3874 = vadd.f32 %v3737, %v3873
        %3875 = vmatmul.bf16.gmra.mxu0 %v3581
        %v3876 = vpop.f32.mrf.mxu0
        %v3877 = vadd.f32 %v3740, %v3876
        %v3878 = vpop.f32.mrf.mxu0
        %v3879 = vadd.f32 %v3742, %v3878
        %3880 = vmatmul.bf16.gmra.mxu0 %v3582
        %v3881 = vpop.f32.mrf.mxu0
        %v3882 = vadd.f32 %v3745, %v3881
        %v3883 = vpop.f32.mrf.mxu0
        %v3884 = vadd.f32 %v3747, %v3883
        %3885 = vmatmul.bf16.gmra.mxu0 %v3583
        %v3886 = vpop.f32.mrf.mxu0
        %v3887 = vadd.f32 %v3750, %v3886
        %v3888 = vpop.f32.mrf.mxu0
        %v3889 = vadd.f32 %v3752, %v3888
        %3890 = vmatmul.bf16.gmra.mxu0 %v3584
        %v3891 = vpop.f32.mrf.mxu0
        %v3892 = vadd.f32 %v3755, %v3891
        %v3893 = vpop.f32.mrf.mxu0
        %v3894 = vadd.f32 %v3757, %v3893
        %3895 = vmatmul.bf16.gmra.mxu0 %v3585
        %v3896 = vpop.f32.mrf.mxu0
        %v3897 = vadd.f32 %v3760, %v3896
        %v3898 = vpop.f32.mrf.mxu0
        %v3899 = vadd.f32 %v3762, %v3898
        %3900 = vmatmul.bf16.gmra.mxu0 %v3586
        %v3901 = vpop.f32.mrf.mxu0
        %v3902 = vadd.f32 %v3765, %v3901
        %v3903 = vpop.f32.mrf.mxu0
        %v3904 = vadd.f32 %v3767, %v3903
        %3905 = vmatmul.bf16.gmra.mxu0 %v3587
        %v3906 = vpop.f32.mrf.mxu0
        %v3907 = vadd.f32 %v3770, %v3906
        %v3908 = vpop.f32.mrf.mxu0
        %v3909 = vadd.f32 %v3772, %v3908
        %3910 = vmatmul.bf16.gmra.mxu0 %v3588
        %v3911 = vpop.f32.mrf.mxu0
        %v3912 = vadd.f32 %v3775, %v3911
        %v3913 = vpop.f32.mrf.mxu0
        %v3914 = vadd.f32 %v3777, %v3913
        %3915 = vmatmul.bf16.gmra.mxu0 %v3589
        %v3916 = vpop.f32.mrf.mxu0
        %v3917 = vadd.f32 %v3780, %v3916
        %v3918 = vpop.f32.mrf.mxu0
        %v3919 = vadd.f32 %v3782, %v3918
        %3920 = vmatmul.bf16.gmra.mxu0 %v3590
        %v3921 = vpop.f32.mrf.mxu0
        %v3922 = vadd.f32 %v3785, %v3921
        %v3923 = vpop.f32.mrf.mxu0
        %v3924 = vadd.f32 %v3787, %v3923
        %3925 = vmatmul.bf16.gmra.mxu0 %v3591
        %v3926 = vpop.f32.mrf.mxu0
        %v3927 = vadd.f32 %v3790, %v3926
        %v3928 = vpop.f32.mrf.mxu0
        %v3929 = vadd.f32 %v3792, %v3928
        %3930 = vmatmul.bf16.gmra.mxu0 %v3592
        %v3931 = vpop.f32.mrf.mxu0
        %v3932 = vadd.f32 %v3795, %v3931
        %v3933 = vpop.f32.mrf.mxu0
        %v3934 = vadd.f32 %v3797, %v3933
        %3935 = vmatmul.bf16.gmra.mxu0 %v3593
        %v3936 = vpop.f32.mrf.mxu0
        %v3937 = vadd.f32 %v3800, %v3936
        %v3938 = vpop.f32.mrf.mxu0
        %v3939 = vadd.f32 %v3802, %v3938
        %3940 = vmatmul.bf16.gmra.mxu0 %v3594
        %v3941 = vpop.f32.mrf.mxu0
        %v3942 = vadd.f32 %v3805, %v3941
        %v3943 = vpop.f32.mrf.mxu0
        %v3944 = vadd.f32 %v3807, %v3943
        %3945 = vmatmul.bf16.gmra.mxu0 %v3595
        %v3946 = vpop.f32.mrf.mxu0
        %v3947 = vadd.f32 %v3810, %v3946
        %v3948 = vpop.f32.mrf.mxu0
        %v3949 = vadd.f32 %v3812, %v3948
        %3950 = vdwg.mxu0
        %v3951 = vrot.slane %v3451, 1
        %v3952 = vrot.slane %v3452, 1
        %v3953 = vrot.slane %v3453, 1
        %v3954 = vrot.slane %v3454, 1
        %v3955 = vrot.slane %v3455, 1
        %v3956 = vrot.slane %v3456, 1
        %v3957 = vrot.slane %v3457, 1
        %v3958 = vrot.slane %v3458, 1
        %v3959 = vrot.slane %v3459, 1
        %v3960 = vrot.slane %v3460, 1
        %v3961 = vrot.slane %v3461, 1
        %v3962 = vrot.slane %v3462, 1
        %v3963 = vrot.slane %v3463, 1
        %v3964 = vrot.slane %v3464, 1
        %v3965 = vrot.slane %v3465, 1
        %v3966 = vrot.slane %v3466, 1
        %v3967 = vrot.slane %v3467, 1
        %v3968 = vrot.slane %v3468, 1
        %v3969 = vrot.slane %v3469, 1
        %v3970 = vrot.slane %v3470, 1
        %v3971 = vrot.slane %v3471, 1
        %v3972 = vrot.slane %v3472, 1
        %v3973 = vrot.slane %v3473, 1
        %v3974 = vrot.slane %v3474, 1
        %v3975 = vrot.slane %v3475, 1
        %v3976 = vrot.slane %v3476, 1
        %v3977 = vrot.slane %v3477, 1
        %v3978 = vrot.slane %v3478, 1
        %v3979 = vrot.slane %v3479, 1
        %v3980 = vrot.slane %v3480, 1
        %v3981 = vrot.slane %v3481, 1
        %v3982 = vrot.slane %v3482, 1
        %v3983 = vsel %vm1169, %v3981, %v3982
        %v3984 = vsel %vm1169, %v3980, %v3981
        %v3985 = vsel %vm1169, %v3979, %v3980
        %v3986 = vsel %vm1169, %v3978, %v3979
        %v3987 = vsel %vm1169, %v3977, %v3978
        %v3988 = vsel %vm1169, %v3976, %v3977
        %v3989 = vsel %vm1169, %v3975, %v3976
        %v3990 = vsel %vm1169, %v3974, %v3975
        %v3991 = vsel %vm1169, %v3973, %v3974
        %v3992 = vsel %vm1169, %v3972, %v3973
        %v3993 = vsel %vm1169, %v3971, %v3972
        %v3994 = vsel %vm1169, %v3970, %v3971
        %v3995 = vsel %vm1169, %v3969, %v3970
        %v3996 = vsel %vm1169, %v3968, %v3969
        %v3997 = vsel %vm1169, %v3967, %v3968
        %v3998 = vsel %vm1169, %v3966, %v3967
        %v3999 = vsel %vm1169, %v3965, %v3966
        %v4000 = vsel %vm1169, %v3964, %v3965
        %v4001 = vsel %vm1169, %v3963, %v3964
        %v4002 = vsel %vm1169, %v3962, %v3963
        %v4003 = vsel %vm1169, %v3961, %v3962
        %v4004 = vsel %vm1169, %v3960, %v3961
        %v4005 = vsel %vm1169, %v3959, %v3960
        %v4006 = vsel %vm1169, %v3958, %v3959
        %v4007 = vsel %vm1169, %v3957, %v3958
        %v4008 = vsel %vm1169, %v3956, %v3957
        %v4009 = vsel %vm1169, %v3955, %v3956
        %v4010 = vsel %vm1169, %v3954, %v3955
        %v4011 = vsel %vm1169, %v3953, %v3954
        %v4012 = vsel %vm1169, %v3952, %v3953
        %v4013 = vsel %vm1169, %v3951, %v3952
        %v4014 = vsel %vm1169, %v3982, %v3951
        %v4015 = vsel %vm1298, %v3983, 0.0
        %v4016 = vsel %vm1299, %v4014, 0.0
        %v4017 = vsel %vm1300, %v4013, 0.0
        %v4018 = vsel %vm1301, %v4012, 0.0
        %v4019 = vsel %vm1302, %v4011, 0.0
        %v4020 = vsel %vm1303, %v4010, 0.0
        %v4021 = vsel %vm1304, %v4009, 0.0
        %v4022 = vsel %vm1305, %v4008, 0.0
        %v4023 = vsel %vm1306, %v4007, 0.0
        %v4024 = vsel %vm1307, %v4006, 0.0
        %v4025 = vsel %vm1308, %v4005, 0.0
        %v4026 = vsel %vm1309, %v4004, 0.0
        %v4027 = vsel %vm1310, %v4003, 0.0
        %v4028 = vsel %vm1311, %v4002, 0.0
        %v4029 = vsel %vm1312, %v4001, 0.0
        %v4030 = vsel %vm1313, %v4000, 0.0
        %v4031 = vsel %vm1314, %v3999, 0.0
        %v4032 = vsel %vm1315, %v3998, 0.0
        %v4033 = vsel %vm1316, %v3997, 0.0
        %v4034 = vsel %vm1317, %v3996, 0.0
        %v4035 = vsel %vm1318, %v3995, 0.0
        %v4036 = vsel %vm1319, %v3994, 0.0
        %v4037 = vsel %vm1320, %v3993, 0.0
        %v4038 = vsel %vm1321, %v3992, 0.0
        %v4039 = vsel %vm1322, %v3991, 0.0
        %v4040 = vsel %vm1323, %v3990, 0.0
        %v4041 = vsel %vm1324, %v3989, 0.0
        %v4042 = vsel %vm1325, %v3988, 0.0
        %v4043 = vsel %vm1326, %v3987, 0.0
        %v4044 = vsel %vm1327, %v3986, 0.0
        %v4045 = vsel %vm1328, %v3985, 0.0
        %v4046 = vsel %vm1329, %v3984, 0.0
        %v4047 = vpack.c.bf16 %v4016, %v4015
        %v4048 = vpack.c.bf16 %v4018, %v4017
        %v4049 = vpack.c.bf16 %v4020, %v4019
        %v4050 = vpack.c.bf16 %v4022, %v4021
        %v4051 = vpack.c.bf16 %v4024, %v4023
        %v4052 = vpack.c.bf16 %v4026, %v4025
        %v4053 = vpack.c.bf16 %v4028, %v4027
        %v4054 = vpack.c.bf16 %v4030, %v4029
        %v4055 = vpack.c.bf16 %v4032, %v4031
        %v4056 = vpack.c.bf16 %v4034, %v4033
        %v4057 = vpack.c.bf16 %v4036, %v4035
        %v4058 = vpack.c.bf16 %v4038, %v4037
        %v4059 = vpack.c.bf16 %v4040, %v4039
        %v4060 = vpack.c.bf16 %v4042, %v4041
        %v4061 = vpack.c.bf16 %v4044, %v4043
        %v4062 = vpack.c.bf16 %v4046, %v4045
        %s4063 = scalar_lea.vmem [#allocation8], 128
        %v4064 = vld [vmem:[%s4063] sm:$0xf]
        %v4065 = vld [vmem:[%s4063 + $0x4] sm:$0xf]
        %v4066 = vld [vmem:[%s4063 + $0x8] sm:$0xf]
        %v4067 = vld [vmem:[%s4063 + $0xc] sm:$0xf]
        %v4068 = vld [vmem:[%s4063 + $0x10] sm:$0xf]
        %v4069 = vld [vmem:[%s4063 + $0x14] sm:$0xf]
        %v4070 = vld [vmem:[%s4063 + $0x18] sm:$0xf]
        %v4071 = vld [vmem:[%s4063 + $0x1c] sm:$0xf]
        %v4072 = vld [vmem:[%s4063 + $0x20] sm:$0xf]
        %v4073 = vld [vmem:[%s4063 + $0x24] sm:$0xf]
        %v4074 = vld [vmem:[%s4063 + $0x28] sm:$0xf]
        %v4075 = vld [vmem:[%s4063 + $0x2c] sm:$0xf]
        %v4076 = vld [vmem:[%s4063 + $0x30] sm:$0xf]
        %v4077 = vld [vmem:[%s4063 + $0x34] sm:$0xf]
        %v4078 = vld [vmem:[%s4063 + $0x38] sm:$0xf]
        %v4079 = vld [vmem:[%s4063 + $0x3c] sm:$0xf]
        %v4096 = vunpack.c.l.b16 %v4064
        %v4097 = vunpack.c.l.b16 %v4065
        %v4098 = vunpack.c.l.b16 %v4066
        %v4099 = vunpack.c.l.b16 %v4067
        %v4100 = vunpack.c.l.b16 %v4068
        %v4101 = vunpack.c.l.b16 %v4069
        %v4102 = vunpack.c.l.b16 %v4070
        %v4103 = vunpack.c.l.b16 %v4071
        %v4104 = vunpack.c.l.b16 %v4072
        %v4105 = vunpack.c.l.b16 %v4073
        %v4106 = vunpack.c.l.b16 %v4074
        %v4107 = vunpack.c.l.b16 %v4075
        %v4108 = vunpack.c.l.b16 %v4076
        %v4109 = vunpack.c.l.b16 %v4077
        %v4110 = vunpack.c.l.b16 %v4078
        %v4111 = vunpack.c.l.b16 %v4079
        %v4112 = vpack.c.b16 %v4097, %v4096
        %v4113 = vpack.c.b16 %v4099, %v4098
        %v4114 = vpack.c.b16 %v4101, %v4100
        %v4115 = vpack.c.b16 %v4103, %v4102
        %v4116 = vpack.c.b16 %v4105, %v4104
        %v4117 = vpack.c.b16 %v4107, %v4106
        %v4118 = vpack.c.b16 %v4109, %v4108
        %v4119 = vpack.c.b16 %v4111, %v4110
        %4128 = vmatpush.bf16.msra.mxu0 %v4119
        %4129 = vmatpush.bf16.msra.mxu0 %v4118
        %4130 = vmatpush.bf16.msra.mxu0 %v4117
        %4131 = vmatpush.bf16.msra.mxu0 %v4116
        %4132 = vmatpush.bf16.msra.mxu0 %v4115
        %4133 = vmatpush.bf16.msra.mxu0 %v4114
        %4134 = vmatpush.bf16.msra.mxu0 %v4113
        %4135 = vmatpush.bf16.msra.mxu0 %v4112
        %4136 = vmatmul.bf16.gmra.mxu0 %v4047
        %v4137 = vpop.f32.mrf.mxu0
        %v4138 = vadd.f32 0.0, %v4137
        %v4139 = vpop.f32.mrf.mxu0
        %v4140 = vadd.f32 0.0, %v4139
        %4141 = vmatmul.bf16.gmra.mxu0 %v4048
        %v4142 = vpop.f32.mrf.mxu0
        %v4143 = vadd.f32 0.0, %v4142
        %v4144 = vpop.f32.mrf.mxu0
        %v4145 = vadd.f32 0.0, %v4144
        %4146 = vmatmul.bf16.gmra.mxu0 %v4049
        %v4147 = vpop.f32.mrf.mxu0
        %v4148 = vadd.f32 0.0, %v4147
        %v4149 = vpop.f32.mrf.mxu0
        %v4150 = vadd.f32 0.0, %v4149
        %4151 = vmatmul.bf16.gmra.mxu0 %v4050
        %v4152 = vpop.f32.mrf.mxu0
        %v4153 = vadd.f32 0.0, %v4152
        %v4154 = vpop.f32.mrf.mxu0
        %v4155 = vadd.f32 0.0, %v4154
        %4156 = vmatmul.bf16.gmra.mxu0 %v4051
        %v4157 = vpop.f32.mrf.mxu0
        %v4158 = vadd.f32 0.0, %v4157
        %v4159 = vpop.f32.mrf.mxu0
        %v4160 = vadd.f32 0.0, %v4159
        %4161 = vmatmul.bf16.gmra.mxu0 %v4052
        %v4162 = vpop.f32.mrf.mxu0
        %v4163 = vadd.f32 0.0, %v4162
        %v4164 = vpop.f32.mrf.mxu0
        %v4165 = vadd.f32 0.0, %v4164
        %4166 = vmatmul.bf16.gmra.mxu0 %v4053
        %v4167 = vpop.f32.mrf.mxu0
        %v4168 = vadd.f32 0.0, %v4167
        %v4169 = vpop.f32.mrf.mxu0
        %v4170 = vadd.f32 0.0, %v4169
        %4171 = vmatmul.bf16.gmra.mxu0 %v4054
        %v4172 = vpop.f32.mrf.mxu0
        %v4173 = vadd.f32 0.0, %v4172
        %v4174 = vpop.f32.mrf.mxu0
        %v4175 = vadd.f32 0.0, %v4174
        %4176 = vmatmul.bf16.gmra.mxu0 %v4055
        %v4177 = vpop.f32.mrf.mxu0
        %v4178 = vadd.f32 0.0, %v4177
        %v4179 = vpop.f32.mrf.mxu0
        %v4180 = vadd.f32 0.0, %v4179
        %4181 = vmatmul.bf16.gmra.mxu0 %v4056
        %v4182 = vpop.f32.mrf.mxu0
        %v4183 = vadd.f32 0.0, %v4182
        %v4184 = vpop.f32.mrf.mxu0
        %v4185 = vadd.f32 0.0, %v4184
        %4186 = vmatmul.bf16.gmra.mxu0 %v4057
        %v4187 = vpop.f32.mrf.mxu0
        %v4188 = vadd.f32 0.0, %v4187
        %v4189 = vpop.f32.mrf.mxu0
        %v4190 = vadd.f32 0.0, %v4189
        %4191 = vmatmul.bf16.gmra.mxu0 %v4058
        %v4192 = vpop.f32.mrf.mxu0
        %v4193 = vadd.f32 0.0, %v4192
        %v4194 = vpop.f32.mrf.mxu0
        %v4195 = vadd.f32 0.0, %v4194
        %4196 = vmatmul.bf16.gmra.mxu0 %v4059
        %v4197 = vpop.f32.mrf.mxu0
        %v4198 = vadd.f32 0.0, %v4197
        %v4199 = vpop.f32.mrf.mxu0
        %v4200 = vadd.f32 0.0, %v4199
        %4201 = vmatmul.bf16.gmra.mxu0 %v4060
        %v4202 = vpop.f32.mrf.mxu0
        %v4203 = vadd.f32 0.0, %v4202
        %v4204 = vpop.f32.mrf.mxu0
        %v4205 = vadd.f32 0.0, %v4204
        %4206 = vmatmul.bf16.gmra.mxu0 %v4061
        %v4207 = vpop.f32.mrf.mxu0
        %v4208 = vadd.f32 0.0, %v4207
        %v4209 = vpop.f32.mrf.mxu0
        %v4210 = vadd.f32 0.0, %v4209
        %4211 = vmatmul.bf16.gmra.mxu0 %v4062
        %v4212 = vpop.f32.mrf.mxu0
        %v4213 = vadd.f32 0.0, %v4212
        %v4214 = vpop.f32.mrf.mxu0
        %v4215 = vadd.f32 0.0, %v4214
        %4216 = vdwg.mxu0
        %v4217 = vadd.f32 %v3872, %v4138
        %v4218 = vadd.f32 %v3874, %v4140
        %v4219 = vadd.f32 %v3877, %v4143
        %v4220 = vadd.f32 %v3879, %v4145
        %v4221 = vadd.f32 %v3882, %v4148
        %v4222 = vadd.f32 %v3884, %v4150
        %v4223 = vadd.f32 %v3887, %v4153
        %v4224 = vadd.f32 %v3889, %v4155
        %v4225 = vadd.f32 %v3892, %v4158
        %v4226 = vadd.f32 %v3894, %v4160
        %v4227 = vadd.f32 %v3897, %v4163
        %v4228 = vadd.f32 %v3899, %v4165
        %v4229 = vadd.f32 %v3902, %v4168
        %v4230 = vadd.f32 %v3904, %v4170
        %v4231 = vadd.f32 %v3907, %v4173
        %v4232 = vadd.f32 %v3909, %v4175
        %v4233 = vadd.f32 %v3912, %v4178
        %v4234 = vadd.f32 %v3914, %v4180
        %v4235 = vadd.f32 %v3917, %v4183
        %v4236 = vadd.f32 %v3919, %v4185
        %v4237 = vadd.f32 %v3922, %v4188
        %v4238 = vadd.f32 %v3924, %v4190
        %v4239 = vadd.f32 %v3927, %v4193
        %v4240 = vadd.f32 %v3929, %v4195
        %v4241 = vadd.f32 %v3932, %v4198
        %v4242 = vadd.f32 %v3934, %v4200
        %v4243 = vadd.f32 %v3937, %v4203
        %v4244 = vadd.f32 %v3939, %v4205
        %v4245 = vadd.f32 %v3942, %v4208
        %v4246 = vadd.f32 %v3944, %v4210
        %v4247 = vadd.f32 %v3947, %v4213
        %v4248 = vadd.f32 %v3949, %v4215
        %v4249 = vsel %vm1596, %v3547, 0.0
        %v4250 = vsel %vm1597, %v3546, 0.0
        %v4251 = vsel %vm1598, %v3545, 0.0
        %v4252 = vsel %vm1599, %v3544, 0.0
        %v4253 = vsel %vm1600, %v3543, 0.0
        %v4254 = vsel %vm1601, %v3542, 0.0
        %v4255 = vsel %vm1602, %v3541, 0.0
        %v4256 = vsel %vm1603, %v3540, 0.0
        %v4257 = vsel %vm1604, %v3539, 0.0
        %v4258 = vsel %vm1605, %v3538, 0.0
        %v4259 = vsel %vm1606, %v3537, 0.0
        %v4260 = vsel %vm1607, %v3536, 0.0
        %v4261 = vsel %vm1608, %v3535, 0.0
        %v4262 = vsel %vm1609, %v3534, 0.0
        %v4263 = vsel %vm1610, %v3533, 0.0
        %v4264 = vsel %vm1611, %v3532, 0.0
        %v4265 = vsel %vm1612, %v3531, 0.0
        %v4266 = vsel %vm1613, %v3530, 0.0
        %v4267 = vsel %vm1614, %v3529, 0.0
        %v4268 = vsel %vm1615, %v3528, 0.0
        %v4269 = vsel %vm1616, %v3527, 0.0
        %v4270 = vsel %vm1617, %v3526, 0.0
        %v4271 = vsel %vm1618, %v3525, 0.0
        %v4272 = vsel %vm1619, %v3524, 0.0
        %v4273 = vsel %vm1620, %v3523, 0.0
        %v4274 = vsel %vm1621, %v3522, 0.0
        %v4275 = vsel %vm1622, %v3521, 0.0
        %v4276 = vsel %vm1623, %v3520, 0.0
        %v4277 = vsel %vm1624, %v3519, 0.0
        %v4278 = vsel %vm1625, %v3518, 0.0
        %v4279 = vsel %vm1626, %v3517, 0.0
        %v4280 = vsel %vm1627, %v3516, 0.0
        %v4281 = vpack.c.bf16 %v4250, %v4249
        %v4282 = vpack.c.bf16 %v4252, %v4251
        %v4283 = vpack.c.bf16 %v4254, %v4253
        %v4284 = vpack.c.bf16 %v4256, %v4255
        %v4285 = vpack.c.bf16 %v4258, %v4257
        %v4286 = vpack.c.bf16 %v4260, %v4259
        %v4287 = vpack.c.bf16 %v4262, %v4261
        %v4288 = vpack.c.bf16 %v4264, %v4263
        %v4289 = vpack.c.bf16 %v4266, %v4265
        %v4290 = vpack.c.bf16 %v4268, %v4267
        %v4291 = vpack.c.bf16 %v4270, %v4269
        %v4292 = vpack.c.bf16 %v4272, %v4271
        %v4293 = vpack.c.bf16 %v4274, %v4273
        %v4294 = vpack.c.bf16 %v4276, %v4275
        %v4295 = vpack.c.bf16 %v4278, %v4277
        %v4296 = vpack.c.bf16 %v4280, %v4279
        %s4297 = scalar_lea.vmem [#allocation8], 192
        %v4298 = vld [vmem:[%s4297] sm:$0xf]
        %v4299 = vld [vmem:[%s4297 + $0x4] sm:$0xf]
        %v4300 = vld [vmem:[%s4297 + $0x8] sm:$0xf]
        %v4301 = vld [vmem:[%s4297 + $0xc] sm:$0xf]
        %v4302 = vld [vmem:[%s4297 + $0x10] sm:$0xf]
        %v4303 = vld [vmem:[%s4297 + $0x14] sm:$0xf]
        %v4304 = vld [vmem:[%s4297 + $0x18] sm:$0xf]
        %v4305 = vld [vmem:[%s4297 + $0x1c] sm:$0xf]
        %v4306 = vld [vmem:[%s4297 + $0x20] sm:$0xf]
        %v4307 = vld [vmem:[%s4297 + $0x24] sm:$0xf]
        %v4308 = vld [vmem:[%s4297 + $0x28] sm:$0xf]
        %v4309 = vld [vmem:[%s4297 + $0x2c] sm:$0xf]
        %v4310 = vld [vmem:[%s4297 + $0x30] sm:$0xf]
        %v4311 = vld [vmem:[%s4297 + $0x34] sm:$0xf]
        %v4312 = vld [vmem:[%s4297 + $0x38] sm:$0xf]
        %v4313 = vld [vmem:[%s4297 + $0x3c] sm:$0xf]
        %v4330 = vunpack.c.l.b16 %v4298
        %v4331 = vunpack.c.l.b16 %v4299
        %v4332 = vunpack.c.l.b16 %v4300
        %v4333 = vunpack.c.l.b16 %v4301
        %v4334 = vunpack.c.l.b16 %v4302
        %v4335 = vunpack.c.l.b16 %v4303
        %v4336 = vunpack.c.l.b16 %v4304
        %v4337 = vunpack.c.l.b16 %v4305
        %v4338 = vunpack.c.l.b16 %v4306
        %v4339 = vunpack.c.l.b16 %v4307
        %v4340 = vunpack.c.l.b16 %v4308
        %v4341 = vunpack.c.l.b16 %v4309
        %v4342 = vunpack.c.l.b16 %v4310
        %v4343 = vunpack.c.l.b16 %v4311
        %v4344 = vunpack.c.l.b16 %v4312
        %v4345 = vunpack.c.l.b16 %v4313
        %v4346 = vpack.c.b16 %v4331, %v4330
        %v4347 = vpack.c.b16 %v4333, %v4332
        %v4348 = vpack.c.b16 %v4335, %v4334
        %v4349 = vpack.c.b16 %v4337, %v4336
        %v4350 = vpack.c.b16 %v4339, %v4338
        %v4351 = vpack.c.b16 %v4341, %v4340
        %v4352 = vpack.c.b16 %v4343, %v4342
        %v4353 = vpack.c.b16 %v4345, %v4344
        %4362 = vmatpush.bf16.msra.mxu0 %v4353
        %4363 = vmatpush.bf16.msra.mxu0 %v4352
        %4364 = vmatpush.bf16.msra.mxu0 %v4351
        %4365 = vmatpush.bf16.msra.mxu0 %v4350
        %4366 = vmatpush.bf16.msra.mxu0 %v4349
        %4367 = vmatpush.bf16.msra.mxu0 %v4348
        %4368 = vmatpush.bf16.msra.mxu0 %v4347
        %4369 = vmatpush.bf16.msra.mxu0 %v4346
        %4370 = vmatmul.bf16.gmra.mxu0 %v4281
        %v4371 = vpop.f32.mrf.mxu0
        %v4372 = vadd.f32 0.0, %v4371
        %v4373 = vpop.f32.mrf.mxu0
        %v4374 = vadd.f32 0.0, %v4373
        %4375 = vmatmul.bf16.gmra.mxu0 %v4282
        %v4376 = vpop.f32.mrf.mxu0
        %v4377 = vadd.f32 0.0, %v4376
        %v4378 = vpop.f32.mrf.mxu0
        %v4379 = vadd.f32 0.0, %v4378
        %4380 = vmatmul.bf16.gmra.mxu0 %v4283
        %v4381 = vpop.f32.mrf.mxu0
        %v4382 = vadd.f32 0.0, %v4381
        %v4383 = vpop.f32.mrf.mxu0
        %v4384 = vadd.f32 0.0, %v4383
        %4385 = vmatmul.bf16.gmra.mxu0 %v4284
        %v4386 = vpop.f32.mrf.mxu0
        %v4387 = vadd.f32 0.0, %v4386
        %v4388 = vpop.f32.mrf.mxu0
        %v4389 = vadd.f32 0.0, %v4388
        %4390 = vmatmul.bf16.gmra.mxu0 %v4285
        %v4391 = vpop.f32.mrf.mxu0
        %v4392 = vadd.f32 0.0, %v4391
        %v4393 = vpop.f32.mrf.mxu0
        %v4394 = vadd.f32 0.0, %v4393
        %4395 = vmatmul.bf16.gmra.mxu0 %v4286
        %v4396 = vpop.f32.mrf.mxu0
        %v4397 = vadd.f32 0.0, %v4396
        %v4398 = vpop.f32.mrf.mxu0
        %v4399 = vadd.f32 0.0, %v4398
        %4400 = vmatmul.bf16.gmra.mxu0 %v4287
        %v4401 = vpop.f32.mrf.mxu0
        %v4402 = vadd.f32 0.0, %v4401
        %v4403 = vpop.f32.mrf.mxu0
        %v4404 = vadd.f32 0.0, %v4403
        %4405 = vmatmul.bf16.gmra.mxu0 %v4288
        %v4406 = vpop.f32.mrf.mxu0
        %v4407 = vadd.f32 0.0, %v4406
        %v4408 = vpop.f32.mrf.mxu0
        %v4409 = vadd.f32 0.0, %v4408
        %4410 = vmatmul.bf16.gmra.mxu0 %v4289
        %v4411 = vpop.f32.mrf.mxu0
        %v4412 = vadd.f32 0.0, %v4411
        %v4413 = vpop.f32.mrf.mxu0
        %v4414 = vadd.f32 0.0, %v4413
        %4415 = vmatmul.bf16.gmra.mxu0 %v4290
        %v4416 = vpop.f32.mrf.mxu0
        %v4417 = vadd.f32 0.0, %v4416
        %v4418 = vpop.f32.mrf.mxu0
        %v4419 = vadd.f32 0.0, %v4418
        %4420 = vmatmul.bf16.gmra.mxu0 %v4291
        %v4421 = vpop.f32.mrf.mxu0
        %v4422 = vadd.f32 0.0, %v4421
        %v4423 = vpop.f32.mrf.mxu0
        %v4424 = vadd.f32 0.0, %v4423
        %4425 = vmatmul.bf16.gmra.mxu0 %v4292
        %v4426 = vpop.f32.mrf.mxu0
        %v4427 = vadd.f32 0.0, %v4426
        %v4428 = vpop.f32.mrf.mxu0
        %v4429 = vadd.f32 0.0, %v4428
        %4430 = vmatmul.bf16.gmra.mxu0 %v4293
        %v4431 = vpop.f32.mrf.mxu0
        %v4432 = vadd.f32 0.0, %v4431
        %v4433 = vpop.f32.mrf.mxu0
        %v4434 = vadd.f32 0.0, %v4433
        %4435 = vmatmul.bf16.gmra.mxu0 %v4294
        %v4436 = vpop.f32.mrf.mxu0
        %v4437 = vadd.f32 0.0, %v4436
        %v4438 = vpop.f32.mrf.mxu0
        %v4439 = vadd.f32 0.0, %v4438
        %4440 = vmatmul.bf16.gmra.mxu0 %v4295
        %v4441 = vpop.f32.mrf.mxu0
        %v4442 = vadd.f32 0.0, %v4441
        %v4443 = vpop.f32.mrf.mxu0
        %v4444 = vadd.f32 0.0, %v4443
        %4445 = vmatmul.bf16.gmra.mxu0 %v4296
        %v4446 = vpop.f32.mrf.mxu0
        %v4447 = vadd.f32 0.0, %v4446
        %v4448 = vpop.f32.mrf.mxu0
        %v4449 = vadd.f32 0.0, %v4448
        %4450 = vdwg.mxu0
        %v4451 = vadd.f32 %v4217, %v4372
        %v4452 = vadd.f32 %v4218, %v4374
        %v4453 = vadd.f32 %v4219, %v4377
        %v4454 = vadd.f32 %v4220, %v4379
        %v4455 = vadd.f32 %v4221, %v4382
        %v4456 = vadd.f32 %v4222, %v4384
        %v4457 = vadd.f32 %v4223, %v4387
        %v4458 = vadd.f32 %v4224, %v4389
        %v4459 = vadd.f32 %v4225, %v4392
        %v4460 = vadd.f32 %v4226, %v4394
        %v4461 = vadd.f32 %v4227, %v4397
        %v4462 = vadd.f32 %v4228, %v4399
        %v4463 = vadd.f32 %v4229, %v4402
        %v4464 = vadd.f32 %v4230, %v4404
        %v4465 = vadd.f32 %v4231, %v4407
        %v4466 = vadd.f32 %v4232, %v4409
        %v4467 = vadd.f32 %v4233, %v4412
        %v4468 = vadd.f32 %v4234, %v4414
        %v4469 = vadd.f32 %v4235, %v4417
        %v4470 = vadd.f32 %v4236, %v4419
        %v4471 = vadd.f32 %v4237, %v4422
        %v4472 = vadd.f32 %v4238, %v4424
        %v4473 = vadd.f32 %v4239, %v4427
        %v4474 = vadd.f32 %v4240, %v4429
        %v4475 = vadd.f32 %v4241, %v4432
        %v4476 = vadd.f32 %v4242, %v4434
        %v4477 = vadd.f32 %v4243, %v4437
        %v4478 = vadd.f32 %v4244, %v4439
        %v4479 = vadd.f32 %v4245, %v4442
        %v4480 = vadd.f32 %v4246, %v4444
        %v4481 = vadd.f32 %v4247, %v4447
        %v4482 = vadd.f32 %v4248, %v4449
        %v4483 = vpack.c.bf16 %v3452, %v3451
        %v4484 = vpack.c.bf16 %v3454, %v3453
        %v4485 = vpack.c.bf16 %v3456, %v3455
        %v4486 = vpack.c.bf16 %v3458, %v3457
        %v4487 = vpack.c.bf16 %v3460, %v3459
        %v4488 = vpack.c.bf16 %v3462, %v3461
        %v4489 = vpack.c.bf16 %v3464, %v3463
        %v4490 = vpack.c.bf16 %v3466, %v3465
        %v4491 = vpack.c.bf16 %v3468, %v3467
        %v4492 = vpack.c.bf16 %v3470, %v3469
        %v4493 = vpack.c.bf16 %v3472, %v3471
        %v4494 = vpack.c.bf16 %v3474, %v3473
        %v4495 = vpack.c.bf16 %v3476, %v3475
        %v4496 = vpack.c.bf16 %v3478, %v3477
        %v4497 = vpack.c.bf16 %v3480, %v3479
        %v4498 = vpack.c.bf16 %v3482, %v3481
        %s4499 = scalar_lea.vmem [#allocation8], 256
        %v4500 = vld [vmem:[%s4499] sm:$0xf]
        %v4501 = vld [vmem:[%s4499 + $0x4] sm:$0xf]
        %v4502 = vld [vmem:[%s4499 + $0x8] sm:$0xf]
        %v4503 = vld [vmem:[%s4499 + $0xc] sm:$0xf]
        %v4504 = vld [vmem:[%s4499 + $0x10] sm:$0xf]
        %v4505 = vld [vmem:[%s4499 + $0x14] sm:$0xf]
        %v4506 = vld [vmem:[%s4499 + $0x18] sm:$0xf]
        %v4507 = vld [vmem:[%s4499 + $0x1c] sm:$0xf]
        %v4508 = vld [vmem:[%s4499 + $0x20] sm:$0xf]
        %v4509 = vld [vmem:[%s4499 + $0x24] sm:$0xf]
        %v4510 = vld [vmem:[%s4499 + $0x28] sm:$0xf]
        %v4511 = vld [vmem:[%s4499 + $0x2c] sm:$0xf]
        %v4512 = vld [vmem:[%s4499 + $0x30] sm:$0xf]
        %v4513 = vld [vmem:[%s4499 + $0x34] sm:$0xf]
        %v4514 = vld [vmem:[%s4499 + $0x38] sm:$0xf]
        %v4515 = vld [vmem:[%s4499 + $0x3c] sm:$0xf]
        %v4532 = vunpack.c.l.b16 %v4500
        %v4533 = vunpack.c.l.b16 %v4501
        %v4534 = vunpack.c.l.b16 %v4502
        %v4535 = vunpack.c.l.b16 %v4503
        %v4536 = vunpack.c.l.b16 %v4504
        %v4537 = vunpack.c.l.b16 %v4505
        %v4538 = vunpack.c.l.b16 %v4506
        %v4539 = vunpack.c.l.b16 %v4507
        %v4540 = vunpack.c.l.b16 %v4508
        %v4541 = vunpack.c.l.b16 %v4509
        %v4542 = vunpack.c.l.b16 %v4510
        %v4543 = vunpack.c.l.b16 %v4511
        %v4544 = vunpack.c.l.b16 %v4512
        %v4545 = vunpack.c.l.b16 %v4513
        %v4546 = vunpack.c.l.b16 %v4514
        %v4547 = vunpack.c.l.b16 %v4515
        %v4548 = vpack.c.b16 %v4533, %v4532
        %v4549 = vpack.c.b16 %v4535, %v4534
        %v4550 = vpack.c.b16 %v4537, %v4536
        %v4551 = vpack.c.b16 %v4539, %v4538
        %v4552 = vpack.c.b16 %v4541, %v4540
        %v4553 = vpack.c.b16 %v4543, %v4542
        %v4554 = vpack.c.b16 %v4545, %v4544
        %v4555 = vpack.c.b16 %v4547, %v4546
        %4564 = vmatpush.bf16.msra.mxu0 %v4555
        %4565 = vmatpush.bf16.msra.mxu0 %v4554
        %4566 = vmatpush.bf16.msra.mxu0 %v4553
        %4567 = vmatpush.bf16.msra.mxu0 %v4552
        %4568 = vmatpush.bf16.msra.mxu0 %v4551
        %4569 = vmatpush.bf16.msra.mxu0 %v4550
        %4570 = vmatpush.bf16.msra.mxu0 %v4549
        %4571 = vmatpush.bf16.msra.mxu0 %v4548
        %4572 = vmatmul.bf16.gmra.mxu0 %v4483
        %v4573 = vpop.f32.mrf.mxu0
        %v4574 = vadd.f32 0.0, %v4573
        %v4575 = vpop.f32.mrf.mxu0
        %v4576 = vadd.f32 0.0, %v4575
        %4577 = vmatmul.bf16.gmra.mxu0 %v4484
        %v4578 = vpop.f32.mrf.mxu0
        %v4579 = vadd.f32 0.0, %v4578
        %v4580 = vpop.f32.mrf.mxu0
        %v4581 = vadd.f32 0.0, %v4580
        %4582 = vmatmul.bf16.gmra.mxu0 %v4485
        %v4583 = vpop.f32.mrf.mxu0
        %v4584 = vadd.f32 0.0, %v4583
        %v4585 = vpop.f32.mrf.mxu0
        %v4586 = vadd.f32 0.0, %v4585
        %4587 = vmatmul.bf16.gmra.mxu0 %v4486
        %v4588 = vpop.f32.mrf.mxu0
        %v4589 = vadd.f32 0.0, %v4588
        %v4590 = vpop.f32.mrf.mxu0
        %v4591 = vadd.f32 0.0, %v4590
        %4592 = vmatmul.bf16.gmra.mxu0 %v4487
        %v4593 = vpop.f32.mrf.mxu0
        %v4594 = vadd.f32 0.0, %v4593
        %v4595 = vpop.f32.mrf.mxu0
        %v4596 = vadd.f32 0.0, %v4595
        %4597 = vmatmul.bf16.gmra.mxu0 %v4488
        %v4598 = vpop.f32.mrf.mxu0
        %v4599 = vadd.f32 0.0, %v4598
        %v4600 = vpop.f32.mrf.mxu0
        %v4601 = vadd.f32 0.0, %v4600
        %4602 = vmatmul.bf16.gmra.mxu0 %v4489
        %v4603 = vpop.f32.mrf.mxu0
        %v4604 = vadd.f32 0.0, %v4603
        %v4605 = vpop.f32.mrf.mxu0
        %v4606 = vadd.f32 0.0, %v4605
        %4607 = vmatmul.bf16.gmra.mxu0 %v4490
        %v4608 = vpop.f32.mrf.mxu0
        %v4609 = vadd.f32 0.0, %v4608
        %v4610 = vpop.f32.mrf.mxu0
        %v4611 = vadd.f32 0.0, %v4610
        %4612 = vmatmul.bf16.gmra.mxu0 %v4491
        %v4613 = vpop.f32.mrf.mxu0
        %v4614 = vadd.f32 0.0, %v4613
        %v4615 = vpop.f32.mrf.mxu0
        %v4616 = vadd.f32 0.0, %v4615
        %4617 = vmatmul.bf16.gmra.mxu0 %v4492
        %v4618 = vpop.f32.mrf.mxu0
        %v4619 = vadd.f32 0.0, %v4618
        %v4620 = vpop.f32.mrf.mxu0
        %v4621 = vadd.f32 0.0, %v4620
        %4622 = vmatmul.bf16.gmra.mxu0 %v4493
        %v4623 = vpop.f32.mrf.mxu0
        %v4624 = vadd.f32 0.0, %v4623
        %v4625 = vpop.f32.mrf.mxu0
        %v4626 = vadd.f32 0.0, %v4625
        %4627 = vmatmul.bf16.gmra.mxu0 %v4494
        %v4628 = vpop.f32.mrf.mxu0
        %v4629 = vadd.f32 0.0, %v4628
        %v4630 = vpop.f32.mrf.mxu0
        %v4631 = vadd.f32 0.0, %v4630
        %4632 = vmatmul.bf16.gmra.mxu0 %v4495
        %v4633 = vpop.f32.mrf.mxu0
        %v4634 = vadd.f32 0.0, %v4633
        %v4635 = vpop.f32.mrf.mxu0
        %v4636 = vadd.f32 0.0, %v4635
        %4637 = vmatmul.bf16.gmra.mxu0 %v4496
        %v4638 = vpop.f32.mrf.mxu0
        %v4639 = vadd.f32 0.0, %v4638
        %v4640 = vpop.f32.mrf.mxu0
        %v4641 = vadd.f32 0.0, %v4640
        %4642 = vmatmul.bf16.gmra.mxu0 %v4497
        %v4643 = vpop.f32.mrf.mxu0
        %v4644 = vadd.f32 0.0, %v4643
        %v4645 = vpop.f32.mrf.mxu0
        %v4646 = vadd.f32 0.0, %v4645
        %4647 = vmatmul.bf16.gmra.mxu0 %v4498
        %v4648 = vpop.f32.mrf.mxu0
        %v4649 = vadd.f32 0.0, %v4648
        %v4650 = vpop.f32.mrf.mxu0
        %v4651 = vadd.f32 0.0, %v4650
        %4652 = vdwg.mxu0
        %v4653 = vadd.f32 %v4451, %v4574
        %v4654 = vadd.f32 %v4452, %v4576
        %v4655 = vadd.f32 %v4453, %v4579
        %v4656 = vadd.f32 %v4454, %v4581
        %v4657 = vadd.f32 %v4455, %v4584
        %v4658 = vadd.f32 %v4456, %v4586
        %v4659 = vadd.f32 %v4457, %v4589
        %v4660 = vadd.f32 %v4458, %v4591
        %v4661 = vadd.f32 %v4459, %v4594
        %v4662 = vadd.f32 %v4460, %v4596
        %v4663 = vadd.f32 %v4461, %v4599
        %v4664 = vadd.f32 %v4462, %v4601
        %v4665 = vadd.f32 %v4463, %v4604
        %v4666 = vadd.f32 %v4464, %v4606
        %v4667 = vadd.f32 %v4465, %v4609
        %v4668 = vadd.f32 %v4466, %v4611
        %v4669 = vadd.f32 %v4467, %v4614
        %v4670 = vadd.f32 %v4468, %v4616
        %v4671 = vadd.f32 %v4469, %v4619
        %v4672 = vadd.f32 %v4470, %v4621
        %v4673 = vadd.f32 %v4471, %v4624
        %v4674 = vadd.f32 %v4472, %v4626
        %v4675 = vadd.f32 %v4473, %v4629
        %v4676 = vadd.f32 %v4474, %v4631
        %v4677 = vadd.f32 %v4475, %v4634
        %v4678 = vadd.f32 %v4476, %v4636
        %v4679 = vadd.f32 %v4477, %v4639
        %v4680 = vadd.f32 %v4478, %v4641
        %v4681 = vadd.f32 %v4479, %v4644
        %v4682 = vadd.f32 %v4480, %v4646
        %v4683 = vadd.f32 %v4481, %v4649
        %v4684 = vadd.f32 %v4482, %v4651
        %v4685 = vsel %vm2096, %v4013, 0.0
        %v4686 = vsel %vm2097, %v4012, 0.0
        %v4687 = vsel %vm2098, %v4011, 0.0
        %v4688 = vsel %vm2099, %v4010, 0.0
        %v4689 = vsel %vm2100, %v4009, 0.0
        %v4690 = vsel %vm2101, %v4008, 0.0
        %v4691 = vsel %vm2102, %v4007, 0.0
        %v4692 = vsel %vm2103, %v4006, 0.0
        %v4693 = vsel %vm2104, %v4005, 0.0
        %v4694 = vsel %vm2105, %v4004, 0.0
        %v4695 = vsel %vm2106, %v4003, 0.0
        %v4696 = vsel %vm2107, %v4002, 0.0
        %v4697 = vsel %vm2108, %v4001, 0.0
        %v4698 = vsel %vm2109, %v4000, 0.0
        %v4699 = vsel %vm2110, %v3999, 0.0
        %v4700 = vsel %vm2111, %v3998, 0.0
        %v4701 = vsel %vm2112, %v3997, 0.0
        %v4702 = vsel %vm2113, %v3996, 0.0
        %v4703 = vsel %vm2114, %v3995, 0.0
        %v4704 = vsel %vm2115, %v3994, 0.0
        %v4705 = vsel %vm2116, %v3993, 0.0
        %v4706 = vsel %vm2117, %v3992, 0.0
        %v4707 = vsel %vm2118, %v3991, 0.0
        %v4708 = vsel %vm2119, %v3990, 0.0
        %v4709 = vsel %vm2120, %v3989, 0.0
        %v4710 = vsel %vm2121, %v3988, 0.0
        %v4711 = vsel %vm2122, %v3987, 0.0
        %v4712 = vsel %vm2123, %v3986, 0.0
        %v4713 = vsel %vm2124, %v3985, 0.0
        %v4714 = vsel %vm2125, %v3984, 0.0
        %v4715 = vsel %vm2126, %v3983, 0.0
        %v4716 = vsel %vm2127, %v4014, 0.0
        %v4717 = vpack.c.bf16 %v4686, %v4685
        %v4718 = vpack.c.bf16 %v4688, %v4687
        %v4719 = vpack.c.bf16 %v4690, %v4689
        %v4720 = vpack.c.bf16 %v4692, %v4691
        %v4721 = vpack.c.bf16 %v4694, %v4693
        %v4722 = vpack.c.bf16 %v4696, %v4695
        %v4723 = vpack.c.bf16 %v4698, %v4697
        %v4724 = vpack.c.bf16 %v4700, %v4699
        %v4725 = vpack.c.bf16 %v4702, %v4701
        %v4726 = vpack.c.bf16 %v4704, %v4703
        %v4727 = vpack.c.bf16 %v4706, %v4705
        %v4728 = vpack.c.bf16 %v4708, %v4707
        %v4729 = vpack.c.bf16 %v4710, %v4709
        %v4730 = vpack.c.bf16 %v4712, %v4711
        %v4731 = vpack.c.bf16 %v4714, %v4713
        %v4732 = vpack.c.bf16 %v4716, %v4715
        %s4733 = scalar_lea.vmem [#allocation8], 320
        %v4734 = vld [vmem:[%s4733] sm:$0xf]
        %v4735 = vld [vmem:[%s4733 + $0x4] sm:$0xf]
        %v4736 = vld [vmem:[%s4733 + $0x8] sm:$0xf]
        %v4737 = vld [vmem:[%s4733 + $0xc] sm:$0xf]
        %v4738 = vld [vmem:[%s4733 + $0x10] sm:$0xf]
        %v4739 = vld [vmem:[%s4733 + $0x14] sm:$0xf]
        %v4740 = vld [vmem:[%s4733 + $0x18] sm:$0xf]
        %v4741 = vld [vmem:[%s4733 + $0x1c] sm:$0xf]
        %v4742 = vld [vmem:[%s4733 + $0x20] sm:$0xf]
        %v4743 = vld [vmem:[%s4733 + $0x24] sm:$0xf]
        %v4744 = vld [vmem:[%s4733 + $0x28] sm:$0xf]
        %v4745 = vld [vmem:[%s4733 + $0x2c] sm:$0xf]
        %v4746 = vld [vmem:[%s4733 + $0x30] sm:$0xf]
        %v4747 = vld [vmem:[%s4733 + $0x34] sm:$0xf]
        %v4748 = vld [vmem:[%s4733 + $0x38] sm:$0xf]
        %v4749 = vld [vmem:[%s4733 + $0x3c] sm:$0xf]
        %v4766 = vunpack.c.l.b16 %v4734
        %v4767 = vunpack.c.l.b16 %v4735
        %v4768 = vunpack.c.l.b16 %v4736
        %v4769 = vunpack.c.l.b16 %v4737
        %v4770 = vunpack.c.l.b16 %v4738
        %v4771 = vunpack.c.l.b16 %v4739
        %v4772 = vunpack.c.l.b16 %v4740
        %v4773 = vunpack.c.l.b16 %v4741
        %v4774 = vunpack.c.l.b16 %v4742
        %v4775 = vunpack.c.l.b16 %v4743
        %v4776 = vunpack.c.l.b16 %v4744
        %v4777 = vunpack.c.l.b16 %v4745
        %v4778 = vunpack.c.l.b16 %v4746
        %v4779 = vunpack.c.l.b16 %v4747
        %v4780 = vunpack.c.l.b16 %v4748
        %v4781 = vunpack.c.l.b16 %v4749
        %v4782 = vpack.c.b16 %v4767, %v4766
        %v4783 = vpack.c.b16 %v4769, %v4768
        %v4784 = vpack.c.b16 %v4771, %v4770
        %v4785 = vpack.c.b16 %v4773, %v4772
        %v4786 = vpack.c.b16 %v4775, %v4774
        %v4787 = vpack.c.b16 %v4777, %v4776
        %v4788 = vpack.c.b16 %v4779, %v4778
        %v4789 = vpack.c.b16 %v4781, %v4780
        %4798 = vmatpush.bf16.msra.mxu0 %v4789
        %4799 = vmatpush.bf16.msra.mxu0 %v4788
        %4800 = vmatpush.bf16.msra.mxu0 %v4787
        %4801 = vmatpush.bf16.msra.mxu0 %v4786
        %4802 = vmatpush.bf16.msra.mxu0 %v4785
        %4803 = vmatpush.bf16.msra.mxu0 %v4784
        %4804 = vmatpush.bf16.msra.mxu0 %v4783
        %4805 = vmatpush.bf16.msra.mxu0 %v4782
        %4806 = vmatmul.bf16.gmra.mxu0 %v4717
        %v4807 = vpop.f32.mrf.mxu0
        %v4808 = vadd.f32 0.0, %v4807
        %v4809 = vpop.f32.mrf.mxu0
        %v4810 = vadd.f32 0.0, %v4809
        %4811 = vmatmul.bf16.gmra.mxu0 %v4718
        %v4812 = vpop.f32.mrf.mxu0
        %v4813 = vadd.f32 0.0, %v4812
        %v4814 = vpop.f32.mrf.mxu0
        %v4815 = vadd.f32 0.0, %v4814
        %4816 = vmatmul.bf16.gmra.mxu0 %v4719
        %v4817 = vpop.f32.mrf.mxu0
        %v4818 = vadd.f32 0.0, %v4817
        %v4819 = vpop.f32.mrf.mxu0
        %v4820 = vadd.f32 0.0, %v4819
        %4821 = vmatmul.bf16.gmra.mxu0 %v4720
        %v4822 = vpop.f32.mrf.mxu0
        %v4823 = vadd.f32 0.0, %v4822
        %v4824 = vpop.f32.mrf.mxu0
        %v4825 = vadd.f32 0.0, %v4824
        %4826 = vmatmul.bf16.gmra.mxu0 %v4721
        %v4827 = vpop.f32.mrf.mxu0
        %v4828 = vadd.f32 0.0, %v4827
        %v4829 = vpop.f32.mrf.mxu0
        %v4830 = vadd.f32 0.0, %v4829
        %4831 = vmatmul.bf16.gmra.mxu0 %v4722
        %v4832 = vpop.f32.mrf.mxu0
        %v4833 = vadd.f32 0.0, %v4832
        %v4834 = vpop.f32.mrf.mxu0
        %v4835 = vadd.f32 0.0, %v4834
        %4836 = vmatmul.bf16.gmra.mxu0 %v4723
        %v4837 = vpop.f32.mrf.mxu0
        %v4838 = vadd.f32 0.0, %v4837
        %v4839 = vpop.f32.mrf.mxu0
        %v4840 = vadd.f32 0.0, %v4839
        %4841 = vmatmul.bf16.gmra.mxu0 %v4724
        %v4842 = vpop.f32.mrf.mxu0
        %v4843 = vadd.f32 0.0, %v4842
        %v4844 = vpop.f32.mrf.mxu0
        %v4845 = vadd.f32 0.0, %v4844
        %4846 = vmatmul.bf16.gmra.mxu0 %v4725
        %v4847 = vpop.f32.mrf.mxu0
        %v4848 = vadd.f32 0.0, %v4847
        %v4849 = vpop.f32.mrf.mxu0
        %v4850 = vadd.f32 0.0, %v4849
        %4851 = vmatmul.bf16.gmra.mxu0 %v4726
        %v4852 = vpop.f32.mrf.mxu0
        %v4853 = vadd.f32 0.0, %v4852
        %v4854 = vpop.f32.mrf.mxu0
        %v4855 = vadd.f32 0.0, %v4854
        %4856 = vmatmul.bf16.gmra.mxu0 %v4727
        %v4857 = vpop.f32.mrf.mxu0
        %v4858 = vadd.f32 0.0, %v4857
        %v4859 = vpop.f32.mrf.mxu0
        %v4860 = vadd.f32 0.0, %v4859
        %4861 = vmatmul.bf16.gmra.mxu0 %v4728
        %v4862 = vpop.f32.mrf.mxu0
        %v4863 = vadd.f32 0.0, %v4862
        %v4864 = vpop.f32.mrf.mxu0
        %v4865 = vadd.f32 0.0, %v4864
        %4866 = vmatmul.bf16.gmra.mxu0 %v4729
        %v4867 = vpop.f32.mrf.mxu0
        %v4868 = vadd.f32 0.0, %v4867
        %v4869 = vpop.f32.mrf.mxu0
        %v4870 = vadd.f32 0.0, %v4869
        %4871 = vmatmul.bf16.gmra.mxu0 %v4730
        %v4872 = vpop.f32.mrf.mxu0
        %v4873 = vadd.f32 0.0, %v4872
        %v4874 = vpop.f32.mrf.mxu0
        %v4875 = vadd.f32 0.0, %v4874
        %4876 = vmatmul.bf16.gmra.mxu0 %v4731
        %v4877 = vpop.f32.mrf.mxu0
        %v4878 = vadd.f32 0.0, %v4877
        %v4879 = vpop.f32.mrf.mxu0
        %v4880 = vadd.f32 0.0, %v4879
        %4881 = vmatmul.bf16.gmra.mxu0 %v4732
        %v4882 = vpop.f32.mrf.mxu0
        %v4883 = vadd.f32 0.0, %v4882
        %v4884 = vpop.f32.mrf.mxu0
        %v4885 = vadd.f32 0.0, %v4884
        %4886 = vdwg.mxu0
        %v4887 = vadd.f32 %v4653, %v4808
        %v4888 = vadd.f32 %v4654, %v4810
        %v4889 = vadd.f32 %v4655, %v4813
        %v4890 = vadd.f32 %v4656, %v4815
        %v4891 = vadd.f32 %v4657, %v4818
        %v4892 = vadd.f32 %v4658, %v4820
        %v4893 = vadd.f32 %v4659, %v4823
        %v4894 = vadd.f32 %v4660, %v4825
        %v4895 = vadd.f32 %v4661, %v4828
        %v4896 = vadd.f32 %v4662, %v4830
        %v4897 = vadd.f32 %v4663, %v4833
        %v4898 = vadd.f32 %v4664, %v4835
        %v4899 = vadd.f32 %v4665, %v4838
        %v4900 = vadd.f32 %v4666, %v4840
        %v4901 = vadd.f32 %v4667, %v4843
        %v4902 = vadd.f32 %v4668, %v4845
        %v4903 = vadd.f32 %v4669, %v4848
        %v4904 = vadd.f32 %v4670, %v4850
        %v4905 = vadd.f32 %v4671, %v4853
        %v4906 = vadd.f32 %v4672, %v4855
        %v4907 = vadd.f32 %v4673, %v4858
        %v4908 = vadd.f32 %v4674, %v4860
        %v4909 = vadd.f32 %v4675, %v4863
        %v4910 = vadd.f32 %v4676, %v4865
        %v4911 = vadd.f32 %v4677, %v4868
        %v4912 = vadd.f32 %v4678, %v4870
        %v4913 = vadd.f32 %v4679, %v4873
        %v4914 = vadd.f32 %v4680, %v4875
        %v4915 = vadd.f32 %v4681, %v4878
        %v4916 = vadd.f32 %v4682, %v4880
        %v4917 = vadd.f32 %v4683, %v4883
        %v4918 = vadd.f32 %v4684, %v4885
        %v4919 = vsel %vm2458, %v3545, 0.0
        %v4920 = vsel %vm2459, %v3544, 0.0
        %v4921 = vsel %vm2460, %v3543, 0.0
        %v4922 = vsel %vm2461, %v3542, 0.0
        %v4923 = vsel %vm2462, %v3541, 0.0
        %v4924 = vsel %vm2463, %v3540, 0.0
        %v4925 = vsel %vm2464, %v3539, 0.0
        %v4926 = vsel %vm2465, %v3538, 0.0
        %v4927 = vsel %vm2466, %v3537, 0.0
        %v4928 = vsel %vm2467, %v3536, 0.0
        %v4929 = vsel %vm2468, %v3535, 0.0
        %v4930 = vsel %vm2469, %v3534, 0.0
        %v4931 = vsel %vm2470, %v3533, 0.0
        %v4932 = vsel %vm2471, %v3532, 0.0
        %v4933 = vsel %vm2472, %v3531, 0.0
        %v4934 = vsel %vm2473, %v3530, 0.0
        %v4935 = vsel %vm2474, %v3529, 0.0
        %v4936 = vsel %vm2475, %v3528, 0.0
        %v4937 = vsel %vm2476, %v3527, 0.0
        %v4938 = vsel %vm2477, %v3526, 0.0
        %v4939 = vsel %vm2478, %v3525, 0.0
        %v4940 = vsel %vm2479, %v3524, 0.0
        %v4941 = vsel %vm2480, %v3523, 0.0
        %v4942 = vsel %vm2481, %v3522, 0.0
        %v4943 = vsel %vm2482, %v3521, 0.0
        %v4944 = vsel %vm2483, %v3520, 0.0
        %v4945 = vsel %vm2484, %v3519, 0.0
        %v4946 = vsel %vm2485, %v3518, 0.0
        %v4947 = vsel %vm2486, %v3517, 0.0
        %v4948 = vsel %vm2487, %v3516, 0.0
        %v4949 = vsel %vm2488, %v3547, 0.0
        %v4950 = vsel %vm2489, %v3546, 0.0
        %v4951 = vpack.c.bf16 %v4920, %v4919
        %v4952 = vpack.c.bf16 %v4922, %v4921
        %v4953 = vpack.c.bf16 %v4924, %v4923
        %v4954 = vpack.c.bf16 %v4926, %v4925
        %v4955 = vpack.c.bf16 %v4928, %v4927
        %v4956 = vpack.c.bf16 %v4930, %v4929
        %v4957 = vpack.c.bf16 %v4932, %v4931
        %v4958 = vpack.c.bf16 %v4934, %v4933
        %v4959 = vpack.c.bf16 %v4936, %v4935
        %v4960 = vpack.c.bf16 %v4938, %v4937
        %v4961 = vpack.c.bf16 %v4940, %v4939
        %v4962 = vpack.c.bf16 %v4942, %v4941
        %v4963 = vpack.c.bf16 %v4944, %v4943
        %v4964 = vpack.c.bf16 %v4946, %v4945
        %v4965 = vpack.c.bf16 %v4948, %v4947
        %v4966 = vpack.c.bf16 %v4950, %v4949
        %s4967 = scalar_lea.vmem [#allocation8], 384
        %v4968 = vld [vmem:[%s4967] sm:$0xf]
        %v4969 = vld [vmem:[%s4967 + $0x4] sm:$0xf]
        %v4970 = vld [vmem:[%s4967 + $0x8] sm:$0xf]
        %v4971 = vld [vmem:[%s4967 + $0xc] sm:$0xf]
        %v4972 = vld [vmem:[%s4967 + $0x10] sm:$0xf]
        %v4973 = vld [vmem:[%s4967 + $0x14] sm:$0xf]
        %v4974 = vld [vmem:[%s4967 + $0x18] sm:$0xf]
        %v4975 = vld [vmem:[%s4967 + $0x1c] sm:$0xf]
        %v4976 = vld [vmem:[%s4967 + $0x20] sm:$0xf]
        %v4977 = vld [vmem:[%s4967 + $0x24] sm:$0xf]
        %v4978 = vld [vmem:[%s4967 + $0x28] sm:$0xf]
        %v4979 = vld [vmem:[%s4967 + $0x2c] sm:$0xf]
        %v4980 = vld [vmem:[%s4967 + $0x30] sm:$0xf]
        %v4981 = vld [vmem:[%s4967 + $0x34] sm:$0xf]
        %v4982 = vld [vmem:[%s4967 + $0x38] sm:$0xf]
        %v4983 = vld [vmem:[%s4967 + $0x3c] sm:$0xf]
        %v5000 = vunpack.c.l.b16 %v4968
        %v5001 = vunpack.c.l.b16 %v4969
        %v5002 = vunpack.c.l.b16 %v4970
        %v5003 = vunpack.c.l.b16 %v4971
        %v5004 = vunpack.c.l.b16 %v4972
        %v5005 = vunpack.c.l.b16 %v4973
        %v5006 = vunpack.c.l.b16 %v4974
        %v5007 = vunpack.c.l.b16 %v4975
        %v5008 = vunpack.c.l.b16 %v4976
        %v5009 = vunpack.c.l.b16 %v4977
        %v5010 = vunpack.c.l.b16 %v4978
        %v5011 = vunpack.c.l.b16 %v4979
        %v5012 = vunpack.c.l.b16 %v4980
        %v5013 = vunpack.c.l.b16 %v4981
        %v5014 = vunpack.c.l.b16 %v4982
        %v5015 = vunpack.c.l.b16 %v4983
        %v5016 = vpack.c.b16 %v5001, %v5000
        %v5017 = vpack.c.b16 %v5003, %v5002
        %v5018 = vpack.c.b16 %v5005, %v5004
        %v5019 = vpack.c.b16 %v5007, %v5006
        %v5020 = vpack.c.b16 %v5009, %v5008
        %v5021 = vpack.c.b16 %v5011, %v5010
        %v5022 = vpack.c.b16 %v5013, %v5012
        %v5023 = vpack.c.b16 %v5015, %v5014
        %5032 = vmatpush.bf16.msra.mxu0 %v5023
        %5033 = vmatpush.bf16.msra.mxu0 %v5022
        %5034 = vmatpush.bf16.msra.mxu0 %v5021
        %5035 = vmatpush.bf16.msra.mxu0 %v5020
        %5036 = vmatpush.bf16.msra.mxu0 %v5019
        %5037 = vmatpush.bf16.msra.mxu0 %v5018
        %5038 = vmatpush.bf16.msra.mxu0 %v5017
        %5039 = vmatpush.bf16.msra.mxu0 %v5016
        %5040 = vmatmul.bf16.gmra.mxu0 %v4951
        %v5041 = vpop.f32.mrf.mxu0
        %v5042 = vadd.f32 0.0, %v5041
        %v5043 = vpop.f32.mrf.mxu0
        %v5044 = vadd.f32 0.0, %v5043
        %5045 = vmatmul.bf16.gmra.mxu0 %v4952
        %v5046 = vpop.f32.mrf.mxu0
        %v5047 = vadd.f32 0.0, %v5046
        %v5048 = vpop.f32.mrf.mxu0
        %v5049 = vadd.f32 0.0, %v5048
        %5050 = vmatmul.bf16.gmra.mxu0 %v4953
        %v5051 = vpop.f32.mrf.mxu0
        %v5052 = vadd.f32 0.0, %v5051
        %v5053 = vpop.f32.mrf.mxu0
        %v5054 = vadd.f32 0.0, %v5053
        %5055 = vmatmul.bf16.gmra.mxu0 %v4954
        %v5056 = vpop.f32.mrf.mxu0
        %v5057 = vadd.f32 0.0, %v5056
        %v5058 = vpop.f32.mrf.mxu0
        %v5059 = vadd.f32 0.0, %v5058
        %5060 = vmatmul.bf16.gmra.mxu0 %v4955
        %v5061 = vpop.f32.mrf.mxu0
        %v5062 = vadd.f32 0.0, %v5061
        %v5063 = vpop.f32.mrf.mxu0
        %v5064 = vadd.f32 0.0, %v5063
        %5065 = vmatmul.bf16.gmra.mxu0 %v4956
        %v5066 = vpop.f32.mrf.mxu0
        %v5067 = vadd.f32 0.0, %v5066
        %v5068 = vpop.f32.mrf.mxu0
        %v5069 = vadd.f32 0.0, %v5068
        %5070 = vmatmul.bf16.gmra.mxu0 %v4957
        %v5071 = vpop.f32.mrf.mxu0
        %v5072 = vadd.f32 0.0, %v5071
        %v5073 = vpop.f32.mrf.mxu0
        %v5074 = vadd.f32 0.0, %v5073
        %5075 = vmatmul.bf16.gmra.mxu0 %v4958
        %v5076 = vpop.f32.mrf.mxu0
        %v5077 = vadd.f32 0.0, %v5076
        %v5078 = vpop.f32.mrf.mxu0
        %v5079 = vadd.f32 0.0, %v5078
        %5080 = vmatmul.bf16.gmra.mxu0 %v4959
        %v5081 = vpop.f32.mrf.mxu0
        %v5082 = vadd.f32 0.0, %v5081
        %v5083 = vpop.f32.mrf.mxu0
        %v5084 = vadd.f32 0.0, %v5083
        %5085 = vmatmul.bf16.gmra.mxu0 %v4960
        %v5086 = vpop.f32.mrf.mxu0
        %v5087 = vadd.f32 0.0, %v5086
        %v5088 = vpop.f32.mrf.mxu0
        %v5089 = vadd.f32 0.0, %v5088
        %5090 = vmatmul.bf16.gmra.mxu0 %v4961
        %v5091 = vpop.f32.mrf.mxu0
        %v5092 = vadd.f32 0.0, %v5091
        %v5093 = vpop.f32.mrf.mxu0
        %v5094 = vadd.f32 0.0, %v5093
        %5095 = vmatmul.bf16.gmra.mxu0 %v4962
        %v5096 = vpop.f32.mrf.mxu0
        %v5097 = vadd.f32 0.0, %v5096
        %v5098 = vpop.f32.mrf.mxu0
        %v5099 = vadd.f32 0.0, %v5098
        %5100 = vmatmul.bf16.gmra.mxu0 %v4963
        %v5101 = vpop.f32.mrf.mxu0
        %v5102 = vadd.f32 0.0, %v5101
        %v5103 = vpop.f32.mrf.mxu0
        %v5104 = vadd.f32 0.0, %v5103
        %5105 = vmatmul.bf16.gmra.mxu0 %v4964
        %v5106 = vpop.f32.mrf.mxu0
        %v5107 = vadd.f32 0.0, %v5106
        %v5108 = vpop.f32.mrf.mxu0
        %v5109 = vadd.f32 0.0, %v5108
        %5110 = vmatmul.bf16.gmra.mxu0 %v4965
        %v5111 = vpop.f32.mrf.mxu0
        %v5112 = vadd.f32 0.0, %v5111
        %v5113 = vpop.f32.mrf.mxu0
        %v5114 = vadd.f32 0.0, %v5113
        %5115 = vmatmul.bf16.gmra.mxu0 %v4966
        %v5116 = vpop.f32.mrf.mxu0
        %v5117 = vadd.f32 0.0, %v5116
        %v5118 = vpop.f32.mrf.mxu0
        %v5119 = vadd.f32 0.0, %v5118
        %5120 = vdwg.mxu0
        %v5121 = vadd.f32 %v4887, %v5042
        %v5122 = vadd.f32 %v4888, %v5044
        %v5123 = vadd.f32 %v4889, %v5047
        %v5124 = vadd.f32 %v4890, %v5049
        %v5125 = vadd.f32 %v4891, %v5052
        %v5126 = vadd.f32 %v4892, %v5054
        %v5127 = vadd.f32 %v4893, %v5057
        %v5128 = vadd.f32 %v4894, %v5059
        %v5129 = vadd.f32 %v4895, %v5062
        %v5130 = vadd.f32 %v4896, %v5064
        %v5131 = vadd.f32 %v4897, %v5067
        %v5132 = vadd.f32 %v4898, %v5069
        %v5133 = vadd.f32 %v4899, %v5072
        %v5134 = vadd.f32 %v4900, %v5074
        %v5135 = vadd.f32 %v4901, %v5077
        %v5136 = vadd.f32 %v4902, %v5079
        %v5137 = vadd.f32 %v4903, %v5082
        %v5138 = vadd.f32 %v4904, %v5084
        %v5139 = vadd.f32 %v4905, %v5087
        %v5140 = vadd.f32 %v4906, %v5089
        %v5141 = vadd.f32 %v4907, %v5092
        %v5142 = vadd.f32 %v4908, %v5094
        %v5143 = vadd.f32 %v4909, %v5097
        %v5144 = vadd.f32 %v4910, %v5099
        %v5145 = vadd.f32 %v4911, %v5102
        %v5146 = vadd.f32 %v4912, %v5104
        %v5147 = vadd.f32 %v4913, %v5107
        %v5148 = vadd.f32 %v4914, %v5109
        %v5149 = vadd.f32 %v4915, %v5112
        %v5150 = vadd.f32 %v4916, %v5114
        %v5151 = vadd.f32 %v4917, %v5117
        %v5152 = vadd.f32 %v4918, %v5119
        %v5153 = vsel %vm2756, %v3453, 0.0
        %v5154 = vsel %vm2757, %v3454, 0.0
        %v5155 = vsel %vm2758, %v3455, 0.0
        %v5156 = vsel %vm2759, %v3456, 0.0
        %v5157 = vsel %vm2760, %v3457, 0.0
        %v5158 = vsel %vm2761, %v3458, 0.0
        %v5159 = vsel %vm2762, %v3459, 0.0
        %v5160 = vsel %vm2763, %v3460, 0.0
        %v5161 = vsel %vm2764, %v3461, 0.0
        %v5162 = vsel %vm2765, %v3462, 0.0
        %v5163 = vsel %vm2766, %v3463, 0.0
        %v5164 = vsel %vm2767, %v3464, 0.0
        %v5165 = vsel %vm2768, %v3465, 0.0
        %v5166 = vsel %vm2769, %v3466, 0.0
        %v5167 = vsel %vm2770, %v3467, 0.0
        %v5168 = vsel %vm2771, %v3468, 0.0
        %v5169 = vsel %vm2772, %v3469, 0.0
        %v5170 = vsel %vm2773, %v3470, 0.0
        %v5171 = vsel %vm2774, %v3471, 0.0
        %v5172 = vsel %vm2775, %v3472, 0.0
        %v5173 = vsel %vm2776, %v3473, 0.0
        %v5174 = vsel %vm2777, %v3474, 0.0
        %v5175 = vsel %vm2778, %v3475, 0.0
        %v5176 = vsel %vm2779, %v3476, 0.0
        %v5177 = vsel %vm2780, %v3477, 0.0
        %v5178 = vsel %vm2781, %v3478, 0.0
        %v5179 = vsel %vm2782, %v3479, 0.0
        %v5180 = vsel %vm2783, %v3480, 0.0
        %v5181 = vsel %vm2784, %v3481, 0.0
        %v5182 = vsel %vm2785, %v3482, 0.0
        %v5183 = vsel %vm2786, %v3451, 0.0
        %v5184 = vsel %vm2787, %v3452, 0.0
        %v5185 = vpack.c.bf16 %v5154, %v5153
        %v5186 = vpack.c.bf16 %v5156, %v5155
        %v5187 = vpack.c.bf16 %v5158, %v5157
        %v5188 = vpack.c.bf16 %v5160, %v5159
        %v5189 = vpack.c.bf16 %v5162, %v5161
        %v5190 = vpack.c.bf16 %v5164, %v5163
        %v5191 = vpack.c.bf16 %v5166, %v5165
        %v5192 = vpack.c.bf16 %v5168, %v5167
        %v5193 = vpack.c.bf16 %v5170, %v5169
        %v5194 = vpack.c.bf16 %v5172, %v5171
        %v5195 = vpack.c.bf16 %v5174, %v5173
        %v5196 = vpack.c.bf16 %v5176, %v5175
        %v5197 = vpack.c.bf16 %v5178, %v5177
        %v5198 = vpack.c.bf16 %v5180, %v5179
        %v5199 = vpack.c.bf16 %v5182, %v5181
        %v5200 = vpack.c.bf16 %v5184, %v5183
        %s5201 = scalar_lea.vmem [#allocation8], 448
        %v5202 = vld [vmem:[%s5201] sm:$0xf]
        %v5203 = vld [vmem:[%s5201 + $0x4] sm:$0xf]
        %v5204 = vld [vmem:[%s5201 + $0x8] sm:$0xf]
        %v5205 = vld [vmem:[%s5201 + $0xc] sm:$0xf]
        %v5206 = vld [vmem:[%s5201 + $0x10] sm:$0xf]
        %v5207 = vld [vmem:[%s5201 + $0x14] sm:$0xf]
        %v5208 = vld [vmem:[%s5201 + $0x18] sm:$0xf]
        %v5209 = vld [vmem:[%s5201 + $0x1c] sm:$0xf]
        %v5210 = vld [vmem:[%s5201 + $0x20] sm:$0xf]
        %v5211 = vld [vmem:[%s5201 + $0x24] sm:$0xf]
        %v5212 = vld [vmem:[%s5201 + $0x28] sm:$0xf]
        %v5213 = vld [vmem:[%s5201 + $0x2c] sm:$0xf]
        %v5214 = vld [vmem:[%s5201 + $0x30] sm:$0xf]
        %v5215 = vld [vmem:[%s5201 + $0x34] sm:$0xf]
        %v5216 = vld [vmem:[%s5201 + $0x38] sm:$0xf]
        %v5217 = vld [vmem:[%s5201 + $0x3c] sm:$0xf]
        %v5234 = vunpack.c.l.b16 %v5202
        %v5235 = vunpack.c.l.b16 %v5203
        %v5236 = vunpack.c.l.b16 %v5204
        %v5237 = vunpack.c.l.b16 %v5205
        %v5238 = vunpack.c.l.b16 %v5206
        %v5239 = vunpack.c.l.b16 %v5207
        %v5240 = vunpack.c.l.b16 %v5208
        %v5241 = vunpack.c.l.b16 %v5209
        %v5242 = vunpack.c.l.b16 %v5210
        %v5243 = vunpack.c.l.b16 %v5211
        %v5244 = vunpack.c.l.b16 %v5212
        %v5245 = vunpack.c.l.b16 %v5213
        %v5246 = vunpack.c.l.b16 %v5214
        %v5247 = vunpack.c.l.b16 %v5215
        %v5248 = vunpack.c.l.b16 %v5216
        %v5249 = vunpack.c.l.b16 %v5217
        %v5250 = vpack.c.b16 %v5235, %v5234
        %v5251 = vpack.c.b16 %v5237, %v5236
        %v5252 = vpack.c.b16 %v5239, %v5238
        %v5253 = vpack.c.b16 %v5241, %v5240
        %v5254 = vpack.c.b16 %v5243, %v5242
        %v5255 = vpack.c.b16 %v5245, %v5244
        %v5256 = vpack.c.b16 %v5247, %v5246
        %v5257 = vpack.c.b16 %v5249, %v5248
        %5266 = vmatpush.bf16.msra.mxu0 %v5257
        %5267 = vmatpush.bf16.msra.mxu0 %v5256
        %5268 = vmatpush.bf16.msra.mxu0 %v5255
        %5269 = vmatpush.bf16.msra.mxu0 %v5254
        %5270 = vmatpush.bf16.msra.mxu0 %v5253
        %5271 = vmatpush.bf16.msra.mxu0 %v5252
        %5272 = vmatpush.bf16.msra.mxu0 %v5251
        %5273 = vmatpush.bf16.msra.mxu0 %v5250
        %5274 = vmatmul.bf16.gmra.mxu0 %v5185
        %v5275 = vpop.f32.mrf.mxu0
        %v5276 = vadd.f32 0.0, %v5275
        %v5277 = vpop.f32.mrf.mxu0
        %v5278 = vadd.f32 0.0, %v5277
        %5279 = vmatmul.bf16.gmra.mxu0 %v5186
        %v5280 = vpop.f32.mrf.mxu0
        %v5281 = vadd.f32 0.0, %v5280
        %v5282 = vpop.f32.mrf.mxu0
        %v5283 = vadd.f32 0.0, %v5282
        %5284 = vmatmul.bf16.gmra.mxu0 %v5187
        %v5285 = vpop.f32.mrf.mxu0
        %v5286 = vadd.f32 0.0, %v5285
        %v5287 = vpop.f32.mrf.mxu0
        %v5288 = vadd.f32 0.0, %v5287
        %5289 = vmatmul.bf16.gmra.mxu0 %v5188
        %v5290 = vpop.f32.mrf.mxu0
        %v5291 = vadd.f32 0.0, %v5290
        %v5292 = vpop.f32.mrf.mxu0
        %v5293 = vadd.f32 0.0, %v5292
        %5294 = vmatmul.bf16.gmra.mxu0 %v5189
        %v5295 = vpop.f32.mrf.mxu0
        %v5296 = vadd.f32 0.0, %v5295
        %v5297 = vpop.f32.mrf.mxu0
        %v5298 = vadd.f32 0.0, %v5297
        %5299 = vmatmul.bf16.gmra.mxu0 %v5190
        %v5300 = vpop.f32.mrf.mxu0
        %v5301 = vadd.f32 0.0, %v5300
        %v5302 = vpop.f32.mrf.mxu0
        %v5303 = vadd.f32 0.0, %v5302
        %5304 = vmatmul.bf16.gmra.mxu0 %v5191
        %v5305 = vpop.f32.mrf.mxu0
        %v5306 = vadd.f32 0.0, %v5305
        %v5307 = vpop.f32.mrf.mxu0
        %v5308 = vadd.f32 0.0, %v5307
        %5309 = vmatmul.bf16.gmra.mxu0 %v5192
        %v5310 = vpop.f32.mrf.mxu0
        %v5311 = vadd.f32 0.0, %v5310
        %v5312 = vpop.f32.mrf.mxu0
        %v5313 = vadd.f32 0.0, %v5312
        %5314 = vmatmul.bf16.gmra.mxu0 %v5193
        %v5315 = vpop.f32.mrf.mxu0
        %v5316 = vadd.f32 0.0, %v5315
        %v5317 = vpop.f32.mrf.mxu0
        %v5318 = vadd.f32 0.0, %v5317
        %5319 = vmatmul.bf16.gmra.mxu0 %v5194
        %v5320 = vpop.f32.mrf.mxu0
        %v5321 = vadd.f32 0.0, %v5320
        %v5322 = vpop.f32.mrf.mxu0
        %v5323 = vadd.f32 0.0, %v5322
        %5324 = vmatmul.bf16.gmra.mxu0 %v5195
        %v5325 = vpop.f32.mrf.mxu0
        %v5326 = vadd.f32 0.0, %v5325
        %v5327 = vpop.f32.mrf.mxu0
        %v5328 = vadd.f32 0.0, %v5327
        %5329 = vmatmul.bf16.gmra.mxu0 %v5196
        %v5330 = vpop.f32.mrf.mxu0
        %v5331 = vadd.f32 0.0, %v5330
        %v5332 = vpop.f32.mrf.mxu0
        %v5333 = vadd.f32 0.0, %v5332
        %5334 = vmatmul.bf16.gmra.mxu0 %v5197
        %v5335 = vpop.f32.mrf.mxu0
        %v5336 = vadd.f32 0.0, %v5335
        %v5337 = vpop.f32.mrf.mxu0
        %v5338 = vadd.f32 0.0, %v5337
        %5339 = vmatmul.bf16.gmra.mxu0 %v5198
        %v5340 = vpop.f32.mrf.mxu0
        %v5341 = vadd.f32 0.0, %v5340
        %v5342 = vpop.f32.mrf.mxu0
        %v5343 = vadd.f32 0.0, %v5342
        %5344 = vmatmul.bf16.gmra.mxu0 %v5199
        %v5345 = vpop.f32.mrf.mxu0
        %v5346 = vadd.f32 0.0, %v5345
        %v5347 = vpop.f32.mrf.mxu0
        %v5348 = vadd.f32 0.0, %v5347
        %5349 = vmatmul.bf16.gmra.mxu0 %v5200
        %v5350 = vpop.f32.mrf.mxu0
        %v5351 = vadd.f32 0.0, %v5350
        %v5352 = vpop.f32.mrf.mxu0
        %v5353 = vadd.f32 0.0, %v5352
        %5354 = vdwg.mxu0
        %v5355 = vadd.f32 %v5121, %v5276
        %v5356 = vadd.f32 %v5122, %v5278
        %v5357 = vadd.f32 %v5123, %v5281
        %v5358 = vadd.f32 %v5124, %v5283
        %v5359 = vadd.f32 %v5125, %v5286
        %v5360 = vadd.f32 %v5126, %v5288
        %v5361 = vadd.f32 %v5127, %v5291
        %v5362 = vadd.f32 %v5128, %v5293
        %v5363 = vadd.f32 %v5129, %v5296
        %v5364 = vadd.f32 %v5130, %v5298
        %v5365 = vadd.f32 %v5131, %v5301
        %v5366 = vadd.f32 %v5132, %v5303
        %v5367 = vadd.f32 %v5133, %v5306
        %v5368 = vadd.f32 %v5134, %v5308
        %v5369 = vadd.f32 %v5135, %v5311
        %v5370 = vadd.f32 %v5136, %v5313
        %v5371 = vadd.f32 %v5137, %v5316
        %v5372 = vadd.f32 %v5138, %v5318
        %v5373 = vadd.f32 %v5139, %v5321
        %v5374 = vadd.f32 %v5140, %v5323
        %v5375 = vadd.f32 %v5141, %v5326
        %v5376 = vadd.f32 %v5142, %v5328
        %v5377 = vadd.f32 %v5143, %v5331
        %v5378 = vadd.f32 %v5144, %v5333
        %v5379 = vadd.f32 %v5145, %v5336
        %v5380 = vadd.f32 %v5146, %v5338
        %v5381 = vadd.f32 %v5147, %v5341
        %v5382 = vadd.f32 %v5148, %v5343
        %v5383 = vadd.f32 %v5149, %v5346
        %v5384 = vadd.f32 %v5150, %v5348
        %v5385 = vadd.f32 %v5151, %v5351
        %v5386 = vadd.f32 %v5152, %v5353
        %v5387 = vsel %vm3086, %v4011, 0.0
        %v5388 = vsel %vm3087, %v4010, 0.0
        %v5389 = vsel %vm3088, %v4009, 0.0
        %v5390 = vsel %vm3089, %v4008, 0.0
        %v5391 = vsel %vm3090, %v4007, 0.0
        %v5392 = vsel %vm3091, %v4006, 0.0
        %v5393 = vsel %vm3092, %v4005, 0.0
        %v5394 = vsel %vm3093, %v4004, 0.0
        %v5395 = vsel %vm3094, %v4003, 0.0
        %v5396 = vsel %vm3095, %v4002, 0.0
        %v5397 = vsel %vm3096, %v4001, 0.0
        %v5398 = vsel %vm3097, %v4000, 0.0
        %v5399 = vsel %vm3098, %v3999, 0.0
        %v5400 = vsel %vm3099, %v3998, 0.0
        %v5401 = vsel %vm3100, %v3997, 0.0
        %v5402 = vsel %vm3101, %v3996, 0.0
        %v5403 = vsel %vm3102, %v3995, 0.0
        %v5404 = vsel %vm3103, %v3994, 0.0
        %v5405 = vsel %vm3104, %v3993, 0.0
        %v5406 = vsel %vm3105, %v3992, 0.0
        %v5407 = vsel %vm3106, %v3991, 0.0
        %v5408 = vsel %vm3107, %v3990, 0.0
        %v5409 = vsel %vm3108, %v3989, 0.0
        %v5410 = vsel %vm3109, %v3988, 0.0
        %v5411 = vsel %vm3110, %v3987, 0.0
        %v5412 = vsel %vm3111, %v3986, 0.0
        %v5413 = vsel %vm3112, %v3985, 0.0
        %v5414 = vsel %vm3113, %v3984, 0.0
        %v5415 = vsel %vm3114, %v3983, 0.0
        %v5416 = vsel %vm3115, %v4014, 0.0
        %v5417 = vsel %vm3116, %v4013, 0.0
        %v5418 = vsel %vm3117, %v4012, 0.0
        %v5419 = vpack.c.bf16 %v5388, %v5387
        %v5420 = vpack.c.bf16 %v5390, %v5389
        %v5421 = vpack.c.bf16 %v5392, %v5391
        %v5422 = vpack.c.bf16 %v5394, %v5393
        %v5423 = vpack.c.bf16 %v5396, %v5395
        %v5424 = vpack.c.bf16 %v5398, %v5397
        %v5425 = vpack.c.bf16 %v5400, %v5399
        %v5426 = vpack.c.bf16 %v5402, %v5401
        %v5427 = vpack.c.bf16 %v5404, %v5403
        %v5428 = vpack.c.bf16 %v5406, %v5405
        %v5429 = vpack.c.bf16 %v5408, %v5407
        %v5430 = vpack.c.bf16 %v5410, %v5409
        %v5431 = vpack.c.bf16 %v5412, %v5411
        %v5432 = vpack.c.bf16 %v5414, %v5413
        %v5433 = vpack.c.bf16 %v5416, %v5415
        %v5434 = vpack.c.bf16 %v5418, %v5417
        %s5435 = scalar_lea.vmem [#allocation8], 512
        %v5436 = vld [vmem:[%s5435] sm:$0xf]
        %v5437 = vld [vmem:[%s5435 + $0x4] sm:$0xf]
        %v5438 = vld [vmem:[%s5435 + $0x8] sm:$0xf]
        %v5439 = vld [vmem:[%s5435 + $0xc] sm:$0xf]
        %v5440 = vld [vmem:[%s5435 + $0x10] sm:$0xf]
        %v5441 = vld [vmem:[%s5435 + $0x14] sm:$0xf]
        %v5442 = vld [vmem:[%s5435 + $0x18] sm:$0xf]
        %v5443 = vld [vmem:[%s5435 + $0x1c] sm:$0xf]
        %v5444 = vld [vmem:[%s5435 + $0x20] sm:$0xf]
        %v5445 = vld [vmem:[%s5435 + $0x24] sm:$0xf]
        %v5446 = vld [vmem:[%s5435 + $0x28] sm:$0xf]
        %v5447 = vld [vmem:[%s5435 + $0x2c] sm:$0xf]
        %v5448 = vld [vmem:[%s5435 + $0x30] sm:$0xf]
        %v5449 = vld [vmem:[%s5435 + $0x34] sm:$0xf]
        %v5450 = vld [vmem:[%s5435 + $0x38] sm:$0xf]
        %v5451 = vld [vmem:[%s5435 + $0x3c] sm:$0xf]
        %v5468 = vunpack.c.l.b16 %v5436
        %v5469 = vunpack.c.l.b16 %v5437
        %v5470 = vunpack.c.l.b16 %v5438
        %v5471 = vunpack.c.l.b16 %v5439
        %v5472 = vunpack.c.l.b16 %v5440
        %v5473 = vunpack.c.l.b16 %v5441
        %v5474 = vunpack.c.l.b16 %v5442
        %v5475 = vunpack.c.l.b16 %v5443
        %v5476 = vunpack.c.l.b16 %v5444
        %v5477 = vunpack.c.l.b16 %v5445
        %v5478 = vunpack.c.l.b16 %v5446
        %v5479 = vunpack.c.l.b16 %v5447
        %v5480 = vunpack.c.l.b16 %v5448
        %v5481 = vunpack.c.l.b16 %v5449
        %v5482 = vunpack.c.l.b16 %v5450
        %v5483 = vunpack.c.l.b16 %v5451
        %v5484 = vpack.c.b16 %v5469, %v5468
        %v5485 = vpack.c.b16 %v5471, %v5470
        %v5486 = vpack.c.b16 %v5473, %v5472
        %v5487 = vpack.c.b16 %v5475, %v5474
        %v5488 = vpack.c.b16 %v5477, %v5476
        %v5489 = vpack.c.b16 %v5479, %v5478
        %v5490 = vpack.c.b16 %v5481, %v5480
        %v5491 = vpack.c.b16 %v5483, %v5482
        %5500 = vmatpush.bf16.msra.mxu0 %v5491
        %5501 = vmatpush.bf16.msra.mxu0 %v5490
        %5502 = vmatpush.bf16.msra.mxu0 %v5489
        %5503 = vmatpush.bf16.msra.mxu0 %v5488
        %5504 = vmatpush.bf16.msra.mxu0 %v5487
        %5505 = vmatpush.bf16.msra.mxu0 %v5486
        %5506 = vmatpush.bf16.msra.mxu0 %v5485
        %5507 = vmatpush.bf16.msra.mxu0 %v5484
        %5508 = vmatmul.bf16.gmra.mxu0 %v5419
        %v5509 = vpop.f32.mrf.mxu0
        %v5510 = vadd.f32 0.0, %v5509
        %v5511 = vpop.f32.mrf.mxu0
        %v5512 = vadd.f32 0.0, %v5511
        %5513 = vmatmul.bf16.gmra.mxu0 %v5420
        %v5514 = vpop.f32.mrf.mxu0
        %v5515 = vadd.f32 0.0, %v5514
        %v5516 = vpop.f32.mrf.mxu0
        %v5517 = vadd.f32 0.0, %v5516
        %5518 = vmatmul.bf16.gmra.mxu0 %v5421
        %v5519 = vpop.f32.mrf.mxu0
        %v5520 = vadd.f32 0.0, %v5519
        %v5521 = vpop.f32.mrf.mxu0
        %v5522 = vadd.f32 0.0, %v5521
        %5523 = vmatmul.bf16.gmra.mxu0 %v5422
        %v5524 = vpop.f32.mrf.mxu0
        %v5525 = vadd.f32 0.0, %v5524
        %v5526 = vpop.f32.mrf.mxu0
        %v5527 = vadd.f32 0.0, %v5526
        %5528 = vmatmul.bf16.gmra.mxu0 %v5423
        %v5529 = vpop.f32.mrf.mxu0
        %v5530 = vadd.f32 0.0, %v5529
        %v5531 = vpop.f32.mrf.mxu0
        %v5532 = vadd.f32 0.0, %v5531
        %5533 = vmatmul.bf16.gmra.mxu0 %v5424
        %v5534 = vpop.f32.mrf.mxu0
        %v5535 = vadd.f32 0.0, %v5534
        %v5536 = vpop.f32.mrf.mxu0
        %v5537 = vadd.f32 0.0, %v5536
        %5538 = vmatmul.bf16.gmra.mxu0 %v5425
        %v5539 = vpop.f32.mrf.mxu0
        %v5540 = vadd.f32 0.0, %v5539
        %v5541 = vpop.f32.mrf.mxu0
        %v5542 = vadd.f32 0.0, %v5541
        %5543 = vmatmul.bf16.gmra.mxu0 %v5426
        %v5544 = vpop.f32.mrf.mxu0
        %v5545 = vadd.f32 0.0, %v5544
        %v5546 = vpop.f32.mrf.mxu0
        %v5547 = vadd.f32 0.0, %v5546
        %5548 = vmatmul.bf16.gmra.mxu0 %v5427
        %v5549 = vpop.f32.mrf.mxu0
        %v5550 = vadd.f32 0.0, %v5549
        %v5551 = vpop.f32.mrf.mxu0
        %v5552 = vadd.f32 0.0, %v5551
        %5553 = vmatmul.bf16.gmra.mxu0 %v5428
        %v5554 = vpop.f32.mrf.mxu0
        %v5555 = vadd.f32 0.0, %v5554
        %v5556 = vpop.f32.mrf.mxu0
        %v5557 = vadd.f32 0.0, %v5556
        %5558 = vmatmul.bf16.gmra.mxu0 %v5429
        %v5559 = vpop.f32.mrf.mxu0
        %v5560 = vadd.f32 0.0, %v5559
        %v5561 = vpop.f32.mrf.mxu0
        %v5562 = vadd.f32 0.0, %v5561
        %5563 = vmatmul.bf16.gmra.mxu0 %v5430
        %v5564 = vpop.f32.mrf.mxu0
        %v5565 = vadd.f32 0.0, %v5564
        %v5566 = vpop.f32.mrf.mxu0
        %v5567 = vadd.f32 0.0, %v5566
        %5568 = vmatmul.bf16.gmra.mxu0 %v5431
        %v5569 = vpop.f32.mrf.mxu0
        %v5570 = vadd.f32 0.0, %v5569
        %v5571 = vpop.f32.mrf.mxu0
        %v5572 = vadd.f32 0.0, %v5571
        %5573 = vmatmul.bf16.gmra.mxu0 %v5432
        %v5574 = vpop.f32.mrf.mxu0
        %v5575 = vadd.f32 0.0, %v5574
        %v5576 = vpop.f32.mrf.mxu0
        %v5577 = vadd.f32 0.0, %v5576
        %5578 = vmatmul.bf16.gmra.mxu0 %v5433
        %v5579 = vpop.f32.mrf.mxu0
        %v5580 = vadd.f32 0.0, %v5579
        %v5581 = vpop.f32.mrf.mxu0
        %v5582 = vadd.f32 0.0, %v5581
        %5583 = vmatmul.bf16.gmra.mxu0 %v5434
        %v5584 = vpop.f32.mrf.mxu0
        %v5585 = vadd.f32 0.0, %v5584
        %v5586 = vpop.f32.mrf.mxu0
        %v5587 = vadd.f32 0.0, %v5586
        %5588 = vdwg.mxu0
        %v5589 = vadd.f32 %v5355, %v5510
        %v5590 = vadd.f32 %v5356, %v5512
        %v5591 = vadd.f32 %v5357, %v5515
        %v5592 = vadd.f32 %v5358, %v5517
        %v5593 = vadd.f32 %v5359, %v5520
        %v5594 = vadd.f32 %v5360, %v5522
        %v5595 = vadd.f32 %v5361, %v5525
        %v5596 = vadd.f32 %v5362, %v5527
        %v5597 = vadd.f32 %v5363, %v5530
        %v5598 = vadd.f32 %v5364, %v5532
        %v5599 = vadd.f32 %v5365, %v5535
        %v5600 = vadd.f32 %v5366, %v5537
        %v5601 = vadd.f32 %v5367, %v5540
        %v5602 = vadd.f32 %v5368, %v5542
        %v5603 = vadd.f32 %v5369, %v5545
        %v5604 = vadd.f32 %v5370, %v5547
        %v5605 = vadd.f32 %v5371, %v5550
        %v5606 = vadd.f32 %v5372, %v5552
        %v5607 = vadd.f32 %v5373, %v5555
        %v5608 = vadd.f32 %v5374, %v5557
        %v5609 = vadd.f32 %v5375, %v5560
        %v5610 = vadd.f32 %v5376, %v5562
        %v5611 = vadd.f32 %v5377, %v5565
        %v5612 = vadd.f32 %v5378, %v5567
        %v5613 = vadd.f32 %v5379, %v5570
        %v5614 = vadd.f32 %v5380, %v5572
        %v5615 = vadd.f32 %v5381, %v5575
        %v5616 = vadd.f32 %v5382, %v5577
        %v5617 = vadd.f32 %v5383, %v5580
        %v5618 = vadd.f32 %v5384, %v5582
        %v5619 = vadd.f32 %v5385, %v5585
        %v5620 = vadd.f32 %v5386, %v5587
        %v5622 = vperm.slane %v3483, 0
        %v5624 = vadd.f32 %v5589, %v5622
        %v5625 = vadd.f32 %v5590, %v5622
        %v5626 = vadd.f32 %v5591, %v5622
        %v5627 = vadd.f32 %v5592, %v5622
        %v5628 = vadd.f32 %v5593, %v5622
        %v5629 = vadd.f32 %v5594, %v5622
        %v5630 = vadd.f32 %v5595, %v5622
        %v5631 = vadd.f32 %v5596, %v5622
        %v5632 = vadd.f32 %v5597, %v5622
        %v5633 = vadd.f32 %v5598, %v5622
        %v5634 = vadd.f32 %v5599, %v5622
        %v5635 = vadd.f32 %v5600, %v5622
        %v5636 = vadd.f32 %v5601, %v5622
        %v5637 = vadd.f32 %v5602, %v5622
        %v5638 = vadd.f32 %v5603, %v5622
        %v5639 = vadd.f32 %v5604, %v5622
        %v5640 = vadd.f32 %v5605, %v5622
        %v5641 = vadd.f32 %v5606, %v5622
        %v5642 = vadd.f32 %v5607, %v5622
        %v5643 = vadd.f32 %v5608, %v5622
        %v5644 = vadd.f32 %v5609, %v5622
        %v5645 = vadd.f32 %v5610, %v5622
        %v5646 = vadd.f32 %v5611, %v5622
        %v5647 = vadd.f32 %v5612, %v5622
        %v5648 = vadd.f32 %v5613, %v5622
        %v5649 = vadd.f32 %v5614, %v5622
        %v5650 = vadd.f32 %v5615, %v5622
        %v5651 = vadd.f32 %v5616, %v5622
        %v5652 = vadd.f32 %v5617, %v5622
        %v5653 = vadd.f32 %v5618, %v5622
        %v5654 = vadd.f32 %v5619, %v5622
        %v5655 = vadd.f32 %v5620, %v5622
        %v5656 = vmax.f32 %v5624, 0.0
        %v5657 = vmax.f32 %v5625, 0.0
        %v5658 = vmax.f32 %v5626, 0.0
        %v5659 = vmax.f32 %v5627, 0.0
        %v5660 = vmax.f32 %v5628, 0.0
        %v5661 = vmax.f32 %v5629, 0.0
        %v5662 = vmax.f32 %v5630, 0.0
        %v5663 = vmax.f32 %v5631, 0.0
        %v5664 = vmax.f32 %v5632, 0.0
        %v5665 = vmax.f32 %v5633, 0.0
        %v5666 = vmax.f32 %v5634, 0.0
        %v5667 = vmax.f32 %v5635, 0.0
        %v5668 = vmax.f32 %v5636, 0.0
        %v5669 = vmax.f32 %v5637, 0.0
        %v5670 = vmax.f32 %v5638, 0.0
        %v5671 = vmax.f32 %v5639, 0.0
        %v5672 = vmax.f32 %v5640, 0.0
        %v5673 = vmax.f32 %v5641, 0.0
        %v5674 = vmax.f32 %v5642, 0.0
        %v5675 = vmax.f32 %v5643, 0.0
        %v5676 = vmax.f32 %v5644, 0.0
        %v5677 = vmax.f32 %v5645, 0.0
        %v5678 = vmax.f32 %v5646, 0.0
        %v5679 = vmax.f32 %v5647, 0.0
        %v5680 = vmax.f32 %v5648, 0.0
        %v5681 = vmax.f32 %v5649, 0.0
        %v5682 = vmax.f32 %v5650, 0.0
        %v5683 = vmax.f32 %v5651, 0.0
        %v5684 = vmax.f32 %v5652, 0.0
        %v5685 = vmax.f32 %v5653, 0.0
        %v5686 = vmax.f32 %v5654, 0.0
        %v5687 = vmax.f32 %v5655, 0.0
        %vm5688 = vcmp.lt.s32.totalorder %v381, 16
        %vm5689 = vcmp.lt.s32.totalorder %v382, 16
        %vm5690 = vcmp.lt.s32.totalorder %v383, 16
        %vm5691 = vcmp.lt.s32.totalorder %v384, 16
        %vm5692 = vcmp.lt.s32.totalorder %v385, 16
        %vm5693 = vcmp.lt.s32.totalorder %v386, 16
        %vm5694 = vcmp.lt.s32.totalorder %v387, 16
        %vm5695 = vcmp.lt.s32.totalorder %v388, 16
        %vm5696 = vcmp.lt.s32.totalorder %v389, 16
        %vm5697 = vcmp.lt.s32.totalorder %v390, 16
        %vm5698 = vcmp.lt.s32.totalorder %v391, 16
        %vm5699 = vcmp.lt.s32.totalorder %v392, 16
        %vm5700 = vcmp.lt.s32.totalorder %v393, 16
        %vm5701 = vcmp.lt.s32.totalorder %v394, 16
        %vm5702 = vcmp.lt.s32.totalorder %v395, 16
        %vm5703 = vcmp.lt.s32.totalorder %v396, 16
        %vm5704 = vcmp.lt.s32.totalorder %v397, 16
        %vm5705 = vcmp.lt.s32.totalorder %v398, 16
        %vm5706 = vcmp.lt.s32.totalorder %v399, 16
        %vm5707 = vcmp.lt.s32.totalorder %v400, 16
        %vm5708 = vcmp.lt.s32.totalorder %v401, 16
        %vm5709 = vcmp.lt.s32.totalorder %v402, 16
        %vm5710 = vcmp.lt.s32.totalorder %v403, 16
        %vm5711 = vcmp.lt.s32.totalorder %v404, 16
        %vm5712 = vcmp.lt.s32.totalorder %v405, 16
        %vm5713 = vcmp.lt.s32.totalorder %v406, 16
        %vm5714 = vcmp.lt.s32.totalorder %v407, 16
        %vm5715 = vcmp.lt.s32.totalorder %v408, 16
        %vm5716 = vcmp.lt.s32.totalorder %v409, 16
        %vm5717 = vcmp.lt.s32.totalorder %v410, 16
        %vm5718 = vcmp.lt.s32.totalorder %v411, 16
        %vm5719 = vcmp.lt.s32.totalorder %v412, 16
        %v5720 = vsel %vm5688, 1, 0
        %v5721 = vsel %vm5689, 1, 0
        %v5722 = vsel %vm5690, 1, 0
        %v5723 = vsel %vm5691, 1, 0
        %v5724 = vsel %vm5692, 1, 0
        %v5725 = vsel %vm5693, 1, 0
        %v5726 = vsel %vm5694, 1, 0
        %v5727 = vsel %vm5695, 1, 0
        %v5728 = vsel %vm5696, 1, 0
        %v5729 = vsel %vm5697, 1, 0
        %v5730 = vsel %vm5698, 1, 0
        %v5731 = vsel %vm5699, 1, 0
        %v5732 = vsel %vm5700, 1, 0
        %v5733 = vsel %vm5701, 1, 0
        %v5734 = vsel %vm5702, 1, 0
        %v5735 = vsel %vm5703, 1, 0
        %v5736 = vsel %vm5704, 1, 0
        %v5737 = vsel %vm5705, 1, 0
        %v5738 = vsel %vm5706, 1, 0
        %v5739 = vsel %vm5707, 1, 0
        %v5740 = vsel %vm5708, 1, 0
        %v5741 = vsel %vm5709, 1, 0
        %v5742 = vsel %vm5710, 1, 0
        %v5743 = vsel %vm5711, 1, 0
        %v5744 = vsel %vm5712, 1, 0
        %v5745 = vsel %vm5713, 1, 0
        %v5746 = vsel %vm5714, 1, 0
        %v5747 = vsel %vm5715, 1, 0
        %v5748 = vsel %vm5716, 1, 0
        %v5749 = vsel %vm5717, 1, 0
        %v5750 = vsel %vm5718, 1, 0
        %v5751 = vsel %vm5719, 1, 0
        %vm5752 = vcmp.eq.s32.totalorder %v5720, 1
        %vm5753 = vcmp.eq.s32.totalorder %v5721, 1
        %vm5754 = vcmp.eq.s32.totalorder %v5722, 1
        %vm5755 = vcmp.eq.s32.totalorder %v5723, 1
        %vm5756 = vcmp.eq.s32.totalorder %v5724, 1
        %vm5757 = vcmp.eq.s32.totalorder %v5725, 1
        %vm5758 = vcmp.eq.s32.totalorder %v5726, 1
        %vm5759 = vcmp.eq.s32.totalorder %v5727, 1
        %vm5760 = vcmp.eq.s32.totalorder %v5728, 1
        %vm5761 = vcmp.eq.s32.totalorder %v5729, 1
        %vm5762 = vcmp.eq.s32.totalorder %v5730, 1
        %vm5763 = vcmp.eq.s32.totalorder %v5731, 1
        %vm5764 = vcmp.eq.s32.totalorder %v5732, 1
        %vm5765 = vcmp.eq.s32.totalorder %v5733, 1
        %vm5766 = vcmp.eq.s32.totalorder %v5734, 1
        %vm5767 = vcmp.eq.s32.totalorder %v5735, 1
        %vm5768 = vcmp.eq.s32.totalorder %v5736, 1
        %vm5769 = vcmp.eq.s32.totalorder %v5737, 1
        %vm5770 = vcmp.eq.s32.totalorder %v5738, 1
        %vm5771 = vcmp.eq.s32.totalorder %v5739, 1
        %vm5772 = vcmp.eq.s32.totalorder %v5740, 1
        %vm5773 = vcmp.eq.s32.totalorder %v5741, 1
        %vm5774 = vcmp.eq.s32.totalorder %v5742, 1
        %vm5775 = vcmp.eq.s32.totalorder %v5743, 1
        %vm5776 = vcmp.eq.s32.totalorder %v5744, 1
        %vm5777 = vcmp.eq.s32.totalorder %v5745, 1
        %vm5778 = vcmp.eq.s32.totalorder %v5746, 1
        %vm5779 = vcmp.eq.s32.totalorder %v5747, 1
        %vm5780 = vcmp.eq.s32.totalorder %v5748, 1
        %vm5781 = vcmp.eq.s32.totalorder %v5749, 1
        %vm5782 = vcmp.eq.s32.totalorder %v5750, 1
        %vm5783 = vcmp.eq.s32.totalorder %v5751, 1
        %v5784 = vsel %vm5752, %v5656, %v5686
        %v5785 = vsel %vm5753, %v5657, %v5687
        %v5786 = vsel %vm5754, %v5658, %v5656
        %v5787 = vsel %vm5755, %v5659, %v5657
        %v5788 = vsel %vm5756, %v5660, %v5658
        %v5789 = vsel %vm5757, %v5661, %v5659
        %v5790 = vsel %vm5758, %v5662, %v5660
        %v5791 = vsel %vm5759, %v5663, %v5661
        %v5792 = vsel %vm5760, %v5664, %v5662
        %v5793 = vsel %vm5761, %v5665, %v5663
        %v5794 = vsel %vm5762, %v5666, %v5664
        %v5795 = vsel %vm5763, %v5667, %v5665
        %v5796 = vsel %vm5764, %v5668, %v5666
        %v5797 = vsel %vm5765, %v5669, %v5667
        %v5798 = vsel %vm5766, %v5670, %v5668
        %v5799 = vsel %vm5767, %v5671, %v5669
        %v5800 = vsel %vm5768, %v5672, %v5670
        %v5801 = vsel %vm5769, %v5673, %v5671
        %v5802 = vsel %vm5770, %v5674, %v5672
        %v5803 = vsel %vm5771, %v5675, %v5673
        %v5804 = vsel %vm5772, %v5676, %v5674
        %v5805 = vsel %vm5773, %v5677, %v5675
        %v5806 = vsel %vm5774, %v5678, %v5676
        %v5807 = vsel %vm5775, %v5679, %v5677
        %v5808 = vsel %vm5776, %v5680, %v5678
        %v5809 = vsel %vm5777, %v5681, %v5679
        %v5810 = vsel %vm5778, %v5682, %v5680
        %v5811 = vsel %vm5779, %v5683, %v5681
        %v5812 = vsel %vm5780, %v5684, %v5682
        %v5813 = vsel %vm5781, %v5685, %v5683
        %v5814 = vsel %vm5782, %v5686, %v5684
        %v5815 = vsel %vm5783, %v5687, %v5685
        %vm5816 = vcmp.ge.s32.totalorder %v381, 240
        %vm5817 = vcmp.ge.s32.totalorder %v382, 240
        %vm5818 = vcmp.ge.s32.totalorder %v383, 240
        %vm5819 = vcmp.ge.s32.totalorder %v384, 240
        %vm5820 = vcmp.ge.s32.totalorder %v385, 240
        %vm5821 = vcmp.ge.s32.totalorder %v386, 240
        %vm5822 = vcmp.ge.s32.totalorder %v387, 240
        %vm5823 = vcmp.ge.s32.totalorder %v388, 240
        %vm5824 = vcmp.ge.s32.totalorder %v389, 240
        %vm5825 = vcmp.ge.s32.totalorder %v390, 240
        %vm5826 = vcmp.ge.s32.totalorder %v391, 240
        %vm5827 = vcmp.ge.s32.totalorder %v392, 240
        %vm5828 = vcmp.ge.s32.totalorder %v393, 240
        %vm5829 = vcmp.ge.s32.totalorder %v394, 240
        %vm5830 = vcmp.ge.s32.totalorder %v395, 240
        %vm5831 = vcmp.ge.s32.totalorder %v396, 240
        %vm5832 = vcmp.ge.s32.totalorder %v397, 240
        %vm5833 = vcmp.ge.s32.totalorder %v398, 240
        %vm5834 = vcmp.ge.s32.totalorder %v399, 240
        %vm5835 = vcmp.ge.s32.totalorder %v400, 240
        %vm5836 = vcmp.ge.s32.totalorder %v401, 240
        %vm5837 = vcmp.ge.s32.totalorder %v402, 240
        %vm5838 = vcmp.ge.s32.totalorder %v403, 240
        %vm5839 = vcmp.ge.s32.totalorder %v404, 240
        %vm5840 = vcmp.ge.s32.totalorder %v405, 240
        %vm5841 = vcmp.ge.s32.totalorder %v406, 240
        %vm5842 = vcmp.ge.s32.totalorder %v407, 240
        %vm5843 = vcmp.ge.s32.totalorder %v408, 240
        %vm5844 = vcmp.ge.s32.totalorder %v409, 240
        %vm5845 = vcmp.ge.s32.totalorder %v410, 240
        %vm5846 = vcmp.ge.s32.totalorder %v411, 240
        %vm5847 = vcmp.ge.s32.totalorder %v412, 240
        %v5848 = vsel %vm5816, 1, 0
        %v5849 = vsel %vm5817, 1, 0
        %v5850 = vsel %vm5818, 1, 0
        %v5851 = vsel %vm5819, 1, 0
        %v5852 = vsel %vm5820, 1, 0
        %v5853 = vsel %vm5821, 1, 0
        %v5854 = vsel %vm5822, 1, 0
        %v5855 = vsel %vm5823, 1, 0
        %v5856 = vsel %vm5824, 1, 0
        %v5857 = vsel %vm5825, 1, 0
        %v5858 = vsel %vm5826, 1, 0
        %v5859 = vsel %vm5827, 1, 0
        %v5860 = vsel %vm5828, 1, 0
        %v5861 = vsel %vm5829, 1, 0
        %v5862 = vsel %vm5830, 1, 0
        %v5863 = vsel %vm5831, 1, 0
        %v5864 = vsel %vm5832, 1, 0
        %v5865 = vsel %vm5833, 1, 0
        %v5866 = vsel %vm5834, 1, 0
        %v5867 = vsel %vm5835, 1, 0
        %v5868 = vsel %vm5836, 1, 0
        %v5869 = vsel %vm5837, 1, 0
        %v5870 = vsel %vm5838, 1, 0
        %v5871 = vsel %vm5839, 1, 0
        %v5872 = vsel %vm5840, 1, 0
        %v5873 = vsel %vm5841, 1, 0
        %v5874 = vsel %vm5842, 1, 0
        %v5875 = vsel %vm5843, 1, 0
        %v5876 = vsel %vm5844, 1, 0
        %v5877 = vsel %vm5845, 1, 0
        %v5878 = vsel %vm5846, 1, 0
        %v5879 = vsel %vm5847, 1, 0
        %vm5880 = vcmp.eq.s32.totalorder %v5848, 1
        %vm5881 = vcmp.eq.s32.totalorder %v5849, 1
        %vm5882 = vcmp.eq.s32.totalorder %v5850, 1
        %vm5883 = vcmp.eq.s32.totalorder %v5851, 1
        %vm5884 = vcmp.eq.s32.totalorder %v5852, 1
        %vm5885 = vcmp.eq.s32.totalorder %v5853, 1
        %vm5886 = vcmp.eq.s32.totalorder %v5854, 1
        %vm5887 = vcmp.eq.s32.totalorder %v5855, 1
        %vm5888 = vcmp.eq.s32.totalorder %v5856, 1
        %vm5889 = vcmp.eq.s32.totalorder %v5857, 1
        %vm5890 = vcmp.eq.s32.totalorder %v5858, 1
        %vm5891 = vcmp.eq.s32.totalorder %v5859, 1
        %vm5892 = vcmp.eq.s32.totalorder %v5860, 1
        %vm5893 = vcmp.eq.s32.totalorder %v5861, 1
        %vm5894 = vcmp.eq.s32.totalorder %v5862, 1
        %vm5895 = vcmp.eq.s32.totalorder %v5863, 1
        %vm5896 = vcmp.eq.s32.totalorder %v5864, 1
        %vm5897 = vcmp.eq.s32.totalorder %v5865, 1
        %vm5898 = vcmp.eq.s32.totalorder %v5866, 1
        %vm5899 = vcmp.eq.s32.totalorder %v5867, 1
        %vm5900 = vcmp.eq.s32.totalorder %v5868, 1
        %vm5901 = vcmp.eq.s32.totalorder %v5869, 1
        %vm5902 = vcmp.eq.s32.totalorder %v5870, 1
        %vm5903 = vcmp.eq.s32.totalorder %v5871, 1
        %vm5904 = vcmp.eq.s32.totalorder %v5872, 1
        %vm5905 = vcmp.eq.s32.totalorder %v5873, 1
        %vm5906 = vcmp.eq.s32.totalorder %v5874, 1
        %vm5907 = vcmp.eq.s32.totalorder %v5875, 1
        %vm5908 = vcmp.eq.s32.totalorder %v5876, 1
        %vm5909 = vcmp.eq.s32.totalorder %v5877, 1
        %vm5910 = vcmp.eq.s32.totalorder %v5878, 1
        %vm5911 = vcmp.eq.s32.totalorder %v5879, 1
        %v5912 = vsel %vm5880, %v5656, %v5658
        %v5913 = vsel %vm5881, %v5657, %v5659
        %v5914 = vsel %vm5882, %v5658, %v5660
        %v5915 = vsel %vm5883, %v5659, %v5661
        %v5916 = vsel %vm5884, %v5660, %v5662
        %v5917 = vsel %vm5885, %v5661, %v5663
        %v5918 = vsel %vm5886, %v5662, %v5664
        %v5919 = vsel %vm5887, %v5663, %v5665
        %v5920 = vsel %vm5888, %v5664, %v5666
        %v5921 = vsel %vm5889, %v5665, %v5667
        %v5922 = vsel %vm5890, %v5666, %v5668
        %v5923 = vsel %vm5891, %v5667, %v5669
        %v5924 = vsel %vm5892, %v5668, %v5670
        %v5925 = vsel %vm5893, %v5669, %v5671
        %v5926 = vsel %vm5894, %v5670, %v5672
        %v5927 = vsel %vm5895, %v5671, %v5673
        %v5928 = vsel %vm5896, %v5672, %v5674
        %v5929 = vsel %vm5897, %v5673, %v5675
        %v5930 = vsel %vm5898, %v5674, %v5676
        %v5931 = vsel %vm5899, %v5675, %v5677
        %v5932 = vsel %vm5900, %v5676, %v5678
        %v5933 = vsel %vm5901, %v5677, %v5679
        %v5934 = vsel %vm5902, %v5678, %v5680
        %v5935 = vsel %vm5903, %v5679, %v5681
        %v5936 = vsel %vm5904, %v5680, %v5682
        %v5937 = vsel %vm5905, %v5681, %v5683
        %v5938 = vsel %vm5906, %v5682, %v5684
        %v5939 = vsel %vm5907, %v5683, %v5685
        %v5940 = vsel %vm5908, %v5684, %v5686
        %v5941 = vsel %vm5909, %v5685, %v5687
        %v5942 = vsel %vm5910, %v5686, %v5656
        %v5943 = vsel %vm5911, %v5687, %v5657
        %v5944 = vmul.f32 %v5656, 0.75
        %v5945 = vmul.f32 %v5657, 0.75
        %v5946 = vmul.f32 %v5658, 0.75
        %v5947 = vmul.f32 %v5659, 0.75
        %v5948 = vmul.f32 %v5660, 0.75
        %v5949 = vmul.f32 %v5661, 0.75
        %v5950 = vmul.f32 %v5662, 0.75
        %v5951 = vmul.f32 %v5663, 0.75
        %v5952 = vmul.f32 %v5664, 0.75
        %v5953 = vmul.f32 %v5665, 0.75
        %v5954 = vmul.f32 %v5666, 0.75
        %v5955 = vmul.f32 %v5667, 0.75
        %v5956 = vmul.f32 %v5668, 0.75
        %v5957 = vmul.f32 %v5669, 0.75
        %v5958 = vmul.f32 %v5670, 0.75
        %v5959 = vmul.f32 %v5671, 0.75
        %v5960 = vmul.f32 %v5672, 0.75
        %v5961 = vmul.f32 %v5673, 0.75
        %v5962 = vmul.f32 %v5674, 0.75
        %v5963 = vmul.f32 %v5675, 0.75
        %v5964 = vmul.f32 %v5676, 0.75
        %v5965 = vmul.f32 %v5677, 0.75
        %v5966 = vmul.f32 %v5678, 0.75
        %v5967 = vmul.f32 %v5679, 0.75
        %v5968 = vmul.f32 %v5680, 0.75
        %v5969 = vmul.f32 %v5681, 0.75
        %v5970 = vmul.f32 %v5682, 0.75
        %v5971 = vmul.f32 %v5683, 0.75
        %v5972 = vmul.f32 %v5684, 0.75
        %v5973 = vmul.f32 %v5685, 0.75
        %v5974 = vmul.f32 %v5686, 0.75
        %v5975 = vmul.f32 %v5687, 0.75
        %v5976 = vmul.f32 %v5784, 0.25
        %v5977 = vmul.f32 %v5785, 0.25
        %v5978 = vmul.f32 %v5786, 0.25
        %v5979 = vmul.f32 %v5787, 0.25
        %v5980 = vmul.f32 %v5788, 0.25
        %v5981 = vmul.f32 %v5789, 0.25
        %v5982 = vmul.f32 %v5790, 0.25
        %v5983 = vmul.f32 %v5791, 0.25
        %v5984 = vmul.f32 %v5792, 0.25
        %v5985 = vmul.f32 %v5793, 0.25
        %v5986 = vmul.f32 %v5794, 0.25
        %v5987 = vmul.f32 %v5795, 0.25
        %v5988 = vmul.f32 %v5796, 0.25
        %v5989 = vmul.f32 %v5797, 0.25
        %v5990 = vmul.f32 %v5798, 0.25
        %v5991 = vmul.f32 %v5799, 0.25
        %v5992 = vmul.f32 %v5800, 0.25
        %v5993 = vmul.f32 %v5801, 0.25
        %v5994 = vmul.f32 %v5802, 0.25
        %v5995 = vmul.f32 %v5803, 0.25
        %v5996 = vmul.f32 %v5804, 0.25
        %v5997 = vmul.f32 %v5805, 0.25
        %v5998 = vmul.f32 %v5806, 0.25
        %v5999 = vmul.f32 %v5807, 0.25
        %v6000 = vmul.f32 %v5808, 0.25
        %v6001 = vmul.f32 %v5809, 0.25
        %v6002 = vmul.f32 %v5810, 0.25
        %v6003 = vmul.f32 %v5811, 0.25
        %v6004 = vmul.f32 %v5812, 0.25
        %v6005 = vmul.f32 %v5813, 0.25
        %v6006 = vmul.f32 %v5814, 0.25
        %v6007 = vmul.f32 %v5815, 0.25
        %v6008 = vadd.f32 %v5944, %v5976
        %v6009 = vadd.f32 %v5945, %v5977
        %v6010 = vadd.f32 %v5946, %v5978
        %v6011 = vadd.f32 %v5947, %v5979
        %v6012 = vadd.f32 %v5948, %v5980
        %v6013 = vadd.f32 %v5949, %v5981
        %v6014 = vadd.f32 %v5950, %v5982
        %v6015 = vadd.f32 %v5951, %v5983
        %v6016 = vadd.f32 %v5952, %v5984
        %v6017 = vadd.f32 %v5953, %v5985
        %v6018 = vadd.f32 %v5954, %v5986
        %v6019 = vadd.f32 %v5955, %v5987
        %v6020 = vadd.f32 %v5956, %v5988
        %v6021 = vadd.f32 %v5957, %v5989
        %v6022 = vadd.f32 %v5958, %v5990
        %v6023 = vadd.f32 %v5959, %v5991
        %v6024 = vadd.f32 %v5960, %v5992
        %v6025 = vadd.f32 %v5961, %v5993
        %v6026 = vadd.f32 %v5962, %v5994
        %v6027 = vadd.f32 %v5963, %v5995
        %v6028 = vadd.f32 %v5964, %v5996
        %v6029 = vadd.f32 %v5965, %v5997
        %v6030 = vadd.f32 %v5966, %v5998
        %v6031 = vadd.f32 %v5967, %v5999
        %v6032 = vadd.f32 %v5968, %v6000
        %v6033 = vadd.f32 %v5969, %v6001
        %v6034 = vadd.f32 %v5970, %v6002
        %v6035 = vadd.f32 %v5971, %v6003
        %v6036 = vadd.f32 %v5972, %v6004
        %v6037 = vadd.f32 %v5973, %v6005
        %v6038 = vadd.f32 %v5974, %v6006
        %v6039 = vadd.f32 %v5975, %v6007
        %v6040 = vmul.f32 %v5912, 0.25
        %v6041 = vmul.f32 %v5913, 0.25
        %v6042 = vmul.f32 %v5914, 0.25
        %v6043 = vmul.f32 %v5915, 0.25
        %v6044 = vmul.f32 %v5916, 0.25
        %v6045 = vmul.f32 %v5917, 0.25
        %v6046 = vmul.f32 %v5918, 0.25
        %v6047 = vmul.f32 %v5919, 0.25
        %v6048 = vmul.f32 %v5920, 0.25
        %v6049 = vmul.f32 %v5921, 0.25
        %v6050 = vmul.f32 %v5922, 0.25
        %v6051 = vmul.f32 %v5923, 0.25
        %v6052 = vmul.f32 %v5924, 0.25
        %v6053 = vmul.f32 %v5925, 0.25
        %v6054 = vmul.f32 %v5926, 0.25
        %v6055 = vmul.f32 %v5927, 0.25
        %v6056 = vmul.f32 %v5928, 0.25
        %v6057 = vmul.f32 %v5929, 0.25
        %v6058 = vmul.f32 %v5930, 0.25
        %v6059 = vmul.f32 %v5931, 0.25
        %v6060 = vmul.f32 %v5932, 0.25
        %v6061 = vmul.f32 %v5933, 0.25
        %v6062 = vmul.f32 %v5934, 0.25
        %v6063 = vmul.f32 %v5935, 0.25
        %v6064 = vmul.f32 %v5936, 0.25
        %v6065 = vmul.f32 %v5937, 0.25
        %v6066 = vmul.f32 %v5938, 0.25
        %v6067 = vmul.f32 %v5939, 0.25
        %v6068 = vmul.f32 %v5940, 0.25
        %v6069 = vmul.f32 %v5941, 0.25
        %v6070 = vmul.f32 %v5942, 0.25
        %v6071 = vmul.f32 %v5943, 0.25
        %v6072 = vadd.f32 %v5944, %v6040
        %v6073 = vadd.f32 %v5945, %v6041
        %v6074 = vadd.f32 %v5946, %v6042
        %v6075 = vadd.f32 %v5947, %v6043
        %v6076 = vadd.f32 %v5948, %v6044
        %v6077 = vadd.f32 %v5949, %v6045
        %v6078 = vadd.f32 %v5950, %v6046
        %v6079 = vadd.f32 %v5951, %v6047
        %v6080 = vadd.f32 %v5952, %v6048
        %v6081 = vadd.f32 %v5953, %v6049
        %v6082 = vadd.f32 %v5954, %v6050
        %v6083 = vadd.f32 %v5955, %v6051
        %v6084 = vadd.f32 %v5956, %v6052
        %v6085 = vadd.f32 %v5957, %v6053
        %v6086 = vadd.f32 %v5958, %v6054
        %v6087 = vadd.f32 %v5959, %v6055
        %v6088 = vadd.f32 %v5960, %v6056
        %v6089 = vadd.f32 %v5961, %v6057
        %v6090 = vadd.f32 %v5962, %v6058
        %v6091 = vadd.f32 %v5963, %v6059
        %v6092 = vadd.f32 %v5964, %v6060
        %v6093 = vadd.f32 %v5965, %v6061
        %v6094 = vadd.f32 %v5966, %v6062
        %v6095 = vadd.f32 %v5967, %v6063
        %v6096 = vadd.f32 %v5968, %v6064
        %v6097 = vadd.f32 %v5969, %v6065
        %v6098 = vadd.f32 %v5970, %v6066
        %v6099 = vadd.f32 %v5971, %v6067
        %v6100 = vadd.f32 %v5972, %v6068
        %v6101 = vadd.f32 %v5973, %v6069
        %v6102 = vadd.f32 %v5974, %v6070
        %v6103 = vadd.f32 %v5975, %v6071
        %vm6104 = vcmp.eq.s32.totalorder %v413, 0
        %vm6105 = vcmp.eq.s32.totalorder %v414, 0
        %vm6106 = vcmp.eq.s32.totalorder %v415, 0
        %vm6107 = vcmp.eq.s32.totalorder %v416, 0
        %vm6108 = vcmp.eq.s32.totalorder %v417, 0
        %vm6109 = vcmp.eq.s32.totalorder %v418, 0
        %vm6110 = vcmp.eq.s32.totalorder %v419, 0
        %vm6111 = vcmp.eq.s32.totalorder %v420, 0
        %vm6112 = vcmp.eq.s32.totalorder %v421, 0
        %vm6113 = vcmp.eq.s32.totalorder %v422, 0
        %vm6114 = vcmp.eq.s32.totalorder %v423, 0
        %vm6115 = vcmp.eq.s32.totalorder %v424, 0
        %vm6116 = vcmp.eq.s32.totalorder %v425, 0
        %vm6117 = vcmp.eq.s32.totalorder %v426, 0
        %vm6118 = vcmp.eq.s32.totalorder %v427, 0
        %vm6119 = vcmp.eq.s32.totalorder %v428, 0
        %vm6120 = vcmp.eq.s32.totalorder %v429, 0
        %vm6121 = vcmp.eq.s32.totalorder %v430, 0
        %vm6122 = vcmp.eq.s32.totalorder %v431, 0
        %vm6123 = vcmp.eq.s32.totalorder %v432, 0
        %vm6124 = vcmp.eq.s32.totalorder %v433, 0
        %vm6125 = vcmp.eq.s32.totalorder %v434, 0
        %vm6126 = vcmp.eq.s32.totalorder %v435, 0
        %vm6127 = vcmp.eq.s32.totalorder %v436, 0
        %vm6128 = vcmp.eq.s32.totalorder %v437, 0
        %vm6129 = vcmp.eq.s32.totalorder %v438, 0
        %vm6130 = vcmp.eq.s32.totalorder %v439, 0
        %vm6131 = vcmp.eq.s32.totalorder %v440, 0
        %vm6132 = vcmp.eq.s32.totalorder %v441, 0
        %vm6133 = vcmp.eq.s32.totalorder %v442, 0
        %vm6134 = vcmp.eq.s32.totalorder %v443, 0
        %vm6135 = vcmp.eq.s32.totalorder %v444, 0
        %v6136 = vrot.slane %v6008, 7
        %v6137 = vrot.slane %v6009, 7
        %v6138 = vrot.slane %v6010, 7
        %v6139 = vrot.slane %v6011, 7
        %v6140 = vrot.slane %v6012, 7
        %v6141 = vrot.slane %v6013, 7
        %v6142 = vrot.slane %v6014, 7
        %v6143 = vrot.slane %v6015, 7
        %v6144 = vrot.slane %v6016, 7
        %v6145 = vrot.slane %v6017, 7
        %v6146 = vrot.slane %v6018, 7
        %v6147 = vrot.slane %v6019, 7
        %v6148 = vrot.slane %v6020, 7
        %v6149 = vrot.slane %v6021, 7
        %v6150 = vrot.slane %v6022, 7
        %v6151 = vrot.slane %v6023, 7
        %v6152 = vrot.slane %v6024, 7
        %v6153 = vrot.slane %v6025, 7
        %v6154 = vrot.slane %v6026, 7
        %v6155 = vrot.slane %v6027, 7
        %v6156 = vrot.slane %v6028, 7
        %v6157 = vrot.slane %v6029, 7
        %v6158 = vrot.slane %v6030, 7
        %v6159 = vrot.slane %v6031, 7
        %v6160 = vrot.slane %v6032, 7
        %v6161 = vrot.slane %v6033, 7
        %v6162 = vrot.slane %v6034, 7
        %v6163 = vrot.slane %v6035, 7
        %v6164 = vrot.slane %v6036, 7
        %v6165 = vrot.slane %v6037, 7
        %v6166 = vrot.slane %v6038, 7
        %v6167 = vrot.slane %v6039, 7
        %v6168 = vsel %vm477, %v6166, %v6167
        %v6169 = vsel %vm477, %v6165, %v6166
        %v6170 = vsel %vm477, %v6164, %v6165
        %v6171 = vsel %vm477, %v6163, %v6164
        %v6172 = vsel %vm477, %v6162, %v6163
        %v6173 = vsel %vm477, %v6161, %v6162
        %v6174 = vsel %vm477, %v6160, %v6161
        %v6175 = vsel %vm477, %v6159, %v6160
        %v6176 = vsel %vm477, %v6158, %v6159
        %v6177 = vsel %vm477, %v6157, %v6158
        %v6178 = vsel %vm477, %v6156, %v6157
        %v6179 = vsel %vm477, %v6155, %v6156
        %v6180 = vsel %vm477, %v6154, %v6155
        %v6181 = vsel %vm477, %v6153, %v6154
        %v6182 = vsel %vm477, %v6152, %v6153
        %v6183 = vsel %vm477, %v6151, %v6152
        %v6184 = vsel %vm477, %v6150, %v6151
        %v6185 = vsel %vm477, %v6149, %v6150
        %v6186 = vsel %vm477, %v6148, %v6149
        %v6187 = vsel %vm477, %v6147, %v6148
        %v6188 = vsel %vm477, %v6146, %v6147
        %v6189 = vsel %vm477, %v6145, %v6146
        %v6190 = vsel %vm477, %v6144, %v6145
        %v6191 = vsel %vm477, %v6143, %v6144
        %v6192 = vsel %vm477, %v6142, %v6143
        %v6193 = vsel %vm477, %v6141, %v6142
        %v6194 = vsel %vm477, %v6140, %v6141
        %v6195 = vsel %vm477, %v6139, %v6140
        %v6196 = vsel %vm477, %v6138, %v6139
        %v6197 = vsel %vm477, %v6137, %v6138
        %v6198 = vsel %vm477, %v6136, %v6137
        %v6199 = vsel %vm477, %v6167, %v6136
        %v6200 = vsel %vm6104, 1, 0
        %v6201 = vsel %vm6105, 1, 0
        %v6202 = vsel %vm6106, 1, 0
        %v6203 = vsel %vm6107, 1, 0
        %v6204 = vsel %vm6108, 1, 0
        %v6205 = vsel %vm6109, 1, 0
        %v6206 = vsel %vm6110, 1, 0
        %v6207 = vsel %vm6111, 1, 0
        %v6208 = vsel %vm6112, 1, 0
        %v6209 = vsel %vm6113, 1, 0
        %v6210 = vsel %vm6114, 1, 0
        %v6211 = vsel %vm6115, 1, 0
        %v6212 = vsel %vm6116, 1, 0
        %v6213 = vsel %vm6117, 1, 0
        %v6214 = vsel %vm6118, 1, 0
        %v6215 = vsel %vm6119, 1, 0
        %v6216 = vsel %vm6120, 1, 0
        %v6217 = vsel %vm6121, 1, 0
        %v6218 = vsel %vm6122, 1, 0
        %v6219 = vsel %vm6123, 1, 0
        %v6220 = vsel %vm6124, 1, 0
        %v6221 = vsel %vm6125, 1, 0
        %v6222 = vsel %vm6126, 1, 0
        %v6223 = vsel %vm6127, 1, 0
        %v6224 = vsel %vm6128, 1, 0
        %v6225 = vsel %vm6129, 1, 0
        %v6226 = vsel %vm6130, 1, 0
        %v6227 = vsel %vm6131, 1, 0
        %v6228 = vsel %vm6132, 1, 0
        %v6229 = vsel %vm6133, 1, 0
        %v6230 = vsel %vm6134, 1, 0
        %v6231 = vsel %vm6135, 1, 0
        %vm6232 = vcmp.eq.s32.totalorder %v6200, 1
        %vm6233 = vcmp.eq.s32.totalorder %v6201, 1
        %vm6234 = vcmp.eq.s32.totalorder %v6202, 1
        %vm6235 = vcmp.eq.s32.totalorder %v6203, 1
        %vm6236 = vcmp.eq.s32.totalorder %v6204, 1
        %vm6237 = vcmp.eq.s32.totalorder %v6205, 1
        %vm6238 = vcmp.eq.s32.totalorder %v6206, 1
        %vm6239 = vcmp.eq.s32.totalorder %v6207, 1
        %vm6240 = vcmp.eq.s32.totalorder %v6208, 1
        %vm6241 = vcmp.eq.s32.totalorder %v6209, 1
        %vm6242 = vcmp.eq.s32.totalorder %v6210, 1
        %vm6243 = vcmp.eq.s32.totalorder %v6211, 1
        %vm6244 = vcmp.eq.s32.totalorder %v6212, 1
        %vm6245 = vcmp.eq.s32.totalorder %v6213, 1
        %vm6246 = vcmp.eq.s32.totalorder %v6214, 1
        %vm6247 = vcmp.eq.s32.totalorder %v6215, 1
        %vm6248 = vcmp.eq.s32.totalorder %v6216, 1
        %vm6249 = vcmp.eq.s32.totalorder %v6217, 1
        %vm6250 = vcmp.eq.s32.totalorder %v6218, 1
        %vm6251 = vcmp.eq.s32.totalorder %v6219, 1
        %vm6252 = vcmp.eq.s32.totalorder %v6220, 1
        %vm6253 = vcmp.eq.s32.totalorder %v6221, 1
        %vm6254 = vcmp.eq.s32.totalorder %v6222, 1
        %vm6255 = vcmp.eq.s32.totalorder %v6223, 1
        %vm6256 = vcmp.eq.s32.totalorder %v6224, 1
        %vm6257 = vcmp.eq.s32.totalorder %v6225, 1
        %vm6258 = vcmp.eq.s32.totalorder %v6226, 1
        %vm6259 = vcmp.eq.s32.totalorder %v6227, 1
        %vm6260 = vcmp.eq.s32.totalorder %v6228, 1
        %vm6261 = vcmp.eq.s32.totalorder %v6229, 1
        %vm6262 = vcmp.eq.s32.totalorder %v6230, 1
        %vm6263 = vcmp.eq.s32.totalorder %v6231, 1
        %v6264 = vsel %vm6232, %v6008, %v6199
        %v6265 = vsel %vm6233, %v6009, %v6198
        %v6266 = vsel %vm6234, %v6010, %v6197
        %v6267 = vsel %vm6235, %v6011, %v6196
        %v6268 = vsel %vm6236, %v6012, %v6195
        %v6269 = vsel %vm6237, %v6013, %v6194
        %v6270 = vsel %vm6238, %v6014, %v6193
        %v6271 = vsel %vm6239, %v6015, %v6192
        %v6272 = vsel %vm6240, %v6016, %v6191
        %v6273 = vsel %vm6241, %v6017, %v6190
        %v6274 = vsel %vm6242, %v6018, %v6189
        %v6275 = vsel %vm6243, %v6019, %v6188
        %v6276 = vsel %vm6244, %v6020, %v6187
        %v6277 = vsel %vm6245, %v6021, %v6186
        %v6278 = vsel %vm6246, %v6022, %v6185
        %v6279 = vsel %vm6247, %v6023, %v6184
        %v6280 = vsel %vm6248, %v6024, %v6183
        %v6281 = vsel %vm6249, %v6025, %v6182
        %v6282 = vsel %vm6250, %v6026, %v6181
        %v6283 = vsel %vm6251, %v6027, %v6180
        %v6284 = vsel %vm6252, %v6028, %v6179
        %v6285 = vsel %vm6253, %v6029, %v6178
        %v6286 = vsel %vm6254, %v6030, %v6177
        %v6287 = vsel %vm6255, %v6031, %v6176
        %v6288 = vsel %vm6256, %v6032, %v6175
        %v6289 = vsel %vm6257, %v6033, %v6174
        %v6290 = vsel %vm6258, %v6034, %v6173
        %v6291 = vsel %vm6259, %v6035, %v6172
        %v6292 = vsel %vm6260, %v6036, %v6171
        %v6293 = vsel %vm6261, %v6037, %v6170
        %v6294 = vsel %vm6262, %v6038, %v6169
        %v6295 = vsel %vm6263, %v6039, %v6168
        %vm6296 = vcmp.eq.s32.totalorder %v413, 15
        %vm6297 = vcmp.eq.s32.totalorder %v414, 15
        %vm6298 = vcmp.eq.s32.totalorder %v415, 15
        %vm6299 = vcmp.eq.s32.totalorder %v416, 15
        %vm6300 = vcmp.eq.s32.totalorder %v417, 15
        %vm6301 = vcmp.eq.s32.totalorder %v418, 15
        %vm6302 = vcmp.eq.s32.totalorder %v419, 15
        %vm6303 = vcmp.eq.s32.totalorder %v420, 15
        %vm6304 = vcmp.eq.s32.totalorder %v421, 15
        %vm6305 = vcmp.eq.s32.totalorder %v422, 15
        %vm6306 = vcmp.eq.s32.totalorder %v423, 15
        %vm6307 = vcmp.eq.s32.totalorder %v424, 15
        %vm6308 = vcmp.eq.s32.totalorder %v425, 15
        %vm6309 = vcmp.eq.s32.totalorder %v426, 15
        %vm6310 = vcmp.eq.s32.totalorder %v427, 15
        %vm6311 = vcmp.eq.s32.totalorder %v428, 15
        %vm6312 = vcmp.eq.s32.totalorder %v429, 15
        %vm6313 = vcmp.eq.s32.totalorder %v430, 15
        %vm6314 = vcmp.eq.s32.totalorder %v431, 15
        %vm6315 = vcmp.eq.s32.totalorder %v432, 15
        %vm6316 = vcmp.eq.s32.totalorder %v433, 15
        %vm6317 = vcmp.eq.s32.totalorder %v434, 15
        %vm6318 = vcmp.eq.s32.totalorder %v435, 15
        %vm6319 = vcmp.eq.s32.totalorder %v436, 15
        %vm6320 = vcmp.eq.s32.totalorder %v437, 15
        %vm6321 = vcmp.eq.s32.totalorder %v438, 15
        %vm6322 = vcmp.eq.s32.totalorder %v439, 15
        %vm6323 = vcmp.eq.s32.totalorder %v440, 15
        %vm6324 = vcmp.eq.s32.totalorder %v441, 15
        %vm6325 = vcmp.eq.s32.totalorder %v442, 15
        %vm6326 = vcmp.eq.s32.totalorder %v443, 15
        %vm6327 = vcmp.eq.s32.totalorder %v444, 15
        %v6328 = vrot.slane %v6008, 1
        %v6329 = vrot.slane %v6009, 1
        %v6330 = vrot.slane %v6010, 1
        %v6331 = vrot.slane %v6011, 1
        %v6332 = vrot.slane %v6012, 1
        %v6333 = vrot.slane %v6013, 1
        %v6334 = vrot.slane %v6014, 1
        %v6335 = vrot.slane %v6015, 1
        %v6336 = vrot.slane %v6016, 1
        %v6337 = vrot.slane %v6017, 1
        %v6338 = vrot.slane %v6018, 1
        %v6339 = vrot.slane %v6019, 1
        %v6340 = vrot.slane %v6020, 1
        %v6341 = vrot.slane %v6021, 1
        %v6342 = vrot.slane %v6022, 1
        %v6343 = vrot.slane %v6023, 1
        %v6344 = vrot.slane %v6024, 1
        %v6345 = vrot.slane %v6025, 1
        %v6346 = vrot.slane %v6026, 1
        %v6347 = vrot.slane %v6027, 1
        %v6348 = vrot.slane %v6028, 1
        %v6349 = vrot.slane %v6029, 1
        %v6350 = vrot.slane %v6030, 1
        %v6351 = vrot.slane %v6031, 1
        %v6352 = vrot.slane %v6032, 1
        %v6353 = vrot.slane %v6033, 1
        %v6354 = vrot.slane %v6034, 1
        %v6355 = vrot.slane %v6035, 1
        %v6356 = vrot.slane %v6036, 1
        %v6357 = vrot.slane %v6037, 1
        %v6358 = vrot.slane %v6038, 1
        %v6359 = vrot.slane %v6039, 1
        %v6360 = vsel %vm1169, %v6358, %v6359
        %v6361 = vsel %vm1169, %v6357, %v6358
        %v6362 = vsel %vm1169, %v6356, %v6357
        %v6363 = vsel %vm1169, %v6355, %v6356
        %v6364 = vsel %vm1169, %v6354, %v6355
        %v6365 = vsel %vm1169, %v6353, %v6354
        %v6366 = vsel %vm1169, %v6352, %v6353
        %v6367 = vsel %vm1169, %v6351, %v6352
        %v6368 = vsel %vm1169, %v6350, %v6351
        %v6369 = vsel %vm1169, %v6349, %v6350
        %v6370 = vsel %vm1169, %v6348, %v6349
        %v6371 = vsel %vm1169, %v6347, %v6348
        %v6372 = vsel %vm1169, %v6346, %v6347
        %v6373 = vsel %vm1169, %v6345, %v6346
        %v6374 = vsel %vm1169, %v6344, %v6345
        %v6375 = vsel %vm1169, %v6343, %v6344
        %v6376 = vsel %vm1169, %v6342, %v6343
        %v6377 = vsel %vm1169, %v6341, %v6342
        %v6378 = vsel %vm1169, %v6340, %v6341
        %v6379 = vsel %vm1169, %v6339, %v6340
        %v6380 = vsel %vm1169, %v6338, %v6339
        %v6381 = vsel %vm1169, %v6337, %v6338
        %v6382 = vsel %vm1169, %v6336, %v6337
        %v6383 = vsel %vm1169, %v6335, %v6336
        %v6384 = vsel %vm1169, %v6334, %v6335
        %v6385 = vsel %vm1169, %v6333, %v6334
        %v6386 = vsel %vm1169, %v6332, %v6333
        %v6387 = vsel %vm1169, %v6331, %v6332
        %v6388 = vsel %vm1169, %v6330, %v6331
        %v6389 = vsel %vm1169, %v6329, %v6330
        %v6390 = vsel %vm1169, %v6328, %v6329
        %v6391 = vsel %vm1169, %v6359, %v6328
        %v6392 = vsel %vm6296, 1, 0
        %v6393 = vsel %vm6297, 1, 0
        %v6394 = vsel %vm6298, 1, 0
        %v6395 = vsel %vm6299, 1, 0
        %v6396 = vsel %vm6300, 1, 0
        %v6397 = vsel %vm6301, 1, 0
        %v6398 = vsel %vm6302, 1, 0
        %v6399 = vsel %vm6303, 1, 0
        %v6400 = vsel %vm6304, 1, 0
        %v6401 = vsel %vm6305, 1, 0
        %v6402 = vsel %vm6306, 1, 0
        %v6403 = vsel %vm6307, 1, 0
        %v6404 = vsel %vm6308, 1, 0
        %v6405 = vsel %vm6309, 1, 0
        %v6406 = vsel %vm6310, 1, 0
        %v6407 = vsel %vm6311, 1, 0
        %v6408 = vsel %vm6312, 1, 0
        %v6409 = vsel %vm6313, 1, 0
        %v6410 = vsel %vm6314, 1, 0
        %v6411 = vsel %vm6315, 1, 0
        %v6412 = vsel %vm6316, 1, 0
        %v6413 = vsel %vm6317, 1, 0
        %v6414 = vsel %vm6318, 1, 0
        %v6415 = vsel %vm6319, 1, 0
        %v6416 = vsel %vm6320, 1, 0
        %v6417 = vsel %vm6321, 1, 0
        %v6418 = vsel %vm6322, 1, 0
        %v6419 = vsel %vm6323, 1, 0
        %v6420 = vsel %vm6324, 1, 0
        %v6421 = vsel %vm6325, 1, 0
        %v6422 = vsel %vm6326, 1, 0
        %v6423 = vsel %vm6327, 1, 0
        %vm6424 = vcmp.eq.s32.totalorder %v6392, 1
        %vm6425 = vcmp.eq.s32.totalorder %v6393, 1
        %vm6426 = vcmp.eq.s32.totalorder %v6394, 1
        %vm6427 = vcmp.eq.s32.totalorder %v6395, 1
        %vm6428 = vcmp.eq.s32.totalorder %v6396, 1
        %vm6429 = vcmp.eq.s32.totalorder %v6397, 1
        %vm6430 = vcmp.eq.s32.totalorder %v6398, 1
        %vm6431 = vcmp.eq.s32.totalorder %v6399, 1
        %vm6432 = vcmp.eq.s32.totalorder %v6400, 1
        %vm6433 = vcmp.eq.s32.totalorder %v6401, 1
        %vm6434 = vcmp.eq.s32.totalorder %v6402, 1
        %vm6435 = vcmp.eq.s32.totalorder %v6403, 1
        %vm6436 = vcmp.eq.s32.totalorder %v6404, 1
        %vm6437 = vcmp.eq.s32.totalorder %v6405, 1
        %vm6438 = vcmp.eq.s32.totalorder %v6406, 1
        %vm6439 = vcmp.eq.s32.totalorder %v6407, 1
        %vm6440 = vcmp.eq.s32.totalorder %v6408, 1
        %vm6441 = vcmp.eq.s32.totalorder %v6409, 1
        %vm6442 = vcmp.eq.s32.totalorder %v6410, 1
        %vm6443 = vcmp.eq.s32.totalorder %v6411, 1
        %vm6444 = vcmp.eq.s32.totalorder %v6412, 1
        %vm6445 = vcmp.eq.s32.totalorder %v6413, 1
        %vm6446 = vcmp.eq.s32.totalorder %v6414, 1
        %vm6447 = vcmp.eq.s32.totalorder %v6415, 1
        %vm6448 = vcmp.eq.s32.totalorder %v6416, 1
        %vm6449 = vcmp.eq.s32.totalorder %v6417, 1
        %vm6450 = vcmp.eq.s32.totalorder %v6418, 1
        %vm6451 = vcmp.eq.s32.totalorder %v6419, 1
        %vm6452 = vcmp.eq.s32.totalorder %v6420, 1
        %vm6453 = vcmp.eq.s32.totalorder %v6421, 1
        %vm6454 = vcmp.eq.s32.totalorder %v6422, 1
        %vm6455 = vcmp.eq.s32.totalorder %v6423, 1
        %v6456 = vsel %vm6424, %v6008, %v6390
        %v6457 = vsel %vm6425, %v6009, %v6389
        %v6458 = vsel %vm6426, %v6010, %v6388
        %v6459 = vsel %vm6427, %v6011, %v6387
        %v6460 = vsel %vm6428, %v6012, %v6386
        %v6461 = vsel %vm6429, %v6013, %v6385
        %v6462 = vsel %vm6430, %v6014, %v6384
        %v6463 = vsel %vm6431, %v6015, %v6383
        %v6464 = vsel %vm6432, %v6016, %v6382
        %v6465 = vsel %vm6433, %v6017, %v6381
        %v6466 = vsel %vm6434, %v6018, %v6380
        %v6467 = vsel %vm6435, %v6019, %v6379
        %v6468 = vsel %vm6436, %v6020, %v6378
        %v6469 = vsel %vm6437, %v6021, %v6377
        %v6470 = vsel %vm6438, %v6022, %v6376
        %v6471 = vsel %vm6439, %v6023, %v6375
        %v6472 = vsel %vm6440, %v6024, %v6374
        %v6473 = vsel %vm6441, %v6025, %v6373
        %v6474 = vsel %vm6442, %v6026, %v6372
        %v6475 = vsel %vm6443, %v6027, %v6371
        %v6476 = vsel %vm6444, %v6028, %v6370
        %v6477 = vsel %vm6445, %v6029, %v6369
        %v6478 = vsel %vm6446, %v6030, %v6368
        %v6479 = vsel %vm6447, %v6031, %v6367
        %v6480 = vsel %vm6448, %v6032, %v6366
        %v6481 = vsel %vm6449, %v6033, %v6365
        %v6482 = vsel %vm6450, %v6034, %v6364
        %v6483 = vsel %vm6451, %v6035, %v6363
        %v6484 = vsel %vm6452, %v6036, %v6362
        %v6485 = vsel %vm6453, %v6037, %v6361
        %v6486 = vsel %vm6454, %v6038, %v6360
        %v6487 = vsel %vm6455, %v6039, %v6391
        %v6488 = vmul.f32 %v6008, 0.75
        %v6489 = vmul.f32 %v6009, 0.75
        %v6490 = vmul.f32 %v6010, 0.75
        %v6491 = vmul.f32 %v6011, 0.75
        %v6492 = vmul.f32 %v6012, 0.75
        %v6493 = vmul.f32 %v6013, 0.75
        %v6494 = vmul.f32 %v6014, 0.75
        %v6495 = vmul.f32 %v6015, 0.75
        %v6496 = vmul.f32 %v6016, 0.75
        %v6497 = vmul.f32 %v6017, 0.75
        %v6498 = vmul.f32 %v6018, 0.75
        %v6499 = vmul.f32 %v6019, 0.75
        %v6500 = vmul.f32 %v6020, 0.75
        %v6501 = vmul.f32 %v6021, 0.75
        %v6502 = vmul.f32 %v6022, 0.75
        %v6503 = vmul.f32 %v6023, 0.75
        %v6504 = vmul.f32 %v6024, 0.75
        %v6505 = vmul.f32 %v6025, 0.75
        %v6506 = vmul.f32 %v6026, 0.75
        %v6507 = vmul.f32 %v6027, 0.75
        %v6508 = vmul.f32 %v6028, 0.75
        %v6509 = vmul.f32 %v6029, 0.75
        %v6510 = vmul.f32 %v6030, 0.75
        %v6511 = vmul.f32 %v6031, 0.75
        %v6512 = vmul.f32 %v6032, 0.75
        %v6513 = vmul.f32 %v6033, 0.75
        %v6514 = vmul.f32 %v6034, 0.75
        %v6515 = vmul.f32 %v6035, 0.75
        %v6516 = vmul.f32 %v6036, 0.75
        %v6517 = vmul.f32 %v6037, 0.75
        %v6518 = vmul.f32 %v6038, 0.75
        %v6519 = vmul.f32 %v6039, 0.75
        %v6520 = vmul.f32 %v6264, 0.25
        %v6521 = vmul.f32 %v6265, 0.25
        %v6522 = vmul.f32 %v6266, 0.25
        %v6523 = vmul.f32 %v6267, 0.25
        %v6524 = vmul.f32 %v6268, 0.25
        %v6525 = vmul.f32 %v6269, 0.25
        %v6526 = vmul.f32 %v6270, 0.25
        %v6527 = vmul.f32 %v6271, 0.25
        %v6528 = vmul.f32 %v6272, 0.25
        %v6529 = vmul.f32 %v6273, 0.25
        %v6530 = vmul.f32 %v6274, 0.25
        %v6531 = vmul.f32 %v6275, 0.25
        %v6532 = vmul.f32 %v6276, 0.25
        %v6533 = vmul.f32 %v6277, 0.25
        %v6534 = vmul.f32 %v6278, 0.25
        %v6535 = vmul.f32 %v6279, 0.25
        %v6536 = vmul.f32 %v6280, 0.25
        %v6537 = vmul.f32 %v6281, 0.25
        %v6538 = vmul.f32 %v6282, 0.25
        %v6539 = vmul.f32 %v6283, 0.25
        %v6540 = vmul.f32 %v6284, 0.25
        %v6541 = vmul.f32 %v6285, 0.25
        %v6542 = vmul.f32 %v6286, 0.25
        %v6543 = vmul.f32 %v6287, 0.25
        %v6544 = vmul.f32 %v6288, 0.25
        %v6545 = vmul.f32 %v6289, 0.25
        %v6546 = vmul.f32 %v6290, 0.25
        %v6547 = vmul.f32 %v6291, 0.25
        %v6548 = vmul.f32 %v6292, 0.25
        %v6549 = vmul.f32 %v6293, 0.25
        %v6550 = vmul.f32 %v6294, 0.25
        %v6551 = vmul.f32 %v6295, 0.25
        %v6552 = vadd.f32 %v6488, %v6520
        %v6553 = vadd.f32 %v6489, %v6521
        %v6554 = vadd.f32 %v6490, %v6522
        %v6555 = vadd.f32 %v6491, %v6523
        %v6556 = vadd.f32 %v6492, %v6524
        %v6557 = vadd.f32 %v6493, %v6525
        %v6558 = vadd.f32 %v6494, %v6526
        %v6559 = vadd.f32 %v6495, %v6527
        %v6560 = vadd.f32 %v6496, %v6528
        %v6561 = vadd.f32 %v6497, %v6529
        %v6562 = vadd.f32 %v6498, %v6530
        %v6563 = vadd.f32 %v6499, %v6531
        %v6564 = vadd.f32 %v6500, %v6532
        %v6565 = vadd.f32 %v6501, %v6533
        %v6566 = vadd.f32 %v6502, %v6534
        %v6567 = vadd.f32 %v6503, %v6535
        %v6568 = vadd.f32 %v6504, %v6536
        %v6569 = vadd.f32 %v6505, %v6537
        %v6570 = vadd.f32 %v6506, %v6538
        %v6571 = vadd.f32 %v6507, %v6539
        %v6572 = vadd.f32 %v6508, %v6540
        %v6573 = vadd.f32 %v6509, %v6541
        %v6574 = vadd.f32 %v6510, %v6542
        %v6575 = vadd.f32 %v6511, %v6543
        %v6576 = vadd.f32 %v6512, %v6544
        %v6577 = vadd.f32 %v6513, %v6545
        %v6578 = vadd.f32 %v6514, %v6546
        %v6579 = vadd.f32 %v6515, %v6547
        %v6580 = vadd.f32 %v6516, %v6548
        %v6581 = vadd.f32 %v6517, %v6549
        %v6582 = vadd.f32 %v6518, %v6550
        %v6583 = vadd.f32 %v6519, %v6551
        %v6584 = vmul.f32 %v6456, 0.25
        %v6585 = vmul.f32 %v6457, 0.25
        %v6586 = vmul.f32 %v6458, 0.25
        %v6587 = vmul.f32 %v6459, 0.25
        %v6588 = vmul.f32 %v6460, 0.25
        %v6589 = vmul.f32 %v6461, 0.25
        %v6590 = vmul.f32 %v6462, 0.25
        %v6591 = vmul.f32 %v6463, 0.25
        %v6592 = vmul.f32 %v6464, 0.25
        %v6593 = vmul.f32 %v6465, 0.25
        %v6594 = vmul.f32 %v6466, 0.25
        %v6595 = vmul.f32 %v6467, 0.25
        %v6596 = vmul.f32 %v6468, 0.25
        %v6597 = vmul.f32 %v6469, 0.25
        %v6598 = vmul.f32 %v6470, 0.25
        %v6599 = vmul.f32 %v6471, 0.25
        %v6600 = vmul.f32 %v6472, 0.25
        %v6601 = vmul.f32 %v6473, 0.25
        %v6602 = vmul.f32 %v6474, 0.25
        %v6603 = vmul.f32 %v6475, 0.25
        %v6604 = vmul.f32 %v6476, 0.25
        %v6605 = vmul.f32 %v6477, 0.25
        %v6606 = vmul.f32 %v6478, 0.25
        %v6607 = vmul.f32 %v6479, 0.25
        %v6608 = vmul.f32 %v6480, 0.25
        %v6609 = vmul.f32 %v6481, 0.25
        %v6610 = vmul.f32 %v6482, 0.25
        %v6611 = vmul.f32 %v6483, 0.25
        %v6612 = vmul.f32 %v6484, 0.25
        %v6613 = vmul.f32 %v6485, 0.25
        %v6614 = vmul.f32 %v6486, 0.25
        %v6615 = vmul.f32 %v6487, 0.25
        %v6616 = vadd.f32 %v6488, %v6584
        %v6617 = vadd.f32 %v6489, %v6585
        %v6618 = vadd.f32 %v6490, %v6586
        %v6619 = vadd.f32 %v6491, %v6587
        %v6620 = vadd.f32 %v6492, %v6588
        %v6621 = vadd.f32 %v6493, %v6589
        %v6622 = vadd.f32 %v6494, %v6590
        %v6623 = vadd.f32 %v6495, %v6591
        %v6624 = vadd.f32 %v6496, %v6592
        %v6625 = vadd.f32 %v6497, %v6593
        %v6626 = vadd.f32 %v6498, %v6594
        %v6627 = vadd.f32 %v6499, %v6595
        %v6628 = vadd.f32 %v6500, %v6596
        %v6629 = vadd.f32 %v6501, %v6597
        %v6630 = vadd.f32 %v6502, %v6598
        %v6631 = vadd.f32 %v6503, %v6599
        %v6632 = vadd.f32 %v6504, %v6600
        %v6633 = vadd.f32 %v6505, %v6601
        %v6634 = vadd.f32 %v6506, %v6602
        %v6635 = vadd.f32 %v6507, %v6603
        %v6636 = vadd.f32 %v6508, %v6604
        %v6637 = vadd.f32 %v6509, %v6605
        %v6638 = vadd.f32 %v6510, %v6606
        %v6639 = vadd.f32 %v6511, %v6607
        %v6640 = vadd.f32 %v6512, %v6608
        %v6641 = vadd.f32 %v6513, %v6609
        %v6642 = vadd.f32 %v6514, %v6610
        %v6643 = vadd.f32 %v6515, %v6611
        %v6644 = vadd.f32 %v6516, %v6612
        %v6645 = vadd.f32 %v6517, %v6613
        %v6646 = vadd.f32 %v6518, %v6614
        %v6647 = vadd.f32 %v6519, %v6615
        %v6648 = vrot.slane %v6072, 7
        %v6649 = vrot.slane %v6073, 7
        %v6650 = vrot.slane %v6074, 7
        %v6651 = vrot.slane %v6075, 7
        %v6652 = vrot.slane %v6076, 7
        %v6653 = vrot.slane %v6077, 7
        %v6654 = vrot.slane %v6078, 7
        %v6655 = vrot.slane %v6079, 7
        %v6656 = vrot.slane %v6080, 7
        %v6657 = vrot.slane %v6081, 7
        %v6658 = vrot.slane %v6082, 7
        %v6659 = vrot.slane %v6083, 7
        %v6660 = vrot.slane %v6084, 7
        %v6661 = vrot.slane %v6085, 7
        %v6662 = vrot.slane %v6086, 7
        %v6663 = vrot.slane %v6087, 7
        %v6664 = vrot.slane %v6088, 7
        %v6665 = vrot.slane %v6089, 7
        %v6666 = vrot.slane %v6090, 7
        %v6667 = vrot.slane %v6091, 7
        %v6668 = vrot.slane %v6092, 7
        %v6669 = vrot.slane %v6093, 7
        %v6670 = vrot.slane %v6094, 7
        %v6671 = vrot.slane %v6095, 7
        %v6672 = vrot.slane %v6096, 7
        %v6673 = vrot.slane %v6097, 7
        %v6674 = vrot.slane %v6098, 7
        %v6675 = vrot.slane %v6099, 7
        %v6676 = vrot.slane %v6100, 7
        %v6677 = vrot.slane %v6101, 7
        %v6678 = vrot.slane %v6102, 7
        %v6679 = vrot.slane %v6103, 7
        %v6680 = vsel %vm477, %v6678, %v6679
        %v6681 = vsel %vm477, %v6677, %v6678
        %v6682 = vsel %vm477, %v6676, %v6677
        %v6683 = vsel %vm477, %v6675, %v6676
        %v6684 = vsel %vm477, %v6674, %v6675
        %v6685 = vsel %vm477, %v6673, %v6674
        %v6686 = vsel %vm477, %v6672, %v6673
        %v6687 = vsel %vm477, %v6671, %v6672
        %v6688 = vsel %vm477, %v6670, %v6671
        %v6689 = vsel %vm477, %v6669, %v6670
        %v6690 = vsel %vm477, %v6668, %v6669
        %v6691 = vsel %vm477, %v6667, %v6668
        %v6692 = vsel %vm477, %v6666, %v6667
        %v6693 = vsel %vm477, %v6665, %v6666
        %v6694 = vsel %vm477, %v6664, %v6665
        %v6695 = vsel %vm477, %v6663, %v6664
        %v6696 = vsel %vm477, %v6662, %v6663
        %v6697 = vsel %vm477, %v6661, %v6662
        %v6698 = vsel %vm477, %v6660, %v6661
        %v6699 = vsel %vm477, %v6659, %v6660
        %v6700 = vsel %vm477, %v6658, %v6659
        %v6701 = vsel %vm477, %v6657, %v6658
        %v6702 = vsel %vm477, %v6656, %v6657
        %v6703 = vsel %vm477, %v6655, %v6656
        %v6704 = vsel %vm477, %v6654, %v6655
        %v6705 = vsel %vm477, %v6653, %v6654
        %v6706 = vsel %vm477, %v6652, %v6653
        %v6707 = vsel %vm477, %v6651, %v6652
        %v6708 = vsel %vm477, %v6650, %v6651
        %v6709 = vsel %vm477, %v6649, %v6650
        %v6710 = vsel %vm477, %v6648, %v6649
        %v6711 = vsel %vm477, %v6679, %v6648
        %v6712 = vsel %vm6232, %v6072, %v6711
        %v6713 = vsel %vm6233, %v6073, %v6710
        %v6714 = vsel %vm6234, %v6074, %v6709
        %v6715 = vsel %vm6235, %v6075, %v6708
        %v6716 = vsel %vm6236, %v6076, %v6707
        %v6717 = vsel %vm6237, %v6077, %v6706
        %v6718 = vsel %vm6238, %v6078, %v6705
        %v6719 = vsel %vm6239, %v6079, %v6704
        %v6720 = vsel %vm6240, %v6080, %v6703
        %v6721 = vsel %vm6241, %v6081, %v6702
        %v6722 = vsel %vm6242, %v6082, %v6701
        %v6723 = vsel %vm6243, %v6083, %v6700
        %v6724 = vsel %vm6244, %v6084, %v6699
        %v6725 = vsel %vm6245, %v6085, %v6698
        %v6726 = vsel %vm6246, %v6086, %v6697
        %v6727 = vsel %vm6247, %v6087, %v6696
        %v6728 = vsel %vm6248, %v6088, %v6695
        %v6729 = vsel %vm6249, %v6089, %v6694
        %v6730 = vsel %vm6250, %v6090, %v6693
        %v6731 = vsel %vm6251, %v6091, %v6692
        %v6732 = vsel %vm6252, %v6092, %v6691
        %v6733 = vsel %vm6253, %v6093, %v6690
        %v6734 = vsel %vm6254, %v6094, %v6689
        %v6735 = vsel %vm6255, %v6095, %v6688
        %v6736 = vsel %vm6256, %v6096, %v6687
        %v6737 = vsel %vm6257, %v6097, %v6686
        %v6738 = vsel %vm6258, %v6098, %v6685
        %v6739 = vsel %vm6259, %v6099, %v6684
        %v6740 = vsel %vm6260, %v6100, %v6683
        %v6741 = vsel %vm6261, %v6101, %v6682
        %v6742 = vsel %vm6262, %v6102, %v6681
        %v6743 = vsel %vm6263, %v6103, %v6680
        %v6744 = vrot.slane %v6072, 1
        %v6745 = vrot.slane %v6073, 1
        %v6746 = vrot.slane %v6074, 1
        %v6747 = vrot.slane %v6075, 1
        %v6748 = vrot.slane %v6076, 1
        %v6749 = vrot.slane %v6077, 1
        %v6750 = vrot.slane %v6078, 1
        %v6751 = vrot.slane %v6079, 1
        %v6752 = vrot.slane %v6080, 1
        %v6753 = vrot.slane %v6081, 1
        %v6754 = vrot.slane %v6082, 1
        %v6755 = vrot.slane %v6083, 1
        %v6756 = vrot.slane %v6084, 1
        %v6757 = vrot.slane %v6085, 1
        %v6758 = vrot.slane %v6086, 1
        %v6759 = vrot.slane %v6087, 1
        %v6760 = vrot.slane %v6088, 1
        %v6761 = vrot.slane %v6089, 1
        %v6762 = vrot.slane %v6090, 1
        %v6763 = vrot.slane %v6091, 1
        %v6764 = vrot.slane %v6092, 1
        %v6765 = vrot.slane %v6093, 1
        %v6766 = vrot.slane %v6094, 1
        %v6767 = vrot.slane %v6095, 1
        %v6768 = vrot.slane %v6096, 1
        %v6769 = vrot.slane %v6097, 1
        %v6770 = vrot.slane %v6098, 1
        %v6771 = vrot.slane %v6099, 1
        %v6772 = vrot.slane %v6100, 1
        %v6773 = vrot.slane %v6101, 1
        %v6774 = vrot.slane %v6102, 1
        %v6775 = vrot.slane %v6103, 1
        %v6776 = vsel %vm1169, %v6774, %v6775
        %v6777 = vsel %vm1169, %v6773, %v6774
        %v6778 = vsel %vm1169, %v6772, %v6773
        %v6779 = vsel %vm1169, %v6771, %v6772
        %v6780 = vsel %vm1169, %v6770, %v6771
        %v6781 = vsel %vm1169, %v6769, %v6770
        %v6782 = vsel %vm1169, %v6768, %v6769
        %v6783 = vsel %vm1169, %v6767, %v6768
        %v6784 = vsel %vm1169, %v6766, %v6767
        %v6785 = vsel %vm1169, %v6765, %v6766
        %v6786 = vsel %vm1169, %v6764, %v6765
        %v6787 = vsel %vm1169, %v6763, %v6764
        %v6788 = vsel %vm1169, %v6762, %v6763
        %v6789 = vsel %vm1169, %v6761, %v6762
        %v6790 = vsel %vm1169, %v6760, %v6761
        %v6791 = vsel %vm1169, %v6759, %v6760
        %v6792 = vsel %vm1169, %v6758, %v6759
        %v6793 = vsel %vm1169, %v6757, %v6758
        %v6794 = vsel %vm1169, %v6756, %v6757
        %v6795 = vsel %vm1169, %v6755, %v6756
        %v6796 = vsel %vm1169, %v6754, %v6755
        %v6797 = vsel %vm1169, %v6753, %v6754
        %v6798 = vsel %vm1169, %v6752, %v6753
        %v6799 = vsel %vm1169, %v6751, %v6752
        %v6800 = vsel %vm1169, %v6750, %v6751
        %v6801 = vsel %vm1169, %v6749, %v6750
        %v6802 = vsel %vm1169, %v6748, %v6749
        %v6803 = vsel %vm1169, %v6747, %v6748
        %v6804 = vsel %vm1169, %v6746, %v6747
        %v6805 = vsel %vm1169, %v6745, %v6746
        %v6806 = vsel %vm1169, %v6744, %v6745
        %v6807 = vsel %vm1169, %v6775, %v6744
        %v6808 = vsel %vm6424, %v6072, %v6806
        %v6809 = vsel %vm6425, %v6073, %v6805
        %v6810 = vsel %vm6426, %v6074, %v6804
        %v6811 = vsel %vm6427, %v6075, %v6803
        %v6812 = vsel %vm6428, %v6076, %v6802
        %v6813 = vsel %vm6429, %v6077, %v6801
        %v6814 = vsel %vm6430, %v6078, %v6800
        %v6815 = vsel %vm6431, %v6079, %v6799
        %v6816 = vsel %vm6432, %v6080, %v6798
        %v6817 = vsel %vm6433, %v6081, %v6797
        %v6818 = vsel %vm6434, %v6082, %v6796
        %v6819 = vsel %vm6435, %v6083, %v6795
        %v6820 = vsel %vm6436, %v6084, %v6794
        %v6821 = vsel %vm6437, %v6085, %v6793
        %v6822 = vsel %vm6438, %v6086, %v6792
        %v6823 = vsel %vm6439, %v6087, %v6791
        %v6824 = vsel %vm6440, %v6088, %v6790
        %v6825 = vsel %vm6441, %v6089, %v6789
        %v6826 = vsel %vm6442, %v6090, %v6788
        %v6827 = vsel %vm6443, %v6091, %v6787
        %v6828 = vsel %vm6444, %v6092, %v6786
        %v6829 = vsel %vm6445, %v6093, %v6785
        %v6830 = vsel %vm6446, %v6094, %v6784
        %v6831 = vsel %vm6447, %v6095, %v6783
        %v6832 = vsel %vm6448, %v6096, %v6782
        %v6833 = vsel %vm6449, %v6097, %v6781
        %v6834 = vsel %vm6450, %v6098, %v6780
        %v6835 = vsel %vm6451, %v6099, %v6779
        %v6836 = vsel %vm6452, %v6100, %v6778
        %v6837 = vsel %vm6453, %v6101, %v6777
        %v6838 = vsel %vm6454, %v6102, %v6776
        %v6839 = vsel %vm6455, %v6103, %v6807
        %v6840 = vmul.f32 %v6072, 0.75
        %v6841 = vmul.f32 %v6073, 0.75
        %v6842 = vmul.f32 %v6074, 0.75
        %v6843 = vmul.f32 %v6075, 0.75
        %v6844 = vmul.f32 %v6076, 0.75
        %v6845 = vmul.f32 %v6077, 0.75
        %v6846 = vmul.f32 %v6078, 0.75
        %v6847 = vmul.f32 %v6079, 0.75
        %v6848 = vmul.f32 %v6080, 0.75
        %v6849 = vmul.f32 %v6081, 0.75
        %v6850 = vmul.f32 %v6082, 0.75
        %v6851 = vmul.f32 %v6083, 0.75
        %v6852 = vmul.f32 %v6084, 0.75
        %v6853 = vmul.f32 %v6085, 0.75
        %v6854 = vmul.f32 %v6086, 0.75
        %v6855 = vmul.f32 %v6087, 0.75
        %v6856 = vmul.f32 %v6088, 0.75
        %v6857 = vmul.f32 %v6089, 0.75
        %v6858 = vmul.f32 %v6090, 0.75
        %v6859 = vmul.f32 %v6091, 0.75
        %v6860 = vmul.f32 %v6092, 0.75
        %v6861 = vmul.f32 %v6093, 0.75
        %v6862 = vmul.f32 %v6094, 0.75
        %v6863 = vmul.f32 %v6095, 0.75
        %v6864 = vmul.f32 %v6096, 0.75
        %v6865 = vmul.f32 %v6097, 0.75
        %v6866 = vmul.f32 %v6098, 0.75
        %v6867 = vmul.f32 %v6099, 0.75
        %v6868 = vmul.f32 %v6100, 0.75
        %v6869 = vmul.f32 %v6101, 0.75
        %v6870 = vmul.f32 %v6102, 0.75
        %v6871 = vmul.f32 %v6103, 0.75
        %v6872 = vmul.f32 %v6712, 0.25
        %v6873 = vmul.f32 %v6713, 0.25
        %v6874 = vmul.f32 %v6714, 0.25
        %v6875 = vmul.f32 %v6715, 0.25
        %v6876 = vmul.f32 %v6716, 0.25
        %v6877 = vmul.f32 %v6717, 0.25
        %v6878 = vmul.f32 %v6718, 0.25
        %v6879 = vmul.f32 %v6719, 0.25
        %v6880 = vmul.f32 %v6720, 0.25
        %v6881 = vmul.f32 %v6721, 0.25
        %v6882 = vmul.f32 %v6722, 0.25
        %v6883 = vmul.f32 %v6723, 0.25
        %v6884 = vmul.f32 %v6724, 0.25
        %v6885 = vmul.f32 %v6725, 0.25
        %v6886 = vmul.f32 %v6726, 0.25
        %v6887 = vmul.f32 %v6727, 0.25
        %v6888 = vmul.f32 %v6728, 0.25
        %v6889 = vmul.f32 %v6729, 0.25
        %v6890 = vmul.f32 %v6730, 0.25
        %v6891 = vmul.f32 %v6731, 0.25
        %v6892 = vmul.f32 %v6732, 0.25
        %v6893 = vmul.f32 %v6733, 0.25
        %v6894 = vmul.f32 %v6734, 0.25
        %v6895 = vmul.f32 %v6735, 0.25
        %v6896 = vmul.f32 %v6736, 0.25
        %v6897 = vmul.f32 %v6737, 0.25
        %v6898 = vmul.f32 %v6738, 0.25
        %v6899 = vmul.f32 %v6739, 0.25
        %v6900 = vmul.f32 %v6740, 0.25
        %v6901 = vmul.f32 %v6741, 0.25
        %v6902 = vmul.f32 %v6742, 0.25
        %v6903 = vmul.f32 %v6743, 0.25
        %v6904 = vadd.f32 %v6840, %v6872
        %v6905 = vadd.f32 %v6841, %v6873
        %v6906 = vadd.f32 %v6842, %v6874
        %v6907 = vadd.f32 %v6843, %v6875
        %v6908 = vadd.f32 %v6844, %v6876
        %v6909 = vadd.f32 %v6845, %v6877
        %v6910 = vadd.f32 %v6846, %v6878
        %v6911 = vadd.f32 %v6847, %v6879
        %v6912 = vadd.f32 %v6848, %v6880
        %v6913 = vadd.f32 %v6849, %v6881
        %v6914 = vadd.f32 %v6850, %v6882
        %v6915 = vadd.f32 %v6851, %v6883
        %v6916 = vadd.f32 %v6852, %v6884
        %v6917 = vadd.f32 %v6853, %v6885
        %v6918 = vadd.f32 %v6854, %v6886
        %v6919 = vadd.f32 %v6855, %v6887
        %v6920 = vadd.f32 %v6856, %v6888
        %v6921 = vadd.f32 %v6857, %v6889
        %v6922 = vadd.f32 %v6858, %v6890
        %v6923 = vadd.f32 %v6859, %v6891
        %v6924 = vadd.f32 %v6860, %v6892
        %v6925 = vadd.f32 %v6861, %v6893
        %v6926 = vadd.f32 %v6862, %v6894
        %v6927 = vadd.f32 %v6863, %v6895
        %v6928 = vadd.f32 %v6864, %v6896
        %v6929 = vadd.f32 %v6865, %v6897
        %v6930 = vadd.f32 %v6866, %v6898
        %v6931 = vadd.f32 %v6867, %v6899
        %v6932 = vadd.f32 %v6868, %v6900
        %v6933 = vadd.f32 %v6869, %v6901
        %v6934 = vadd.f32 %v6870, %v6902
        %v6935 = vadd.f32 %v6871, %v6903
        %v6936 = vmul.f32 %v6808, 0.25
        %v6937 = vmul.f32 %v6809, 0.25
        %v6938 = vmul.f32 %v6810, 0.25
        %v6939 = vmul.f32 %v6811, 0.25
        %v6940 = vmul.f32 %v6812, 0.25
        %v6941 = vmul.f32 %v6813, 0.25
        %v6942 = vmul.f32 %v6814, 0.25
        %v6943 = vmul.f32 %v6815, 0.25
        %v6944 = vmul.f32 %v6816, 0.25
        %v6945 = vmul.f32 %v6817, 0.25
        %v6946 = vmul.f32 %v6818, 0.25
        %v6947 = vmul.f32 %v6819, 0.25
        %v6948 = vmul.f32 %v6820, 0.25
        %v6949 = vmul.f32 %v6821, 0.25
        %v6950 = vmul.f32 %v6822, 0.25
        %v6951 = vmul.f32 %v6823, 0.25
        %v6952 = vmul.f32 %v6824, 0.25
        %v6953 = vmul.f32 %v6825, 0.25
        %v6954 = vmul.f32 %v6826, 0.25
        %v6955 = vmul.f32 %v6827, 0.25
        %v6956 = vmul.f32 %v6828, 0.25
        %v6957 = vmul.f32 %v6829, 0.25
        %v6958 = vmul.f32 %v6830, 0.25
        %v6959 = vmul.f32 %v6831, 0.25
        %v6960 = vmul.f32 %v6832, 0.25
        %v6961 = vmul.f32 %v6833, 0.25
        %v6962 = vmul.f32 %v6834, 0.25
        %v6963 = vmul.f32 %v6835, 0.25
        %v6964 = vmul.f32 %v6836, 0.25
        %v6965 = vmul.f32 %v6837, 0.25
        %v6966 = vmul.f32 %v6838, 0.25
        %v6967 = vmul.f32 %v6839, 0.25
        %v6968 = vadd.f32 %v6840, %v6936
        %v6969 = vadd.f32 %v6841, %v6937
        %v6970 = vadd.f32 %v6842, %v6938
        %v6971 = vadd.f32 %v6843, %v6939
        %v6972 = vadd.f32 %v6844, %v6940
        %v6973 = vadd.f32 %v6845, %v6941
        %v6974 = vadd.f32 %v6846, %v6942
        %v6975 = vadd.f32 %v6847, %v6943
        %v6976 = vadd.f32 %v6848, %v6944
        %v6977 = vadd.f32 %v6849, %v6945
        %v6978 = vadd.f32 %v6850, %v6946
        %v6979 = vadd.f32 %v6851, %v6947
        %v6980 = vadd.f32 %v6852, %v6948
        %v6981 = vadd.f32 %v6853, %v6949
        %v6982 = vadd.f32 %v6854, %v6950
        %v6983 = vadd.f32 %v6855, %v6951
        %v6984 = vadd.f32 %v6856, %v6952
        %v6985 = vadd.f32 %v6857, %v6953
        %v6986 = vadd.f32 %v6858, %v6954
        %v6987 = vadd.f32 %v6859, %v6955
        %v6988 = vadd.f32 %v6860, %v6956
        %v6989 = vadd.f32 %v6861, %v6957
        %v6990 = vadd.f32 %v6862, %v6958
        %v6991 = vadd.f32 %v6863, %v6959
        %v6992 = vadd.f32 %v6864, %v6960
        %v6993 = vadd.f32 %v6865, %v6961
        %v6994 = vadd.f32 %v6866, %v6962
        %v6995 = vadd.f32 %v6867, %v6963
        %v6996 = vadd.f32 %v6868, %v6964
        %v6997 = vadd.f32 %v6869, %v6965
        %v6998 = vadd.f32 %v6870, %v6966
        %v6999 = vadd.f32 %v6871, %v6967
        %v7016 = vrot.slane %v6554, 7
        %vm7017 = vcmask 1041409
        %v7018 = vsel %vm7017, %v7016, %v6552
        %v7019 = vrot.slane %v6556, 6
        %vm7020 = vcmask 1042434
        %v7021 = vsel %vm7020, %v7019, %v7018
        %v7022 = vrot.slane %v6558, 5
        %vm7023 = vcmask 1043459
        %v7024 = vsel %vm7023, %v7022, %v7021
        %v7025 = vrot.slane %v6560, 4
        %vm7026 = vcmask 1044484
        %v7027 = vsel %vm7026, %v7025, %v7024
        %v7028 = vrot.slane %v6562, 3
        %vm7029 = vcmask 1045509
        %v7030 = vsel %vm7029, %v7028, %v7027
        %v7031 = vrot.slane %v6564, 2
        %vm7032 = vcmask 1046534
        %v7033 = vsel %vm7032, %v7031, %v7030
        %v7034 = vrot.slane %v6566, 1
        %vm7035 = vcmask 1047559
        %v7036 = vsel %vm7035, %v7034, %v7033
        %v7037 = vrot.slane %v6570, 7
        %v7038 = vsel %vm7017, %v7037, %v6568
        %v7039 = vrot.slane %v6572, 6
        %v7040 = vsel %vm7020, %v7039, %v7038
        %v7041 = vrot.slane %v6574, 5
        %v7042 = vsel %vm7023, %v7041, %v7040
        %v7043 = vrot.slane %v6576, 4
        %v7044 = vsel %vm7026, %v7043, %v7042
        %v7045 = vrot.slane %v6578, 3
        %v7046 = vsel %vm7029, %v7045, %v7044
        %v7047 = vrot.slane %v6580, 2
        %v7048 = vsel %vm7032, %v7047, %v7046
        %v7049 = vrot.slane %v6582, 1
        %v7050 = vsel %vm7035, %v7049, %v7048
        %v7069 = vrot.slane %v6618, 7
        %v7070 = vsel %vm7017, %v7069, %v6616
        %v7071 = vrot.slane %v6620, 6
        %v7072 = vsel %vm7020, %v7071, %v7070
        %v7073 = vrot.slane %v6622, 5
        %v7074 = vsel %vm7023, %v7073, %v7072
        %v7075 = vrot.slane %v6624, 4
        %v7076 = vsel %vm7026, %v7075, %v7074
        %v7077 = vrot.slane %v6626, 3
        %v7078 = vsel %vm7029, %v7077, %v7076
        %v7079 = vrot.slane %v6628, 2
        %v7080 = vsel %vm7032, %v7079, %v7078
        %v7081 = vrot.slane %v6630, 1
        %v7082 = vsel %vm7035, %v7081, %v7080
        %v7083 = vrot.slane %v6634, 7
        %v7084 = vsel %vm7017, %v7083, %v6632
        %v7085 = vrot.slane %v6636, 6
        %v7086 = vsel %vm7020, %v7085, %v7084
        %v7087 = vrot.slane %v6638, 5
        %v7088 = vsel %vm7023, %v7087, %v7086
        %v7089 = vrot.slane %v6640, 4
        %v7090 = vsel %vm7026, %v7089, %v7088
        %v7091 = vrot.slane %v6642, 3
        %v7092 = vsel %vm7029, %v7091, %v7090
        %v7093 = vrot.slane %v6644, 2
        %v7094 = vsel %vm7032, %v7093, %v7092
        %v7095 = vrot.slane %v6646, 1
        %v7096 = vsel %vm7035, %v7095, %v7094
        %7097 = vrot.lane.b32.xlu0 %v7082, 8
        %v7098 = vpop.permute.xlu0 %7097
        %7099 = vrot.lane.b32.xlu0 %v7096, 8
        %v7100 = vpop.permute.xlu0 %7099
        %v7103 = vrot.slane %v6552, 1
        %v7104 = vsel %vm7017, %v6554, %v7103
        %v7105 = vrot.slane %v6556, 7
        %v7106 = vsel %vm7020, %v7105, %v7104
        %v7107 = vrot.slane %v6558, 6
        %v7108 = vsel %vm7023, %v7107, %v7106
        %v7109 = vrot.slane %v6560, 5
        %v7110 = vsel %vm7026, %v7109, %v7108
        %v7111 = vrot.slane %v6562, 4
        %v7112 = vsel %vm7029, %v7111, %v7110
        %v7113 = vrot.slane %v6564, 3
        %v7114 = vsel %vm7032, %v7113, %v7112
        %v7115 = vrot.slane %v6566, 2
        %v7116 = vsel %vm7035, %v7115, %v7114
        %v7117 = vrot.slane %v6568, 1
        %v7118 = vsel %vm7017, %v6570, %v7117
        %v7119 = vrot.slane %v6572, 7
        %v7120 = vsel %vm7020, %v7119, %v7118
        %v7121 = vrot.slane %v6574, 6
        %v7122 = vsel %vm7023, %v7121, %v7120
        %v7123 = vrot.slane %v6576, 5
        %v7124 = vsel %vm7026, %v7123, %v7122
        %v7125 = vrot.slane %v6578, 4
        %v7126 = vsel %vm7029, %v7125, %v7124
        %v7127 = vrot.slane %v6580, 3
        %v7128 = vsel %vm7032, %v7127, %v7126
        %v7129 = vrot.slane %v6582, 2
        %v7130 = vsel %vm7035, %v7129, %v7128
        %7131 = vrot.lane.b32.xlu0 %v7116, 16
        %v7132 = vpop.permute.xlu0 %7131
        %7133 = vrot.lane.b32.xlu0 %v7130, 16
        %v7134 = vpop.permute.xlu0 %7133
        %v7137 = vrot.slane %v6616, 1
        %v7138 = vsel %vm7017, %v6618, %v7137
        %v7139 = vrot.slane %v6620, 7
        %v7140 = vsel %vm7020, %v7139, %v7138
        %v7141 = vrot.slane %v6622, 6
        %v7142 = vsel %vm7023, %v7141, %v7140
        %v7143 = vrot.slane %v6624, 5
        %v7144 = vsel %vm7026, %v7143, %v7142
        %v7145 = vrot.slane %v6626, 4
        %v7146 = vsel %vm7029, %v7145, %v7144
        %v7147 = vrot.slane %v6628, 3
        %v7148 = vsel %vm7032, %v7147, %v7146
        %v7149 = vrot.slane %v6630, 2
        %v7150 = vsel %vm7035, %v7149, %v7148
        %v7151 = vrot.slane %v6632, 1
        %v7152 = vsel %vm7017, %v6634, %v7151
        %v7153 = vrot.slane %v6636, 7
        %v7154 = vsel %vm7020, %v7153, %v7152
        %v7155 = vrot.slane %v6638, 6
        %v7156 = vsel %vm7023, %v7155, %v7154
        %v7157 = vrot.slane %v6640, 5
        %v7158 = vsel %vm7026, %v7157, %v7156
        %v7159 = vrot.slane %v6642, 4
        %v7160 = vsel %vm7029, %v7159, %v7158
        %v7161 = vrot.slane %v6644, 3
        %v7162 = vsel %vm7032, %v7161, %v7160
        %v7163 = vrot.slane %v6646, 2
        %v7164 = vsel %vm7035, %v7163, %v7162
        %7165 = vrot.lane.b32.xlu0 %v7150, 24
        %v7166 = vpop.permute.xlu0 %7165
        %7167 = vrot.lane.b32.xlu0 %v7164, 24
        %v7168 = vpop.permute.xlu0 %7167
        %v7171 = vrot.slane %v6552, 2
        %v7172 = vrot.slane %v6554, 1
        %v7173 = vsel %vm7017, %v7172, %v7171
        %v7174 = vsel %vm7020, %v6556, %v7173
        %v7175 = vrot.slane %v6558, 7
        %v7176 = vsel %vm7023, %v7175, %v7174
        %v7177 = vrot.slane %v6560, 6
        %v7178 = vsel %vm7026, %v7177, %v7176
        %v7179 = vrot.slane %v6562, 5
        %v7180 = vsel %vm7029, %v7179, %v7178
        %v7181 = vrot.slane %v6564, 4
        %v7182 = vsel %vm7032, %v7181, %v7180
        %v7183 = vrot.slane %v6566, 3
        %v7184 = vsel %vm7035, %v7183, %v7182
        %v7185 = vrot.slane %v6568, 2
        %v7186 = vrot.slane %v6570, 1
        %v7187 = vsel %vm7017, %v7186, %v7185
        %v7188 = vsel %vm7020, %v6572, %v7187
        %v7189 = vrot.slane %v6574, 7
        %v7190 = vsel %vm7023, %v7189, %v7188
        %v7191 = vrot.slane %v6576, 6
        %v7192 = vsel %vm7026, %v7191, %v7190
        %v7193 = vrot.slane %v6578, 5
        %v7194 = vsel %vm7029, %v7193, %v7192
        %v7195 = vrot.slane %v6580, 4
        %v7196 = vsel %vm7032, %v7195, %v7194
        %v7197 = vrot.slane %v6582, 3
        %v7198 = vsel %vm7035, %v7197, %v7196
        %7199 = vrot.lane.b32.xlu0 %v7184, 32
        %v7200 = vpop.permute.xlu0 %7199
        %7201 = vrot.lane.b32.xlu0 %v7198, 32
        %v7202 = vpop.permute.xlu0 %7201
        %v7205 = vrot.slane %v6616, 2
        %v7206 = vrot.slane %v6618, 1
        %v7207 = vsel %vm7017, %v7206, %v7205
        %v7208 = vsel %vm7020, %v6620, %v7207
        %v7209 = vrot.slane %v6622, 7
        %v7210 = vsel %vm7023, %v7209, %v7208
        %v7211 = vrot.slane %v6624, 6
        %v7212 = vsel %vm7026, %v7211, %v7210
        %v7213 = vrot.slane %v6626, 5
        %v7214 = vsel %vm7029, %v7213, %v7212
        %v7215 = vrot.slane %v6628, 4
        %v7216 = vsel %vm7032, %v7215, %v7214
        %v7217 = vrot.slane %v6630, 3
        %v7218 = vsel %vm7035, %v7217, %v7216
        %v7219 = vrot.slane %v6632, 2
        %v7220 = vrot.slane %v6634, 1
        %v7221 = vsel %vm7017, %v7220, %v7219
        %v7222 = vsel %vm7020, %v6636, %v7221
        %v7223 = vrot.slane %v6638, 7
        %v7224 = vsel %vm7023, %v7223, %v7222
        %v7225 = vrot.slane %v6640, 6
        %v7226 = vsel %vm7026, %v7225, %v7224
        %v7227 = vrot.slane %v6642, 5
        %v7228 = vsel %vm7029, %v7227, %v7226
        %v7229 = vrot.slane %v6644, 4
        %v7230 = vsel %vm7032, %v7229, %v7228
        %v7231 = vrot.slane %v6646, 3
        %v7232 = vsel %vm7035, %v7231, %v7230
        %7233 = vrot.lane.b32.xlu0 %v7218, 40
        %v7234 = vpop.permute.xlu0 %7233
        %7235 = vrot.lane.b32.xlu0 %v7232, 40
        %v7236 = vpop.permute.xlu0 %7235
        %v7239 = vrot.slane %v6552, 3
        %v7240 = vrot.slane %v6554, 2
        %v7241 = vsel %vm7017, %v7240, %v7239
        %v7242 = vrot.slane %v6556, 1
        %v7243 = vsel %vm7020, %v7242, %v7241
        %v7244 = vsel %vm7023, %v6558, %v7243
        %v7245 = vrot.slane %v6560, 7
        %v7246 = vsel %vm7026, %v7245, %v7244
        %v7247 = vrot.slane %v6562, 6
        %v7248 = vsel %vm7029, %v7247, %v7246
        %v7249 = vrot.slane %v6564, 5
        %v7250 = vsel %vm7032, %v7249, %v7248
        %v7251 = vrot.slane %v6566, 4
        %v7252 = vsel %vm7035, %v7251, %v7250
        %v7253 = vrot.slane %v6568, 3
        %v7254 = vrot.slane %v6570, 2
        %v7255 = vsel %vm7017, %v7254, %v7253
        %v7256 = vrot.slane %v6572, 1
        %v7257 = vsel %vm7020, %v7256, %v7255
        %v7258 = vsel %vm7023, %v6574, %v7257
        %v7259 = vrot.slane %v6576, 7
        %v7260 = vsel %vm7026, %v7259, %v7258
        %v7261 = vrot.slane %v6578, 6
        %v7262 = vsel %vm7029, %v7261, %v7260
        %v7263 = vrot.slane %v6580, 5
        %v7264 = vsel %vm7032, %v7263, %v7262
        %v7265 = vrot.slane %v6582, 4
        %v7266 = vsel %vm7035, %v7265, %v7264
        %7267 = vrot.lane.b32.xlu0 %v7252, 48
        %v7268 = vpop.permute.xlu0 %7267
        %7269 = vrot.lane.b32.xlu0 %v7266, 48
        %v7270 = vpop.permute.xlu0 %7269
        %v7273 = vrot.slane %v6616, 3
        %v7274 = vrot.slane %v6618, 2
        %v7275 = vsel %vm7017, %v7274, %v7273
        %v7276 = vrot.slane %v6620, 1
        %v7277 = vsel %vm7020, %v7276, %v7275
        %v7278 = vsel %vm7023, %v6622, %v7277
        %v7279 = vrot.slane %v6624, 7
        %v7280 = vsel %vm7026, %v7279, %v7278
        %v7281 = vrot.slane %v6626, 6
        %v7282 = vsel %vm7029, %v7281, %v7280
        %v7283 = vrot.slane %v6628, 5
        %v7284 = vsel %vm7032, %v7283, %v7282
        %v7285 = vrot.slane %v6630, 4
        %v7286 = vsel %vm7035, %v7285, %v7284
        %v7287 = vrot.slane %v6632, 3
        %v7288 = vrot.slane %v6634, 2
        %v7289 = vsel %vm7017, %v7288, %v7287
        %v7290 = vrot.slane %v6636, 1
        %v7291 = vsel %vm7020, %v7290, %v7289
        %v7292 = vsel %vm7023, %v6638, %v7291
        %v7293 = vrot.slane %v6640, 7
        %v7294 = vsel %vm7026, %v7293, %v7292
        %v7295 = vrot.slane %v6642, 6
        %v7296 = vsel %vm7029, %v7295, %v7294
        %v7297 = vrot.slane %v6644, 5
        %v7298 = vsel %vm7032, %v7297, %v7296
        %v7299 = vrot.slane %v6646, 4
        %v7300 = vsel %vm7035, %v7299, %v7298
        %7301 = vrot.lane.b32.xlu0 %v7286, 56
        %v7302 = vpop.permute.xlu0 %7301
        %7303 = vrot.lane.b32.xlu0 %v7300, 56
        %v7304 = vpop.permute.xlu0 %7303
        %v7307 = vrot.slane %v6552, 4
        %v7308 = vrot.slane %v6554, 3
        %v7309 = vsel %vm7017, %v7308, %v7307
        %v7310 = vrot.slane %v6556, 2
        %v7311 = vsel %vm7020, %v7310, %v7309
        %v7312 = vrot.slane %v6558, 1
        %v7313 = vsel %vm7023, %v7312, %v7311
        %v7314 = vsel %vm7026, %v6560, %v7313
        %v7315 = vrot.slane %v6562, 7
        %v7316 = vsel %vm7029, %v7315, %v7314
        %v7317 = vrot.slane %v6564, 6
        %v7318 = vsel %vm7032, %v7317, %v7316
        %v7319 = vrot.slane %v6566, 5
        %v7320 = vsel %vm7035, %v7319, %v7318
        %v7321 = vrot.slane %v6568, 4
        %v7322 = vrot.slane %v6570, 3
        %v7323 = vsel %vm7017, %v7322, %v7321
        %v7324 = vrot.slane %v6572, 2
        %v7325 = vsel %vm7020, %v7324, %v7323
        %v7326 = vrot.slane %v6574, 1
        %v7327 = vsel %vm7023, %v7326, %v7325
        %v7328 = vsel %vm7026, %v6576, %v7327
        %v7329 = vrot.slane %v6578, 7
        %v7330 = vsel %vm7029, %v7329, %v7328
        %v7331 = vrot.slane %v6580, 6
        %v7332 = vsel %vm7032, %v7331, %v7330
        %v7333 = vrot.slane %v6582, 5
        %v7334 = vsel %vm7035, %v7333, %v7332
        %7335 = vrot.lane.b32.xlu0 %v7320, 64
        %v7336 = vpop.permute.xlu0 %7335
        %7337 = vrot.lane.b32.xlu0 %v7334, 64
        %v7338 = vpop.permute.xlu0 %7337
        %v7341 = vrot.slane %v6616, 4
        %v7342 = vrot.slane %v6618, 3
        %v7343 = vsel %vm7017, %v7342, %v7341
        %v7344 = vrot.slane %v6620, 2
        %v7345 = vsel %vm7020, %v7344, %v7343
        %v7346 = vrot.slane %v6622, 1
        %v7347 = vsel %vm7023, %v7346, %v7345
        %v7348 = vsel %vm7026, %v6624, %v7347
        %v7349 = vrot.slane %v6626, 7
        %v7350 = vsel %vm7029, %v7349, %v7348
        %v7351 = vrot.slane %v6628, 6
        %v7352 = vsel %vm7032, %v7351, %v7350
        %v7353 = vrot.slane %v6630, 5
        %v7354 = vsel %vm7035, %v7353, %v7352
        %v7355 = vrot.slane %v6632, 4
        %v7356 = vrot.slane %v6634, 3
        %v7357 = vsel %vm7017, %v7356, %v7355
        %v7358 = vrot.slane %v6636, 2
        %v7359 = vsel %vm7020, %v7358, %v7357
        %v7360 = vrot.slane %v6638, 1
        %v7361 = vsel %vm7023, %v7360, %v7359
        %v7362 = vsel %vm7026, %v6640, %v7361
        %v7363 = vrot.slane %v6642, 7
        %v7364 = vsel %vm7029, %v7363, %v7362
        %v7365 = vrot.slane %v6644, 6
        %v7366 = vsel %vm7032, %v7365, %v7364
        %v7367 = vrot.slane %v6646, 5
        %v7368 = vsel %vm7035, %v7367, %v7366
        %7369 = vrot.lane.b32.xlu0 %v7354, 72
        %v7370 = vpop.permute.xlu0 %7369
        %7371 = vrot.lane.b32.xlu0 %v7368, 72
        %v7372 = vpop.permute.xlu0 %7371
        %v7375 = vrot.slane %v6552, 5
        %v7376 = vrot.slane %v6554, 4
        %v7377 = vsel %vm7017, %v7376, %v7375
        %v7378 = vrot.slane %v6556, 3
        %v7379 = vsel %vm7020, %v7378, %v7377
        %v7380 = vrot.slane %v6558, 2
        %v7381 = vsel %vm7023, %v7380, %v7379
        %v7382 = vrot.slane %v6560, 1
        %v7383 = vsel %vm7026, %v7382, %v7381
        %v7384 = vsel %vm7029, %v6562, %v7383
        %v7385 = vrot.slane %v6564, 7
        %v7386 = vsel %vm7032, %v7385, %v7384
        %v7387 = vrot.slane %v6566, 6
        %v7388 = vsel %vm7035, %v7387, %v7386
        %v7389 = vrot.slane %v6568, 5
        %v7390 = vrot.slane %v6570, 4
        %v7391 = vsel %vm7017, %v7390, %v7389
        %v7392 = vrot.slane %v6572, 3
        %v7393 = vsel %vm7020, %v7392, %v7391
        %v7394 = vrot.slane %v6574, 2
        %v7395 = vsel %vm7023, %v7394, %v7393
        %v7396 = vrot.slane %v6576, 1
        %v7397 = vsel %vm7026, %v7396, %v7395
        %v7398 = vsel %vm7029, %v6578, %v7397
        %v7399 = vrot.slane %v6580, 7
        %v7400 = vsel %vm7032, %v7399, %v7398
        %v7401 = vrot.slane %v6582, 6
        %v7402 = vsel %vm7035, %v7401, %v7400
        %7403 = vrot.lane.b32.xlu0 %v7388, 80
        %v7404 = vpop.permute.xlu0 %7403
        %7405 = vrot.lane.b32.xlu0 %v7402, 80
        %v7406 = vpop.permute.xlu0 %7405
        %v7409 = vrot.slane %v6616, 5
        %v7410 = vrot.slane %v6618, 4
        %v7411 = vsel %vm7017, %v7410, %v7409
        %v7412 = vrot.slane %v6620, 3
        %v7413 = vsel %vm7020, %v7412, %v7411
        %v7414 = vrot.slane %v6622, 2
        %v7415 = vsel %vm7023, %v7414, %v7413
        %v7416 = vrot.slane %v6624, 1
        %v7417 = vsel %vm7026, %v7416, %v7415
        %v7418 = vsel %vm7029, %v6626, %v7417
        %v7419 = vrot.slane %v6628, 7
        %v7420 = vsel %vm7032, %v7419, %v7418
        %v7421 = vrot.slane %v6630, 6
        %v7422 = vsel %vm7035, %v7421, %v7420
        %v7423 = vrot.slane %v6632, 5
        %v7424 = vrot.slane %v6634, 4
        %v7425 = vsel %vm7017, %v7424, %v7423
        %v7426 = vrot.slane %v6636, 3
        %v7427 = vsel %vm7020, %v7426, %v7425
        %v7428 = vrot.slane %v6638, 2
        %v7429 = vsel %vm7023, %v7428, %v7427
        %v7430 = vrot.slane %v6640, 1
        %v7431 = vsel %vm7026, %v7430, %v7429
        %v7432 = vsel %vm7029, %v6642, %v7431
        %v7433 = vrot.slane %v6644, 7
        %v7434 = vsel %vm7032, %v7433, %v7432
        %v7435 = vrot.slane %v6646, 6
        %v7436 = vsel %vm7035, %v7435, %v7434
        %7437 = vrot.lane.b32.xlu0 %v7422, 88
        %v7438 = vpop.permute.xlu0 %7437
        %7439 = vrot.lane.b32.xlu0 %v7436, 88
        %v7440 = vpop.permute.xlu0 %7439
        %v7443 = vrot.slane %v6552, 6
        %v7444 = vrot.slane %v6554, 5
        %v7445 = vsel %vm7017, %v7444, %v7443
        %v7446 = vrot.slane %v6556, 4
        %v7447 = vsel %vm7020, %v7446, %v7445
        %v7448 = vrot.slane %v6558, 3
        %v7449 = vsel %vm7023, %v7448, %v7447
        %v7450 = vrot.slane %v6560, 2
        %v7451 = vsel %vm7026, %v7450, %v7449
        %v7452 = vrot.slane %v6562, 1
        %v7453 = vsel %vm7029, %v7452, %v7451
        %v7454 = vsel %vm7032, %v6564, %v7453
        %v7455 = vrot.slane %v6566, 7
        %v7456 = vsel %vm7035, %v7455, %v7454
        %v7457 = vrot.slane %v6568, 6
        %v7458 = vrot.slane %v6570, 5
        %v7459 = vsel %vm7017, %v7458, %v7457
        %v7460 = vrot.slane %v6572, 4
        %v7461 = vsel %vm7020, %v7460, %v7459
        %v7462 = vrot.slane %v6574, 3
        %v7463 = vsel %vm7023, %v7462, %v7461
        %v7464 = vrot.slane %v6576, 2
        %v7465 = vsel %vm7026, %v7464, %v7463
        %v7466 = vrot.slane %v6578, 1
        %v7467 = vsel %vm7029, %v7466, %v7465
        %v7468 = vsel %vm7032, %v6580, %v7467
        %v7469 = vrot.slane %v6582, 7
        %v7470 = vsel %vm7035, %v7469, %v7468
        %7471 = vrot.lane.b32.xlu0 %v7456, 96
        %v7472 = vpop.permute.xlu0 %7471
        %7473 = vrot.lane.b32.xlu0 %v7470, 96
        %v7474 = vpop.permute.xlu0 %7473
        %v7477 = vrot.slane %v6616, 6
        %v7478 = vrot.slane %v6618, 5
        %v7479 = vsel %vm7017, %v7478, %v7477
        %v7480 = vrot.slane %v6620, 4
        %v7481 = vsel %vm7020, %v7480, %v7479
        %v7482 = vrot.slane %v6622, 3
        %v7483 = vsel %vm7023, %v7482, %v7481
        %v7484 = vrot.slane %v6624, 2
        %v7485 = vsel %vm7026, %v7484, %v7483
        %v7486 = vrot.slane %v6626, 1
        %v7487 = vsel %vm7029, %v7486, %v7485
        %v7488 = vsel %vm7032, %v6628, %v7487
        %v7489 = vrot.slane %v6630, 7
        %v7490 = vsel %vm7035, %v7489, %v7488
        %v7491 = vrot.slane %v6632, 6
        %v7492 = vrot.slane %v6634, 5
        %v7493 = vsel %vm7017, %v7492, %v7491
        %v7494 = vrot.slane %v6636, 4
        %v7495 = vsel %vm7020, %v7494, %v7493
        %v7496 = vrot.slane %v6638, 3
        %v7497 = vsel %vm7023, %v7496, %v7495
        %v7498 = vrot.slane %v6640, 2
        %v7499 = vsel %vm7026, %v7498, %v7497
        %v7500 = vrot.slane %v6642, 1
        %v7501 = vsel %vm7029, %v7500, %v7499
        %v7502 = vsel %vm7032, %v6644, %v7501
        %v7503 = vrot.slane %v6646, 7
        %v7504 = vsel %vm7035, %v7503, %v7502
        %7505 = vrot.lane.b32.xlu0 %v7490, 104
        %v7506 = vpop.permute.xlu0 %7505
        %7507 = vrot.lane.b32.xlu0 %v7504, 104
        %v7508 = vpop.permute.xlu0 %7507
        %v7511 = vrot.slane %v6552, 7
        %v7512 = vrot.slane %v6554, 6
        %v7513 = vsel %vm7017, %v7512, %v7511
        %v7514 = vrot.slane %v6556, 5
        %v7515 = vsel %vm7020, %v7514, %v7513
        %v7516 = vrot.slane %v6558, 4
        %v7517 = vsel %vm7023, %v7516, %v7515
        %v7518 = vrot.slane %v6560, 3
        %v7519 = vsel %vm7026, %v7518, %v7517
        %v7520 = vrot.slane %v6562, 2
        %v7521 = vsel %vm7029, %v7520, %v7519
        %v7522 = vrot.slane %v6564, 1
        %v7523 = vsel %vm7032, %v7522, %v7521
        %v7524 = vsel %vm7035, %v6566, %v7523
        %v7525 = vrot.slane %v6568, 7
        %v7526 = vrot.slane %v6570, 6
        %v7527 = vsel %vm7017, %v7526, %v7525
        %v7528 = vrot.slane %v6572, 5
        %v7529 = vsel %vm7020, %v7528, %v7527
        %v7530 = vrot.slane %v6574, 4
        %v7531 = vsel %vm7023, %v7530, %v7529
        %v7532 = vrot.slane %v6576, 3
        %v7533 = vsel %vm7026, %v7532, %v7531
        %v7534 = vrot.slane %v6578, 2
        %v7535 = vsel %vm7029, %v7534, %v7533
        %v7536 = vrot.slane %v6580, 1
        %v7537 = vsel %vm7032, %v7536, %v7535
        %v7538 = vsel %vm7035, %v6582, %v7537
        %7539 = vrot.lane.b32.xlu0 %v7524, 112
        %v7540 = vpop.permute.xlu0 %7539
        %7541 = vrot.lane.b32.xlu0 %v7538, 112
        %v7542 = vpop.permute.xlu0 %7541
        %v7545 = vrot.slane %v6616, 7
        %v7546 = vrot.slane %v6618, 6
        %v7547 = vsel %vm7017, %v7546, %v7545
        %v7548 = vrot.slane %v6620, 5
        %v7549 = vsel %vm7020, %v7548, %v7547
        %v7550 = vrot.slane %v6622, 4
        %v7551 = vsel %vm7023, %v7550, %v7549
        %v7552 = vrot.slane %v6624, 3
        %v7553 = vsel %vm7026, %v7552, %v7551
        %v7554 = vrot.slane %v6626, 2
        %v7555 = vsel %vm7029, %v7554, %v7553
        %v7556 = vrot.slane %v6628, 1
        %v7557 = vsel %vm7032, %v7556, %v7555
        %v7558 = vsel %vm7035, %v6630, %v7557
        %v7559 = vrot.slane %v6632, 7
        %v7560 = vrot.slane %v6634, 6
        %v7561 = vsel %vm7017, %v7560, %v7559
        %v7562 = vrot.slane %v6636, 5
        %v7563 = vsel %vm7020, %v7562, %v7561
        %v7564 = vrot.slane %v6638, 4
        %v7565 = vsel %vm7023, %v7564, %v7563
        %v7566 = vrot.slane %v6640, 3
        %v7567 = vsel %vm7026, %v7566, %v7565
        %v7568 = vrot.slane %v6642, 2
        %v7569 = vsel %vm7029, %v7568, %v7567
        %v7570 = vrot.slane %v6644, 1
        %v7571 = vsel %vm7032, %v7570, %v7569
        %v7572 = vsel %vm7035, %v6646, %v7571
        %7573 = vrot.lane.b32.xlu0 %v7558, 120
        %v7574 = vpop.permute.xlu0 %7573
        %7575 = vrot.lane.b32.xlu0 %v7572, 120
        %v7576 = vpop.permute.xlu0 %7575
        %vm7579 = vcmask 64512
        %v7580 = vsel %vm7579, %v7036, %v7098
        %v7581 = vsel %vm7579, %v7050, %v7100
        %vm7582 = vcmask 130048
        %v7583 = vsel %vm7582, %v7580, %v7132
        %v7584 = vsel %vm7582, %v7581, %v7134
        %vm7585 = vcmask 195584
        %v7586 = vsel %vm7585, %v7583, %v7166
        %v7587 = vsel %vm7585, %v7584, %v7168
        %vm7588 = vcmask 261120
        %v7589 = vsel %vm7588, %v7586, %v7200
        %v7590 = vsel %vm7588, %v7587, %v7202
        %vm7591 = vcmask 326656
        %v7592 = vsel %vm7591, %v7589, %v7234
        %v7593 = vsel %vm7591, %v7590, %v7236
        %vm7594 = vcmask 392192
        %v7595 = vsel %vm7594, %v7592, %v7268
        %v7596 = vsel %vm7594, %v7593, %v7270
        %vm7597 = vcmask 457728
        %v7598 = vsel %vm7597, %v7595, %v7302
        %v7599 = vsel %vm7597, %v7596, %v7304
        %vm7600 = vcmask 523264
        %v7601 = vsel %vm7600, %v7598, %v7336
        %v7602 = vsel %vm7600, %v7599, %v7338
        %vm7603 = vcmask 588800
        %v7604 = vsel %vm7603, %v7601, %v7370
        %v7605 = vsel %vm7603, %v7602, %v7372
        %vm7606 = vcmask 654336
        %v7607 = vsel %vm7606, %v7604, %v7404
        %v7608 = vsel %vm7606, %v7605, %v7406
        %vm7609 = vcmask 719872
        %v7610 = vsel %vm7609, %v7607, %v7438
        %v7611 = vsel %vm7609, %v7608, %v7440
        %vm7612 = vcmask 785408
        %v7613 = vsel %vm7612, %v7610, %v7472
        %v7614 = vsel %vm7612, %v7611, %v7474
        %vm7615 = vcmask 850944
        %v7616 = vsel %vm7615, %v7613, %v7506
        %v7617 = vsel %vm7615, %v7614, %v7508
        %vm7618 = vcmask 916480
        %v7619 = vsel %vm7618, %v7616, %v7540
        %v7620 = vsel %vm7618, %v7617, %v7542
        %vm7621 = vcmask 982016
        %v7622 = vsel %vm7621, %v7619, %v7574
        %v7623 = vsel %vm7621, %v7620, %v7576
        %v7640 = vrot.slane %v6555, 7
        %v7641 = vsel %vm7017, %v7640, %v6553
        %v7642 = vrot.slane %v6557, 6
        %v7643 = vsel %vm7020, %v7642, %v7641
        %v7644 = vrot.slane %v6559, 5
        %v7645 = vsel %vm7023, %v7644, %v7643
        %v7646 = vrot.slane %v6561, 4
        %v7647 = vsel %vm7026, %v7646, %v7645
        %v7648 = vrot.slane %v6563, 3
        %v7649 = vsel %vm7029, %v7648, %v7647
        %v7650 = vrot.slane %v6565, 2
        %v7651 = vsel %vm7032, %v7650, %v7649
        %v7652 = vrot.slane %v6567, 1
        %v7653 = vsel %vm7035, %v7652, %v7651
        %v7654 = vrot.slane %v6571, 7
        %v7655 = vsel %vm7017, %v7654, %v6569
        %v7656 = vrot.slane %v6573, 6
        %v7657 = vsel %vm7020, %v7656, %v7655
        %v7658 = vrot.slane %v6575, 5
        %v7659 = vsel %vm7023, %v7658, %v7657
        %v7660 = vrot.slane %v6577, 4
        %v7661 = vsel %vm7026, %v7660, %v7659
        %v7662 = vrot.slane %v6579, 3
        %v7663 = vsel %vm7029, %v7662, %v7661
        %v7664 = vrot.slane %v6581, 2
        %v7665 = vsel %vm7032, %v7664, %v7663
        %v7666 = vrot.slane %v6583, 1
        %v7667 = vsel %vm7035, %v7666, %v7665
        %v7686 = vrot.slane %v6619, 7
        %v7687 = vsel %vm7017, %v7686, %v6617
        %v7688 = vrot.slane %v6621, 6
        %v7689 = vsel %vm7020, %v7688, %v7687
        %v7690 = vrot.slane %v6623, 5
        %v7691 = vsel %vm7023, %v7690, %v7689
        %v7692 = vrot.slane %v6625, 4
        %v7693 = vsel %vm7026, %v7692, %v7691
        %v7694 = vrot.slane %v6627, 3
        %v7695 = vsel %vm7029, %v7694, %v7693
        %v7696 = vrot.slane %v6629, 2
        %v7697 = vsel %vm7032, %v7696, %v7695
        %v7698 = vrot.slane %v6631, 1
        %v7699 = vsel %vm7035, %v7698, %v7697
        %v7700 = vrot.slane %v6635, 7
        %v7701 = vsel %vm7017, %v7700, %v6633
        %v7702 = vrot.slane %v6637, 6
        %v7703 = vsel %vm7020, %v7702, %v7701
        %v7704 = vrot.slane %v6639, 5
        %v7705 = vsel %vm7023, %v7704, %v7703
        %v7706 = vrot.slane %v6641, 4
        %v7707 = vsel %vm7026, %v7706, %v7705
        %v7708 = vrot.slane %v6643, 3
        %v7709 = vsel %vm7029, %v7708, %v7707
        %v7710 = vrot.slane %v6645, 2
        %v7711 = vsel %vm7032, %v7710, %v7709
        %v7712 = vrot.slane %v6647, 1
        %v7713 = vsel %vm7035, %v7712, %v7711
        %7714 = vrot.lane.b32.xlu0 %v7699, 8
        %v7715 = vpop.permute.xlu0 %7714
        %7716 = vrot.lane.b32.xlu0 %v7713, 8
        %v7717 = vpop.permute.xlu0 %7716
        %v7720 = vrot.slane %v6553, 1
        %v7721 = vsel %vm7017, %v6555, %v7720
        %v7722 = vrot.slane %v6557, 7
        %v7723 = vsel %vm7020, %v7722, %v7721
        %v7724 = vrot.slane %v6559, 6
        %v7725 = vsel %vm7023, %v7724, %v7723
        %v7726 = vrot.slane %v6561, 5
        %v7727 = vsel %vm7026, %v7726, %v7725
        %v7728 = vrot.slane %v6563, 4
        %v7729 = vsel %vm7029, %v7728, %v7727
        %v7730 = vrot.slane %v6565, 3
        %v7731 = vsel %vm7032, %v7730, %v7729
        %v7732 = vrot.slane %v6567, 2
        %v7733 = vsel %vm7035, %v7732, %v7731
        %v7734 = vrot.slane %v6569, 1
        %v7735 = vsel %vm7017, %v6571, %v7734
        %v7736 = vrot.slane %v6573, 7
        %v7737 = vsel %vm7020, %v7736, %v7735
        %v7738 = vrot.slane %v6575, 6
        %v7739 = vsel %vm7023, %v7738, %v7737
        %v7740 = vrot.slane %v6577, 5
        %v7741 = vsel %vm7026, %v7740, %v7739
        %v7742 = vrot.slane %v6579, 4
        %v7743 = vsel %vm7029, %v7742, %v7741
        %v7744 = vrot.slane %v6581, 3
        %v7745 = vsel %vm7032, %v7744, %v7743
        %v7746 = vrot.slane %v6583, 2
        %v7747 = vsel %vm7035, %v7746, %v7745
        %7748 = vrot.lane.b32.xlu0 %v7733, 16
        %v7749 = vpop.permute.xlu0 %7748
        %7750 = vrot.lane.b32.xlu0 %v7747, 16
        %v7751 = vpop.permute.xlu0 %7750
        %v7754 = vrot.slane %v6617, 1
        %v7755 = vsel %vm7017, %v6619, %v7754
        %v7756 = vrot.slane %v6621, 7
        %v7757 = vsel %vm7020, %v7756, %v7755
        %v7758 = vrot.slane %v6623, 6
        %v7759 = vsel %vm7023, %v7758, %v7757
        %v7760 = vrot.slane %v6625, 5
        %v7761 = vsel %vm7026, %v7760, %v7759
        %v7762 = vrot.slane %v6627, 4
        %v7763 = vsel %vm7029, %v7762, %v7761
        %v7764 = vrot.slane %v6629, 3
        %v7765 = vsel %vm7032, %v7764, %v7763
        %v7766 = vrot.slane %v6631, 2
        %v7767 = vsel %vm7035, %v7766, %v7765
        %v7768 = vrot.slane %v6633, 1
        %v7769 = vsel %vm7017, %v6635, %v7768
        %v7770 = vrot.slane %v6637, 7
        %v7771 = vsel %vm7020, %v7770, %v7769
        %v7772 = vrot.slane %v6639, 6
        %v7773 = vsel %vm7023, %v7772, %v7771
        %v7774 = vrot.slane %v6641, 5
        %v7775 = vsel %vm7026, %v7774, %v7773
        %v7776 = vrot.slane %v6643, 4
        %v7777 = vsel %vm7029, %v7776, %v7775
        %v7778 = vrot.slane %v6645, 3
        %v7779 = vsel %vm7032, %v7778, %v7777
        %v7780 = vrot.slane %v6647, 2
        %v7781 = vsel %vm7035, %v7780, %v7779
        %7782 = vrot.lane.b32.xlu0 %v7767, 24
        %v7783 = vpop.permute.xlu0 %7782
        %7784 = vrot.lane.b32.xlu0 %v7781, 24
        %v7785 = vpop.permute.xlu0 %7784
        %v7788 = vrot.slane %v6553, 2
        %v7789 = vrot.slane %v6555, 1
        %v7790 = vsel %vm7017, %v7789, %v7788
        %v7791 = vsel %vm7020, %v6557, %v7790
        %v7792 = vrot.slane %v6559, 7
        %v7793 = vsel %vm7023, %v7792, %v7791
        %v7794 = vrot.slane %v6561, 6
        %v7795 = vsel %vm7026, %v7794, %v7793
        %v7796 = vrot.slane %v6563, 5
        %v7797 = vsel %vm7029, %v7796, %v7795
        %v7798 = vrot.slane %v6565, 4
        %v7799 = vsel %vm7032, %v7798, %v7797
        %v7800 = vrot.slane %v6567, 3
        %v7801 = vsel %vm7035, %v7800, %v7799
        %v7802 = vrot.slane %v6569, 2
        %v7803 = vrot.slane %v6571, 1
        %v7804 = vsel %vm7017, %v7803, %v7802
        %v7805 = vsel %vm7020, %v6573, %v7804
        %v7806 = vrot.slane %v6575, 7
        %v7807 = vsel %vm7023, %v7806, %v7805
        %v7808 = vrot.slane %v6577, 6
        %v7809 = vsel %vm7026, %v7808, %v7807
        %v7810 = vrot.slane %v6579, 5
        %v7811 = vsel %vm7029, %v7810, %v7809
        %v7812 = vrot.slane %v6581, 4
        %v7813 = vsel %vm7032, %v7812, %v7811
        %v7814 = vrot.slane %v6583, 3
        %v7815 = vsel %vm7035, %v7814, %v7813
        %7816 = vrot.lane.b32.xlu0 %v7801, 32
        %v7817 = vpop.permute.xlu0 %7816
        %7818 = vrot.lane.b32.xlu0 %v7815, 32
        %v7819 = vpop.permute.xlu0 %7818
        %v7822 = vrot.slane %v6617, 2
        %v7823 = vrot.slane %v6619, 1
        %v7824 = vsel %vm7017, %v7823, %v7822
        %v7825 = vsel %vm7020, %v6621, %v7824
        %v7826 = vrot.slane %v6623, 7
        %v7827 = vsel %vm7023, %v7826, %v7825
        %v7828 = vrot.slane %v6625, 6
        %v7829 = vsel %vm7026, %v7828, %v7827
        %v7830 = vrot.slane %v6627, 5
        %v7831 = vsel %vm7029, %v7830, %v7829
        %v7832 = vrot.slane %v6629, 4
        %v7833 = vsel %vm7032, %v7832, %v7831
        %v7834 = vrot.slane %v6631, 3
        %v7835 = vsel %vm7035, %v7834, %v7833
        %v7836 = vrot.slane %v6633, 2
        %v7837 = vrot.slane %v6635, 1
        %v7838 = vsel %vm7017, %v7837, %v7836
        %v7839 = vsel %vm7020, %v6637, %v7838
        %v7840 = vrot.slane %v6639, 7
        %v7841 = vsel %vm7023, %v7840, %v7839
        %v7842 = vrot.slane %v6641, 6
        %v7843 = vsel %vm7026, %v7842, %v7841
        %v7844 = vrot.slane %v6643, 5
        %v7845 = vsel %vm7029, %v7844, %v7843
        %v7846 = vrot.slane %v6645, 4
        %v7847 = vsel %vm7032, %v7846, %v7845
        %v7848 = vrot.slane %v6647, 3
        %v7849 = vsel %vm7035, %v7848, %v7847
        %7850 = vrot.lane.b32.xlu0 %v7835, 40
        %v7851 = vpop.permute.xlu0 %7850
        %7852 = vrot.lane.b32.xlu0 %v7849, 40
        %v7853 = vpop.permute.xlu0 %7852
        %v7856 = vrot.slane %v6553, 3
        %v7857 = vrot.slane %v6555, 2
        %v7858 = vsel %vm7017, %v7857, %v7856
        %v7859 = vrot.slane %v6557, 1
        %v7860 = vsel %vm7020, %v7859, %v7858
        %v7861 = vsel %vm7023, %v6559, %v7860
        %v7862 = vrot.slane %v6561, 7
        %v7863 = vsel %vm7026, %v7862, %v7861
        %v7864 = vrot.slane %v6563, 6
        %v7865 = vsel %vm7029, %v7864, %v7863
        %v7866 = vrot.slane %v6565, 5
        %v7867 = vsel %vm7032, %v7866, %v7865
        %v7868 = vrot.slane %v6567, 4
        %v7869 = vsel %vm7035, %v7868, %v7867
        %v7870 = vrot.slane %v6569, 3
        %v7871 = vrot.slane %v6571, 2
        %v7872 = vsel %vm7017, %v7871, %v7870
        %v7873 = vrot.slane %v6573, 1
        %v7874 = vsel %vm7020, %v7873, %v7872
        %v7875 = vsel %vm7023, %v6575, %v7874
        %v7876 = vrot.slane %v6577, 7
        %v7877 = vsel %vm7026, %v7876, %v7875
        %v7878 = vrot.slane %v6579, 6
        %v7879 = vsel %vm7029, %v7878, %v7877
        %v7880 = vrot.slane %v6581, 5
        %v7881 = vsel %vm7032, %v7880, %v7879
        %v7882 = vrot.slane %v6583, 4
        %v7883 = vsel %vm7035, %v7882, %v7881
        %7884 = vrot.lane.b32.xlu0 %v7869, 48
        %v7885 = vpop.permute.xlu0 %7884
        %7886 = vrot.lane.b32.xlu0 %v7883, 48
        %v7887 = vpop.permute.xlu0 %7886
        %v7890 = vrot.slane %v6617, 3
        %v7891 = vrot.slane %v6619, 2
        %v7892 = vsel %vm7017, %v7891, %v7890
        %v7893 = vrot.slane %v6621, 1
        %v7894 = vsel %vm7020, %v7893, %v7892
        %v7895 = vsel %vm7023, %v6623, %v7894
        %v7896 = vrot.slane %v6625, 7
        %v7897 = vsel %vm7026, %v7896, %v7895
        %v7898 = vrot.slane %v6627, 6
        %v7899 = vsel %vm7029, %v7898, %v7897
        %v7900 = vrot.slane %v6629, 5
        %v7901 = vsel %vm7032, %v7900, %v7899
        %v7902 = vrot.slane %v6631, 4
        %v7903 = vsel %vm7035, %v7902, %v7901
        %v7904 = vrot.slane %v6633, 3
        %v7905 = vrot.slane %v6635, 2
        %v7906 = vsel %vm7017, %v7905, %v7904
        %v7907 = vrot.slane %v6637, 1
        %v7908 = vsel %vm7020, %v7907, %v7906
        %v7909 = vsel %vm7023, %v6639, %v7908
        %v7910 = vrot.slane %v6641, 7
        %v7911 = vsel %vm7026, %v7910, %v7909
        %v7912 = vrot.slane %v6643, 6
        %v7913 = vsel %vm7029, %v7912, %v7911
        %v7914 = vrot.slane %v6645, 5
        %v7915 = vsel %vm7032, %v7914, %v7913
        %v7916 = vrot.slane %v6647, 4
        %v7917 = vsel %vm7035, %v7916, %v7915
        %7918 = vrot.lane.b32.xlu0 %v7903, 56
        %v7919 = vpop.permute.xlu0 %7918
        %7920 = vrot.lane.b32.xlu0 %v7917, 56
        %v7921 = vpop.permute.xlu0 %7920
        %v7924 = vrot.slane %v6553, 4
        %v7925 = vrot.slane %v6555, 3
        %v7926 = vsel %vm7017, %v7925, %v7924
        %v7927 = vrot.slane %v6557, 2
        %v7928 = vsel %vm7020, %v7927, %v7926
        %v7929 = vrot.slane %v6559, 1
        %v7930 = vsel %vm7023, %v7929, %v7928
        %v7931 = vsel %vm7026, %v6561, %v7930
        %v7932 = vrot.slane %v6563, 7
        %v7933 = vsel %vm7029, %v7932, %v7931
        %v7934 = vrot.slane %v6565, 6
        %v7935 = vsel %vm7032, %v7934, %v7933
        %v7936 = vrot.slane %v6567, 5
        %v7937 = vsel %vm7035, %v7936, %v7935
        %v7938 = vrot.slane %v6569, 4
        %v7939 = vrot.slane %v6571, 3
        %v7940 = vsel %vm7017, %v7939, %v7938
        %v7941 = vrot.slane %v6573, 2
        %v7942 = vsel %vm7020, %v7941, %v7940
        %v7943 = vrot.slane %v6575, 1
        %v7944 = vsel %vm7023, %v7943, %v7942
        %v7945 = vsel %vm7026, %v6577, %v7944
        %v7946 = vrot.slane %v6579, 7
        %v7947 = vsel %vm7029, %v7946, %v7945
        %v7948 = vrot.slane %v6581, 6
        %v7949 = vsel %vm7032, %v7948, %v7947
        %v7950 = vrot.slane %v6583, 5
        %v7951 = vsel %vm7035, %v7950, %v7949
        %7952 = vrot.lane.b32.xlu0 %v7937, 64
        %v7953 = vpop.permute.xlu0 %7952
        %7954 = vrot.lane.b32.xlu0 %v7951, 64
        %v7955 = vpop.permute.xlu0 %7954
        %v7958 = vrot.slane %v6617, 4
        %v7959 = vrot.slane %v6619, 3
        %v7960 = vsel %vm7017, %v7959, %v7958
        %v7961 = vrot.slane %v6621, 2
        %v7962 = vsel %vm7020, %v7961, %v7960
        %v7963 = vrot.slane %v6623, 1
        %v7964 = vsel %vm7023, %v7963, %v7962
        %v7965 = vsel %vm7026, %v6625, %v7964
        %v7966 = vrot.slane %v6627, 7
        %v7967 = vsel %vm7029, %v7966, %v7965
        %v7968 = vrot.slane %v6629, 6
        %v7969 = vsel %vm7032, %v7968, %v7967
        %v7970 = vrot.slane %v6631, 5
        %v7971 = vsel %vm7035, %v7970, %v7969
        %v7972 = vrot.slane %v6633, 4
        %v7973 = vrot.slane %v6635, 3
        %v7974 = vsel %vm7017, %v7973, %v7972
        %v7975 = vrot.slane %v6637, 2
        %v7976 = vsel %vm7020, %v7975, %v7974
        %v7977 = vrot.slane %v6639, 1
        %v7978 = vsel %vm7023, %v7977, %v7976
        %v7979 = vsel %vm7026, %v6641, %v7978
        %v7980 = vrot.slane %v6643, 7
        %v7981 = vsel %vm7029, %v7980, %v7979
        %v7982 = vrot.slane %v6645, 6
        %v7983 = vsel %vm7032, %v7982, %v7981
        %v7984 = vrot.slane %v6647, 5
        %v7985 = vsel %vm7035, %v7984, %v7983
        %7986 = vrot.lane.b32.xlu0 %v7971, 72
        %v7987 = vpop.permute.xlu0 %7986
        %7988 = vrot.lane.b32.xlu0 %v7985, 72
        %v7989 = vpop.permute.xlu0 %7988
        %v7992 = vrot.slane %v6553, 5
        %v7993 = vrot.slane %v6555, 4
        %v7994 = vsel %vm7017, %v7993, %v7992
        %v7995 = vrot.slane %v6557, 3
        %v7996 = vsel %vm7020, %v7995, %v7994
        %v7997 = vrot.slane %v6559, 2
        %v7998 = vsel %vm7023, %v7997, %v7996
        %v7999 = vrot.slane %v6561, 1
        %v8000 = vsel %vm7026, %v7999, %v7998
        %v8001 = vsel %vm7029, %v6563, %v8000
        %v8002 = vrot.slane %v6565, 7
        %v8003 = vsel %vm7032, %v8002, %v8001
        %v8004 = vrot.slane %v6567, 6
        %v8005 = vsel %vm7035, %v8004, %v8003
        %v8006 = vrot.slane %v6569, 5
        %v8007 = vrot.slane %v6571, 4
        %v8008 = vsel %vm7017, %v8007, %v8006
        %v8009 = vrot.slane %v6573, 3
        %v8010 = vsel %vm7020, %v8009, %v8008
        %v8011 = vrot.slane %v6575, 2
        %v8012 = vsel %vm7023, %v8011, %v8010
        %v8013 = vrot.slane %v6577, 1
        %v8014 = vsel %vm7026, %v8013, %v8012
        %v8015 = vsel %vm7029, %v6579, %v8014
        %v8016 = vrot.slane %v6581, 7
        %v8017 = vsel %vm7032, %v8016, %v8015
        %v8018 = vrot.slane %v6583, 6
        %v8019 = vsel %vm7035, %v8018, %v8017
        %8020 = vrot.lane.b32.xlu0 %v8005, 80
        %v8021 = vpop.permute.xlu0 %8020
        %8022 = vrot.lane.b32.xlu0 %v8019, 80
        %v8023 = vpop.permute.xlu0 %8022
        %v8026 = vrot.slane %v6617, 5
        %v8027 = vrot.slane %v6619, 4
        %v8028 = vsel %vm7017, %v8027, %v8026
        %v8029 = vrot.slane %v6621, 3
        %v8030 = vsel %vm7020, %v8029, %v8028
        %v8031 = vrot.slane %v6623, 2
        %v8032 = vsel %vm7023, %v8031, %v8030
        %v8033 = vrot.slane %v6625, 1
        %v8034 = vsel %vm7026, %v8033, %v8032
        %v8035 = vsel %vm7029, %v6627, %v8034
        %v8036 = vrot.slane %v6629, 7
        %v8037 = vsel %vm7032, %v8036, %v8035
        %v8038 = vrot.slane %v6631, 6
        %v8039 = vsel %vm7035, %v8038, %v8037
        %v8040 = vrot.slane %v6633, 5
        %v8041 = vrot.slane %v6635, 4
        %v8042 = vsel %vm7017, %v8041, %v8040
        %v8043 = vrot.slane %v6637, 3
        %v8044 = vsel %vm7020, %v8043, %v8042
        %v8045 = vrot.slane %v6639, 2
        %v8046 = vsel %vm7023, %v8045, %v8044
        %v8047 = vrot.slane %v6641, 1
        %v8048 = vsel %vm7026, %v8047, %v8046
        %v8049 = vsel %vm7029, %v6643, %v8048
        %v8050 = vrot.slane %v6645, 7
        %v8051 = vsel %vm7032, %v8050, %v8049
        %v8052 = vrot.slane %v6647, 6
        %v8053 = vsel %vm7035, %v8052, %v8051
        %8054 = vrot.lane.b32.xlu0 %v8039, 88
        %v8055 = vpop.permute.xlu0 %8054
        %8056 = vrot.lane.b32.xlu0 %v8053, 88
        %v8057 = vpop.permute.xlu0 %8056
        %v8060 = vrot.slane %v6553, 6
        %v8061 = vrot.slane %v6555, 5
        %v8062 = vsel %vm7017, %v8061, %v8060
        %v8063 = vrot.slane %v6557, 4
        %v8064 = vsel %vm7020, %v8063, %v8062
        %v8065 = vrot.slane %v6559, 3
        %v8066 = vsel %vm7023, %v8065, %v8064
        %v8067 = vrot.slane %v6561, 2
        %v8068 = vsel %vm7026, %v8067, %v8066
        %v8069 = vrot.slane %v6563, 1
        %v8070 = vsel %vm7029, %v8069, %v8068
        %v8071 = vsel %vm7032, %v6565, %v8070
        %v8072 = vrot.slane %v6567, 7
        %v8073 = vsel %vm7035, %v8072, %v8071
        %v8074 = vrot.slane %v6569, 6
        %v8075 = vrot.slane %v6571, 5
        %v8076 = vsel %vm7017, %v8075, %v8074
        %v8077 = vrot.slane %v6573, 4
        %v8078 = vsel %vm7020, %v8077, %v8076
        %v8079 = vrot.slane %v6575, 3
        %v8080 = vsel %vm7023, %v8079, %v8078
        %v8081 = vrot.slane %v6577, 2
        %v8082 = vsel %vm7026, %v8081, %v8080
        %v8083 = vrot.slane %v6579, 1
        %v8084 = vsel %vm7029, %v8083, %v8082
        %v8085 = vsel %vm7032, %v6581, %v8084
        %v8086 = vrot.slane %v6583, 7
        %v8087 = vsel %vm7035, %v8086, %v8085
        %8088 = vrot.lane.b32.xlu0 %v8073, 96
        %v8089 = vpop.permute.xlu0 %8088
        %8090 = vrot.lane.b32.xlu0 %v8087, 96
        %v8091 = vpop.permute.xlu0 %8090
        %v8094 = vrot.slane %v6617, 6
        %v8095 = vrot.slane %v6619, 5
        %v8096 = vsel %vm7017, %v8095, %v8094
        %v8097 = vrot.slane %v6621, 4
        %v8098 = vsel %vm7020, %v8097, %v8096
        %v8099 = vrot.slane %v6623, 3
        %v8100 = vsel %vm7023, %v8099, %v8098
        %v8101 = vrot.slane %v6625, 2
        %v8102 = vsel %vm7026, %v8101, %v8100
        %v8103 = vrot.slane %v6627, 1
        %v8104 = vsel %vm7029, %v8103, %v8102
        %v8105 = vsel %vm7032, %v6629, %v8104
        %v8106 = vrot.slane %v6631, 7
        %v8107 = vsel %vm7035, %v8106, %v8105
        %v8108 = vrot.slane %v6633, 6
        %v8109 = vrot.slane %v6635, 5
        %v8110 = vsel %vm7017, %v8109, %v8108
        %v8111 = vrot.slane %v6637, 4
        %v8112 = vsel %vm7020, %v8111, %v8110
        %v8113 = vrot.slane %v6639, 3
        %v8114 = vsel %vm7023, %v8113, %v8112
        %v8115 = vrot.slane %v6641, 2
        %v8116 = vsel %vm7026, %v8115, %v8114
        %v8117 = vrot.slane %v6643, 1
        %v8118 = vsel %vm7029, %v8117, %v8116
        %v8119 = vsel %vm7032, %v6645, %v8118
        %v8120 = vrot.slane %v6647, 7
        %v8121 = vsel %vm7035, %v8120, %v8119
        %8122 = vrot.lane.b32.xlu0 %v8107, 104
        %v8123 = vpop.permute.xlu0 %8122
        %8124 = vrot.lane.b32.xlu0 %v8121, 104
        %v8125 = vpop.permute.xlu0 %8124
        %v8128 = vrot.slane %v6553, 7
        %v8129 = vrot.slane %v6555, 6
        %v8130 = vsel %vm7017, %v8129, %v8128
        %v8131 = vrot.slane %v6557, 5
        %v8132 = vsel %vm7020, %v8131, %v8130
        %v8133 = vrot.slane %v6559, 4
        %v8134 = vsel %vm7023, %v8133, %v8132
        %v8135 = vrot.slane %v6561, 3
        %v8136 = vsel %vm7026, %v8135, %v8134
        %v8137 = vrot.slane %v6563, 2
        %v8138 = vsel %vm7029, %v8137, %v8136
        %v8139 = vrot.slane %v6565, 1
        %v8140 = vsel %vm7032, %v8139, %v8138
        %v8141 = vsel %vm7035, %v6567, %v8140
        %v8142 = vrot.slane %v6569, 7
        %v8143 = vrot.slane %v6571, 6
        %v8144 = vsel %vm7017, %v8143, %v8142
        %v8145 = vrot.slane %v6573, 5
        %v8146 = vsel %vm7020, %v8145, %v8144
        %v8147 = vrot.slane %v6575, 4
        %v8148 = vsel %vm7023, %v8147, %v8146
        %v8149 = vrot.slane %v6577, 3
        %v8150 = vsel %vm7026, %v8149, %v8148
        %v8151 = vrot.slane %v6579, 2
        %v8152 = vsel %vm7029, %v8151, %v8150
        %v8153 = vrot.slane %v6581, 1
        %v8154 = vsel %vm7032, %v8153, %v8152
        %v8155 = vsel %vm7035, %v6583, %v8154
        %8156 = vrot.lane.b32.xlu0 %v8141, 112
        %v8157 = vpop.permute.xlu0 %8156
        %8158 = vrot.lane.b32.xlu0 %v8155, 112
        %v8159 = vpop.permute.xlu0 %8158
        %v8162 = vrot.slane %v6617, 7
        %v8163 = vrot.slane %v6619, 6
        %v8164 = vsel %vm7017, %v8163, %v8162
        %v8165 = vrot.slane %v6621, 5
        %v8166 = vsel %vm7020, %v8165, %v8164
        %v8167 = vrot.slane %v6623, 4
        %v8168 = vsel %vm7023, %v8167, %v8166
        %v8169 = vrot.slane %v6625, 3
        %v8170 = vsel %vm7026, %v8169, %v8168
        %v8171 = vrot.slane %v6627, 2
        %v8172 = vsel %vm7029, %v8171, %v8170
        %v8173 = vrot.slane %v6629, 1
        %v8174 = vsel %vm7032, %v8173, %v8172
        %v8175 = vsel %vm7035, %v6631, %v8174
        %v8176 = vrot.slane %v6633, 7
        %v8177 = vrot.slane %v6635, 6
        %v8178 = vsel %vm7017, %v8177, %v8176
        %v8179 = vrot.slane %v6637, 5
        %v8180 = vsel %vm7020, %v8179, %v8178
        %v8181 = vrot.slane %v6639, 4
        %v8182 = vsel %vm7023, %v8181, %v8180
        %v8183 = vrot.slane %v6641, 3
        %v8184 = vsel %vm7026, %v8183, %v8182
        %v8185 = vrot.slane %v6643, 2
        %v8186 = vsel %vm7029, %v8185, %v8184
        %v8187 = vrot.slane %v6645, 1
        %v8188 = vsel %vm7032, %v8187, %v8186
        %v8189 = vsel %vm7035, %v6647, %v8188
        %8190 = vrot.lane.b32.xlu0 %v8175, 120
        %v8191 = vpop.permute.xlu0 %8190
        %8192 = vrot.lane.b32.xlu0 %v8189, 120
        %v8193 = vpop.permute.xlu0 %8192
        %v8196 = vsel %vm7579, %v7653, %v7715
        %v8197 = vsel %vm7579, %v7667, %v7717
        %v8198 = vsel %vm7582, %v8196, %v7749
        %v8199 = vsel %vm7582, %v8197, %v7751
        %v8200 = vsel %vm7585, %v8198, %v7783
        %v8201 = vsel %vm7585, %v8199, %v7785
        %v8202 = vsel %vm7588, %v8200, %v7817
        %v8203 = vsel %vm7588, %v8201, %v7819
        %v8204 = vsel %vm7591, %v8202, %v7851
        %v8205 = vsel %vm7591, %v8203, %v7853
        %v8206 = vsel %vm7594, %v8204, %v7885
        %v8207 = vsel %vm7594, %v8205, %v7887
        %v8208 = vsel %vm7597, %v8206, %v7919
        %v8209 = vsel %vm7597, %v8207, %v7921
        %v8210 = vsel %vm7600, %v8208, %v7953
        %v8211 = vsel %vm7600, %v8209, %v7955
        %v8212 = vsel %vm7603, %v8210, %v7987
        %v8213 = vsel %vm7603, %v8211, %v7989
        %v8214 = vsel %vm7606, %v8212, %v8021
        %v8215 = vsel %vm7606, %v8213, %v8023
        %v8216 = vsel %vm7609, %v8214, %v8055
        %v8217 = vsel %vm7609, %v8215, %v8057
        %v8218 = vsel %vm7612, %v8216, %v8089
        %v8219 = vsel %vm7612, %v8217, %v8091
        %v8220 = vsel %vm7615, %v8218, %v8123
        %v8221 = vsel %vm7615, %v8219, %v8125
        %v8222 = vsel %vm7618, %v8220, %v8157
        %v8223 = vsel %vm7618, %v8221, %v8159
        %v8224 = vsel %vm7621, %v8222, %v8191
        %v8225 = vsel %vm7621, %v8223, %v8193
        %v8242 = vrot.slane %v6906, 7
        %v8243 = vsel %vm7017, %v8242, %v6904
        %v8244 = vrot.slane %v6908, 6
        %v8245 = vsel %vm7020, %v8244, %v8243
        %v8246 = vrot.slane %v6910, 5
        %v8247 = vsel %vm7023, %v8246, %v8245
        %v8248 = vrot.slane %v6912, 4
        %v8249 = vsel %vm7026, %v8248, %v8247
        %v8250 = vrot.slane %v6914, 3
        %v8251 = vsel %vm7029, %v8250, %v8249
        %v8252 = vrot.slane %v6916, 2
        %v8253 = vsel %vm7032, %v8252, %v8251
        %v8254 = vrot.slane %v6918, 1
        %v8255 = vsel %vm7035, %v8254, %v8253
        %v8256 = vrot.slane %v6922, 7
        %v8257 = vsel %vm7017, %v8256, %v6920
        %v8258 = vrot.slane %v6924, 6
        %v8259 = vsel %vm7020, %v8258, %v8257
        %v8260 = vrot.slane %v6926, 5
        %v8261 = vsel %vm7023, %v8260, %v8259
        %v8262 = vrot.slane %v6928, 4
        %v8263 = vsel %vm7026, %v8262, %v8261
        %v8264 = vrot.slane %v6930, 3
        %v8265 = vsel %vm7029, %v8264, %v8263
        %v8266 = vrot.slane %v6932, 2
        %v8267 = vsel %vm7032, %v8266, %v8265
        %v8268 = vrot.slane %v6934, 1
        %v8269 = vsel %vm7035, %v8268, %v8267
        %v8288 = vrot.slane %v6970, 7
        %v8289 = vsel %vm7017, %v8288, %v6968
        %v8290 = vrot.slane %v6972, 6
        %v8291 = vsel %vm7020, %v8290, %v8289
        %v8292 = vrot.slane %v6974, 5
        %v8293 = vsel %vm7023, %v8292, %v8291
        %v8294 = vrot.slane %v6976, 4
        %v8295 = vsel %vm7026, %v8294, %v8293
        %v8296 = vrot.slane %v6978, 3
        %v8297 = vsel %vm7029, %v8296, %v8295
        %v8298 = vrot.slane %v6980, 2
        %v8299 = vsel %vm7032, %v8298, %v8297
        %v8300 = vrot.slane %v6982, 1
        %v8301 = vsel %vm7035, %v8300, %v8299
        %v8302 = vrot.slane %v6986, 7
        %v8303 = vsel %vm7017, %v8302, %v6984
        %v8304 = vrot.slane %v6988, 6
        %v8305 = vsel %vm7020, %v8304, %v8303
        %v8306 = vrot.slane %v6990, 5
        %v8307 = vsel %vm7023, %v8306, %v8305
        %v8308 = vrot.slane %v6992, 4
        %v8309 = vsel %vm7026, %v8308, %v8307
        %v8310 = vrot.slane %v6994, 3
        %v8311 = vsel %vm7029, %v8310, %v8309
        %v8312 = vrot.slane %v6996, 2
        %v8313 = vsel %vm7032, %v8312, %v8311
        %v8314 = vrot.slane %v6998, 1
        %v8315 = vsel %vm7035, %v8314, %v8313
        %8316 = vrot.lane.b32.xlu0 %v8301, 8
        %v8317 = vpop.permute.xlu0 %8316
        %8318 = vrot.lane.b32.xlu0 %v8315, 8
        %v8319 = vpop.permute.xlu0 %8318
        %v8322 = vrot.slane %v6904, 1
        %v8323 = vsel %vm7017, %v6906, %v8322
        %v8324 = vrot.slane %v6908, 7
        %v8325 = vsel %vm7020, %v8324, %v8323
        %v8326 = vrot.slane %v6910, 6
        %v8327 = vsel %vm7023, %v8326, %v8325
        %v8328 = vrot.slane %v6912, 5
        %v8329 = vsel %vm7026, %v8328, %v8327
        %v8330 = vrot.slane %v6914, 4
        %v8331 = vsel %vm7029, %v8330, %v8329
        %v8332 = vrot.slane %v6916, 3
        %v8333 = vsel %vm7032, %v8332, %v8331
        %v8334 = vrot.slane %v6918, 2
        %v8335 = vsel %vm7035, %v8334, %v8333
        %v8336 = vrot.slane %v6920, 1
        %v8337 = vsel %vm7017, %v6922, %v8336
        %v8338 = vrot.slane %v6924, 7
        %v8339 = vsel %vm7020, %v8338, %v8337
        %v8340 = vrot.slane %v6926, 6
        %v8341 = vsel %vm7023, %v8340, %v8339
        %v8342 = vrot.slane %v6928, 5
        %v8343 = vsel %vm7026, %v8342, %v8341
        %v8344 = vrot.slane %v6930, 4
        %v8345 = vsel %vm7029, %v8344, %v8343
        %v8346 = vrot.slane %v6932, 3
        %v8347 = vsel %vm7032, %v8346, %v8345
        %v8348 = vrot.slane %v6934, 2
        %v8349 = vsel %vm7035, %v8348, %v8347
        %8350 = vrot.lane.b32.xlu0 %v8335, 16
        %v8351 = vpop.permute.xlu0 %8350
        %8352 = vrot.lane.b32.xlu0 %v8349, 16
        %v8353 = vpop.permute.xlu0 %8352
        %v8356 = vrot.slane %v6968, 1
        %v8357 = vsel %vm7017, %v6970, %v8356
        %v8358 = vrot.slane %v6972, 7
        %v8359 = vsel %vm7020, %v8358, %v8357
        %v8360 = vrot.slane %v6974, 6
        %v8361 = vsel %vm7023, %v8360, %v8359
        %v8362 = vrot.slane %v6976, 5
        %v8363 = vsel %vm7026, %v8362, %v8361
        %v8364 = vrot.slane %v6978, 4
        %v8365 = vsel %vm7029, %v8364, %v8363
        %v8366 = vrot.slane %v6980, 3
        %v8367 = vsel %vm7032, %v8366, %v8365
        %v8368 = vrot.slane %v6982, 2
        %v8369 = vsel %vm7035, %v8368, %v8367
        %v8370 = vrot.slane %v6984, 1
        %v8371 = vsel %vm7017, %v6986, %v8370
        %v8372 = vrot.slane %v6988, 7
        %v8373 = vsel %vm7020, %v8372, %v8371
        %v8374 = vrot.slane %v6990, 6
        %v8375 = vsel %vm7023, %v8374, %v8373
        %v8376 = vrot.slane %v6992, 5
        %v8377 = vsel %vm7026, %v8376, %v8375
        %v8378 = vrot.slane %v6994, 4
        %v8379 = vsel %vm7029, %v8378, %v8377
        %v8380 = vrot.slane %v6996, 3
        %v8381 = vsel %vm7032, %v8380, %v8379
        %v8382 = vrot.slane %v6998, 2
        %v8383 = vsel %vm7035, %v8382, %v8381
        %8384 = vrot.lane.b32.xlu0 %v8369, 24
        %v8385 = vpop.permute.xlu0 %8384
        %8386 = vrot.lane.b32.xlu0 %v8383, 24
        %v8387 = vpop.permute.xlu0 %8386
        %v8390 = vrot.slane %v6904, 2
        %v8391 = vrot.slane %v6906, 1
        %v8392 = vsel %vm7017, %v8391, %v8390
        %v8393 = vsel %vm7020, %v6908, %v8392
        %v8394 = vrot.slane %v6910, 7
        %v8395 = vsel %vm7023, %v8394, %v8393
        %v8396 = vrot.slane %v6912, 6
        %v8397 = vsel %vm7026, %v8396, %v8395
        %v8398 = vrot.slane %v6914, 5
        %v8399 = vsel %vm7029, %v8398, %v8397
        %v8400 = vrot.slane %v6916, 4
        %v8401 = vsel %vm7032, %v8400, %v8399
        %v8402 = vrot.slane %v6918, 3
        %v8403 = vsel %vm7035, %v8402, %v8401
        %v8404 = vrot.slane %v6920, 2
        %v8405 = vrot.slane %v6922, 1
        %v8406 = vsel %vm7017, %v8405, %v8404
        %v8407 = vsel %vm7020, %v6924, %v8406
        %v8408 = vrot.slane %v6926, 7
        %v8409 = vsel %vm7023, %v8408, %v8407
        %v8410 = vrot.slane %v6928, 6
        %v8411 = vsel %vm7026, %v8410, %v8409
        %v8412 = vrot.slane %v6930, 5
        %v8413 = vsel %vm7029, %v8412, %v8411
        %v8414 = vrot.slane %v6932, 4
        %v8415 = vsel %vm7032, %v8414, %v8413
        %v8416 = vrot.slane %v6934, 3
        %v8417 = vsel %vm7035, %v8416, %v8415
        %8418 = vrot.lane.b32.xlu0 %v8403, 32
        %v8419 = vpop.permute.xlu0 %8418
        %8420 = vrot.lane.b32.xlu0 %v8417, 32
        %v8421 = vpop.permute.xlu0 %8420
        %v8424 = vrot.slane %v6968, 2
        %v8425 = vrot.slane %v6970, 1
        %v8426 = vsel %vm7017, %v8425, %v8424
        %v8427 = vsel %vm7020, %v6972, %v8426
        %v8428 = vrot.slane %v6974, 7
        %v8429 = vsel %vm7023, %v8428, %v8427
        %v8430 = vrot.slane %v6976, 6
        %v8431 = vsel %vm7026, %v8430, %v8429
        %v8432 = vrot.slane %v6978, 5
        %v8433 = vsel %vm7029, %v8432, %v8431
        %v8434 = vrot.slane %v6980, 4
        %v8435 = vsel %vm7032, %v8434, %v8433
        %v8436 = vrot.slane %v6982, 3
        %v8437 = vsel %vm7035, %v8436, %v8435
        %v8438 = vrot.slane %v6984, 2
        %v8439 = vrot.slane %v6986, 1
        %v8440 = vsel %vm7017, %v8439, %v8438
        %v8441 = vsel %vm7020, %v6988, %v8440
        %v8442 = vrot.slane %v6990, 7
        %v8443 = vsel %vm7023, %v8442, %v8441
        %v8444 = vrot.slane %v6992, 6
        %v8445 = vsel %vm7026, %v8444, %v8443
        %v8446 = vrot.slane %v6994, 5
        %v8447 = vsel %vm7029, %v8446, %v8445
        %v8448 = vrot.slane %v6996, 4
        %v8449 = vsel %vm7032, %v8448, %v8447
        %v8450 = vrot.slane %v6998, 3
        %v8451 = vsel %vm7035, %v8450, %v8449
        %8452 = vrot.lane.b32.xlu0 %v8437, 40
        %v8453 = vpop.permute.xlu0 %8452
        %8454 = vrot.lane.b32.xlu0 %v8451, 40
        %v8455 = vpop.permute.xlu0 %8454
        %v8458 = vrot.slane %v6904, 3
        %v8459 = vrot.slane %v6906, 2
        %v8460 = vsel %vm7017, %v8459, %v8458
        %v8461 = vrot.slane %v6908, 1
        %v8462 = vsel %vm7020, %v8461, %v8460
        %v8463 = vsel %vm7023, %v6910, %v8462
        %v8464 = vrot.slane %v6912, 7
        %v8465 = vsel %vm7026, %v8464, %v8463
        %v8466 = vrot.slane %v6914, 6
        %v8467 = vsel %vm7029, %v8466, %v8465
        %v8468 = vrot.slane %v6916, 5
        %v8469 = vsel %vm7032, %v8468, %v8467
        %v8470 = vrot.slane %v6918, 4
        %v8471 = vsel %vm7035, %v8470, %v8469
        %v8472 = vrot.slane %v6920, 3
        %v8473 = vrot.slane %v6922, 2
        %v8474 = vsel %vm7017, %v8473, %v8472
        %v8475 = vrot.slane %v6924, 1
        %v8476 = vsel %vm7020, %v8475, %v8474
        %v8477 = vsel %vm7023, %v6926, %v8476
        %v8478 = vrot.slane %v6928, 7
        %v8479 = vsel %vm7026, %v8478, %v8477
        %v8480 = vrot.slane %v6930, 6
        %v8481 = vsel %vm7029, %v8480, %v8479
        %v8482 = vrot.slane %v6932, 5
        %v8483 = vsel %vm7032, %v8482, %v8481
        %v8484 = vrot.slane %v6934, 4
        %v8485 = vsel %vm7035, %v8484, %v8483
        %8486 = vrot.lane.b32.xlu0 %v8471, 48
        %v8487 = vpop.permute.xlu0 %8486
        %8488 = vrot.lane.b32.xlu0 %v8485, 48
        %v8489 = vpop.permute.xlu0 %8488
        %v8492 = vrot.slane %v6968, 3
        %v8493 = vrot.slane %v6970, 2
        %v8494 = vsel %vm7017, %v8493, %v8492
        %v8495 = vrot.slane %v6972, 1
        %v8496 = vsel %vm7020, %v8495, %v8494
        %v8497 = vsel %vm7023, %v6974, %v8496
        %v8498 = vrot.slane %v6976, 7
        %v8499 = vsel %vm7026, %v8498, %v8497
        %v8500 = vrot.slane %v6978, 6
        %v8501 = vsel %vm7029, %v8500, %v8499
        %v8502 = vrot.slane %v6980, 5
        %v8503 = vsel %vm7032, %v8502, %v8501
        %v8504 = vrot.slane %v6982, 4
        %v8505 = vsel %vm7035, %v8504, %v8503
        %v8506 = vrot.slane %v6984, 3
        %v8507 = vrot.slane %v6986, 2
        %v8508 = vsel %vm7017, %v8507, %v8506
        %v8509 = vrot.slane %v6988, 1
        %v8510 = vsel %vm7020, %v8509, %v8508
        %v8511 = vsel %vm7023, %v6990, %v8510
        %v8512 = vrot.slane %v6992, 7
        %v8513 = vsel %vm7026, %v8512, %v8511
        %v8514 = vrot.slane %v6994, 6
        %v8515 = vsel %vm7029, %v8514, %v8513
        %v8516 = vrot.slane %v6996, 5
        %v8517 = vsel %vm7032, %v8516, %v8515
        %v8518 = vrot.slane %v6998, 4
        %v8519 = vsel %vm7035, %v8518, %v8517
        %8520 = vrot.lane.b32.xlu0 %v8505, 56
        %v8521 = vpop.permute.xlu0 %8520
        %8522 = vrot.lane.b32.xlu0 %v8519, 56
        %v8523 = vpop.permute.xlu0 %8522
        %v8526 = vrot.slane %v6904, 4
        %v8527 = vrot.slane %v6906, 3
        %v8528 = vsel %vm7017, %v8527, %v8526
        %v8529 = vrot.slane %v6908, 2
        %v8530 = vsel %vm7020, %v8529, %v8528
        %v8531 = vrot.slane %v6910, 1
        %v8532 = vsel %vm7023, %v8531, %v8530
        %v8533 = vsel %vm7026, %v6912, %v8532
        %v8534 = vrot.slane %v6914, 7
        %v8535 = vsel %vm7029, %v8534, %v8533
        %v8536 = vrot.slane %v6916, 6
        %v8537 = vsel %vm7032, %v8536, %v8535
        %v8538 = vrot.slane %v6918, 5
        %v8539 = vsel %vm7035, %v8538, %v8537
        %v8540 = vrot.slane %v6920, 4
        %v8541 = vrot.slane %v6922, 3
        %v8542 = vsel %vm7017, %v8541, %v8540
        %v8543 = vrot.slane %v6924, 2
        %v8544 = vsel %vm7020, %v8543, %v8542
        %v8545 = vrot.slane %v6926, 1
        %v8546 = vsel %vm7023, %v8545, %v8544
        %v8547 = vsel %vm7026, %v6928, %v8546
        %v8548 = vrot.slane %v6930, 7
        %v8549 = vsel %vm7029, %v8548, %v8547
        %v8550 = vrot.slane %v6932, 6
        %v8551 = vsel %vm7032, %v8550, %v8549
        %v8552 = vrot.slane %v6934, 5
        %v8553 = vsel %vm7035, %v8552, %v8551
        %8554 = vrot.lane.b32.xlu0 %v8539, 64
        %v8555 = vpop.permute.xlu0 %8554
        %8556 = vrot.lane.b32.xlu0 %v8553, 64
        %v8557 = vpop.permute.xlu0 %8556
        %v8560 = vrot.slane %v6968, 4
        %v8561 = vrot.slane %v6970, 3
        %v8562 = vsel %vm7017, %v8561, %v8560
        %v8563 = vrot.slane %v6972, 2
        %v8564 = vsel %vm7020, %v8563, %v8562
        %v8565 = vrot.slane %v6974, 1
        %v8566 = vsel %vm7023, %v8565, %v8564
        %v8567 = vsel %vm7026, %v6976, %v8566
        %v8568 = vrot.slane %v6978, 7
        %v8569 = vsel %vm7029, %v8568, %v8567
        %v8570 = vrot.slane %v6980, 6
        %v8571 = vsel %vm7032, %v8570, %v8569
        %v8572 = vrot.slane %v6982, 5
        %v8573 = vsel %vm7035, %v8572, %v8571
        %v8574 = vrot.slane %v6984, 4
        %v8575 = vrot.slane %v6986, 3
        %v8576 = vsel %vm7017, %v8575, %v8574
        %v8577 = vrot.slane %v6988, 2
        %v8578 = vsel %vm7020, %v8577, %v8576
        %v8579 = vrot.slane %v6990, 1
        %v8580 = vsel %vm7023, %v8579, %v8578
        %v8581 = vsel %vm7026, %v6992, %v8580
        %v8582 = vrot.slane %v6994, 7
        %v8583 = vsel %vm7029, %v8582, %v8581
        %v8584 = vrot.slane %v6996, 6
        %v8585 = vsel %vm7032, %v8584, %v8583
        %v8586 = vrot.slane %v6998, 5
        %v8587 = vsel %vm7035, %v8586, %v8585
        %8588 = vrot.lane.b32.xlu0 %v8573, 72
        %v8589 = vpop.permute.xlu0 %8588
        %8590 = vrot.lane.b32.xlu0 %v8587, 72
        %v8591 = vpop.permute.xlu0 %8590
        %v8594 = vrot.slane %v6904, 5
        %v8595 = vrot.slane %v6906, 4
        %v8596 = vsel %vm7017, %v8595, %v8594
        %v8597 = vrot.slane %v6908, 3
        %v8598 = vsel %vm7020, %v8597, %v8596
        %v8599 = vrot.slane %v6910, 2
        %v8600 = vsel %vm7023, %v8599, %v8598
        %v8601 = vrot.slane %v6912, 1
        %v8602 = vsel %vm7026, %v8601, %v8600
        %v8603 = vsel %vm7029, %v6914, %v8602
        %v8604 = vrot.slane %v6916, 7
        %v8605 = vsel %vm7032, %v8604, %v8603
        %v8606 = vrot.slane %v6918, 6
        %v8607 = vsel %vm7035, %v8606, %v8605
        %v8608 = vrot.slane %v6920, 5
        %v8609 = vrot.slane %v6922, 4
        %v8610 = vsel %vm7017, %v8609, %v8608
        %v8611 = vrot.slane %v6924, 3
        %v8612 = vsel %vm7020, %v8611, %v8610
        %v8613 = vrot.slane %v6926, 2
        %v8614 = vsel %vm7023, %v8613, %v8612
        %v8615 = vrot.slane %v6928, 1
        %v8616 = vsel %vm7026, %v8615, %v8614
        %v8617 = vsel %vm7029, %v6930, %v8616
        %v8618 = vrot.slane %v6932, 7
        %v8619 = vsel %vm7032, %v8618, %v8617
        %v8620 = vrot.slane %v6934, 6
        %v8621 = vsel %vm7035, %v8620, %v8619
        %8622 = vrot.lane.b32.xlu0 %v8607, 80
        %v8623 = vpop.permute.xlu0 %8622
        %8624 = vrot.lane.b32.xlu0 %v8621, 80
        %v8625 = vpop.permute.xlu0 %8624
        %v8628 = vrot.slane %v6968, 5
        %v8629 = vrot.slane %v6970, 4
        %v8630 = vsel %vm7017, %v8629, %v8628
        %v8631 = vrot.slane %v6972, 3
        %v8632 = vsel %vm7020, %v8631, %v8630
        %v8633 = vrot.slane %v6974, 2
        %v8634 = vsel %vm7023, %v8633, %v8632
        %v8635 = vrot.slane %v6976, 1
        %v8636 = vsel %vm7026, %v8635, %v8634
        %v8637 = vsel %vm7029, %v6978, %v8636
        %v8638 = vrot.slane %v6980, 7
        %v8639 = vsel %vm7032, %v8638, %v8637
        %v8640 = vrot.slane %v6982, 6
        %v8641 = vsel %vm7035, %v8640, %v8639
        %v8642 = vrot.slane %v6984, 5
        %v8643 = vrot.slane %v6986, 4
        %v8644 = vsel %vm7017, %v8643, %v8642
        %v8645 = vrot.slane %v6988, 3
        %v8646 = vsel %vm7020, %v8645, %v8644
        %v8647 = vrot.slane %v6990, 2
        %v8648 = vsel %vm7023, %v8647, %v8646
        %v8649 = vrot.slane %v6992, 1
        %v8650 = vsel %vm7026, %v8649, %v8648
        %v8651 = vsel %vm7029, %v6994, %v8650
        %v8652 = vrot.slane %v6996, 7
        %v8653 = vsel %vm7032, %v8652, %v8651
        %v8654 = vrot.slane %v6998, 6
        %v8655 = vsel %vm7035, %v8654, %v8653
        %8656 = vrot.lane.b32.xlu0 %v8641, 88
        %v8657 = vpop.permute.xlu0 %8656
        %8658 = vrot.lane.b32.xlu0 %v8655, 88
        %v8659 = vpop.permute.xlu0 %8658
        %v8662 = vrot.slane %v6904, 6
        %v8663 = vrot.slane %v6906, 5
        %v8664 = vsel %vm7017, %v8663, %v8662
        %v8665 = vrot.slane %v6908, 4
        %v8666 = vsel %vm7020, %v8665, %v8664
        %v8667 = vrot.slane %v6910, 3
        %v8668 = vsel %vm7023, %v8667, %v8666
        %v8669 = vrot.slane %v6912, 2
        %v8670 = vsel %vm7026, %v8669, %v8668
        %v8671 = vrot.slane %v6914, 1
        %v8672 = vsel %vm7029, %v8671, %v8670
        %v8673 = vsel %vm7032, %v6916, %v8672
        %v8674 = vrot.slane %v6918, 7
        %v8675 = vsel %vm7035, %v8674, %v8673
        %v8676 = vrot.slane %v6920, 6
        %v8677 = vrot.slane %v6922, 5
        %v8678 = vsel %vm7017, %v8677, %v8676
        %v8679 = vrot.slane %v6924, 4
        %v8680 = vsel %vm7020, %v8679, %v8678
        %v8681 = vrot.slane %v6926, 3
        %v8682 = vsel %vm7023, %v8681, %v8680
        %v8683 = vrot.slane %v6928, 2
        %v8684 = vsel %vm7026, %v8683, %v8682
        %v8685 = vrot.slane %v6930, 1
        %v8686 = vsel %vm7029, %v8685, %v8684
        %v8687 = vsel %vm7032, %v6932, %v8686
        %v8688 = vrot.slane %v6934, 7
        %v8689 = vsel %vm7035, %v8688, %v8687
        %8690 = vrot.lane.b32.xlu0 %v8675, 96
        %v8691 = vpop.permute.xlu0 %8690
        %8692 = vrot.lane.b32.xlu0 %v8689, 96
        %v8693 = vpop.permute.xlu0 %8692
        %v8696 = vrot.slane %v6968, 6
        %v8697 = vrot.slane %v6970, 5
        %v8698 = vsel %vm7017, %v8697, %v8696
        %v8699 = vrot.slane %v6972, 4
        %v8700 = vsel %vm7020, %v8699, %v8698
        %v8701 = vrot.slane %v6974, 3
        %v8702 = vsel %vm7023, %v8701, %v8700
        %v8703 = vrot.slane %v6976, 2
        %v8704 = vsel %vm7026, %v8703, %v8702
        %v8705 = vrot.slane %v6978, 1
        %v8706 = vsel %vm7029, %v8705, %v8704
        %v8707 = vsel %vm7032, %v6980, %v8706
        %v8708 = vrot.slane %v6982, 7
        %v8709 = vsel %vm7035, %v8708, %v8707
        %v8710 = vrot.slane %v6984, 6
        %v8711 = vrot.slane %v6986, 5
        %v8712 = vsel %vm7017, %v8711, %v8710
        %v8713 = vrot.slane %v6988, 4
        %v8714 = vsel %vm7020, %v8713, %v8712
        %v8715 = vrot.slane %v6990, 3
        %v8716 = vsel %vm7023, %v8715, %v8714
        %v8717 = vrot.slane %v6992, 2
        %v8718 = vsel %vm7026, %v8717, %v8716
        %v8719 = vrot.slane %v6994, 1
        %v8720 = vsel %vm7029, %v8719, %v8718
        %v8721 = vsel %vm7032, %v6996, %v8720
        %v8722 = vrot.slane %v6998, 7
        %v8723 = vsel %vm7035, %v8722, %v8721
        %8724 = vrot.lane.b32.xlu0 %v8709, 104
        %v8725 = vpop.permute.xlu0 %8724
        %8726 = vrot.lane.b32.xlu0 %v8723, 104
        %v8727 = vpop.permute.xlu0 %8726
        %v8730 = vrot.slane %v6904, 7
        %v8731 = vrot.slane %v6906, 6
        %v8732 = vsel %vm7017, %v8731, %v8730
        %v8733 = vrot.slane %v6908, 5
        %v8734 = vsel %vm7020, %v8733, %v8732
        %v8735 = vrot.slane %v6910, 4
        %v8736 = vsel %vm7023, %v8735, %v8734
        %v8737 = vrot.slane %v6912, 3
        %v8738 = vsel %vm7026, %v8737, %v8736
        %v8739 = vrot.slane %v6914, 2
        %v8740 = vsel %vm7029, %v8739, %v8738
        %v8741 = vrot.slane %v6916, 1
        %v8742 = vsel %vm7032, %v8741, %v8740
        %v8743 = vsel %vm7035, %v6918, %v8742
        %v8744 = vrot.slane %v6920, 7
        %v8745 = vrot.slane %v6922, 6
        %v8746 = vsel %vm7017, %v8745, %v8744
        %v8747 = vrot.slane %v6924, 5
        %v8748 = vsel %vm7020, %v8747, %v8746
        %v8749 = vrot.slane %v6926, 4
        %v8750 = vsel %vm7023, %v8749, %v8748
        %v8751 = vrot.slane %v6928, 3
        %v8752 = vsel %vm7026, %v8751, %v8750
        %v8753 = vrot.slane %v6930, 2
        %v8754 = vsel %vm7029, %v8753, %v8752
        %v8755 = vrot.slane %v6932, 1
        %v8756 = vsel %vm7032, %v8755, %v8754
        %v8757 = vsel %vm7035, %v6934, %v8756
        %8758 = vrot.lane.b32.xlu0 %v8743, 112
        %v8759 = vpop.permute.xlu0 %8758
        %8760 = vrot.lane.b32.xlu0 %v8757, 112
        %v8761 = vpop.permute.xlu0 %8760
        %v8764 = vrot.slane %v6968, 7
        %v8765 = vrot.slane %v6970, 6
        %v8766 = vsel %vm7017, %v8765, %v8764
        %v8767 = vrot.slane %v6972, 5
        %v8768 = vsel %vm7020, %v8767, %v8766
        %v8769 = vrot.slane %v6974, 4
        %v8770 = vsel %vm7023, %v8769, %v8768
        %v8771 = vrot.slane %v6976, 3
        %v8772 = vsel %vm7026, %v8771, %v8770
        %v8773 = vrot.slane %v6978, 2
        %v8774 = vsel %vm7029, %v8773, %v8772
        %v8775 = vrot.slane %v6980, 1
        %v8776 = vsel %vm7032, %v8775, %v8774
        %v8777 = vsel %vm7035, %v6982, %v8776
        %v8778 = vrot.slane %v6984, 7
        %v8779 = vrot.slane %v6986, 6
        %v8780 = vsel %vm7017, %v8779, %v8778
        %v8781 = vrot.slane %v6988, 5
        %v8782 = vsel %vm7020, %v8781, %v8780
        %v8783 = vrot.slane %v6990, 4
        %v8784 = vsel %vm7023, %v8783, %v8782
        %v8785 = vrot.slane %v6992, 3
        %v8786 = vsel %vm7026, %v8785, %v8784
        %v8787 = vrot.slane %v6994, 2
        %v8788 = vsel %vm7029, %v8787, %v8786
        %v8789 = vrot.slane %v6996, 1
        %v8790 = vsel %vm7032, %v8789, %v8788
        %v8791 = vsel %vm7035, %v6998, %v8790
        %8792 = vrot.lane.b32.xlu0 %v8777, 120
        %v8793 = vpop.permute.xlu0 %8792
        %8794 = vrot.lane.b32.xlu0 %v8791, 120
        %v8795 = vpop.permute.xlu0 %8794
        %v8798 = vsel %vm7579, %v8255, %v8317
        %v8799 = vsel %vm7579, %v8269, %v8319
        %v8800 = vsel %vm7582, %v8798, %v8351
        %v8801 = vsel %vm7582, %v8799, %v8353
        %v8802 = vsel %vm7585, %v8800, %v8385
        %v8803 = vsel %vm7585, %v8801, %v8387
        %v8804 = vsel %vm7588, %v8802, %v8419
        %v8805 = vsel %vm7588, %v8803, %v8421
        %v8806 = vsel %vm7591, %v8804, %v8453
        %v8807 = vsel %vm7591, %v8805, %v8455
        %v8808 = vsel %vm7594, %v8806, %v8487
        %v8809 = vsel %vm7594, %v8807, %v8489
        %v8810 = vsel %vm7597, %v8808, %v8521
        %v8811 = vsel %vm7597, %v8809, %v8523
        %v8812 = vsel %vm7600, %v8810, %v8555
        %v8813 = vsel %vm7600, %v8811, %v8557
        %v8814 = vsel %vm7603, %v8812, %v8589
        %v8815 = vsel %vm7603, %v8813, %v8591
        %v8816 = vsel %vm7606, %v8814, %v8623
        %v8817 = vsel %vm7606, %v8815, %v8625
        %v8818 = vsel %vm7609, %v8816, %v8657
        %v8819 = vsel %vm7609, %v8817, %v8659
        %v8820 = vsel %vm7612, %v8818, %v8691
        %v8821 = vsel %vm7612, %v8819, %v8693
        %v8822 = vsel %vm7615, %v8820, %v8725
        %v8823 = vsel %vm7615, %v8821, %v8727
        %v8824 = vsel %vm7618, %v8822, %v8759
        %v8825 = vsel %vm7618, %v8823, %v8761
        %v8826 = vsel %vm7621, %v8824, %v8793
        %v8827 = vsel %vm7621, %v8825, %v8795
        %v8844 = vrot.slane %v6907, 7
        %v8845 = vsel %vm7017, %v8844, %v6905
        %v8846 = vrot.slane %v6909, 6
        %v8847 = vsel %vm7020, %v8846, %v8845
        %v8848 = vrot.slane %v6911, 5
        %v8849 = vsel %vm7023, %v8848, %v8847
        %v8850 = vrot.slane %v6913, 4
        %v8851 = vsel %vm7026, %v8850, %v8849
        %v8852 = vrot.slane %v6915, 3
        %v8853 = vsel %vm7029, %v8852, %v8851
        %v8854 = vrot.slane %v6917, 2
        %v8855 = vsel %vm7032, %v8854, %v8853
        %v8856 = vrot.slane %v6919, 1
        %v8857 = vsel %vm7035, %v8856, %v8855
        %v8858 = vrot.slane %v6923, 7
        %v8859 = vsel %vm7017, %v8858, %v6921
        %v8860 = vrot.slane %v6925, 6
        %v8861 = vsel %vm7020, %v8860, %v8859
        %v8862 = vrot.slane %v6927, 5
        %v8863 = vsel %vm7023, %v8862, %v8861
        %v8864 = vrot.slane %v6929, 4
        %v8865 = vsel %vm7026, %v8864, %v8863
        %v8866 = vrot.slane %v6931, 3
        %v8867 = vsel %vm7029, %v8866, %v8865
        %v8868 = vrot.slane %v6933, 2
        %v8869 = vsel %vm7032, %v8868, %v8867
        %v8870 = vrot.slane %v6935, 1
        %v8871 = vsel %vm7035, %v8870, %v8869
        %v8890 = vrot.slane %v6971, 7
        %v8891 = vsel %vm7017, %v8890, %v6969
        %v8892 = vrot.slane %v6973, 6
        %v8893 = vsel %vm7020, %v8892, %v8891
        %v8894 = vrot.slane %v6975, 5
        %v8895 = vsel %vm7023, %v8894, %v8893
        %v8896 = vrot.slane %v6977, 4
        %v8897 = vsel %vm7026, %v8896, %v8895
        %v8898 = vrot.slane %v6979, 3
        %v8899 = vsel %vm7029, %v8898, %v8897
        %v8900 = vrot.slane %v6981, 2
        %v8901 = vsel %vm7032, %v8900, %v8899
        %v8902 = vrot.slane %v6983, 1
        %v8903 = vsel %vm7035, %v8902, %v8901
        %v8904 = vrot.slane %v6987, 7
        %v8905 = vsel %vm7017, %v8904, %v6985
        %v8906 = vrot.slane %v6989, 6
        %v8907 = vsel %vm7020, %v8906, %v8905
        %v8908 = vrot.slane %v6991, 5
        %v8909 = vsel %vm7023, %v8908, %v8907
        %v8910 = vrot.slane %v6993, 4
        %v8911 = vsel %vm7026, %v8910, %v8909
        %v8912 = vrot.slane %v6995, 3
        %v8913 = vsel %vm7029, %v8912, %v8911
        %v8914 = vrot.slane %v6997, 2
        %v8915 = vsel %vm7032, %v8914, %v8913
        %v8916 = vrot.slane %v6999, 1
        %v8917 = vsel %vm7035, %v8916, %v8915
        %8918 = vrot.lane.b32.xlu0 %v8903, 8
        %v8919 = vpop.permute.xlu0 %8918
        %8920 = vrot.lane.b32.xlu0 %v8917, 8
        %v8921 = vpop.permute.xlu0 %8920
        %v8924 = vrot.slane %v6905, 1
        %v8925 = vsel %vm7017, %v6907, %v8924
        %v8926 = vrot.slane %v6909, 7
        %v8927 = vsel %vm7020, %v8926, %v8925
        %v8928 = vrot.slane %v6911, 6
        %v8929 = vsel %vm7023, %v8928, %v8927
        %v8930 = vrot.slane %v6913, 5
        %v8931 = vsel %vm7026, %v8930, %v8929
        %v8932 = vrot.slane %v6915, 4
        %v8933 = vsel %vm7029, %v8932, %v8931
        %v8934 = vrot.slane %v6917, 3
        %v8935 = vsel %vm7032, %v8934, %v8933
        %v8936 = vrot.slane %v6919, 2
        %v8937 = vsel %vm7035, %v8936, %v8935
        %v8938 = vrot.slane %v6921, 1
        %v8939 = vsel %vm7017, %v6923, %v8938
        %v8940 = vrot.slane %v6925, 7
        %v8941 = vsel %vm7020, %v8940, %v8939
        %v8942 = vrot.slane %v6927, 6
        %v8943 = vsel %vm7023, %v8942, %v8941
        %v8944 = vrot.slane %v6929, 5
        %v8945 = vsel %vm7026, %v8944, %v8943
        %v8946 = vrot.slane %v6931, 4
        %v8947 = vsel %vm7029, %v8946, %v8945
        %v8948 = vrot.slane %v6933, 3
        %v8949 = vsel %vm7032, %v8948, %v8947
        %v8950 = vrot.slane %v6935, 2
        %v8951 = vsel %vm7035, %v8950, %v8949
        %8952 = vrot.lane.b32.xlu0 %v8937, 16
        %v8953 = vpop.permute.xlu0 %8952
        %8954 = vrot.lane.b32.xlu0 %v8951, 16
        %v8955 = vpop.permute.xlu0 %8954
        %v8958 = vrot.slane %v6969, 1
        %v8959 = vsel %vm7017, %v6971, %v8958
        %v8960 = vrot.slane %v6973, 7
        %v8961 = vsel %vm7020, %v8960, %v8959
        %v8962 = vrot.slane %v6975, 6
        %v8963 = vsel %vm7023, %v8962, %v8961
        %v8964 = vrot.slane %v6977, 5
        %v8965 = vsel %vm7026, %v8964, %v8963
        %v8966 = vrot.slane %v6979, 4
        %v8967 = vsel %vm7029, %v8966, %v8965
        %v8968 = vrot.slane %v6981, 3
        %v8969 = vsel %vm7032, %v8968, %v8967
        %v8970 = vrot.slane %v6983, 2
        %v8971 = vsel %vm7035, %v8970, %v8969
        %v8972 = vrot.slane %v6985, 1
        %v8973 = vsel %vm7017, %v6987, %v8972
        %v8974 = vrot.slane %v6989, 7
        %v8975 = vsel %vm7020, %v8974, %v8973
        %v8976 = vrot.slane %v6991, 6
        %v8977 = vsel %vm7023, %v8976, %v8975
        %v8978 = vrot.slane %v6993, 5
        %v8979 = vsel %vm7026, %v8978, %v8977
        %v8980 = vrot.slane %v6995, 4
        %v8981 = vsel %vm7029, %v8980, %v8979
        %v8982 = vrot.slane %v6997, 3
        %v8983 = vsel %vm7032, %v8982, %v8981
        %v8984 = vrot.slane %v6999, 2
        %v8985 = vsel %vm7035, %v8984, %v8983
        %8986 = vrot.lane.b32.xlu0 %v8971, 24
        %v8987 = vpop.permute.xlu0 %8986
        %8988 = vrot.lane.b32.xlu0 %v8985, 24
        %v8989 = vpop.permute.xlu0 %8988
        %v8992 = vrot.slane %v6905, 2
        %v8993 = vrot.slane %v6907, 1
        %v8994 = vsel %vm7017, %v8993, %v8992
        %v8995 = vsel %vm7020, %v6909, %v8994
        %v8996 = vrot.slane %v6911, 7
        %v8997 = vsel %vm7023, %v8996, %v8995
        %v8998 = vrot.slane %v6913, 6
        %v8999 = vsel %vm7026, %v8998, %v8997
        %v9000 = vrot.slane %v6915, 5
        %v9001 = vsel %vm7029, %v9000, %v8999
        %v9002 = vrot.slane %v6917, 4
        %v9003 = vsel %vm7032, %v9002, %v9001
        %v9004 = vrot.slane %v6919, 3
        %v9005 = vsel %vm7035, %v9004, %v9003
        %v9006 = vrot.slane %v6921, 2
        %v9007 = vrot.slane %v6923, 1
        %v9008 = vsel %vm7017, %v9007, %v9006
        %v9009 = vsel %vm7020, %v6925, %v9008
        %v9010 = vrot.slane %v6927, 7
        %v9011 = vsel %vm7023, %v9010, %v9009
        %v9012 = vrot.slane %v6929, 6
        %v9013 = vsel %vm7026, %v9012, %v9011
        %v9014 = vrot.slane %v6931, 5
        %v9015 = vsel %vm7029, %v9014, %v9013
        %v9016 = vrot.slane %v6933, 4
        %v9017 = vsel %vm7032, %v9016, %v9015
        %v9018 = vrot.slane %v6935, 3
        %v9019 = vsel %vm7035, %v9018, %v9017
        %9020 = vrot.lane.b32.xlu0 %v9005, 32
        %v9021 = vpop.permute.xlu0 %9020
        %9022 = vrot.lane.b32.xlu0 %v9019, 32
        %v9023 = vpop.permute.xlu0 %9022
        %v9026 = vrot.slane %v6969, 2
        %v9027 = vrot.slane %v6971, 1
        %v9028 = vsel %vm7017, %v9027, %v9026
        %v9029 = vsel %vm7020, %v6973, %v9028
        %v9030 = vrot.slane %v6975, 7
        %v9031 = vsel %vm7023, %v9030, %v9029
        %v9032 = vrot.slane %v6977, 6
        %v9033 = vsel %vm7026, %v9032, %v9031
        %v9034 = vrot.slane %v6979, 5
        %v9035 = vsel %vm7029, %v9034, %v9033
        %v9036 = vrot.slane %v6981, 4
        %v9037 = vsel %vm7032, %v9036, %v9035
        %v9038 = vrot.slane %v6983, 3
        %v9039 = vsel %vm7035, %v9038, %v9037
        %v9040 = vrot.slane %v6985, 2
        %v9041 = vrot.slane %v6987, 1
        %v9042 = vsel %vm7017, %v9041, %v9040
        %v9043 = vsel %vm7020, %v6989, %v9042
        %v9044 = vrot.slane %v6991, 7
        %v9045 = vsel %vm7023, %v9044, %v9043
        %v9046 = vrot.slane %v6993, 6
        %v9047 = vsel %vm7026, %v9046, %v9045
        %v9048 = vrot.slane %v6995, 5
        %v9049 = vsel %vm7029, %v9048, %v9047
        %v9050 = vrot.slane %v6997, 4
        %v9051 = vsel %vm7032, %v9050, %v9049
        %v9052 = vrot.slane %v6999, 3
        %v9053 = vsel %vm7035, %v9052, %v9051
        %9054 = vrot.lane.b32.xlu0 %v9039, 40
        %v9055 = vpop.permute.xlu0 %9054
        %9056 = vrot.lane.b32.xlu0 %v9053, 40
        %v9057 = vpop.permute.xlu0 %9056
        %v9060 = vrot.slane %v6905, 3
        %v9061 = vrot.slane %v6907, 2
        %v9062 = vsel %vm7017, %v9061, %v9060
        %v9063 = vrot.slane %v6909, 1
        %v9064 = vsel %vm7020, %v9063, %v9062
        %v9065 = vsel %vm7023, %v6911, %v9064
        %v9066 = vrot.slane %v6913, 7
        %v9067 = vsel %vm7026, %v9066, %v9065
        %v9068 = vrot.slane %v6915, 6
        %v9069 = vsel %vm7029, %v9068, %v9067
        %v9070 = vrot.slane %v6917, 5
        %v9071 = vsel %vm7032, %v9070, %v9069
        %v9072 = vrot.slane %v6919, 4
        %v9073 = vsel %vm7035, %v9072, %v9071
        %v9074 = vrot.slane %v6921, 3
        %v9075 = vrot.slane %v6923, 2
        %v9076 = vsel %vm7017, %v9075, %v9074
        %v9077 = vrot.slane %v6925, 1
        %v9078 = vsel %vm7020, %v9077, %v9076
        %v9079 = vsel %vm7023, %v6927, %v9078
        %v9080 = vrot.slane %v6929, 7
        %v9081 = vsel %vm7026, %v9080, %v9079
        %v9082 = vrot.slane %v6931, 6
        %v9083 = vsel %vm7029, %v9082, %v9081
        %v9084 = vrot.slane %v6933, 5
        %v9085 = vsel %vm7032, %v9084, %v9083
        %v9086 = vrot.slane %v6935, 4
        %v9087 = vsel %vm7035, %v9086, %v9085
        %9088 = vrot.lane.b32.xlu0 %v9073, 48
        %v9089 = vpop.permute.xlu0 %9088
        %9090 = vrot.lane.b32.xlu0 %v9087, 48
        %v9091 = vpop.permute.xlu0 %9090
        %v9094 = vrot.slane %v6969, 3
        %v9095 = vrot.slane %v6971, 2
        %v9096 = vsel %vm7017, %v9095, %v9094
        %v9097 = vrot.slane %v6973, 1
        %v9098 = vsel %vm7020, %v9097, %v9096
        %v9099 = vsel %vm7023, %v6975, %v9098
        %v9100 = vrot.slane %v6977, 7
        %v9101 = vsel %vm7026, %v9100, %v9099
        %v9102 = vrot.slane %v6979, 6
        %v9103 = vsel %vm7029, %v9102, %v9101
        %v9104 = vrot.slane %v6981, 5
        %v9105 = vsel %vm7032, %v9104, %v9103
        %v9106 = vrot.slane %v6983, 4
        %v9107 = vsel %vm7035, %v9106, %v9105
        %v9108 = vrot.slane %v6985, 3
        %v9109 = vrot.slane %v6987, 2
        %v9110 = vsel %vm7017, %v9109, %v9108
        %v9111 = vrot.slane %v6989, 1
        %v9112 = vsel %vm7020, %v9111, %v9110
        %v9113 = vsel %vm7023, %v6991, %v9112
        %v9114 = vrot.slane %v6993, 7
        %v9115 = vsel %vm7026, %v9114, %v9113
        %v9116 = vrot.slane %v6995, 6
        %v9117 = vsel %vm7029, %v9116, %v9115
        %v9118 = vrot.slane %v6997, 5
        %v9119 = vsel %vm7032, %v9118, %v9117
        %v9120 = vrot.slane %v6999, 4
        %v9121 = vsel %vm7035, %v9120, %v9119
        %9122 = vrot.lane.b32.xlu0 %v9107, 56
        %v9123 = vpop.permute.xlu0 %9122
        %9124 = vrot.lane.b32.xlu0 %v9121, 56
        %v9125 = vpop.permute.xlu0 %9124
        %v9128 = vrot.slane %v6905, 4
        %v9129 = vrot.slane %v6907, 3
        %v9130 = vsel %vm7017, %v9129, %v9128
        %v9131 = vrot.slane %v6909, 2
        %v9132 = vsel %vm7020, %v9131, %v9130
        %v9133 = vrot.slane %v6911, 1
        %v9134 = vsel %vm7023, %v9133, %v9132
        %v9135 = vsel %vm7026, %v6913, %v9134
        %v9136 = vrot.slane %v6915, 7
        %v9137 = vsel %vm7029, %v9136, %v9135
        %v9138 = vrot.slane %v6917, 6
        %v9139 = vsel %vm7032, %v9138, %v9137
        %v9140 = vrot.slane %v6919, 5
        %v9141 = vsel %vm7035, %v9140, %v9139
        %v9142 = vrot.slane %v6921, 4
        %v9143 = vrot.slane %v6923, 3
        %v9144 = vsel %vm7017, %v9143, %v9142
        %v9145 = vrot.slane %v6925, 2
        %v9146 = vsel %vm7020, %v9145, %v9144
        %v9147 = vrot.slane %v6927, 1
        %v9148 = vsel %vm7023, %v9147, %v9146
        %v9149 = vsel %vm7026, %v6929, %v9148
        %v9150 = vrot.slane %v6931, 7
        %v9151 = vsel %vm7029, %v9150, %v9149
        %v9152 = vrot.slane %v6933, 6
        %v9153 = vsel %vm7032, %v9152, %v9151
        %v9154 = vrot.slane %v6935, 5
        %v9155 = vsel %vm7035, %v9154, %v9153
        %9156 = vrot.lane.b32.xlu0 %v9141, 64
        %v9157 = vpop.permute.xlu0 %9156
        %9158 = vrot.lane.b32.xlu0 %v9155, 64
        %v9159 = vpop.permute.xlu0 %9158
        %v9162 = vrot.slane %v6969, 4
        %v9163 = vrot.slane %v6971, 3
        %v9164 = vsel %vm7017, %v9163, %v9162
        %v9165 = vrot.slane %v6973, 2
        %v9166 = vsel %vm7020, %v9165, %v9164
        %v9167 = vrot.slane %v6975, 1
        %v9168 = vsel %vm7023, %v9167, %v9166
        %v9169 = vsel %vm7026, %v6977, %v9168
        %v9170 = vrot.slane %v6979, 7
        %v9171 = vsel %vm7029, %v9170, %v9169
        %v9172 = vrot.slane %v6981, 6
        %v9173 = vsel %vm7032, %v9172, %v9171
        %v9174 = vrot.slane %v6983, 5
        %v9175 = vsel %vm7035, %v9174, %v9173
        %v9176 = vrot.slane %v6985, 4
        %v9177 = vrot.slane %v6987, 3
        %v9178 = vsel %vm7017, %v9177, %v9176
        %v9179 = vrot.slane %v6989, 2
        %v9180 = vsel %vm7020, %v9179, %v9178
        %v9181 = vrot.slane %v6991, 1
        %v9182 = vsel %vm7023, %v9181, %v9180
        %v9183 = vsel %vm7026, %v6993, %v9182
        %v9184 = vrot.slane %v6995, 7
        %v9185 = vsel %vm7029, %v9184, %v9183
        %v9186 = vrot.slane %v6997, 6
        %v9187 = vsel %vm7032, %v9186, %v9185
        %v9188 = vrot.slane %v6999, 5
        %v9189 = vsel %vm7035, %v9188, %v9187
        %9190 = vrot.lane.b32.xlu0 %v9175, 72
        %v9191 = vpop.permute.xlu0 %9190
        %9192 = vrot.lane.b32.xlu0 %v9189, 72
        %v9193 = vpop.permute.xlu0 %9192
        %v9196 = vrot.slane %v6905, 5
        %v9197 = vrot.slane %v6907, 4
        %v9198 = vsel %vm7017, %v9197, %v9196
        %v9199 = vrot.slane %v6909, 3
        %v9200 = vsel %vm7020, %v9199, %v9198
        %v9201 = vrot.slane %v6911, 2
        %v9202 = vsel %vm7023, %v9201, %v9200
        %v9203 = vrot.slane %v6913, 1
        %v9204 = vsel %vm7026, %v9203, %v9202
        %v9205 = vsel %vm7029, %v6915, %v9204
        %v9206 = vrot.slane %v6917, 7
        %v9207 = vsel %vm7032, %v9206, %v9205
        %v9208 = vrot.slane %v6919, 6
        %v9209 = vsel %vm7035, %v9208, %v9207
        %v9210 = vrot.slane %v6921, 5
        %v9211 = vrot.slane %v6923, 4
        %v9212 = vsel %vm7017, %v9211, %v9210
        %v9213 = vrot.slane %v6925, 3
        %v9214 = vsel %vm7020, %v9213, %v9212
        %v9215 = vrot.slane %v6927, 2
        %v9216 = vsel %vm7023, %v9215, %v9214
        %v9217 = vrot.slane %v6929, 1
        %v9218 = vsel %vm7026, %v9217, %v9216
        %v9219 = vsel %vm7029, %v6931, %v9218
        %v9220 = vrot.slane %v6933, 7
        %v9221 = vsel %vm7032, %v9220, %v9219
        %v9222 = vrot.slane %v6935, 6
        %v9223 = vsel %vm7035, %v9222, %v9221
        %9224 = vrot.lane.b32.xlu0 %v9209, 80
        %v9225 = vpop.permute.xlu0 %9224
        %9226 = vrot.lane.b32.xlu0 %v9223, 80
        %v9227 = vpop.permute.xlu0 %9226
        %v9230 = vrot.slane %v6969, 5
        %v9231 = vrot.slane %v6971, 4
        %v9232 = vsel %vm7017, %v9231, %v9230
        %v9233 = vrot.slane %v6973, 3
        %v9234 = vsel %vm7020, %v9233, %v9232
        %v9235 = vrot.slane %v6975, 2
        %v9236 = vsel %vm7023, %v9235, %v9234
        %v9237 = vrot.slane %v6977, 1
        %v9238 = vsel %vm7026, %v9237, %v9236
        %v9239 = vsel %vm7029, %v6979, %v9238
        %v9240 = vrot.slane %v6981, 7
        %v9241 = vsel %vm7032, %v9240, %v9239
        %v9242 = vrot.slane %v6983, 6
        %v9243 = vsel %vm7035, %v9242, %v9241
        %v9244 = vrot.slane %v6985, 5
        %v9245 = vrot.slane %v6987, 4
        %v9246 = vsel %vm7017, %v9245, %v9244
        %v9247 = vrot.slane %v6989, 3
        %v9248 = vsel %vm7020, %v9247, %v9246
        %v9249 = vrot.slane %v6991, 2
        %v9250 = vsel %vm7023, %v9249, %v9248
        %v9251 = vrot.slane %v6993, 1
        %v9252 = vsel %vm7026, %v9251, %v9250
        %v9253 = vsel %vm7029, %v6995, %v9252
        %v9254 = vrot.slane %v6997, 7
        %v9255 = vsel %vm7032, %v9254, %v9253
        %v9256 = vrot.slane %v6999, 6
        %v9257 = vsel %vm7035, %v9256, %v9255
        %9258 = vrot.lane.b32.xlu0 %v9243, 88
        %v9259 = vpop.permute.xlu0 %9258
        %9260 = vrot.lane.b32.xlu0 %v9257, 88
        %v9261 = vpop.permute.xlu0 %9260
        %v9264 = vrot.slane %v6905, 6
        %v9265 = vrot.slane %v6907, 5
        %v9266 = vsel %vm7017, %v9265, %v9264
        %v9267 = vrot.slane %v6909, 4
        %v9268 = vsel %vm7020, %v9267, %v9266
        %v9269 = vrot.slane %v6911, 3
        %v9270 = vsel %vm7023, %v9269, %v9268
        %v9271 = vrot.slane %v6913, 2
        %v9272 = vsel %vm7026, %v9271, %v9270
        %v9273 = vrot.slane %v6915, 1
        %v9274 = vsel %vm7029, %v9273, %v9272
        %v9275 = vsel %vm7032, %v6917, %v9274
        %v9276 = vrot.slane %v6919, 7
        %v9277 = vsel %vm7035, %v9276, %v9275
        %v9278 = vrot.slane %v6921, 6
        %v9279 = vrot.slane %v6923, 5
        %v9280 = vsel %vm7017, %v9279, %v9278
        %v9281 = vrot.slane %v6925, 4
        %v9282 = vsel %vm7020, %v9281, %v9280
        %v9283 = vrot.slane %v6927, 3
        %v9284 = vsel %vm7023, %v9283, %v9282
        %v9285 = vrot.slane %v6929, 2
        %v9286 = vsel %vm7026, %v9285, %v9284
        %v9287 = vrot.slane %v6931, 1
        %v9288 = vsel %vm7029, %v9287, %v9286
        %v9289 = vsel %vm7032, %v6933, %v9288
        %v9290 = vrot.slane %v6935, 7
        %v9291 = vsel %vm7035, %v9290, %v9289
        %9292 = vrot.lane.b32.xlu0 %v9277, 96
        %v9293 = vpop.permute.xlu0 %9292
        %9294 = vrot.lane.b32.xlu0 %v9291, 96
        %v9295 = vpop.permute.xlu0 %9294
        %v9298 = vrot.slane %v6969, 6
        %v9299 = vrot.slane %v6971, 5
        %v9300 = vsel %vm7017, %v9299, %v9298
        %v9301 = vrot.slane %v6973, 4
        %v9302 = vsel %vm7020, %v9301, %v9300
        %v9303 = vrot.slane %v6975, 3
        %v9304 = vsel %vm7023, %v9303, %v9302
        %v9305 = vrot.slane %v6977, 2
        %v9306 = vsel %vm7026, %v9305, %v9304
        %v9307 = vrot.slane %v6979, 1
        %v9308 = vsel %vm7029, %v9307, %v9306
        %v9309 = vsel %vm7032, %v6981, %v9308
        %v9310 = vrot.slane %v6983, 7
        %v9311 = vsel %vm7035, %v9310, %v9309
        %v9312 = vrot.slane %v6985, 6
        %v9313 = vrot.slane %v6987, 5
        %v9314 = vsel %vm7017, %v9313, %v9312
        %v9315 = vrot.slane %v6989, 4
        %v9316 = vsel %vm7020, %v9315, %v9314
        %v9317 = vrot.slane %v6991, 3
        %v9318 = vsel %vm7023, %v9317, %v9316
        %v9319 = vrot.slane %v6993, 2
        %v9320 = vsel %vm7026, %v9319, %v9318
        %v9321 = vrot.slane %v6995, 1
        %v9322 = vsel %vm7029, %v9321, %v9320
        %v9323 = vsel %vm7032, %v6997, %v9322
        %v9324 = vrot.slane %v6999, 7
        %v9325 = vsel %vm7035, %v9324, %v9323
        %9326 = vrot.lane.b32.xlu0 %v9311, 104
        %v9327 = vpop.permute.xlu0 %9326
        %9328 = vrot.lane.b32.xlu0 %v9325, 104
        %v9329 = vpop.permute.xlu0 %9328
        %v9332 = vrot.slane %v6905, 7
        %v9333 = vrot.slane %v6907, 6
        %v9334 = vsel %vm7017, %v9333, %v9332
        %v9335 = vrot.slane %v6909, 5
        %v9336 = vsel %vm7020, %v9335, %v9334
        %v9337 = vrot.slane %v6911, 4
        %v9338 = vsel %vm7023, %v9337, %v9336
        %v9339 = vrot.slane %v6913, 3
        %v9340 = vsel %vm7026, %v9339, %v9338
        %v9341 = vrot.slane %v6915, 2
        %v9342 = vsel %vm7029, %v9341, %v9340
        %v9343 = vrot.slane %v6917, 1
        %v9344 = vsel %vm7032, %v9343, %v9342
        %v9345 = vsel %vm7035, %v6919, %v9344
        %v9346 = vrot.slane %v6921, 7
        %v9347 = vrot.slane %v6923, 6
        %v9348 = vsel %vm7017, %v9347, %v9346
        %v9349 = vrot.slane %v6925, 5
        %v9350 = vsel %vm7020, %v9349, %v9348
        %v9351 = vrot.slane %v6927, 4
        %v9352 = vsel %vm7023, %v9351, %v9350
        %v9353 = vrot.slane %v6929, 3
        %v9354 = vsel %vm7026, %v9353, %v9352
        %v9355 = vrot.slane %v6931, 2
        %v9356 = vsel %vm7029, %v9355, %v9354
        %v9357 = vrot.slane %v6933, 1
        %v9358 = vsel %vm7032, %v9357, %v9356
        %v9359 = vsel %vm7035, %v6935, %v9358
        %9360 = vrot.lane.b32.xlu0 %v9345, 112
        %v9361 = vpop.permute.xlu0 %9360
        %9362 = vrot.lane.b32.xlu0 %v9359, 112
        %v9363 = vpop.permute.xlu0 %9362
        %v9366 = vrot.slane %v6969, 7
        %v9367 = vrot.slane %v6971, 6
        %v9368 = vsel %vm7017, %v9367, %v9366
        %v9369 = vrot.slane %v6973, 5
        %v9370 = vsel %vm7020, %v9369, %v9368
        %v9371 = vrot.slane %v6975, 4
        %v9372 = vsel %vm7023, %v9371, %v9370
        %v9373 = vrot.slane %v6977, 3
        %v9374 = vsel %vm7026, %v9373, %v9372
        %v9375 = vrot.slane %v6979, 2
        %v9376 = vsel %vm7029, %v9375, %v9374
        %v9377 = vrot.slane %v6981, 1
        %v9378 = vsel %vm7032, %v9377, %v9376
        %v9379 = vsel %vm7035, %v6983, %v9378
        %v9380 = vrot.slane %v6985, 7
        %v9381 = vrot.slane %v6987, 6
        %v9382 = vsel %vm7017, %v9381, %v9380
        %v9383 = vrot.slane %v6989, 5
        %v9384 = vsel %vm7020, %v9383, %v9382
        %v9385 = vrot.slane %v6991, 4
        %v9386 = vsel %vm7023, %v9385, %v9384
        %v9387 = vrot.slane %v6993, 3
        %v9388 = vsel %vm7026, %v9387, %v9386
        %v9389 = vrot.slane %v6995, 2
        %v9390 = vsel %vm7029, %v9389, %v9388
        %v9391 = vrot.slane %v6997, 1
        %v9392 = vsel %vm7032, %v9391, %v9390
        %v9393 = vsel %vm7035, %v6999, %v9392
        %9394 = vrot.lane.b32.xlu0 %v9379, 120
        %v9395 = vpop.permute.xlu0 %9394
        %9396 = vrot.lane.b32.xlu0 %v9393, 120
        %v9397 = vpop.permute.xlu0 %9396
        %v9400 = vsel %vm7579, %v8857, %v8919
        %v9401 = vsel %vm7579, %v8871, %v8921
        %v9402 = vsel %vm7582, %v9400, %v8953
        %v9403 = vsel %vm7582, %v9401, %v8955
        %v9404 = vsel %vm7585, %v9402, %v8987
        %v9405 = vsel %vm7585, %v9403, %v8989
        %v9406 = vsel %vm7588, %v9404, %v9021
        %v9407 = vsel %vm7588, %v9405, %v9023
        %v9408 = vsel %vm7591, %v9406, %v9055
        %v9409 = vsel %vm7591, %v9407, %v9057
        %v9410 = vsel %vm7594, %v9408, %v9089
        %v9411 = vsel %vm7594, %v9409, %v9091
        %v9412 = vsel %vm7597, %v9410, %v9123
        %v9413 = vsel %vm7597, %v9411, %v9125
        %v9414 = vsel %vm7600, %v9412, %v9157
        %v9415 = vsel %vm7600, %v9413, %v9159
        %v9416 = vsel %vm7603, %v9414, %v9191
        %v9417 = vsel %vm7603, %v9415, %v9193
        %v9418 = vsel %vm7606, %v9416, %v9225
        %v9419 = vsel %vm7606, %v9417, %v9227
        %v9420 = vsel %vm7609, %v9418, %v9259
        %v9421 = vsel %vm7609, %v9419, %v9261
        %v9422 = vsel %vm7612, %v9420, %v9293
        %v9423 = vsel %vm7612, %v9421, %v9295
        %v9424 = vsel %vm7615, %v9422, %v9327
        %v9425 = vsel %vm7615, %v9423, %v9329
        %v9426 = vsel %vm7618, %v9424, %v9361
        %v9427 = vsel %vm7618, %v9425, %v9363
        %v9428 = vsel %vm7621, %v9426, %v9395
        %v9429 = vsel %vm7621, %v9427, %v9397
        %v9430 = vpack.c.bf16 %v8224, %v7622
        %v9431 = vpack.c.bf16 %v8225, %v7623
        %v9434 = vrot.slane %v9430, 3
        %v9435 = vrot.slane %v9431, 3
        %vm9436 = vcmask 1040384
        %v9439 = vsel %vm9436, %v9430, %v9434
        %v9441 = vsel %vm7017, %v9430, %v9434
        %v9443 = vrot.slane %v9441, 1
        %v9444 = vsel %vm7020, %v9430, %v9434
        %v9446 = vrot.slane %v9444, 2
        %v9447 = vsel %vm7023, %v9430, %v9434
        %v9449 = vrot.slane %v9447, 3
        %v9452 = vsel %vm9436, %v9431, %v9435
        %v9454 = vsel %vm7017, %v9431, %v9435
        %v9456 = vrot.slane %v9454, 1
        %v9457 = vsel %vm7020, %v9431, %v9435
        %v9459 = vrot.slane %v9457, 2
        %v9460 = vsel %vm7023, %v9431, %v9435
        %v9462 = vrot.slane %v9460, 3
        %v9463 = vunpack.i.l.s16 %v9439
        %v9464 = vunpack.i.h.s16 %v9439
        %v9465 = vunpack.i.l.s16 %v9443
        %v9466 = vunpack.i.h.s16 %v9443
        %v9467 = vunpack.i.l.s16 %v9446
        %v9468 = vunpack.i.h.s16 %v9446
        %v9469 = vunpack.i.l.s16 %v9449
        %v9470 = vunpack.i.h.s16 %v9449
        %v9471 = vunpack.i.l.s16 %v9452
        %v9472 = vunpack.i.h.s16 %v9452
        %v9473 = vunpack.i.l.s16 %v9456
        %v9474 = vunpack.i.h.s16 %v9456
        %v9475 = vunpack.i.l.s16 %v9459
        %v9476 = vunpack.i.h.s16 %v9459
        %v9477 = vunpack.i.l.s16 %v9462
        %v9478 = vunpack.i.h.s16 %v9462
        %v9479 = vpack.i.b16 %v9463, %v9463
        %v9480 = vpack.i.b16 %v9464, %v9464
        %v9481 = vpack.i.b16 %v9465, %v9465
        %v9482 = vpack.i.b16 %v9466, %v9466
        %v9483 = vpack.i.b16 %v9467, %v9467
        %v9484 = vpack.i.b16 %v9468, %v9468
        %v9485 = vpack.i.b16 %v9469, %v9469
        %v9486 = vpack.i.b16 %v9470, %v9470
        %v9487 = vpack.i.b16 %v9471, %v9471
        %v9488 = vpack.i.b16 %v9472, %v9472
        %v9489 = vpack.i.b16 %v9473, %v9473
        %v9490 = vpack.i.b16 %v9474, %v9474
        %v9491 = vpack.i.b16 %v9475, %v9475
        %v9492 = vpack.i.b16 %v9476, %v9476
        %v9493 = vpack.i.b16 %v9477, %v9477
        %v9494 = vpack.i.b16 %v9478, %v9478
        %vm9511 = vcmask 1040384
        %vm9512 = vsmask.f32 256
        %vm9513 = vmand %vm9511, %vm9512
        %vm9514 = vcmask 1041409
        %vm9515 = vsmask.f32 1280
        %vm9516 = vmand %vm9514, %vm9515
        %vm9517 = vmor %vm9516, %vm9513
        %v9518 = vld [vmem:[%s346] sm:$0x3]
        %v9519 = vsel %vm9517, %v9479, %v9518
        %9520 = vst [vmem:[%s346] sm:$0x3] %v9519
        %v9521 = vld [vmem:[%s346 + $0x2] sm:$0x3]
        %v9522 = vsel %vm9517, %v9480, %v9521
        %9523 = vst [vmem:[%s346 + $0x2] sm:$0x3] %v9522
        %v9524 = vld [vmem:[%s346 + $0x4] sm:$0x3]
        %v9525 = vsel %vm9517, %v9481, %v9524
        %9526 = vst [vmem:[%s346 + $0x4] sm:$0x3] %v9525
        %v9527 = vld [vmem:[%s346 + $0x6] sm:$0x3]
        %v9528 = vsel %vm9517, %v9482, %v9527
        %9529 = vst [vmem:[%s346 + $0x6] sm:$0x3] %v9528
        %v9530 = vld [vmem:[%s346 + $0x8] sm:$0x3]
        %v9531 = vsel %vm9517, %v9483, %v9530
        %9532 = vst [vmem:[%s346 + $0x8] sm:$0x3] %v9531
        %v9533 = vld [vmem:[%s346 + $0xa] sm:$0x3]
        %v9534 = vsel %vm9517, %v9484, %v9533
        %9535 = vst [vmem:[%s346 + $0xa] sm:$0x3] %v9534
        %v9536 = vld [vmem:[%s346 + $0xc] sm:$0x3]
        %v9537 = vsel %vm9517, %v9485, %v9536
        %9538 = vst [vmem:[%s346 + $0xc] sm:$0x3] %v9537
        %v9539 = vld [vmem:[%s346 + $0xe] sm:$0x3]
        %v9540 = vsel %vm9517, %v9486, %v9539
        %9541 = vst [vmem:[%s346 + $0xe] sm:$0x3] %v9540
        %v9542 = vld [vmem:[%s346 + $0x10] sm:$0x3]
        %v9543 = vsel %vm9517, %v9487, %v9542
        %9544 = vst [vmem:[%s346 + $0x10] sm:$0x3] %v9543
        %v9545 = vld [vmem:[%s346 + $0x12] sm:$0x3]
        %v9546 = vsel %vm9517, %v9488, %v9545
        %9547 = vst [vmem:[%s346 + $0x12] sm:$0x3] %v9546
        %v9548 = vld [vmem:[%s346 + $0x14] sm:$0x3]
        %v9549 = vsel %vm9517, %v9489, %v9548
        %9550 = vst [vmem:[%s346 + $0x14] sm:$0x3] %v9549
        %v9551 = vld [vmem:[%s346 + $0x16] sm:$0x3]
        %v9552 = vsel %vm9517, %v9490, %v9551
        %9553 = vst [vmem:[%s346 + $0x16] sm:$0x3] %v9552
        %v9554 = vld [vmem:[%s346 + $0x18] sm:$0x3]
        %v9555 = vsel %vm9517, %v9491, %v9554
        %9556 = vst [vmem:[%s346 + $0x18] sm:$0x3] %v9555
        %v9557 = vld [vmem:[%s346 + $0x1a] sm:$0x3]
        %v9558 = vsel %vm9517, %v9492, %v9557
        %9559 = vst [vmem:[%s346 + $0x1a] sm:$0x3] %v9558
        %v9560 = vld [vmem:[%s346 + $0x1c] sm:$0x3]
        %v9561 = vsel %vm9517, %v9493, %v9560
        %9562 = vst [vmem:[%s346 + $0x1c] sm:$0x3] %v9561
        %v9563 = vld [vmem:[%s346 + $0x1e] sm:$0x3]
        %v9564 = vsel %vm9517, %v9494, %v9563
        %9565 = vst [vmem:[%s346 + $0x1e] sm:$0x3] %v9564
        %v9566 = vpack.c.bf16 %v9428, %v8826
        %v9567 = vpack.c.bf16 %v9429, %v8827
        %v9570 = vrot.slane %v9566, 3
        %v9571 = vrot.slane %v9567, 3
        %v9574 = vsel %vm9436, %v9566, %v9570
        %v9576 = vsel %vm7017, %v9566, %v9570
        %v9578 = vrot.slane %v9576, 1
        %v9579 = vsel %vm7020, %v9566, %v9570
        %v9581 = vrot.slane %v9579, 2
        %v9582 = vsel %vm7023, %v9566, %v9570
        %v9584 = vrot.slane %v9582, 3
        %v9587 = vsel %vm9436, %v9567, %v9571
        %v9589 = vsel %vm7017, %v9567, %v9571
        %v9591 = vrot.slane %v9589, 1
        %v9592 = vsel %vm7020, %v9567, %v9571
        %v9594 = vrot.slane %v9592, 2
        %v9595 = vsel %vm7023, %v9567, %v9571
        %v9597 = vrot.slane %v9595, 3
        %v9598 = vunpack.i.l.s16 %v9574
        %v9599 = vunpack.i.h.s16 %v9574
        %v9600 = vunpack.i.l.s16 %v9578
        %v9601 = vunpack.i.h.s16 %v9578
        %v9602 = vunpack.i.l.s16 %v9581
        %v9603 = vunpack.i.h.s16 %v9581
        %v9604 = vunpack.i.l.s16 %v9584
        %v9605 = vunpack.i.h.s16 %v9584
        %v9606 = vunpack.i.l.s16 %v9587
        %v9607 = vunpack.i.h.s16 %v9587
        %v9608 = vunpack.i.l.s16 %v9591
        %v9609 = vunpack.i.h.s16 %v9591
        %v9610 = vunpack.i.l.s16 %v9594
        %v9611 = vunpack.i.h.s16 %v9594
        %v9612 = vunpack.i.l.s16 %v9597
        %v9613 = vunpack.i.h.s16 %v9597
        %v9614 = vpack.i.b16 %v9598, %v9598
        %v9615 = vpack.i.b16 %v9599, %v9599
        %v9616 = vpack.i.b16 %v9600, %v9600
        %v9617 = vpack.i.b16 %v9601, %v9601
        %v9618 = vpack.i.b16 %v9602, %v9602
        %v9619 = vpack.i.b16 %v9603, %v9603
        %v9620 = vpack.i.b16 %v9604, %v9604
        %v9621 = vpack.i.b16 %v9605, %v9605
        %v9622 = vpack.i.b16 %v9606, %v9606
        %v9623 = vpack.i.b16 %v9607, %v9607
        %v9624 = vpack.i.b16 %v9608, %v9608
        %v9625 = vpack.i.b16 %v9609, %v9609
        %v9626 = vpack.i.b16 %v9610, %v9610
        %v9627 = vpack.i.b16 %v9611, %v9611
        %v9628 = vpack.i.b16 %v9612, %v9612
        %v9629 = vpack.i.b16 %v9613, %v9613
        %vm9646 = vsmask.f32 7938
        %vm9647 = vmand %vm9511, %vm9646
        %vm9648 = vsmask.f32 7942
        %vm9649 = vmand %vm9514, %vm9648
        %vm9650 = vmor %vm9649, %vm9647
        %v9651 = vld [vmem:[%s346] sm:$0x3]
        %v9652 = vsel %vm9650, %v9614, %v9651
        %9653 = vst [vmem:[%s346] sm:$0x3] %v9652
        %v9654 = vld [vmem:[%s346 + $0x2] sm:$0x3]
        %v9655 = vsel %vm9650, %v9615, %v9654
        %9656 = vst [vmem:[%s346 + $0x2] sm:$0x3] %v9655
        %v9657 = vld [vmem:[%s346 + $0x4] sm:$0x3]
        %v9658 = vsel %vm9650, %v9616, %v9657
        %9659 = vst [vmem:[%s346 + $0x4] sm:$0x3] %v9658
        %v9660 = vld [vmem:[%s346 + $0x6] sm:$0x3]
        %v9661 = vsel %vm9650, %v9617, %v9660
        %9662 = vst [vmem:[%s346 + $0x6] sm:$0x3] %v9661
        %v9663 = vld [vmem:[%s346 + $0x8] sm:$0x3]
        %v9664 = vsel %vm9650, %v9618, %v9663
        %9665 = vst [vmem:[%s346 + $0x8] sm:$0x3] %v9664
        %v9666 = vld [vmem:[%s346 + $0xa] sm:$0x3]
        %v9667 = vsel %vm9650, %v9619, %v9666
        %9668 = vst [vmem:[%s346 + $0xa] sm:$0x3] %v9667
        %v9669 = vld [vmem:[%s346 + $0xc] sm:$0x3]
        %v9670 = vsel %vm9650, %v9620, %v9669
        %9671 = vst [vmem:[%s346 + $0xc] sm:$0x3] %v9670
        %v9672 = vld [vmem:[%s346 + $0xe] sm:$0x3]
        %v9673 = vsel %vm9650, %v9621, %v9672
        %9674 = vst [vmem:[%s346 + $0xe] sm:$0x3] %v9673
        %v9675 = vld [vmem:[%s346 + $0x10] sm:$0x3]
        %v9676 = vsel %vm9650, %v9622, %v9675
        %9677 = vst [vmem:[%s346 + $0x10] sm:$0x3] %v9676
        %v9678 = vld [vmem:[%s346 + $0x12] sm:$0x3]
        %v9679 = vsel %vm9650, %v9623, %v9678
        %9680 = vst [vmem:[%s346 + $0x12] sm:$0x3] %v9679
        %v9681 = vld [vmem:[%s346 + $0x14] sm:$0x3]
        %v9682 = vsel %vm9650, %v9624, %v9681
        %9683 = vst [vmem:[%s346 + $0x14] sm:$0x3] %v9682
        %v9684 = vld [vmem:[%s346 + $0x16] sm:$0x3]
        %v9685 = vsel %vm9650, %v9625, %v9684
        %9686 = vst [vmem:[%s346 + $0x16] sm:$0x3] %v9685
        %v9687 = vld [vmem:[%s346 + $0x18] sm:$0x3]
        %v9688 = vsel %vm9650, %v9626, %v9687
        %9689 = vst [vmem:[%s346 + $0x18] sm:$0x3] %v9688
        %v9690 = vld [vmem:[%s346 + $0x1a] sm:$0x3]
        %v9691 = vsel %vm9650, %v9627, %v9690
        %9692 = vst [vmem:[%s346 + $0x1a] sm:$0x3] %v9691
        %v9693 = vld [vmem:[%s346 + $0x1c] sm:$0x3]
        %v9694 = vsel %vm9650, %v9628, %v9693
        %9695 = vst [vmem:[%s346 + $0x1c] sm:$0x3] %v9694
        %v9696 = vld [vmem:[%s346 + $0x1e] sm:$0x3]
        %v9697 = vsel %vm9650, %v9629, %v9696
        %9698 = vst [vmem:[%s346 + $0x1e] sm:$0x3] %v9697
        %s9699 = sand.u32 %s171, 1
        %s9700 = scalar_lea.sflag [#allocation4], %s9699
        %s9701 = sand.u32 %s171, 1
        %s9702 = smul.addr %s9701, 32
        %s9703 = scalar_lea.vmem [#allocation10], %s9702
        // Predicated region
        $region61: #{tpu_custom_call.1} parent=43 // pred_check
          %p9704 = pneg %p181
        $region62: #{tpu_custom_call.1} parent=43 // pred_check_branch
          %9706 = sbr.rel (%p9704) target = $region64
        $region63: #{tpu_custom_call.1} parent=43 // pred_region
          %9708 = vsyncadd %s9700, 0
          %s9709 = smul.addr %s27, 32
          %s9710 = scalar_lea.hbm %s6, %s9709
          %s9711 = sshll.u32 %s9703, 4
          %s9712 = int_to_ptr.vmem [resolvable:$true] %s9711
          %s9713 = sshll.u32 %s9710, 4
          %s9714 = int_to_ptr.hbm [resolvable:$true] %s9713
          %9719 = dma.vmem_to_hbm [thread:$0]  %s9712, 512, %s9714, %s9700, 32, 32, 2
        $region64: #{tpu_custom_call.1} parent=43 // pred_fallthru
          _
      $region44: #{tpu_custom_call.1} parent=5 // pred_fallthru
        _
      %p9720 = scmp.le.s32.totalorder 2, %s22
      // Predicated region
      $region65: #{tpu_custom_call.1} parent=5 // pred_check
        %p9721 = pneg %p9720
      $region66: #{tpu_custom_call.1} parent=5 // pred_check_branch
        %9723 = sbr.rel (%p9721) target = $region68
      $region67: #{tpu_custom_call.1} parent=5 // pred_region
        %s9724 = ssub.s32 %s22, 2
        // Predicated region
        $region69: #{tpu_custom_call.1} parent=67 // pred_check
          %p9725 = pneg %p187
        $region70: #{tpu_custom_call.1} parent=67 // pred_check_branch
          %9727 = sbr.rel (%p9725) target = $region72
        $region71: #{tpu_custom_call.1} parent=67 // pred_region
          %s9728 = sand.u32 %s172, 1
          %s9729 = scalar_lea.sflag [#allocation4], %s9728
          %s9730 = sand.u32 %s172, 1
          %s9731 = smul.addr %s9730, 32
          %s9732 = scalar_lea.vmem [#allocation10], %s9731
          %9734 = dma.done %s9729, 512
        $region72: #{tpu_custom_call.1} parent=67 // pred_fallthru
          _
      $region68: #{tpu_custom_call.1} parent=5 // pred_fallthru
        _
    $region6: #{tpu_custom_call.1} parent=1 // loop_footer
      %s26 = sadd.s32 1, %s22
    $region7: #{tpu_custom_call.1} parent=1 // loop_footer_branch
      %21 = sbr.rel target = $region3
    $region8: #{tpu_custom_call.1} parent=1 // loop_exit
      _
    %9735 = vsyncpa [#allocation3], 1
    %s9736 = scalar_lea.sflag [#allocation3], 1
    %9737 = vsyncpa %s9736, 1
    %9738 = vsyncpa [#allocation6], 1
    %s9739 = scalar_lea.sflag [#allocation6], 1
    %9740 = vsyncpa %s9739, 1
    %9741 = vsyncpa [#allocation9], 1
    %9742 = vsyncpa [#allocation4], 1
    %s9743 = scalar_lea.sflag [#allocation4], 1
    %9744 = vsyncpa %s9743, 1

</llo_original>
